<compile_context>
chip_gen: v5e
topology: v5e:2x2
jax: 0.10.0
libtpu: 0.0.40
codegen_flags: <defaults>
</compile_context>

<pallas_src>
import functools

import numpy as np
import jax
import jax.numpy as jnp
from jax.experimental import pallas as pl
from jax.experimental.pallas import tpu as pltpu

# ----------------------------- configuration (args) --------------------------
DOWN_NUM = 2                      # args.down_num  -> layer_num = 3
LAYER_NUM = DOWN_NUM + 1
INIT_FEATURE = 8                  # args.init_feature
HIDDEN = 8                        # args.hidden_size
KERNEL_SIZE = 3                   # args.kernel_size (padding = 1)
DROPOUT = 0.0                     # args.dropout (0 -> Dropout2d skipped)
IMG = 16                          # toy spatial resolution
H_FULL, H_MID, H_DEEP = IMG, IMG // 2, IMG // 4          # per-frame rows 16/8/4
L_FULL = IMG * HIDDEN             # 16*8  = 128 lanes (skip 0)
L_MID = (IMG // 2) * 2 * HIDDEN   # 8*16  = 128 lanes (skip 1)
L_DEEP = (IMG // 4) * 2 * HIDDEN  # 4*16  = 64 lanes  (skip 2 / deepest feature)
# per-decoder-layer (input_channels, hidden_channels), mirrors RSIS.__init__
CLSTM_DIMS = [(2 * HIDDEN, 2 * HIDDEN), (4 * HIDDEN, HIDDEN), (2 * HIDDEN, HIDDEN)]
MXU_DTYPE = jnp.bfloat16          # MXU operand dtype (accumulation stays f32)
VMEM_LIMIT = 32 * 1024 * 1024


# ----------------------- weight preprocessing (host, numpy) ------------------
def _conv_band_np(w, W, pad_cols=None):
    """Conv2d(k=3, pad=1) -> band-matmul form (bf16).

    w: (3, 3, Cin, Cout) -> (3, W*Cin, W*Cout) with
      band[dy, xi*Cin+ci, xo*Cout+co] = w[dy, xi-xo+1, ci, co] (0 if |xi-xo|>1),
    so  out_row[y] = sum_dy in_row[y+dy-1] @ band[dy]  is the 'same' conv.
    pad_cols zero-pads the output-lane axis (lane-dense stores)."""
    w = np.asarray(w, np.float32)
    Cin, Cout = w.shape[2], w.shape[3]
    xi = np.arange(W)[:, None]
    xo = np.arange(W)[None, :]
    P = np.stack([(xi == xo + dx - 1) for dx in range(3)]).astype(np.float32)
    band = np.einsum("dxy,edco->excyo", P, w).reshape(3, W * Cin, W * Cout)
    if pad_cols is not None and pad_cols > W * Cout:
        band = np.pad(band, ((0, 0), (0, 0), (0, pad_cols - W * Cout)))
    return jnp.asarray(band, MXU_DTYPE)


def _gate_band_np(w, W, hid):
    """Like _conv_band_np, but the 4*hid gate channels are laid out gate-major:
    column = g*(W*hid) + xo*hid + co, so i/f/o/g are contiguous lane slabs.
    Returns numpy (segments are concatenated before casting)."""
    w = np.asarray(w, np.float32)
    Cin = w.shape[2]
    wg = w.reshape(3, 3, Cin, 4, hid)
    xi = np.arange(W)[:, None]
    xo = np.arange(W)[None, :]
    P = np.stack([(xi == xo + dx - 1) for dx in range(3)]).astype(np.float32)
    return np.einsum("dxy,edcgo->excgyo", P, wg).reshape(3, W * Cin, 4 * W * hid)


def _combined_gate_band_np(w, W, hid, seg_sizes):
    """One fused gate band for a ConvLSTM whose conv input is the channel
    concat of several segments laid out segment-major along lanes."""
    segs, off = [], 0
    for s in seg_sizes:
        segs.append(_gate_band_np(w[:, :, off:off + s], W, hid))
        off += s
    return jnp.asarray(np.concatenate(segs, axis=1), MXU_DTYPE)


def _upsample_mat_np(w, W):
    """ConvTranspose2d(k=2, s=2), torch weight (Cin, Cout, 2, 2) ->
    (2, W*Cin, 2*W*Cout): out_row(2y+ky) = in_row(y) @ U[ky]."""
    w = np.asarray(w, np.float32)
    Cin, Cout = w.shape[0], w.shape[1]
    U = np.zeros((2, W * Cin, 2 * W * Cout), np.float32)
    for ky in range(2):
        for kx in range(2):
            for x in range(W):
                U[ky, x * Cin:(x + 1) * Cin,
                  (2 * x + kx) * Cout:(2 * x + kx + 1) * Cout] = w[:, :, ky, kx]
    return jnp.asarray(U, MXU_DTYPE)


def _interleave_np(Hin):
    """(2, 2*Hin, Hin) even/odd output-row interleave selectors (precomputed
    once host-side instead of rebuilding iota selection matrices per frame)."""
    r = np.arange(2 * Hin)[:, None]
    c = np.arange(Hin)[None, :]
    return jnp.asarray(np.stack([(r == 2 * c), (r == 2 * c + 1)]).astype(np.float32))


def _frame_masks_np(T, H):
    """(2, T*H, 1): [0] zeroes the first row of every frame (rolled y-1 wrap),
    [1] zeroes the last row of every frame (rolled y+1 wrap)."""
    r = np.arange(T * H)
    top = (r % H != 0).astype(np.float32)
    bot = (r % H != H - 1).astype(np.float32)
    return jnp.asarray(np.stack([top, bot])[:, :, None])


def _tile_bias_np(b, reps, pad_to=None):
    """Per-channel bias tiled to the (1, reps*C) pixel-interleaved lane layout."""
    v = np.tile(np.asarray(b, np.float32), reps).reshape(1, -1)
    if pad_to is not None and pad_to > v.shape[1]:
        v = np.pad(v, ((0, 0), (0, pad_to - v.shape[1])))
    return jnp.asarray(v)


def _tile_gate_bias_np(b, W, hid):
    """Gate bias (4*hid,) tiled to the gate-major (1, 4*W*hid) layout."""
    b = np.asarray(b, np.float32).reshape(4, 1, hid)
    return jnp.asarray(np.tile(b, (1, W, 1)).reshape(1, 4 * W * hid))


def _pool_rows_np(Rin):
    """(2, Rin//2, Rin): even/odd row selectors for the 2x2 maxpool."""
    ro = np.arange(Rin // 2)[:, None]
    ci = np.arange(Rin)[None, :]
    return jnp.asarray(np.stack([(ci == 2 * ro), (ci == 2 * ro + 1)]).astype(np.float32))


def _pool_cols_np(W, C):
    """(2, W*C, (W//2)*C): even/odd pixel-column selectors (channel-preserving)."""
    l = np.arange(W * C)[:, None]
    m = np.arange((W // 2) * C)[None, :]
    e = ((l // C) == 2 * (m // C)) & ((l % C) == (m % C))
    o = ((l // C) == 2 * (m // C) + 1) & ((l % C) == (m % C))
    return jnp.asarray(np.stack([e, o]).astype(np.float32))


def _bn_mat_np(W, C):
    """(W*C, W*C) "same channel" matrix: right-multiplying a (1, W*C) row sum
    produces the per-channel total broadcast back to every lane of that channel."""
    l = np.arange(W * C)[:, None]
    m = np.arange(W * C)[None, :]
    return jnp.asarray(((l % C) == (m % C)).astype(np.float32))


# ----------------------------- Pallas kernels --------------------------------
def _encoder_kernel(
    x_ref,
    mfull_ref, mmid_ref, mdeep_ref,              # (2, R, 1) frame-boundary masks
    pr1_ref, pc1_ref, pr2_ref, pc2_ref,          # maxpool selectors
    bnm0_ref, bnm1_ref, bnm2_ref,                # BN channel sum/broadcast matrices
    unet_w_ref, res0_w_ref, down1_w_ref, down2_w_ref,
    skip0_w_ref, skip1_w_ref, skip2_w_ref,       # conv band weights (bf16)
    unet_b_ref, res0_b_ref, down1_b_ref, down2_b_ref,
    skip0_b_ref, skip1_b_ref, skip2_b_ref,       # biases tiled to (1, W*Cout)
    bn0_g_ref, bn0_b_ref, bn1_g_ref, bn1_b_ref, bn2_g_ref, bn2_b_ref,
    skip_full_ref, skip_mid_ref, skip_deep_ref,  # outputs (lane-dense)
    *, n0, n1, n2,
):
    f32 = jnp.float32

    def conv(x, band_ref, mask_ref, bias_ref):
        # 3x3 'same' conv as THREE lane-dense band matmuls; the y-1 / y+1 rows
        # come from an XLU sublane roll + frame-boundary zero mask (no O(T^2)
        # shift-selection matmuls).
        R = x.shape[0]
        xm = pltpu.roll(x, 1, axis=0) * mask_ref[0]
        xp = pltpu.roll(x, R - 1, axis=0) * mask_ref[1]
        return (jnp.dot(xm.astype(MXU_DTYPE), band_ref[0], preferred_element_type=f32)
                + jnp.dot(x.astype(MXU_DTYPE), band_ref[1], preferred_element_type=f32)
                + jnp.dot(xp.astype(MXU_DTYPE), band_ref[2], preferred_element_type=f32)
                + bias_ref[...])

    def maxpool2(x, pr_ref, pc_ref):
        # TODO(synk): at large T replace the (R/2, R) row selectors (O(T^2))
        # with strided sublane reads; negligible at this size.
        r = jnp.maximum(jnp.dot(pr_ref[0], x, preferred_element_type=f32),
                        jnp.dot(pr_ref[1], x, preferred_element_type=f32))
        return jnp.maximum(jnp.dot(r, pc_ref[0], preferred_element_type=f32),
                           jnp.dot(r, pc_ref[1], preferred_element_type=f32))

    def batchnorm(s, m_ref, g_ref, b_ref, n):
        # TODO(synk): training-mode BatchNorm2d (batch statistics over all T
        # frames, biased var); eval-mode running stats would differ.
        rs = jnp.sum(s, axis=0, keepdims=True)            # XLU row reduce first
        rs2 = jnp.sum(s * s, axis=0, keepdims=True)
        mean = jnp.dot(rs, m_ref[...], preferred_element_type=f32) / n
        ex2 = jnp.dot(rs2, m_ref[...], preferred_element_type=f32) / n
        var = jnp.maximum(ex2 - mean * mean, 0.0)          # clamp f32 cancellation
        return (s - mean) * jax.lax.rsqrt(var + 1e-5) * g_ref[...] + b_ref[...]

    x = x_ref[...]                                         # (T*16, 16)
    # TODO(synk): Unet_backbone / First_resnet / Down_resnet internals were not
    # provided; approximated as conv3x3+ReLU stem, residual conv block, and
    # maxpool2 + conv3x3(channel doubling) + ReLU respectively.
    f0 = jnp.maximum(conv(x, unet_w_ref, mfull_ref, unet_b_ref), 0.0)
    f0 = jnp.maximum(f0 + conv(f0, res0_w_ref, mfull_ref, res0_b_ref), 0.0)
    skip_full_ref[...] = batchnorm(
        conv(f0, skip0_w_ref, mfull_ref, skip0_b_ref),
        bnm0_ref, bn0_g_ref, bn0_b_ref, n0)

    f1 = jnp.maximum(conv(maxpool2(f0, pr1_ref, pc1_ref),
                          down1_w_ref, mmid_ref, down1_b_ref), 0.0)     # (T*8, 128)
    skip_mid_ref[...] = batchnorm(
        conv(f1, skip1_w_ref, mmid_ref, skip1_b_ref),
        bnm1_ref, bn1_g_ref, bn1_b_ref, n1)

    f2 = jnp.maximum(conv(maxpool2(f1, pr2_ref, pc2_ref),
                          down2_w_ref, mdeep_ref, down2_b_ref), 0.0)    # (T*4, 128)
    skip_deep_ref[...] = batchnorm(
        conv(f2, skip2_w_ref, mdeep_ref, skip2_b_ref),
        bnm2_ref, bn2_g_ref, bn2_b_ref, n2)


def _decoder_kernel(
    deep_ref, mid_ref, full_ref,                 # per-frame skip blocks
    mmid_ref, mfull_ref,                         # (2, H, 1) shift masks
    band0_ref, b0_ref, u0_ref, u0b_ref, e0_ref,
    band1_ref, b1_ref, u1_ref, u1b_ref, e1_ref,
    band2_ref, b2_ref,
    bo_ref, bob_ref,
    mask_out_ref,                                # (16, 128) lane-dense output block
    h0, c0, h1, c1, h2, c2,                      # LSTM state, persists over t
    cat0, cat1, cat2,                            # fused gate-conv input buffers
):
    f32 = jnp.float32
    t = pl.program_id(0)

    @pl.when(t == 0)
    def _init():
        h0[...] = jnp.zeros_like(h0)
        c0[...] = jnp.zeros_like(c0)
        h1[...] = jnp.zeros_like(h1)
        c1[...] = jnp.zeros_like(c1)
        h2[...] = jnp.zeros_like(h2)
        c2[...] = jnp.zeros_like(c2)
        # cat0 is padded 4 -> 8 rows; the pad rows stay zero forever so the
        # roll wrap-around realises the conv's zero 'same' padding (no mask).
        cat0[...] = jnp.zeros_like(cat0)

    def band_conv(x, band_ref, mask_ref=None):
        R = x.shape[0]
        xm = pltpu.roll(x, 1, axis=0)
        xp = pltpu.roll(x, R - 1, axis=0)
        if mask_ref is not None:
            xm = xm * mask_ref[0]
            xp = xp * mask_ref[1]
        return (jnp.dot(xm.astype(MXU_DTYPE), band_ref[0], preferred_element_type=f32)
                + jnp.dot(x.astype(MXU_DTYPE), band_ref[1], preferred_element_type=f32)
                + jnp.dot(xp.astype(MXU_DTYPE), band_ref[2], preferred_element_type=f32))

    def lstm(z, c_prev, wh):
        # TODO(synk): ConvLSTMCell source not provided; gates assumed i,f,o,g
        # from one conv over concat(input, h_prev).
        i = jax.nn.sigmoid(z[:, 0 * wh:1 * wh])
        f = jax.nn.sigmoid(z[:, 1 * wh:2 * wh])
        o = jax.nn.sigmoid(z[:, 2 * wh:3 * wh])
        g = jnp.tanh(z[:, 3 * wh:4 * wh])
        c_new = f * c_prev + i * g
        return o * jnp.tanh(c_new), c_new

    def upsample(hcur, u_ref, e_ref, ub_ref):
        # ConvTranspose2d(k=2, s=2): even/odd output rows from two matmuls,
        # interleaved with precomputed (2H, H) selectors (no per-frame iota).
        hb = hcur.astype(MXU_DTYPE)
        even = jnp.dot(hb, u_ref[0], preferred_element_type=f32)
        odd = jnp.dot(hb, u_ref[1], preferred_element_type=f32)
        return (jnp.dot(e_ref[0], even, preferred_element_type=f32)
                + jnp.dot(e_ref[1], odd, preferred_element_type=f32)
                + ub_ref[...])

    # ---- layer 0: ConvLSTM(2*hid -> 2*hid) on the deepest feature (4x4) ----
    cat0[0:H_DEEP, 0:L_DEEP] = deep_ref[0]
    cat0[0:H_DEEP, L_DEEP:2 * L_DEEP] = h0[...]
    z0 = band_conv(cat0[...], band0_ref)[0:H_DEEP, :] + b0_ref[...]
    nh0, nc0 = lstm(z0, c0[...], H_DEEP * 2 * HIDDEN)
    h0[...] = nh0
    c0[...] = nc0
    up0 = upsample(nh0, u0_ref, e0_ref, u0b_ref)           # (8, 128): 16ch @ 8x8

    # ---- layer 1: ConvLSTM(4*hid -> hid) on concat(up, skip_mid) (8x8) ----
    cat1[:, 0:128] = up0
    cat1[:, 128:256] = mid_ref[...]
    cat1[:, 256:320] = h1[...]
    z1 = band_conv(cat1[...], band1_ref, mmid_ref) + b1_ref[...]
    nh1, nc1 = lstm(z1, c1[...], H_MID * HIDDEN)
    h1[...] = nh1
    c1[...] = nc1
    up1 = upsample(nh1, u1_ref, e1_ref, u1b_ref)           # (16, 128): 8ch @ 16x16

    # ---- layer 2: ConvLSTM(2*hid -> hid) on concat(up, skip_full) (16x16) ----
    cat2[:, 0:128] = up1
    cat2[:, 128:256] = full_ref[...]
    cat2[:, 256:384] = h2[...]
    z2 = band_conv(cat2[...], band2_ref, mfull_ref) + b2_ref[...]
    nh2, nc2 = lstm(z2, c2[...], H_FULL * HIDDEN)
    h2[...] = nh2
    c2[...] = nc2

    # TODO(synk): Dropout2d skipped (args.dropout == 0).
    # conv_out; band zero-padded to 128 output lanes -> full lane-dense store.
    mask_out_ref[...] = band_conv(nh2, bo_ref, mfull_ref) + bob_ref[...]


# ----------------------------- parameters ------------------------------------
def make_params(key):
    keys = iter(jax.random.split(key, 64))

    def p(shape, scale=0.1):
        return (scale * jax.random.normal(next(keys), shape)).astype(jnp.float32)

    F, HD = INIT_FEATURE, HIDDEN
    params = {}
    params["unet_w"] = p((3, 3, 1, F)); params["unet_b"] = p((F,))
    params["res0_w"] = p((3, 3, F, F)); params["res0_b"] = p((F,))
    params["down1_w"] = p((3, 3, F, 2 * F)); params["down1_b"] = p((2 * F,))
    params["down2_w"] = p((3, 3, 2 * F, 4 * F)); params["down2_b"] = p((4 * F,))
    params["skip0_w"] = p((3, 3, F, HD)); params["skip0_b"] = p((HD,))
    params["bn0_g"] = jnp.ones((HD,), jnp.float32)
    params["bn0_b"] = jnp.zeros((HD,), jnp.float32)
    params["skip1_w"] = p((3, 3, 2 * F, 2 * HD)); params["skip1_b"] = p((2 * HD,))
    params["bn1_g"] = jnp.ones((2 * HD,), jnp.float32)
    params["bn1_b"] = jnp.zeros((2 * HD,), jnp.float32)
    params["skip2_w"] = p((3, 3, 4 * F, 2 * HD)); params["skip2_b"] = p((2 * HD,))
    params["bn2_g"] = jnp.ones((2 * HD,), jnp.float32)
    params["bn2_b"] = jnp.zeros((2 * HD,), jnp.float32)
    for i, (cin, hid) in enumerate(CLSTM_DIMS):
        params[f"clstm{i}_w"] = p((3, 3, cin + hid, 4 * hid))
        params[f"clstm{i}_b"] = p((4 * hid,))
    params["up0_w"] = p((2 * HD, 2 * HD, 2, 2)); params["up0_b"] = p((2 * HD,))
    params["up1_w"] = p((HD, HD, 2, 2)); params["up1_b"] = p((HD,))
    params["out_w"] = p((3, 3, HD, 1)); params["out_b"] = p((1,))
    return params


def prepare_inputs(params, T):
    """Host-side (numpy) repacking of all weights into the band/selector layout."""
    F, HD = INIT_FEATURE, HIDDEN
    enc = (
        _frame_masks_np(T, H_FULL), _frame_masks_np(T, H_MID), _frame_masks_np(T, H_DEEP),
        _pool_rows_np(T * H_FULL), _pool_cols_np(IMG, F),
        _pool_rows_np(T * H_MID), _pool_cols_np(IMG // 2, 2 * F),
        _bn_mat_np(IMG, HD), _bn_mat_np(IMG // 2, 2 * HD), _bn_mat_np(IMG // 4, 2 * HD),
        _conv_band_np(params["unet_w"], IMG),
        _conv_band_np(params["res0_w"], IMG),
        _conv_band_np(params["down1_w"], IMG // 2),
        _conv_band_np(params["down2_w"], IMG // 4),
        _conv_band_np(params["skip0_w"], IMG),
        _conv_band_np(params["skip1_w"], IMG // 2),
        _conv_band_np(params["skip2_w"], IMG // 4),
        _tile_bias_np(params["unet_b"], IMG),
        _tile_bias_np(params["res0_b"], IMG),
        _tile_bias_np(params["down1_b"], IMG // 2),
        _tile_bias_np(params["down2_b"], IMG // 4),
        _tile_bias_np(params["skip0_b"], IMG),
        _tile_bias_np(params["skip1_b"], IMG // 2),
        _tile_bias_np(params["skip2_b"], IMG // 4),
        _tile_bias_np(params["bn0_g"], IMG), _tile_bias_np(params["bn0_b"], IMG),
        _tile_bias_np(params["bn1_g"], IMG // 2), _tile_bias_np(params["bn1_b"], IMG // 2),
        _tile_bias_np(params["bn2_g"], IMG // 4), _tile_bias_np(params["bn2_b"], IMG // 4),
    )

    w0 = np.asarray(params["clstm0_w"])   # (3,3,32,64): [x(16ch) | h(16ch)]
    w1 = np.asarray(params["clstm1_w"])   # (3,3,40,32): [up(16) | skip(16) | h(8)]
    w2 = np.asarray(params["clstm2_w"])   # (3,3,24,32): [up(8)  | skip(8)  | h(8)]
    dec = (
        _frame_masks_np(1, H_MID),                                    # mmid
        _frame_masks_np(1, H_FULL),                                   # mfull
        _combined_gate_band_np(w0, IMG // 4, 2 * HD, (2 * HD, 2 * HD)),      # band0
        _tile_gate_bias_np(params["clstm0_b"], IMG // 4, 2 * HD),            # b0
        _upsample_mat_np(params["up0_w"], IMG // 4),                         # u0
        _tile_bias_np(params["up0_b"], 2 * (IMG // 4)),                      # u0b
        _interleave_np(H_DEEP),                                              # e0
        _combined_gate_band_np(w1, IMG // 2, HD, (2 * HD, 2 * HD, HD)),      # band1
        _tile_gate_bias_np(params["clstm1_b"], IMG // 2, HD),                # b1
        _upsample_mat_np(params["up1_w"], IMG // 2),                         # u1
        _tile_bias_np(params["up1_b"], 2 * (IMG // 2)),                      # u1b
        _interleave_np(H_MID),                                               # e1
        _combined_gate_band_np(w2, IMG, HD, (HD, HD, HD)),                   # band2
        _tile_gate_bias_np(params["clstm2_b"], IMG, HD),                     # b2
        _conv_band_np(params["out_w"], IMG, pad_cols=128),                   # bo
        _tile_bias_np(params["out_b"], IMG, pad_to=128),                     # bob
    )
    return enc, dec


# ----------------------------- model forward ---------------------------------
def _const_spec(a):
    nd = a.ndim
    return pl.BlockSpec(tuple(a.shape), lambda *_, _nd=nd: (0,) * _nd)


def _bytes(arrs):
    return int(sum(int(np.prod(a.shape)) * a.dtype.itemsize for a in arrs))


def rvosnet_forward(x, enc_in, dec_in):
    """x: (n, t, c, h, w) (torch NCHW convention).  Returns (1, t, 1, h, w)."""
    n, t, c, h, w = x.shape
    frames = x[0, :, 0, :, :]                    # module only uses x[0]; c == 1
    x2d = frames.reshape(t * H_FULL, IMG)        # rows = t*H, lanes = W*Cin

    enc_out_shapes = (
        jax.ShapeDtypeStruct((t * H_FULL, L_FULL), jnp.float32),
        jax.ShapeDtypeStruct((t * H_MID, L_MID), jnp.float32),
        jax.ShapeDtypeStruct((t * H_DEEP, L_DEEP), jnp.float32),
    )
    enc_mm = [(16 * t, 16, 128), (16 * t, 128, 128), (16 * t, 128, 128),
              (8 * t, 64, 128), (8 * t, 128, 128), (4 * t, 64, 128), (4 * t, 128, 64)]
    enc_flops = int(sum(6 * m * k * nn for m, k, nn in enc_mm))

    # TODO(synk): for v7x, a frame-tiled "parallel" grid axis would shard the
    # encoder over both TensorCores; kept single-invocation at this toy size.
    skip_full, skip_mid, skip_deep = pl.pallas_call(
        functools.partial(_encoder_kernel,
                          n0=float(t * H_FULL * IMG),
                          n1=float(t * H_MID * (IMG // 2)),
                          n2=float(t * H_DEEP * (IMG // 4))),
        grid=(1,),
        out_shape=enc_out_shapes,
        in_specs=[_const_spec(a) for a in (x2d,) + tuple(enc_in)],
        out_specs=tuple(pl.BlockSpec(s.shape, lambda i: (0, 0)) for s in enc_out_shapes),
        compiler_params=pltpu.CompilerParams(
            dimension_semantics=("arbitrary",),
            vmem_limit_bytes=VMEM_LIMIT),
        cost_estimate=pl.CostEstimate(
            flops=enc_flops, transcendentals=0,
            bytes_accessed=_bytes((x2d,) + tuple(enc_in)) + _bytes(enc_out_shapes)),
    )(x2d, *enc_in)

    # per-frame layout for the deepest skip so its decoder block is (1, 4, 64)
    deep_frames = skip_deep.reshape(t, H_DEEP, L_DEEP)

    dec_mm = ([(8, 128, 256)] * 3 + [(4, 64, 128)] * 2 + [(8, 4, 128)] * 2
              + [(8, 320, 256)] * 3 + [(8, 64, 128)] * 2 + [(16, 8, 128)] * 2
              + [(16, 384, 512)] * 3 + [(16, 128, 128)] * 3)
    dec_flops = int(t * sum(2 * m * k * nn for m, k, nn in dec_mm))
    dec_trans = int(t * 5 * (H_DEEP * 64 + H_MID * 64 + H_FULL * 128))

    # TODO(synk): the reference does `feats.unsqueeze(0)` on a python list (a
    # bug); interpreted as indexing each per-scale feature at frame i.
    masks2d = pl.pallas_call(
        _decoder_kernel,
        grid=(t,),
        out_shape=jax.ShapeDtypeStruct((t * H_FULL, 128), jnp.float32),
        in_specs=[
            pl.BlockSpec((1, H_DEEP, L_DEEP), lambda tt: (tt, 0, 0)),
            pl.BlockSpec((H_MID, L_MID), lambda tt: (tt, 0)),
            pl.BlockSpec((H_FULL, L_FULL), lambda tt: (tt, 0)),
        ] + [_const_spec(a) for a in dec_in],
        out_specs=pl.BlockSpec((H_FULL, 128), lambda tt: (tt, 0)),
        scratch_shapes=[
            pltpu.VMEM((H_DEEP, L_DEEP), jnp.float32),            # h0 (4, 64)
            pltpu.VMEM((H_DEEP, L_DEEP), jnp.float32),            # c0
            pltpu.VMEM((H_MID, H_MID * HIDDEN), jnp.float32),     # h1 (8, 64)
            pltpu.VMEM((H_MID, H_MID * HIDDEN), jnp.float32),     # c1
            pltpu.VMEM((H_FULL, H_FULL * HIDDEN), jnp.float32),   # h2 (16, 128)
            pltpu.VMEM((H_FULL, H_FULL * HIDDEN), jnp.float32),   # c2
            pltpu.VMEM((2 * H_DEEP, 2 * L_DEEP), jnp.float32),    # cat0 (8, 128), padded
            pltpu.VMEM((H_MID, 320), jnp.float32),                # cat1 [up|skip|h]
            pltpu.VMEM((H_FULL, 384), jnp.float32),               # cat2 [up|skip|h]
        ],
        compiler_params=pltpu.CompilerParams(
            dimension_semantics=("arbitrary",),
            vmem_limit_bytes=VMEM_LIMIT),
        cost_estimate=pl.CostEstimate(
            flops=dec_flops, transcendentals=dec_trans,
            bytes_accessed=_bytes((deep_frames, skip_mid, skip_full) + tuple(dec_in))
            + t * H_FULL * 128 * 4),
    )(deep_frames, skip_mid, skip_full, *dec_in)

    masks = masks2d.reshape(t, H_FULL, 128)[:, :, :IMG]   # drop lane padding
    return masks[None, :, None, :, :]                     # (1, t, 1, h, w)


# ----------------------------- main ------------------------------------------
if __name__ == "__main__":
    key = jax.random.PRNGKey(0)
    k_x, k_p = jax.random.split(key)
    T = 2
    # (n, t, c, h, w) = (1, 2, 1, 16, 16): the module only uses x[0] and c == 1
    x = jax.random.normal(k_x, (1, T, 1, IMG, IMG), dtype=jnp.float32)
    params = make_params(k_p)
    enc_in, dec_in = prepare_inputs(params, T)

    fwd = jax.jit(rvosnet_forward)
    out = jax.block_until_ready(fwd(x, enc_in, dec_in))
    assert out.shape == (1, T, 1, IMG, IMG), out.shape
    assert bool(jnp.all(jnp.isfinite(out)))
    print("KERNEL_OK")
</pallas_src>

<mosaic_0001>
module attributes {stable_mosaic.version = 11 : i64} {
  func.func @_decoder_kernel(%arg0: i32, %arg1: memref<1x4x64xf32, #tpu.memory_space<vmem>>, %arg2: memref<8x128xf32, #tpu.memory_space<vmem>>, %arg3: memref<16x128xf32, #tpu.memory_space<vmem>>, %arg4: memref<2x8x1xf32, #tpu.memory_space<vmem>>, %arg5: memref<2x16x1xf32, #tpu.memory_space<vmem>>, %arg6: memref<3x128x256xbf16, #tpu.memory_space<vmem>>, %arg7: memref<1x256xf32, #tpu.memory_space<vmem>>, %arg8: memref<2x64x128xbf16, #tpu.memory_space<vmem>>, %arg9: memref<1x128xf32, #tpu.memory_space<vmem>>, %arg10: memref<2x8x4xf32, #tpu.memory_space<vmem>>, %arg11: memref<3x320x256xbf16, #tpu.memory_space<vmem>>, %arg12: memref<1x256xf32, #tpu.memory_space<vmem>>, %arg13: memref<2x64x128xbf16, #tpu.memory_space<vmem>>, %arg14: memref<1x128xf32, #tpu.memory_space<vmem>>, %arg15: memref<2x16x8xf32, #tpu.memory_space<vmem>>, %arg16: memref<3x384x512xbf16, #tpu.memory_space<vmem>>, %arg17: memref<1x512xf32, #tpu.memory_space<vmem>>, %arg18: memref<3x128x128xbf16, #tpu.memory_space<vmem>>, %arg19: memref<1x128xf32, #tpu.memory_space<vmem>>, %arg20: memref<16x128xf32, #tpu.memory_space<vmem>>, %arg21: memref<4x64xf32, #tpu.memory_space<vmem>>, %arg22: memref<4x64xf32, #tpu.memory_space<vmem>>, %arg23: memref<8x64xf32, #tpu.memory_space<vmem>>, %arg24: memref<8x64xf32, #tpu.memory_space<vmem>>, %arg25: memref<16x128xf32, #tpu.memory_space<vmem>>, %arg26: memref<16x128xf32, #tpu.memory_space<vmem>>, %arg27: memref<8x128xf32, #tpu.memory_space<vmem>>, %arg28: memref<8x320xf32, #tpu.memory_space<vmem>>, %arg29: memref<16x384xf32, #tpu.memory_space<vmem>>) attributes {dimension_semantics = [#tpu.dimension_semantics<arbitrary>], iteration_bounds = array<i64: 2>, scalar_prefetch = 0 : i64, scratch_operands = 9 : i64, tpu.core_type = #tpu.core_type<tc>, window_params = [{transform_indices = @transform_0, window_bounds = array<i64: 1, 4, 64>}, {transform_indices = @transform_1, window_bounds = array<i64: 8, 128>}, {transform_indices = @transform_2, window_bounds = array<i64: 16, 128>}, {pipeline_mode = #tpu.pipeline_mode<synchronous>, transform_indices = @transform_3, window_bounds = array<i64: 2, 8, 1>}, {pipeline_mode = #tpu.pipeline_mode<synchronous>, transform_indices = @transform_4, window_bounds = array<i64: 2, 16, 1>}, {pipeline_mode = #tpu.pipeline_mode<synchronous>, transform_indices = @transform_5, window_bounds = array<i64: 3, 128, 256>}, {pipeline_mode = #tpu.pipeline_mode<synchronous>, transform_indices = @transform_6, window_bounds = array<i64: 1, 256>}, {pipeline_mode = #tpu.pipeline_mode<synchronous>, transform_indices = @transform_7, window_bounds = array<i64: 2, 64, 128>}, {pipeline_mode = #tpu.pipeline_mode<synchronous>, transform_indices = @transform_8, window_bounds = array<i64: 1, 128>}, {pipeline_mode = #tpu.pipeline_mode<synchronous>, transform_indices = @transform_9, window_bounds = array<i64: 2, 8, 4>}, {pipeline_mode = #tpu.pipeline_mode<synchronous>, transform_indices = @transform_10, window_bounds = array<i64: 3, 320, 256>}, {pipeline_mode = #tpu.pipeline_mode<synchronous>, transform_indices = @transform_11, window_bounds = array<i64: 1, 256>}, {pipeline_mode = #tpu.pipeline_mode<synchronous>, transform_indices = @transform_12, window_bounds = array<i64: 2, 64, 128>}, {pipeline_mode = #tpu.pipeline_mode<synchronous>, transform_indices = @transform_13, window_bounds = array<i64: 1, 128>}, {pipeline_mode = #tpu.pipeline_mode<synchronous>, transform_indices = @transform_14, window_bounds = array<i64: 2, 16, 8>}, {pipeline_mode = #tpu.pipeline_mode<synchronous>, transform_indices = @transform_15, window_bounds = array<i64: 3, 384, 512>}, {pipeline_mode = #tpu.pipeline_mode<synchronous>, transform_indices = @transform_16, window_bounds = array<i64: 1, 512>}, {pipeline_mode = #tpu.pipeline_mode<synchronous>, transform_indices = @transform_17, window_bounds = array<i64: 3, 128, 128>}, {pipeline_mode = #tpu.pipeline_mode<synchronous>, transform_indices = @transform_18, window_bounds = array<i64: 1, 128>}, {transform_indices = @transform_19, window_bounds = array<i64: 16, 128>}]} {
    %c0_i32 = arith.constant 0 : i32
    %0 = arith.cmpi eq, %arg0, %c0_i32 : i32
    %1 = arith.extui %0 : i1 to i32
    %c0_i32_0 = arith.constant 0 : i32
    %2 = arith.cmpi ne, %1, %c0_i32_0 : i32
    scf.if %2 {
      %cst_173 = arith.constant 0.000000e+00 : f32
      %241 = vector.broadcast %cst_173 : f32 to vector<4x64xf32>
      %c0_174 = arith.constant 0 : index
      %c0_175 = arith.constant 0 : index
      %242 = vector.load %arg21[%c0_174, %c0_175] : memref<4x64xf32, #tpu.memory_space<vmem>>, vector<4x64xf32>
      tpu.vector_store %arg21[%c0_174, %c0_175], %241 {strides = array<i32>} : memref<4x64xf32, #tpu.memory_space<vmem>>, vector<4x64xf32>,
      %cst_176 = arith.constant 0.000000e+00 : f32
      %243 = vector.broadcast %cst_176 : f32 to vector<4x64xf32>
      %c0_177 = arith.constant 0 : index
      %c0_178 = arith.constant 0 : index
      %244 = vector.load %arg22[%c0_177, %c0_178] : memref<4x64xf32, #tpu.memory_space<vmem>>, vector<4x64xf32>
      tpu.vector_store %arg22[%c0_177, %c0_178], %243 {strides = array<i32>} : memref<4x64xf32, #tpu.memory_space<vmem>>, vector<4x64xf32>,
      %cst_179 = arith.constant 0.000000e+00 : f32
      %245 = vector.broadcast %cst_179 : f32 to vector<8x64xf32>
      %c0_180 = arith.constant 0 : index
      %c0_181 = arith.constant 0 : index
      %246 = vector.load %arg23[%c0_180, %c0_181] : memref<8x64xf32, #tpu.memory_space<vmem>>, vector<8x64xf32>
      tpu.vector_store %arg23[%c0_180, %c0_181], %245 {strides = array<i32>} : memref<8x64xf32, #tpu.memory_space<vmem>>, vector<8x64xf32>,
      %cst_182 = arith.constant 0.000000e+00 : f32
      %247 = vector.broadcast %cst_182 : f32 to vector<8x64xf32>
      %c0_183 = arith.constant 0 : index
      %c0_184 = arith.constant 0 : index
      %248 = vector.load %arg24[%c0_183, %c0_184] : memref<8x64xf32, #tpu.memory_space<vmem>>, vector<8x64xf32>
      tpu.vector_store %arg24[%c0_183, %c0_184], %247 {strides = array<i32>} : memref<8x64xf32, #tpu.memory_space<vmem>>, vector<8x64xf32>,
      %cst_185 = arith.constant 0.000000e+00 : f32
      %249 = vector.broadcast %cst_185 : f32 to vector<16x128xf32>
      %c0_186 = arith.constant 0 : index
      %c0_187 = arith.constant 0 : index
      %250 = vector.load %arg25[%c0_186, %c0_187] : memref<16x128xf32, #tpu.memory_space<vmem>>, vector<16x128xf32>
      tpu.vector_store %arg25[%c0_186, %c0_187], %249 {strides = array<i32>} : memref<16x128xf32, #tpu.memory_space<vmem>>, vector<16x128xf32>,
      %cst_188 = arith.constant 0.000000e+00 : f32
      %251 = vector.broadcast %cst_188 : f32 to vector<16x128xf32>
      %c0_189 = arith.constant 0 : index
      %c0_190 = arith.constant 0 : index
      %252 = vector.load %arg26[%c0_189, %c0_190] : memref<16x128xf32, #tpu.memory_space<vmem>>, vector<16x128xf32>
      tpu.vector_store %arg26[%c0_189, %c0_190], %251 {strides = array<i32>} : memref<16x128xf32, #tpu.memory_space<vmem>>, vector<16x128xf32>,
      %cst_191 = arith.constant 0.000000e+00 : f32
      %253 = vector.broadcast %cst_191 : f32 to vector<8x128xf32>
      %c0_192 = arith.constant 0 : index
      %c0_193 = arith.constant 0 : index
      %254 = vector.load %arg27[%c0_192, %c0_193] : memref<8x128xf32, #tpu.memory_space<vmem>>, vector<8x128xf32>
      tpu.vector_store %arg27[%c0_192, %c0_193], %253 {strides = array<i32>} : memref<8x128xf32, #tpu.memory_space<vmem>>, vector<8x128xf32>,
    } else {
    }
    %c0 = arith.constant 0 : index
    %c0_1 = arith.constant 0 : index
    %c0_2 = arith.constant 0 : index
    %3 = vector.load %arg1[%c0, %c0_1, %c0_2] : memref<1x4x64xf32, #tpu.memory_space<vmem>>, vector<1x4x64xf32>
    %4 = vector.shape_cast %3 : vector<1x4x64xf32> to vector<4x64xf32>
    %c0_3 = arith.constant 0 : index
    %c0_4 = arith.constant 0 : index
    %5 = vector.load %arg27[%c0_3, %c0_4] : memref<8x128xf32, #tpu.memory_space<vmem>>, vector<4x64xf32>
    tpu.vector_store %arg27[%c0_3, %c0_4], %4 {strides = array<i32>} : memref<8x128xf32, #tpu.memory_space<vmem>>, vector<4x64xf32>,
    %c0_5 = arith.constant 0 : index
    %c0_6 = arith.constant 0 : index
    %6 = vector.load %arg21[%c0_5, %c0_6] : memref<4x64xf32, #tpu.memory_space<vmem>>, vector<4x64xf32>
    %c0_7 = arith.constant 0 : index
    %c64 = arith.constant 64 : index
    %7 = vector.load %arg27[%c0_7, %c64] : memref<8x128xf32, #tpu.memory_space<vmem>>, vector<4x64xf32>
    tpu.vector_store %arg27[%c0_7, %c64], %6 {strides = array<i32>} : memref<8x128xf32, #tpu.memory_space<vmem>>, vector<4x64xf32>,
    %c0_8 = arith.constant 0 : index
    %c0_9 = arith.constant 0 : index
    %8 = vector.load %arg27[%c0_8, %c0_9] : memref<8x128xf32, #tpu.memory_space<vmem>>, vector<8x128xf32>
    %c1_i32 = arith.constant 1 : i32
    %9 = tpu.dynamic_rotate %8 by %c1_i32 dim 0 : vector<8x128xf32>, i32 -> vector<8x128xf32>
    %c7_i32 = arith.constant 7 : i32
    %10 = tpu.dynamic_rotate %8 by %c7_i32 dim 0 : vector<8x128xf32>, i32 -> vector<8x128xf32>
    %11 = arith.truncf %9 : vector<8x128xf32> to vector<8x128xbf16>
    %c0_10 = arith.constant 0 : index
    %c0_11 = arith.constant 0 : index
    %c0_12 = arith.constant 0 : index
    %12 = vector.load %arg6[%c0_10, %c0_11, %c0_12] : memref<3x128x256xbf16, #tpu.memory_space<vmem>>, vector<1x128x256xbf16>
    %13 = vector.shape_cast %12 : vector<1x128x256xbf16> to vector<128x256xbf16>
    %cst = arith.constant dense<0.000000e+00> : vector<8x256xf32>
    %14 = tpu.matmul %11, %13, %cst {dimension_numbers = #tpu.dot_dimension_numbers<[1], [0], [0], [1], [0, 0, 1, 1], [], []>} : vector<8x128xbf16>, vector<128x256xbf16>, vector<8x256xf32> -> vector<8x256xf32>
    %15 = arith.truncf %8 : vector<8x128xf32> to vector<8x128xbf16>
    %c1 = arith.constant 1 : index
    %c0_13 = arith.constant 0 : index
    %c0_14 = arith.constant 0 : index
    %16 = vector.load %arg6[%c1, %c0_13, %c0_14] : memref<3x128x256xbf16, #tpu.memory_space<vmem>>, vector<1x128x256xbf16>
    %17 = vector.shape_cast %16 : vector<1x128x256xbf16> to vector<128x256xbf16>
    %cst_15 = arith.constant dense<0.000000e+00> : vector<8x256xf32>
    %18 = tpu.matmul %15, %17, %cst_15 {dimension_numbers = #tpu.dot_dimension_numbers<[1], [0], [0], [1], [0, 0, 1, 1], [], []>} : vector<8x128xbf16>, vector<128x256xbf16>, vector<8x256xf32> -> vector<8x256xf32>
    %19 = arith.addf %14, %18 : vector<8x256xf32>
    %20 = arith.truncf %10 : vector<8x128xf32> to vector<8x128xbf16>
    %c2 = arith.constant 2 : index
    %c0_16 = arith.constant 0 : index
    %c0_17 = arith.constant 0 : index
    %21 = vector.load %arg6[%c2, %c0_16, %c0_17] : memref<3x128x256xbf16, #tpu.memory_space<vmem>>, vector<1x128x256xbf16>
    %22 = vector.shape_cast %21 : vector<1x128x256xbf16> to vector<128x256xbf16>
    %cst_18 = arith.constant dense<0.000000e+00> : vector<8x256xf32>
    %23 = tpu.matmul %20, %22, %cst_18 {dimension_numbers = #tpu.dot_dimension_numbers<[1], [0], [0], [1], [0, 0, 1, 1], [], []>} : vector<8x128xbf16>, vector<128x256xbf16>, vector<8x256xf32> -> vector<8x256xf32>
    %24 = arith.addf %19, %23 : vector<8x256xf32>
    %25 = vector.extract_strided_slice %24 {offsets = [0, 0], sizes = [4, 256], strides = [1, 1]} : vector<8x256xf32> to vector<4x256xf32>
    %c0_19 = arith.constant 0 : index
    %c0_20 = arith.constant 0 : index
    %26 = vector.load %arg7[%c0_19, %c0_20] : memref<1x256xf32, #tpu.memory_space<vmem>>, vector<1x256xf32>
    %27 = vector.broadcast %26 : vector<1x256xf32> to vector<4x256xf32>
    %28 = arith.addf %25, %27 : vector<4x256xf32>
    %c0_21 = arith.constant 0 : index
    %c0_22 = arith.constant 0 : index
    %29 = vector.load %arg22[%c0_21, %c0_22] : memref<4x64xf32, #tpu.memory_space<vmem>>, vector<4x64xf32>
    %30 = vector.extract_strided_slice %28 {offsets = [0, 0], sizes = [4, 64], strides = [1, 1]} : vector<4x256xf32> to vector<4x64xf32>
    %31 = arith.negf %30 : vector<4x64xf32>
    %32 = math.exp %31 : vector<4x64xf32>
    %cst_23 = arith.constant 1.000000e+00 : f32
    %33 = vector.broadcast %cst_23 : f32 to vector<4x64xf32>
    %34 = arith.addf %33, %32 : vector<4x64xf32>
    %35 = arith.divf %33, %34 : vector<4x64xf32>
    %36 = vector.extract_strided_slice %28 {offsets = [0, 64], sizes = [4, 64], strides = [1, 1]} : vector<4x256xf32> to vector<4x64xf32>
    %37 = arith.negf %36 : vector<4x64xf32>
    %38 = math.exp %37 : vector<4x64xf32>
    %cst_24 = arith.constant 1.000000e+00 : f32
    %39 = vector.broadcast %cst_24 : f32 to vector<4x64xf32>
    %40 = arith.addf %39, %38 : vector<4x64xf32>
    %41 = arith.divf %39, %40 : vector<4x64xf32>
    %42 = vector.extract_strided_slice %28 {offsets = [0, 128], sizes = [4, 64], strides = [1, 1]} : vector<4x256xf32> to vector<4x64xf32>
    %43 = arith.negf %42 : vector<4x64xf32>
    %44 = math.exp %43 : vector<4x64xf32>
    %cst_25 = arith.constant 1.000000e+00 : f32
    %45 = vector.broadcast %cst_25 : f32 to vector<4x64xf32>
    %46 = arith.addf %45, %44 : vector<4x64xf32>
    %47 = arith.divf %45, %46 : vector<4x64xf32>
    %48 = vector.extract_strided_slice %28 {offsets = [0, 192], sizes = [4, 64], strides = [1, 1]} : vector<4x256xf32> to vector<4x64xf32>
    %49 = math.tanh %48 : vector<4x64xf32>
    %50 = arith.mulf %41, %29 : vector<4x64xf32>
    %51 = arith.mulf %35, %49 : vector<4x64xf32>
    %52 = arith.addf %50, %51 : vector<4x64xf32>
    %53 = math.tanh %52 : vector<4x64xf32>
    %54 = arith.mulf %47, %53 : vector<4x64xf32>
    %c0_26 = arith.constant 0 : index
    %c0_27 = arith.constant 0 : index
    %55 = vector.load %arg21[%c0_26, %c0_27] : memref<4x64xf32, #tpu.memory_space<vmem>>, vector<4x64xf32>
    tpu.vector_store %arg21[%c0_26, %c0_27], %54 {strides = array<i32>} : memref<4x64xf32, #tpu.memory_space<vmem>>, vector<4x64xf32>,
    %c0_28 = arith.constant 0 : index
    %c0_29 = arith.constant 0 : index
    %56 = vector.load %arg22[%c0_28, %c0_29] : memref<4x64xf32, #tpu.memory_space<vmem>>, vector<4x64xf32>
    tpu.vector_store %arg22[%c0_28, %c0_29], %52 {strides = array<i32>} : memref<4x64xf32, #tpu.memory_space<vmem>>, vector<4x64xf32>,
    %57 = arith.truncf %54 : vector<4x64xf32> to vector<4x64xbf16>
    %c0_30 = arith.constant 0 : index
    %c0_31 = arith.constant 0 : index
    %c0_32 = arith.constant 0 : index
    %58 = vector.load %arg8[%c0_30, %c0_31, %c0_32] : memref<2x64x128xbf16, #tpu.memory_space<vmem>>, vector<1x64x128xbf16>
    %59 = vector.shape_cast %58 : vector<1x64x128xbf16> to vector<64x128xbf16>
    %cst_33 = arith.constant dense<0.000000e+00> : vector<4x128xf32>
    %60 = tpu.matmul %57, %59, %cst_33 {dimension_numbers = #tpu.dot_dimension_numbers<[1], [0], [0], [1], [0, 0, 1, 1], [], []>} : vector<4x64xbf16>, vector<64x128xbf16>, vector<4x128xf32> -> vector<4x128xf32>
    %c1_34 = arith.constant 1 : index
    %c0_35 = arith.constant 0 : index
    %c0_36 = arith.constant 0 : index
    %61 = vector.load %arg8[%c1_34, %c0_35, %c0_36] : memref<2x64x128xbf16, #tpu.memory_space<vmem>>, vector<1x64x128xbf16>
    %62 = vector.shape_cast %61 : vector<1x64x128xbf16> to vector<64x128xbf16>
    %cst_37 = arith.constant dense<0.000000e+00> : vector<4x128xf32>
    %63 = tpu.matmul %57, %62, %cst_37 {dimension_numbers = #tpu.dot_dimension_numbers<[1], [0], [0], [1], [0, 0, 1, 1], [], []>} : vector<4x64xbf16>, vector<64x128xbf16>, vector<4x128xf32> -> vector<4x128xf32>
    %c0_38 = arith.constant 0 : index
    %c0_39 = arith.constant 0 : index
    %c0_40 = arith.constant 0 : index
    %64 = vector.load %arg10[%c0_38, %c0_39, %c0_40] : memref<2x8x4xf32, #tpu.memory_space<vmem>>, vector<1x8x4xf32>
    %65 = vector.shape_cast %64 : vector<1x8x4xf32> to vector<8x4xf32>
    %cst_41 = arith.constant dense<0.000000e+00> : vector<8x128xf32>
    %66 = tpu.matmul %65, %60, %cst_41 {dimension_numbers = #tpu.dot_dimension_numbers<[1], [0], [0], [1], [0, 0, 1, 1], [], []>} : vector<8x4xf32>, vector<4x128xf32>, vector<8x128xf32> -> vector<8x128xf32>
    %c1_42 = arith.constant 1 : index
    %c0_43 = arith.constant 0 : index
    %c0_44 = arith.constant 0 : index
    %67 = vector.load %arg10[%c1_42, %c0_43, %c0_44] : memref<2x8x4xf32, #tpu.memory_space<vmem>>, vector<1x8x4xf32>
    %68 = vector.shape_cast %67 : vector<1x8x4xf32> to vector<8x4xf32>
    %cst_45 = arith.constant dense<0.000000e+00> : vector<8x128xf32>
    %69 = tpu.matmul %68, %63, %cst_45 {dimension_numbers = #tpu.dot_dimension_numbers<[1], [0], [0], [1], [0, 0, 1, 1], [], []>} : vector<8x4xf32>, vector<4x128xf32>, vector<8x128xf32> -> vector<8x128xf32>
    %70 = arith.addf %66, %69 : vector<8x128xf32>
    %c0_46 = arith.constant 0 : index
    %c0_47 = arith.constant 0 : index
    %71 = vector.load %arg9[%c0_46, %c0_47] : memref<1x128xf32, #tpu.memory_space<vmem>>, vector<1x128xf32>
    %72 = vector.broadcast %71 : vector<1x128xf32> to vector<8x128xf32>
    %73 = arith.addf %70, %72 : vector<8x128xf32>
    %c0_48 = arith.constant 0 : index
    %c0_49 = arith.constant 0 : index
    %74 = vector.load %arg28[%c0_48, %c0_49] : memref<8x320xf32, #tpu.memory_space<vmem>>, vector<8x128xf32>
    tpu.vector_store %arg28[%c0_48, %c0_49], %73 {strides = array<i32>} : memref<8x320xf32, #tpu.memory_space<vmem>>, vector<8x128xf32>,
    %c0_50 = arith.constant 0 : index
    %c0_51 = arith.constant 0 : index
    %75 = vector.load %arg2[%c0_50, %c0_51] : memref<8x128xf32, #tpu.memory_space<vmem>>, vector<8x128xf32>
    %c0_52 = arith.constant 0 : index
    %c128 = arith.constant 128 : index
    %76 = vector.load %arg28[%c0_52, %c128] : memref<8x320xf32, #tpu.memory_space<vmem>>, vector<8x128xf32>
    tpu.vector_store %arg28[%c0_52, %c128], %75 {strides = array<i32>} : memref<8x320xf32, #tpu.memory_space<vmem>>, vector<8x128xf32>,
    %c0_53 = arith.constant 0 : index
    %c0_54 = arith.constant 0 : index
    %77 = vector.load %arg23[%c0_53, %c0_54] : memref<8x64xf32, #tpu.memory_space<vmem>>, vector<8x64xf32>
    %c0_55 = arith.constant 0 : index
    %c256 = arith.constant 256 : index
    %78 = vector.load %arg28[%c0_55, %c256] : memref<8x320xf32, #tpu.memory_space<vmem>>, vector<8x64xf32>
    tpu.vector_store %arg28[%c0_55, %c256], %77 {strides = array<i32>} : memref<8x320xf32, #tpu.memory_space<vmem>>, vector<8x64xf32>,
    %c0_56 = arith.constant 0 : index
    %c0_57 = arith.constant 0 : index
    %79 = vector.load %arg28[%c0_56, %c0_57] : memref<8x320xf32, #tpu.memory_space<vmem>>, vector<8x320xf32>
    %c1_i32_58 = arith.constant 1 : i32
    %80 = tpu.dynamic_rotate %79 by %c1_i32_58 dim 0 : vector<8x320xf32>, i32 -> vector<8x320xf32>
    %c7_i32_59 = arith.constant 7 : i32
    %81 = tpu.dynamic_rotate %79 by %c7_i32_59 dim 0 : vector<8x320xf32>, i32 -> vector<8x320xf32>
    %c0_60 = arith.constant 0 : index
    %c0_61 = arith.constant 0 : index
    %c0_62 = arith.constant 0 : index
    %82 = vector.load %arg4[%c0_60, %c0_61, %c0_62] : memref<2x8x1xf32, #tpu.memory_space<vmem>>, vector<1x8x1xf32>
    %83 = vector.shape_cast %82 : vector<1x8x1xf32> to vector<8x1xf32>
    %84 = vector.broadcast %83 : vector<8x1xf32> to vector<8x320xf32>
    %85 = arith.mulf %80, %84 : vector<8x320xf32>
    %c1_63 = arith.constant 1 : index
    %c0_64 = arith.constant 0 : index
    %c0_65 = arith.constant 0 : index
    %86 = vector.load %arg4[%c1_63, %c0_64, %c0_65] : memref<2x8x1xf32, #tpu.memory_space<vmem>>, vector<1x8x1xf32>
    %87 = vector.shape_cast %86 : vector<1x8x1xf32> to vector<8x1xf32>
    %88 = vector.broadcast %87 : vector<8x1xf32> to vector<8x320xf32>
    %89 = arith.mulf %81, %88 : vector<8x320xf32>
    %90 = arith.truncf %85 : vector<8x320xf32> to vector<8x320xbf16>
    %c0_66 = arith.constant 0 : index
    %c0_67 = arith.constant 0 : index
    %c0_68 = arith.constant 0 : index
    %91 = vector.load %arg11[%c0_66, %c0_67, %c0_68] : memref<3x320x256xbf16, #tpu.memory_space<vmem>>, vector<1x320x256xbf16>
    %92 = vector.shape_cast %91 : vector<1x320x256xbf16> to vector<320x256xbf16>
    %cst_69 = arith.constant dense<0.000000e+00> : vector<8x256xf32>
    %93 = tpu.matmul %90, %92, %cst_69 {dimension_numbers = #tpu.dot_dimension_numbers<[1], [0], [0], [1], [0, 0, 1, 1], [], []>} : vector<8x320xbf16>, vector<320x256xbf16>, vector<8x256xf32> -> vector<8x256xf32>
    %94 = arith.truncf %79 : vector<8x320xf32> to vector<8x320xbf16>
    %c1_70 = arith.constant 1 : index
    %c0_71 = arith.constant 0 : index
    %c0_72 = arith.constant 0 : index
    %95 = vector.load %arg11[%c1_70, %c0_71, %c0_72] : memref<3x320x256xbf16, #tpu.memory_space<vmem>>, vector<1x320x256xbf16>
    %96 = vector.shape_cast %95 : vector<1x320x256xbf16> to vector<320x256xbf16>
    %cst_73 = arith.constant dense<0.000000e+00> : vector<8x256xf32>
    %97 = tpu.matmul %94, %96, %cst_73 {dimension_numbers = #tpu.dot_dimension_numbers<[1], [0], [0], [1], [0, 0, 1, 1], [], []>} : vector<8x320xbf16>, vector<320x256xbf16>, vector<8x256xf32> -> vector<8x256xf32>
    %98 = arith.addf %93, %97 : vector<8x256xf32>
    %99 = arith.truncf %89 : vector<8x320xf32> to vector<8x320xbf16>
    %c2_74 = arith.constant 2 : index
    %c0_75 = arith.constant 0 : index
    %c0_76 = arith.constant 0 : index
    %100 = vector.load %arg11[%c2_74, %c0_75, %c0_76] : memref<3x320x256xbf16, #tpu.memory_space<vmem>>, vector<1x320x256xbf16>
    %101 = vector.shape_cast %100 : vector<1x320x256xbf16> to vector<320x256xbf16>
    %cst_77 = arith.constant dense<0.000000e+00> : vector<8x256xf32>
    %102 = tpu.matmul %99, %101, %cst_77 {dimension_numbers = #tpu.dot_dimension_numbers<[1], [0], [0], [1], [0, 0, 1, 1], [], []>} : vector<8x320xbf16>, vector<320x256xbf16>, vector<8x256xf32> -> vector<8x256xf32>
    %103 = arith.addf %98, %102 : vector<8x256xf32>
    %c0_78 = arith.constant 0 : index
    %c0_79 = arith.constant 0 : index
    %104 = vector.load %arg12[%c0_78, %c0_79] : memref<1x256xf32, #tpu.memory_space<vmem>>, vector<1x256xf32>
    %105 = vector.broadcast %104 : vector<1x256xf32> to vector<8x256xf32>
    %106 = arith.addf %103, %105 : vector<8x256xf32>
    %c0_80 = arith.constant 0 : index
    %c0_81 = arith.constant 0 : index
    %107 = vector.load %arg24[%c0_80, %c0_81] : memref<8x64xf32, #tpu.memory_space<vmem>>, vector<8x64xf32>
    %108 = vector.extract_strided_slice %106 {offsets = [0, 0], sizes = [8, 64], strides = [1, 1]} : vector<8x256xf32> to vector<8x64xf32>
    %109 = arith.negf %108 : vector<8x64xf32>
    %110 = math.exp %109 : vector<8x64xf32>
    %cst_82 = arith.constant 1.000000e+00 : f32
    %111 = vector.broadcast %cst_82 : f32 to vector<8x64xf32>
    %112 = arith.addf %111, %110 : vector<8x64xf32>
    %113 = arith.divf %111, %112 : vector<8x64xf32>
    %114 = vector.extract_strided_slice %106 {offsets = [0, 64], sizes = [8, 64], strides = [1, 1]} : vector<8x256xf32> to vector<8x64xf32>
    %115 = arith.negf %114 : vector<8x64xf32>
    %116 = math.exp %115 : vector<8x64xf32>
    %cst_83 = arith.constant 1.000000e+00 : f32
    %117 = vector.broadcast %cst_83 : f32 to vector<8x64xf32>
    %118 = arith.addf %117, %116 : vector<8x64xf32>
    %119 = arith.divf %117, %118 : vector<8x64xf32>
    %120 = vector.extract_strided_slice %106 {offsets = [0, 128], sizes = [8, 64], strides = [1, 1]} : vector<8x256xf32> to vector<8x64xf32>
    %121 = arith.negf %120 : vector<8x64xf32>
    %122 = math.exp %121 : vector<8x64xf32>
    %cst_84 = arith.constant 1.000000e+00 : f32
    %123 = vector.broadcast %cst_84 : f32 to vector<8x64xf32>
    %124 = arith.addf %123, %122 : vector<8x64xf32>
    %125 = arith.divf %123, %124 : vector<8x64xf32>
    %126 = vector.extract_strided_slice %106 {offsets = [0, 192], sizes = [8, 64], strides = [1, 1]} : vector<8x256xf32> to vector<8x64xf32>
    %127 = math.tanh %126 : vector<8x64xf32>
    %128 = arith.mulf %119, %107 : vector<8x64xf32>
    %129 = arith.mulf %113, %127 : vector<8x64xf32>
    %130 = arith.addf %128, %129 : vector<8x64xf32>
    %131 = math.tanh %130 : vector<8x64xf32>
    %132 = arith.mulf %125, %131 : vector<8x64xf32>
    %c0_85 = arith.constant 0 : index
    %c0_86 = arith.constant 0 : index
    %133 = vector.load %arg23[%c0_85, %c0_86] : memref<8x64xf32, #tpu.memory_space<vmem>>, vector<8x64xf32>
    tpu.vector_store %arg23[%c0_85, %c0_86], %132 {strides = array<i32>} : memref<8x64xf32, #tpu.memory_space<vmem>>, vector<8x64xf32>,
    %c0_87 = arith.constant 0 : index
    %c0_88 = arith.constant 0 : index
    %134 = vector.load %arg24[%c0_87, %c0_88] : memref<8x64xf32, #tpu.memory_space<vmem>>, vector<8x64xf32>
    tpu.vector_store %arg24[%c0_87, %c0_88], %130 {strides = array<i32>} : memref<8x64xf32, #tpu.memory_space<vmem>>, vector<8x64xf32>,
    %135 = arith.truncf %132 : vector<8x64xf32> to vector<8x64xbf16>
    %c0_89 = arith.constant 0 : index
    %c0_90 = arith.constant 0 : index
    %c0_91 = arith.constant 0 : index
    %136 = vector.load %arg13[%c0_89, %c0_90, %c0_91] : memref<2x64x128xbf16, #tpu.memory_space<vmem>>, vector<1x64x128xbf16>
    %137 = vector.shape_cast %136 : vector<1x64x128xbf16> to vector<64x128xbf16>
    %cst_92 = arith.constant dense<0.000000e+00> : vector<8x128xf32>
    %138 = tpu.matmul %135, %137, %cst_92 {dimension_numbers = #tpu.dot_dimension_numbers<[1], [0], [0], [1], [0, 0, 1, 1], [], []>} : vector<8x64xbf16>, vector<64x128xbf16>, vector<8x128xf32> -> vector<8x128xf32>
    %c1_93 = arith.constant 1 : index
    %c0_94 = arith.constant 0 : index
    %c0_95 = arith.constant 0 : index
    %139 = vector.load %arg13[%c1_93, %c0_94, %c0_95] : memref<2x64x128xbf16, #tpu.memory_space<vmem>>, vector<1x64x128xbf16>
    %140 = vector.shape_cast %139 : vector<1x64x128xbf16> to vector<64x128xbf16>
    %cst_96 = arith.constant dense<0.000000e+00> : vector<8x128xf32>
    %141 = tpu.matmul %135, %140, %cst_96 {dimension_numbers = #tpu.dot_dimension_numbers<[1], [0], [0], [1], [0, 0, 1, 1], [], []>} : vector<8x64xbf16>, vector<64x128xbf16>, vector<8x128xf32> -> vector<8x128xf32>
    %c0_97 = arith.constant 0 : index
    %c0_98 = arith.constant 0 : index
    %c0_99 = arith.constant 0 : index
    %142 = vector.load %arg15[%c0_97, %c0_98, %c0_99] : memref<2x16x8xf32, #tpu.memory_space<vmem>>, vector<1x16x8xf32>
    %143 = vector.shape_cast %142 : vector<1x16x8xf32> to vector<16x8xf32>
    %cst_100 = arith.constant dense<0.000000e+00> : vector<16x128xf32>
    %144 = tpu.matmul %143, %138, %cst_100 {dimension_numbers = #tpu.dot_dimension_numbers<[1], [0], [0], [1], [0, 0, 1, 1], [], []>} : vector<16x8xf32>, vector<8x128xf32>, vector<16x128xf32> -> vector<16x128xf32>
    %c1_101 = arith.constant 1 : index
    %c0_102 = arith.constant 0 : index
    %c0_103 = arith.constant 0 : index
    %145 = vector.load %arg15[%c1_101, %c0_102, %c0_103] : memref<2x16x8xf32, #tpu.memory_space<vmem>>, vector<1x16x8xf32>
    %146 = vector.shape_cast %145 : vector<1x16x8xf32> to vector<16x8xf32>
    %cst_104 = arith.constant dense<0.000000e+00> : vector<16x128xf32>
    %147 = tpu.matmul %146, %141, %cst_104 {dimension_numbers = #tpu.dot_dimension_numbers<[1], [0], [0], [1], [0, 0, 1, 1], [], []>} : vector<16x8xf32>, vector<8x128xf32>, vector<16x128xf32> -> vector<16x128xf32>
    %148 = arith.addf %144, %147 : vector<16x128xf32>
    %c0_105 = arith.constant 0 : index
    %c0_106 = arith.constant 0 : index
    %149 = vector.load %arg14[%c0_105, %c0_106] : memref<1x128xf32, #tpu.memory_space<vmem>>, vector<1x128xf32>
    %150 = vector.broadcast %149 : vector<1x128xf32> to vector<16x128xf32>
    %151 = arith.addf %148, %150 : vector<16x128xf32>
    %c0_107 = arith.constant 0 : index
    %c0_108 = arith.constant 0 : index
    %152 = vector.load %arg29[%c0_107, %c0_108] : memref<16x384xf32, #tpu.memory_space<vmem>>, vector<16x128xf32>
    tpu.vector_store %arg29[%c0_107, %c0_108], %151 {strides = array<i32>} : memref<16x384xf32, #tpu.memory_space<vmem>>, vector<16x128xf32>,
    %c0_109 = arith.constant 0 : index
    %c0_110 = arith.constant 0 : index
    %153 = vector.load %arg3[%c0_109, %c0_110] : memref<16x128xf32, #tpu.memory_space<vmem>>, vector<16x128xf32>
    %c0_111 = arith.constant 0 : index
    %c128_112 = arith.constant 128 : index
    %154 = vector.load %arg29[%c0_111, %c128_112] : memref<16x384xf32, #tpu.memory_space<vmem>>, vector<16x128xf32>
    tpu.vector_store %arg29[%c0_111, %c128_112], %153 {strides = array<i32>} : memref<16x384xf32, #tpu.memory_space<vmem>>, vector<16x128xf32>,
    %c0_113 = arith.constant 0 : index
    %c0_114 = arith.constant 0 : index
    %155 = vector.load %arg25[%c0_113, %c0_114] : memref<16x128xf32, #tpu.memory_space<vmem>>, vector<16x128xf32>
    %c0_115 = arith.constant 0 : index
    %c256_116 = arith.constant 256 : index
    %156 = vector.load %arg29[%c0_115, %c256_116] : memref<16x384xf32, #tpu.memory_space<vmem>>, vector<16x128xf32>
    tpu.vector_store %arg29[%c0_115, %c256_116], %155 {strides = array<i32>} : memref<16x384xf32, #tpu.memory_space<vmem>>, vector<16x128xf32>,
    %c0_117 = arith.constant 0 : index
    %c0_118 = arith.constant 0 : index
    %157 = vector.load %arg29[%c0_117, %c0_118] : memref<16x384xf32, #tpu.memory_space<vmem>>, vector<16x384xf32>
    %c1_i32_119 = arith.constant 1 : i32
    %158 = tpu.dynamic_rotate %157 by %c1_i32_119 dim 0 : vector<16x384xf32>, i32 -> vector<16x384xf32>
    %c15_i32 = arith.constant 15 : i32
    %159 = tpu.dynamic_rotate %157 by %c15_i32 dim 0 : vector<16x384xf32>, i32 -> vector<16x384xf32>
    %c0_120 = arith.constant 0 : index
    %c0_121 = arith.constant 0 : index
    %c0_122 = arith.constant 0 : index
    %160 = vector.load %arg5[%c0_120, %c0_121, %c0_122] : memref<2x16x1xf32, #tpu.memory_space<vmem>>, vector<1x16x1xf32>
    %161 = vector.shape_cast %160 : vector<1x16x1xf32> to vector<16x1xf32>
    %162 = vector.broadcast %161 : vector<16x1xf32> to vector<16x384xf32>
    %163 = arith.mulf %158, %162 : vector<16x384xf32>
    %c1_123 = arith.constant 1 : index
    %c0_124 = arith.constant 0 : index
    %c0_125 = arith.constant 0 : index
    %164 = vector.load %arg5[%c1_123, %c0_124, %c0_125] : memref<2x16x1xf32, #tpu.memory_space<vmem>>, vector<1x16x1xf32>
    %165 = vector.shape_cast %164 : vector<1x16x1xf32> to vector<16x1xf32>
    %166 = vector.broadcast %165 : vector<16x1xf32> to vector<16x384xf32>
    %167 = arith.mulf %159, %166 : vector<16x384xf32>
    %168 = arith.truncf %163 : vector<16x384xf32> to vector<16x384xbf16>
    %c0_126 = arith.constant 0 : index
    %c0_127 = arith.constant 0 : index
    %c0_128 = arith.constant 0 : index
    %169 = vector.load %arg16[%c0_126, %c0_127, %c0_128] : memref<3x384x512xbf16, #tpu.memory_space<vmem>>, vector<1x384x512xbf16>
    %170 = vector.shape_cast %169 : vector<1x384x512xbf16> to vector<384x512xbf16>
    %cst_129 = arith.constant dense<0.000000e+00> : vector<16x512xf32>
    %171 = tpu.matmul %168, %170, %cst_129 {dimension_numbers = #tpu.dot_dimension_numbers<[1], [0], [0], [1], [0, 0, 1, 1], [], []>} : vector<16x384xbf16>, vector<384x512xbf16>, vector<16x512xf32> -> vector<16x512xf32>
    %172 = arith.truncf %157 : vector<16x384xf32> to vector<16x384xbf16>
    %c1_130 = arith.constant 1 : index
    %c0_131 = arith.constant 0 : index
    %c0_132 = arith.constant 0 : index
    %173 = vector.load %arg16[%c1_130, %c0_131, %c0_132] : memref<3x384x512xbf16, #tpu.memory_space<vmem>>, vector<1x384x512xbf16>
    %174 = vector.shape_cast %173 : vector<1x384x512xbf16> to vector<384x512xbf16>
    %cst_133 = arith.constant dense<0.000000e+00> : vector<16x512xf32>
    %175 = tpu.matmul %172, %174, %cst_133 {dimension_numbers = #tpu.dot_dimension_numbers<[1], [0], [0], [1], [0, 0, 1, 1], [], []>} : vector<16x384xbf16>, vector<384x512xbf16>, vector<16x512xf32> -> vector<16x512xf32>
    %176 = arith.addf %171, %175 : vector<16x512xf32>
    %177 = arith.truncf %167 : vector<16x384xf32> to vector<16x384xbf16>
    %c2_134 = arith.constant 2 : index
    %c0_135 = arith.constant 0 : index
    %c0_136 = arith.constant 0 : index
    %178 = vector.load %arg16[%c2_134, %c0_135, %c0_136] : memref<3x384x512xbf16, #tpu.memory_space<vmem>>, vector<1x384x512xbf16>
    %179 = vector.shape_cast %178 : vector<1x384x512xbf16> to vector<384x512xbf16>
    %cst_137 = arith.constant dense<0.000000e+00> : vector<16x512xf32>
    %180 = tpu.matmul %177, %179, %cst_137 {dimension_numbers = #tpu.dot_dimension_numbers<[1], [0], [0], [1], [0, 0, 1, 1], [], []>} : vector<16x384xbf16>, vector<384x512xbf16>, vector<16x512xf32> -> vector<16x512xf32>
    %181 = arith.addf %176, %180 : vector<16x512xf32>
    %c0_138 = arith.constant 0 : index
    %c0_139 = arith.constant 0 : index
    %182 = vector.load %arg17[%c0_138, %c0_139] : memref<1x512xf32, #tpu.memory_space<vmem>>, vector<1x512xf32>
    %183 = vector.broadcast %182 : vector<1x512xf32> to vector<16x512xf32>
    %184 = arith.addf %181, %183 : vector<16x512xf32>
    %c0_140 = arith.constant 0 : index
    %c0_141 = arith.constant 0 : index
    %185 = vector.load %arg26[%c0_140, %c0_141] : memref<16x128xf32, #tpu.memory_space<vmem>>, vector<16x128xf32>
    %186 = vector.extract_strided_slice %184 {offsets = [0, 0], sizes = [16, 128], strides = [1, 1]} : vector<16x512xf32> to vector<16x128xf32>
    %187 = arith.negf %186 : vector<16x128xf32>
    %188 = math.exp %187 : vector<16x128xf32>
    %cst_142 = arith.constant 1.000000e+00 : f32
    %189 = vector.broadcast %cst_142 : f32 to vector<16x128xf32>
    %190 = arith.addf %189, %188 : vector<16x128xf32>
    %191 = arith.divf %189, %190 : vector<16x128xf32>
    %192 = vector.extract_strided_slice %184 {offsets = [0, 128], sizes = [16, 128], strides = [1, 1]} : vector<16x512xf32> to vector<16x128xf32>
    %193 = arith.negf %192 : vector<16x128xf32>
    %194 = math.exp %193 : vector<16x128xf32>
    %cst_143 = arith.constant 1.000000e+00 : f32
    %195 = vector.broadcast %cst_143 : f32 to vector<16x128xf32>
    %196 = arith.addf %195, %194 : vector<16x128xf32>
    %197 = arith.divf %195, %196 : vector<16x128xf32>
    %198 = vector.extract_strided_slice %184 {offsets = [0, 256], sizes = [16, 128], strides = [1, 1]} : vector<16x512xf32> to vector<16x128xf32>
    %199 = arith.negf %198 : vector<16x128xf32>
    %200 = math.exp %199 : vector<16x128xf32>
    %cst_144 = arith.constant 1.000000e+00 : f32
    %201 = vector.broadcast %cst_144 : f32 to vector<16x128xf32>
    %202 = arith.addf %201, %200 : vector<16x128xf32>
    %203 = arith.divf %201, %202 : vector<16x128xf32>
    %204 = vector.extract_strided_slice %184 {offsets = [0, 384], sizes = [16, 128], strides = [1, 1]} : vector<16x512xf32> to vector<16x128xf32>
    %205 = math.tanh %204 : vector<16x128xf32>
    %206 = arith.mulf %197, %185 : vector<16x128xf32>
    %207 = arith.mulf %191, %205 : vector<16x128xf32>
    %208 = arith.addf %206, %207 : vector<16x128xf32>
    %209 = math.tanh %208 : vector<16x128xf32>
    %210 = arith.mulf %203, %209 : vector<16x128xf32>
    %c0_145 = arith.constant 0 : index
    %c0_146 = arith.constant 0 : index
    %211 = vector.load %arg25[%c0_145, %c0_146] : memref<16x128xf32, #tpu.memory_space<vmem>>, vector<16x128xf32>
    tpu.vector_store %arg25[%c0_145, %c0_146], %210 {strides = array<i32>} : memref<16x128xf32, #tpu.memory_space<vmem>>, vector<16x128xf32>,
    %c0_147 = arith.constant 0 : index
    %c0_148 = arith.constant 0 : index
    %212 = vector.load %arg26[%c0_147, %c0_148] : memref<16x128xf32, #tpu.memory_space<vmem>>, vector<16x128xf32>
    tpu.vector_store %arg26[%c0_147, %c0_148], %208 {strides = array<i32>} : memref<16x128xf32, #tpu.memory_space<vmem>>, vector<16x128xf32>,
    %c1_i32_149 = arith.constant 1 : i32
    %213 = tpu.dynamic_rotate %210 by %c1_i32_149 dim 0 : vector<16x128xf32>, i32 -> vector<16x128xf32>
    %c15_i32_150 = arith.constant 15 : i32
    %214 = tpu.dynamic_rotate %210 by %c15_i32_150 dim 0 : vector<16x128xf32>, i32 -> vector<16x128xf32>
    %c0_151 = arith.constant 0 : index
    %c0_152 = arith.constant 0 : index
    %c0_153 = arith.constant 0 : index
    %215 = vector.load %arg5[%c0_151, %c0_152, %c0_153] : memref<2x16x1xf32, #tpu.memory_space<vmem>>, vector<1x16x1xf32>
    %216 = vector.shape_cast %215 : vector<1x16x1xf32> to vector<16x1xf32>
    %217 = vector.broadcast %216 : vector<16x1xf32> to vector<16x128xf32>
    %218 = arith.mulf %213, %217 : vector<16x128xf32>
    %c1_154 = arith.constant 1 : index
    %c0_155 = arith.constant 0 : index
    %c0_156 = arith.constant 0 : index
    %219 = vector.load %arg5[%c1_154, %c0_155, %c0_156] : memref<2x16x1xf32, #tpu.memory_space<vmem>>, vector<1x16x1xf32>
    %220 = vector.shape_cast %219 : vector<1x16x1xf32> to vector<16x1xf32>
    %221 = vector.broadcast %220 : vector<16x1xf32> to vector<16x128xf32>
    %222 = arith.mulf %214, %221 : vector<16x128xf32>
    %223 = arith.truncf %218 : vector<16x128xf32> to vector<16x128xbf16>
    %c0_157 = arith.constant 0 : index
    %c0_158 = arith.constant 0 : index
    %c0_159 = arith.constant 0 : index
    %224 = vector.load %arg18[%c0_157, %c0_158, %c0_159] : memref<3x128x128xbf16, #tpu.memory_space<vmem>>, vector<1x128x128xbf16>
    %225 = vector.shape_cast %224 : vector<1x128x128xbf16> to vector<128x128xbf16>
    %cst_160 = arith.constant dense<0.000000e+00> : vector<16x128xf32>
    %226 = tpu.matmul %223, %225, %cst_160 {dimension_numbers = #tpu.dot_dimension_numbers<[1], [0], [0], [1], [0, 0, 1, 1], [], []>} : vector<16x128xbf16>, vector<128x128xbf16>, vector<16x128xf32> -> vector<16x128xf32>
    %227 = arith.truncf %210 : vector<16x128xf32> to vector<16x128xbf16>
    %c1_161 = arith.constant 1 : index
    %c0_162 = arith.constant 0 : index
    %c0_163 = arith.constant 0 : index
    %228 = vector.load %arg18[%c1_161, %c0_162, %c0_163] : memref<3x128x128xbf16, #tpu.memory_space<vmem>>, vector<1x128x128xbf16>
    %229 = vector.shape_cast %228 : vector<1x128x128xbf16> to vector<128x128xbf16>
    %cst_164 = arith.constant dense<0.000000e+00> : vector<16x128xf32>
    %230 = tpu.matmul %227, %229, %cst_164 {dimension_numbers = #tpu.dot_dimension_numbers<[1], [0], [0], [1], [0, 0, 1, 1], [], []>} : vector<16x128xbf16>, vector<128x128xbf16>, vector<16x128xf32> -> vector<16x128xf32>
    %231 = arith.addf %226, %230 : vector<16x128xf32>
    %232 = arith.truncf %222 : vector<16x128xf32> to vector<16x128xbf16>
    %c2_165 = arith.constant 2 : index
    %c0_166 = arith.constant 0 : index
    %c0_167 = arith.constant 0 : index
    %233 = vector.load %arg18[%c2_165, %c0_166, %c0_167] : memref<3x128x128xbf16, #tpu.memory_space<vmem>>, vector<1x128x128xbf16>
    %234 = vector.shape_cast %233 : vector<1x128x128xbf16> to vector<128x128xbf16>
    %cst_168 = arith.constant dense<0.000000e+00> : vector<16x128xf32>
    %235 = tpu.matmul %232, %234, %cst_168 {dimension_numbers = #tpu.dot_dimension_numbers<[1], [0], [0], [1], [0, 0, 1, 1], [], []>} : vector<16x128xbf16>, vector<128x128xbf16>, vector<16x128xf32> -> vector<16x128xf32>
    %236 = arith.addf %231, %235 : vector<16x128xf32>
    %c0_169 = arith.constant 0 : index
    %c0_170 = arith.constant 0 : index
    %237 = vector.load %arg19[%c0_169, %c0_170] : memref<1x128xf32, #tpu.memory_space<vmem>>, vector<1x128xf32>
    %238 = vector.broadcast %237 : vector<1x128xf32> to vector<16x128xf32>
    %239 = arith.addf %236, %238 : vector<16x128xf32>
    %c0_171 = arith.constant 0 : index
    %c0_172 = arith.constant 0 : index
    %240 = vector.load %arg20[%c0_171, %c0_172] : memref<16x128xf32, #tpu.memory_space<vmem>>, vector<16x128xf32>
    tpu.vector_store %arg20[%c0_171, %c0_172], %239 {strides = array<i32>} : memref<16x128xf32, #tpu.memory_space<vmem>>, vector<16x128xf32>,
    return
  }
  func.func @transform_0(%arg0: i32) -> (i32, i32, i32) {
    %c0_i32 = arith.constant 0 : i32
    %c0_i32_0 = arith.constant 0 : i32
    %c0_i32_1 = arith.constant 0 : i32
    return %arg0, %c0_i32, %c0_i32_0 : i32, i32, i32
  }
  func.func @transform_1(%arg0: i32) -> (i32, i32) {
    %c0_i32 = arith.constant 0 : i32
    %c0_i32_0 = arith.constant 0 : i32
    return %arg0, %c0_i32 : i32, i32
  }
  func.func @transform_2(%arg0: i32) -> (i32, i32) {
    %c0_i32 = arith.constant 0 : i32
    %c0_i32_0 = arith.constant 0 : i32
    return %arg0, %c0_i32 : i32, i32
  }
  func.func @transform_3(%arg0: i32) -> (i32, i32, i32) {
    %c0_i32 = arith.constant 0 : i32
    %c0_i32_0 = arith.constant 0 : i32
    %c0_i32_1 = arith.constant 0 : i32
    %c0_i32_2 = arith.constant 0 : i32
    return %c0_i32, %c0_i32_0, %c0_i32_1 : i32, i32, i32
  }
  func.func @transform_4(%arg0: i32) -> (i32, i32, i32) {
    %c0_i32 = arith.constant 0 : i32
    %c0_i32_0 = arith.constant 0 : i32
    %c0_i32_1 = arith.constant 0 : i32
    %c0_i32_2 = arith.constant 0 : i32
    return %c0_i32, %c0_i32_0, %c0_i32_1 : i32, i32, i32
  }
  func.func @transform_5(%arg0: i32) -> (i32, i32, i32) {
    %c0_i32 = arith.constant 0 : i32
    %c0_i32_0 = arith.constant 0 : i32
    %c0_i32_1 = arith.constant 0 : i32
    %c0_i32_2 = arith.constant 0 : i32
    return %c0_i32, %c0_i32_0, %c0_i32_1 : i32, i32, i32
  }
  func.func @transform_6(%arg0: i32) -> (i32, i32) {
    %c0_i32 = arith.constant 0 : i32
    %c0_i32_0 = arith.constant 0 : i32
    %c0_i32_1 = arith.constant 0 : i32
    return %c0_i32, %c0_i32_0 : i32, i32
  }
  func.func @transform_7(%arg0: i32) -> (i32, i32, i32) {
    %c0_i32 = arith.constant 0 : i32
    %c0_i32_0 = arith.constant 0 : i32
    %c0_i32_1 = arith.constant 0 : i32
    %c0_i32_2 = arith.constant 0 : i32
    return %c0_i32, %c0_i32_0, %c0_i32_1 : i32, i32, i32
  }
  func.func @transform_8(%arg0: i32) -> (i32, i32) {
    %c0_i32 = arith.constant 0 : i32
    %c0_i32_0 = arith.constant 0 : i32
    %c0_i32_1 = arith.constant 0 : i32
    return %c0_i32, %c0_i32_0 : i32, i32
  }
  func.func @transform_9(%arg0: i32) -> (i32, i32, i32) {
    %c0_i32 = arith.constant 0 : i32
    %c0_i32_0 = arith.constant 0 : i32
    %c0_i32_1 = arith.constant 0 : i32
    %c0_i32_2 = arith.constant 0 : i32
    return %c0_i32, %c0_i32_0, %c0_i32_1 : i32, i32, i32
  }
  func.func @transform_10(%arg0: i32) -> (i32, i32, i32) {
    %c0_i32 = arith.constant 0 : i32
    %c0_i32_0 = arith.constant 0 : i32
    %c0_i32_1 = arith.constant 0 : i32
    %c0_i32_2 = arith.constant 0 : i32
    return %c0_i32, %c0_i32_0, %c0_i32_1 : i32, i32, i32
  }
  func.func @transform_11(%arg0: i32) -> (i32, i32) {
    %c0_i32 = arith.constant 0 : i32
    %c0_i32_0 = arith.constant 0 : i32
    %c0_i32_1 = arith.constant 0 : i32
    return %c0_i32, %c0_i32_0 : i32, i32
  }
  func.func @transform_12(%arg0: i32) -> (i32, i32, i32) {
    %c0_i32 = arith.constant 0 : i32
    %c0_i32_0 = arith.constant 0 : i32
    %c0_i32_1 = arith.constant 0 : i32
    %c0_i32_2 = arith.constant 0 : i32
    return %c0_i32, %c0_i32_0, %c0_i32_1 : i32, i32, i32
  }
  func.func @transform_13(%arg0: i32) -> (i32, i32) {
    %c0_i32 = arith.constant 0 : i32
    %c0_i32_0 = arith.constant 0 : i32
    %c0_i32_1 = arith.constant 0 : i32
    return %c0_i32, %c0_i32_0 : i32, i32
  }
  func.func @transform_14(%arg0: i32) -> (i32, i32, i32) {
    %c0_i32 = arith.constant 0 : i32
    %c0_i32_0 = arith.constant 0 : i32
    %c0_i32_1 = arith.constant 0 : i32
    %c0_i32_2 = arith.constant 0 : i32
    return %c0_i32, %c0_i32_0, %c0_i32_1 : i32, i32, i32
  }
  func.func @transform_15(%arg0: i32) -> (i32, i32, i32) {
    %c0_i32 = arith.constant 0 : i32
    %c0_i32_0 = arith.constant 0 : i32
    %c0_i32_1 = arith.constant 0 : i32
    %c0_i32_2 = arith.constant 0 : i32
    return %c0_i32, %c0_i32_0, %c0_i32_1 : i32, i32, i32
  }
  func.func @transform_16(%arg0: i32) -> (i32, i32) {
    %c0_i32 = arith.constant 0 : i32
    %c0_i32_0 = arith.constant 0 : i32
    %c0_i32_1 = arith.constant 0 : i32
    return %c0_i32, %c0_i32_0 : i32, i32
  }
  func.func @transform_17(%arg0: i32) -> (i32, i32, i32) {
    %c0_i32 = arith.constant 0 : i32
    %c0_i32_0 = arith.constant 0 : i32
    %c0_i32_1 = arith.constant 0 : i32
    %c0_i32_2 = arith.constant 0 : i32
    return %c0_i32, %c0_i32_0, %c0_i32_1 : i32, i32, i32
  }
  func.func @transform_18(%arg0: i32) -> (i32, i32) {
    %c0_i32 = arith.constant 0 : i32
    %c0_i32_0 = arith.constant 0 : i32
    %c0_i32_1 = arith.constant 0 : i32
    return %c0_i32, %c0_i32_0 : i32, i32
  }
  func.func @transform_19(%arg0: i32) -> (i32, i32) {
    %c0_i32 = arith.constant 0 : i32
    %c0_i32_0 = arith.constant 0 : i32
    return %arg0, %c0_i32 : i32, i32
  }
}

module attributes {stable_mosaic.version = 11 : i64} {
  func.func @_encoder_kernel(%arg0: i32, %arg1: memref<32x16xf32, #tpu.memory_space<vmem>>, %arg2: memref<2x32x1xf32, #tpu.memory_space<vmem>>, %arg3: memref<2x16x1xf32, #tpu.memory_space<vmem>>, %arg4: memref<2x8x1xf32, #tpu.memory_space<vmem>>, %arg5: memref<2x16x32xf32, #tpu.memory_space<vmem>>, %arg6: memref<2x128x64xf32, #tpu.memory_space<vmem>>, %arg7: memref<2x8x16xf32, #tpu.memory_space<vmem>>, %arg8: memref<2x128x64xf32, #tpu.memory_space<vmem>>, %arg9: memref<128x128xf32, #tpu.memory_space<vmem>>, %arg10: memref<128x128xf32, #tpu.memory_space<vmem>>, %arg11: memref<64x64xf32, #tpu.memory_space<vmem>>, %arg12: memref<3x16x128xbf16, #tpu.memory_space<vmem>>, %arg13: memref<3x128x128xbf16, #tpu.memory_space<vmem>>, %arg14: memref<3x64x128xbf16, #tpu.memory_space<vmem>>, %arg15: memref<3x64x128xbf16, #tpu.memory_space<vmem>>, %arg16: memref<3x128x128xbf16, #tpu.memory_space<vmem>>, %arg17: memref<3x128x128xbf16, #tpu.memory_space<vmem>>, %arg18: memref<3x128x64xbf16, #tpu.memory_space<vmem>>, %arg19: memref<1x128xf32, #tpu.memory_space<vmem>>, %arg20: memref<1x128xf32, #tpu.memory_space<vmem>>, %arg21: memref<1x128xf32, #tpu.memory_space<vmem>>, %arg22: memref<1x128xf32, #tpu.memory_space<vmem>>, %arg23: memref<1x128xf32, #tpu.memory_space<vmem>>, %arg24: memref<1x128xf32, #tpu.memory_space<vmem>>, %arg25: memref<1x64xf32, #tpu.memory_space<vmem>>, %arg26: memref<1x128xf32, #tpu.memory_space<vmem>>, %arg27: memref<1x128xf32, #tpu.memory_space<vmem>>, %arg28: memref<1x128xf32, #tpu.memory_space<vmem>>, %arg29: memref<1x128xf32, #tpu.memory_space<vmem>>, %arg30: memref<1x64xf32, #tpu.memory_space<vmem>>, %arg31: memref<1x64xf32, #tpu.memory_space<vmem>>, %arg32: memref<32x128xf32, #tpu.memory_space<vmem>>, %arg33: memref<16x128xf32, #tpu.memory_space<vmem>>, %arg34: memref<8x64xf32, #tpu.memory_space<vmem>>) attributes {dimension_semantics = [#tpu.dimension_semantics<arbitrary>], iteration_bounds = array<i64: 1>, scalar_prefetch = 0 : i64, scratch_operands = 0 : i64, tpu.core_type = #tpu.core_type<tc>, window_params = [{pipeline_mode = #tpu.pipeline_mode<synchronous>, transform_indices = @transform_0, window_bounds = array<i64: 32, 16>}, {pipeline_mode = #tpu.pipeline_mode<synchronous>, transform_indices = @transform_1, window_bounds = array<i64: 2, 32, 1>}, {pipeline_mode = #tpu.pipeline_mode<synchronous>, transform_indices = @transform_2, window_bounds = array<i64: 2, 16, 1>}, {pipeline_mode = #tpu.pipeline_mode<synchronous>, transform_indices = @transform_3, window_bounds = array<i64: 2, 8, 1>}, {pipeline_mode = #tpu.pipeline_mode<synchronous>, transform_indices = @transform_4, window_bounds = array<i64: 2, 16, 32>}, {pipeline_mode = #tpu.pipeline_mode<synchronous>, transform_indices = @transform_5, window_bounds = array<i64: 2, 128, 64>}, {pipeline_mode = #tpu.pipeline_mode<synchronous>, transform_indices = @transform_6, window_bounds = array<i64: 2, 8, 16>}, {pipeline_mode = #tpu.pipeline_mode<synchronous>, transform_indices = @transform_7, window_bounds = array<i64: 2, 128, 64>}, {pipeline_mode = #tpu.pipeline_mode<synchronous>, transform_indices = @transform_8, window_bounds = array<i64: 128, 128>}, {pipeline_mode = #tpu.pipeline_mode<synchronous>, transform_indices = @transform_9, window_bounds = array<i64: 128, 128>}, {pipeline_mode = #tpu.pipeline_mode<synchronous>, transform_indices = @transform_10, window_bounds = array<i64: 64, 64>}, {pipeline_mode = #tpu.pipeline_mode<synchronous>, transform_indices = @transform_11, window_bounds = array<i64: 3, 16, 128>}, {pipeline_mode = #tpu.pipeline_mode<synchronous>, transform_indices = @transform_12, window_bounds = array<i64: 3, 128, 128>}, {pipeline_mode = #tpu.pipeline_mode<synchronous>, transform_indices = @transform_13, window_bounds = array<i64: 3, 64, 128>}, {pipeline_mode = #tpu.pipeline_mode<synchronous>, transform_indices = @transform_14, window_bounds = array<i64: 3, 64, 128>}, {pipeline_mode = #tpu.pipeline_mode<synchronous>, transform_indices = @transform_15, window_bounds = array<i64: 3, 128, 128>}, {pipeline_mode = #tpu.pipeline_mode<synchronous>, transform_indices = @transform_16, window_bounds = array<i64: 3, 128, 128>}, {pipeline_mode = #tpu.pipeline_mode<synchronous>, transform_indices = @transform_17, window_bounds = array<i64: 3, 128, 64>}, {pipeline_mode = #tpu.pipeline_mode<synchronous>, transform_indices = @transform_18, window_bounds = array<i64: 1, 128>}, {pipeline_mode = #tpu.pipeline_mode<synchronous>, transform_indices = @transform_19, window_bounds = array<i64: 1, 128>}, {pipeline_mode = #tpu.pipeline_mode<synchronous>, transform_indices = @transform_20, window_bounds = array<i64: 1, 128>}, {pipeline_mode = #tpu.pipeline_mode<synchronous>, transform_indices = @transform_21, window_bounds = array<i64: 1, 128>}, {pipeline_mode = #tpu.pipeline_mode<synchronous>, transform_indices = @transform_22, window_bounds = array<i64: 1, 128>}, {pipeline_mode = #tpu.pipeline_mode<synchronous>, transform_indices = @transform_23, window_bounds = array<i64: 1, 128>}, {pipeline_mode = #tpu.pipeline_mode<synchronous>, transform_indices = @transform_24, window_bounds = array<i64: 1, 64>}, {pipeline_mode = #tpu.pipeline_mode<synchronous>, transform_indices = @transform_25, window_bounds = array<i64: 1, 128>}, {pipeline_mode = #tpu.pipeline_mode<synchronous>, transform_indices = @transform_26, window_bounds = array<i64: 1, 128>}, {pipeline_mode = #tpu.pipeline_mode<synchronous>, transform_indices = @transform_27, window_bounds = array<i64: 1, 128>}, {pipeline_mode = #tpu.pipeline_mode<synchronous>, transform_indices = @transform_28, window_bounds = array<i64: 1, 128>}, {pipeline_mode = #tpu.pipeline_mode<synchronous>, transform_indices = @transform_29, window_bounds = array<i64: 1, 64>}, {pipeline_mode = #tpu.pipeline_mode<synchronous>, transform_indices = @transform_30, window_bounds = array<i64: 1, 64>}, {pipeline_mode = #tpu.pipeline_mode<synchronous>, transform_indices = @transform_31, window_bounds = array<i64: 32, 128>}, {pipeline_mode = #tpu.pipeline_mode<synchronous>, transform_indices = @transform_32, window_bounds = array<i64: 16, 128>}, {pipeline_mode = #tpu.pipeline_mode<synchronous>, transform_indices = @transform_33, window_bounds = array<i64: 8, 64>}]} {
    %c0 = arith.constant 0 : index
    %c0_0 = arith.constant 0 : index
    %0 = vector.load %arg1[%c0, %c0_0] : memref<32x16xf32, #tpu.memory_space<vmem>>, vector<32x16xf32>
    %c1_i32 = arith.constant 1 : i32
    %1 = tpu.dynamic_rotate %0 by %c1_i32 dim 0 : vector<32x16xf32>, i32 -> vector<32x16xf32>
    %c0_1 = arith.constant 0 : index
    %c0_2 = arith.constant 0 : index
    %c0_3 = arith.constant 0 : index
    %2 = vector.load %arg2[%c0_1, %c0_2, %c0_3] : memref<2x32x1xf32, #tpu.memory_space<vmem>>, vector<1x32x1xf32>
    %3 = vector.shape_cast %2 : vector<1x32x1xf32> to vector<32x1xf32>
    %4 = vector.broadcast %3 : vector<32x1xf32> to vector<32x16xf32>
    %5 = arith.mulf %1, %4 : vector<32x16xf32>
    %c31_i32 = arith.constant 31 : i32
    %6 = tpu.dynamic_rotate %0 by %c31_i32 dim 0 : vector<32x16xf32>, i32 -> vector<32x16xf32>
    %c1 = arith.constant 1 : index
    %c0_4 = arith.constant 0 : index
    %c0_5 = arith.constant 0 : index
    %7 = vector.load %arg2[%c1, %c0_4, %c0_5] : memref<2x32x1xf32, #tpu.memory_space<vmem>>, vector<1x32x1xf32>
    %8 = vector.shape_cast %7 : vector<1x32x1xf32> to vector<32x1xf32>
    %9 = vector.broadcast %8 : vector<32x1xf32> to vector<32x16xf32>
    %10 = arith.mulf %6, %9 : vector<32x16xf32>
    %11 = arith.truncf %5 : vector<32x16xf32> to vector<32x16xbf16>
    %c0_6 = arith.constant 0 : index
    %c0_7 = arith.constant 0 : index
    %c0_8 = arith.constant 0 : index
    %12 = vector.load %arg12[%c0_6, %c0_7, %c0_8] : memref<3x16x128xbf16, #tpu.memory_space<vmem>>, vector<1x16x128xbf16>
    %13 = vector.shape_cast %12 : vector<1x16x128xbf16> to vector<16x128xbf16>
    %cst = arith.constant dense<0.000000e+00> : vector<32x128xf32>
    %14 = tpu.matmul %11, %13, %cst {dimension_numbers = #tpu.dot_dimension_numbers<[1], [0], [0], [1], [0, 0, 1, 1], [], []>} : vector<32x16xbf16>, vector<16x128xbf16>, vector<32x128xf32> -> vector<32x128xf32>
    %15 = arith.truncf %0 : vector<32x16xf32> to vector<32x16xbf16>
    %c1_9 = arith.constant 1 : index
    %c0_10 = arith.constant 0 : index
    %c0_11 = arith.constant 0 : index
    %16 = vector.load %arg12[%c1_9, %c0_10, %c0_11] : memref<3x16x128xbf16, #tpu.memory_space<vmem>>, vector<1x16x128xbf16>
    %17 = vector.shape_cast %16 : vector<1x16x128xbf16> to vector<16x128xbf16>
    %cst_12 = arith.constant dense<0.000000e+00> : vector<32x128xf32>
    %18 = tpu.matmul %15, %17, %cst_12 {dimension_numbers = #tpu.dot_dimension_numbers<[1], [0], [0], [1], [0, 0, 1, 1], [], []>} : vector<32x16xbf16>, vector<16x128xbf16>, vector<32x128xf32> -> vector<32x128xf32>
    %19 = arith.addf %14, %18 : vector<32x128xf32>
    %20 = arith.truncf %10 : vector<32x16xf32> to vector<32x16xbf16>
    %c2 = arith.constant 2 : index
    %c0_13 = arith.constant 0 : index
    %c0_14 = arith.constant 0 : index
    %21 = vector.load %arg12[%c2, %c0_13, %c0_14] : memref<3x16x128xbf16, #tpu.memory_space<vmem>>, vector<1x16x128xbf16>
    %22 = vector.shape_cast %21 : vector<1x16x128xbf16> to vector<16x128xbf16>
    %cst_15 = arith.constant dense<0.000000e+00> : vector<32x128xf32>
    %23 = tpu.matmul %20, %22, %cst_15 {dimension_numbers = #tpu.dot_dimension_numbers<[1], [0], [0], [1], [0, 0, 1, 1], [], []>} : vector<32x16xbf16>, vector<16x128xbf16>, vector<32x128xf32> -> vector<32x128xf32>
    %24 = arith.addf %19, %23 : vector<32x128xf32>
    %c0_16 = arith.constant 0 : index
    %c0_17 = arith.constant 0 : index
    %25 = vector.load %arg19[%c0_16, %c0_17] : memref<1x128xf32, #tpu.memory_space<vmem>>, vector<1x128xf32>
    %26 = vector.broadcast %25 : vector<1x128xf32> to vector<32x128xf32>
    %27 = arith.addf %24, %26 : vector<32x128xf32>
    %cst_18 = arith.constant 0.000000e+00 : f32
    %28 = vector.broadcast %cst_18 : f32 to vector<32x128xf32>
    %29 = arith.maximumf %27, %28 : vector<32x128xf32>
    %c1_i32_19 = arith.constant 1 : i32
    %30 = tpu.dynamic_rotate %29 by %c1_i32_19 dim 0 : vector<32x128xf32>, i32 -> vector<32x128xf32>
    %c0_20 = arith.constant 0 : index
    %c0_21 = arith.constant 0 : index
    %c0_22 = arith.constant 0 : index
    %31 = vector.load %arg2[%c0_20, %c0_21, %c0_22] : memref<2x32x1xf32, #tpu.memory_space<vmem>>, vector<1x32x1xf32>
    %32 = vector.shape_cast %31 : vector<1x32x1xf32> to vector<32x1xf32>
    %33 = vector.broadcast %32 : vector<32x1xf32> to vector<32x128xf32>
    %34 = arith.mulf %30, %33 : vector<32x128xf32>
    %c31_i32_23 = arith.constant 31 : i32
    %35 = tpu.dynamic_rotate %29 by %c31_i32_23 dim 0 : vector<32x128xf32>, i32 -> vector<32x128xf32>
    %c1_24 = arith.constant 1 : index
    %c0_25 = arith.constant 0 : index
    %c0_26 = arith.constant 0 : index
    %36 = vector.load %arg2[%c1_24, %c0_25, %c0_26] : memref<2x32x1xf32, #tpu.memory_space<vmem>>, vector<1x32x1xf32>
    %37 = vector.shape_cast %36 : vector<1x32x1xf32> to vector<32x1xf32>
    %38 = vector.broadcast %37 : vector<32x1xf32> to vector<32x128xf32>
    %39 = arith.mulf %35, %38 : vector<32x128xf32>
    %40 = arith.truncf %34 : vector<32x128xf32> to vector<32x128xbf16>
    %c0_27 = arith.constant 0 : index
    %c0_28 = arith.constant 0 : index
    %c0_29 = arith.constant 0 : index
    %41 = vector.load %arg13[%c0_27, %c0_28, %c0_29] : memref<3x128x128xbf16, #tpu.memory_space<vmem>>, vector<1x128x128xbf16>
    %42 = vector.shape_cast %41 : vector<1x128x128xbf16> to vector<128x128xbf16>
    %cst_30 = arith.constant dense<0.000000e+00> : vector<32x128xf32>
    %43 = tpu.matmul %40, %42, %cst_30 {dimension_numbers = #tpu.dot_dimension_numbers<[1], [0], [0], [1], [0, 0, 1, 1], [], []>} : vector<32x128xbf16>, vector<128x128xbf16>, vector<32x128xf32> -> vector<32x128xf32>
    %44 = arith.truncf %29 : vector<32x128xf32> to vector<32x128xbf16>
    %c1_31 = arith.constant 1 : index
    %c0_32 = arith.constant 0 : index
    %c0_33 = arith.constant 0 : index
    %45 = vector.load %arg13[%c1_31, %c0_32, %c0_33] : memref<3x128x128xbf16, #tpu.memory_space<vmem>>, vector<1x128x128xbf16>
    %46 = vector.shape_cast %45 : vector<1x128x128xbf16> to vector<128x128xbf16>
    %cst_34 = arith.constant dense<0.000000e+00> : vector<32x128xf32>
    %47 = tpu.matmul %44, %46, %cst_34 {dimension_numbers = #tpu.dot_dimension_numbers<[1], [0], [0], [1], [0, 0, 1, 1], [], []>} : vector<32x128xbf16>, vector<128x128xbf16>, vector<32x128xf32> -> vector<32x128xf32>
    %48 = arith.addf %43, %47 : vector<32x128xf32>
    %49 = arith.truncf %39 : vector<32x128xf32> to vector<32x128xbf16>
    %c2_35 = arith.constant 2 : index
    %c0_36 = arith.constant 0 : index
    %c0_37 = arith.constant 0 : index
    %50 = vector.load %arg13[%c2_35, %c0_36, %c0_37] : memref<3x128x128xbf16, #tpu.memory_space<vmem>>, vector<1x128x128xbf16>
    %51 = vector.shape_cast %50 : vector<1x128x128xbf16> to vector<128x128xbf16>
    %cst_38 = arith.constant dense<0.000000e+00> : vector<32x128xf32>
    %52 = tpu.matmul %49, %51, %cst_38 {dimension_numbers = #tpu.dot_dimension_numbers<[1], [0], [0], [1], [0, 0, 1, 1], [], []>} : vector<32x128xbf16>, vector<128x128xbf16>, vector<32x128xf32> -> vector<32x128xf32>
    %53 = arith.addf %48, %52 : vector<32x128xf32>
    %c0_39 = arith.constant 0 : index
    %c0_40 = arith.constant 0 : index
    %54 = vector.load %arg20[%c0_39, %c0_40] : memref<1x128xf32, #tpu.memory_space<vmem>>, vector<1x128xf32>
    %55 = vector.broadcast %54 : vector<1x128xf32> to vector<32x128xf32>
    %56 = arith.addf %53, %55 : vector<32x128xf32>
    %57 = arith.addf %29, %56 : vector<32x128xf32>
    %cst_41 = arith.constant 0.000000e+00 : f32
    %58 = vector.broadcast %cst_41 : f32 to vector<32x128xf32>
    %59 = arith.maximumf %57, %58 : vector<32x128xf32>
    %c1_i32_42 = arith.constant 1 : i32
    %60 = tpu.dynamic_rotate %59 by %c1_i32_42 dim 0 : vector<32x128xf32>, i32 -> vector<32x128xf32>
    %c0_43 = arith.constant 0 : index
    %c0_44 = arith.constant 0 : index
    %c0_45 = arith.constant 0 : index
    %61 = vector.load %arg2[%c0_43, %c0_44, %c0_45] : memref<2x32x1xf32, #tpu.memory_space<vmem>>, vector<1x32x1xf32>
    %62 = vector.shape_cast %61 : vector<1x32x1xf32> to vector<32x1xf32>
    %63 = vector.broadcast %62 : vector<32x1xf32> to vector<32x128xf32>
    %64 = arith.mulf %60, %63 : vector<32x128xf32>
    %c31_i32_46 = arith.constant 31 : i32
    %65 = tpu.dynamic_rotate %59 by %c31_i32_46 dim 0 : vector<32x128xf32>, i32 -> vector<32x128xf32>
    %c1_47 = arith.constant 1 : index
    %c0_48 = arith.constant 0 : index
    %c0_49 = arith.constant 0 : index
    %66 = vector.load %arg2[%c1_47, %c0_48, %c0_49] : memref<2x32x1xf32, #tpu.memory_space<vmem>>, vector<1x32x1xf32>
    %67 = vector.shape_cast %66 : vector<1x32x1xf32> to vector<32x1xf32>
    %68 = vector.broadcast %67 : vector<32x1xf32> to vector<32x128xf32>
    %69 = arith.mulf %65, %68 : vector<32x128xf32>
    %70 = arith.truncf %64 : vector<32x128xf32> to vector<32x128xbf16>
    %c0_50 = arith.constant 0 : index
    %c0_51 = arith.constant 0 : index
    %c0_52 = arith.constant 0 : index
    %71 = vector.load %arg16[%c0_50, %c0_51, %c0_52] : memref<3x128x128xbf16, #tpu.memory_space<vmem>>, vector<1x128x128xbf16>
    %72 = vector.shape_cast %71 : vector<1x128x128xbf16> to vector<128x128xbf16>
    %cst_53 = arith.constant dense<0.000000e+00> : vector<32x128xf32>
    %73 = tpu.matmul %70, %72, %cst_53 {dimension_numbers = #tpu.dot_dimension_numbers<[1], [0], [0], [1], [0, 0, 1, 1], [], []>} : vector<32x128xbf16>, vector<128x128xbf16>, vector<32x128xf32> -> vector<32x128xf32>
    %74 = arith.truncf %59 : vector<32x128xf32> to vector<32x128xbf16>
    %c1_54 = arith.constant 1 : index
    %c0_55 = arith.constant 0 : index
    %c0_56 = arith.constant 0 : index
    %75 = vector.load %arg16[%c1_54, %c0_55, %c0_56] : memref<3x128x128xbf16, #tpu.memory_space<vmem>>, vector<1x128x128xbf16>
    %76 = vector.shape_cast %75 : vector<1x128x128xbf16> to vector<128x128xbf16>
    %cst_57 = arith.constant dense<0.000000e+00> : vector<32x128xf32>
    %77 = tpu.matmul %74, %76, %cst_57 {dimension_numbers = #tpu.dot_dimension_numbers<[1], [0], [0], [1], [0, 0, 1, 1], [], []>} : vector<32x128xbf16>, vector<128x128xbf16>, vector<32x128xf32> -> vector<32x128xf32>
    %78 = arith.addf %73, %77 : vector<32x128xf32>
    %79 = arith.truncf %69 : vector<32x128xf32> to vector<32x128xbf16>
    %c2_58 = arith.constant 2 : index
    %c0_59 = arith.constant 0 : index
    %c0_60 = arith.constant 0 : index
    %80 = vector.load %arg16[%c2_58, %c0_59, %c0_60] : memref<3x128x128xbf16, #tpu.memory_space<vmem>>, vector<1x128x128xbf16>
    %81 = vector.shape_cast %80 : vector<1x128x128xbf16> to vector<128x128xbf16>
    %cst_61 = arith.constant dense<0.000000e+00> : vector<32x128xf32>
    %82 = tpu.matmul %79, %81, %cst_61 {dimension_numbers = #tpu.dot_dimension_numbers<[1], [0], [0], [1], [0, 0, 1, 1], [], []>} : vector<32x128xbf16>, vector<128x128xbf16>, vector<32x128xf32> -> vector<32x128xf32>
    %83 = arith.addf %78, %82 : vector<32x128xf32>
    %c0_62 = arith.constant 0 : index
    %c0_63 = arith.constant 0 : index
    %84 = vector.load %arg23[%c0_62, %c0_63] : memref<1x128xf32, #tpu.memory_space<vmem>>, vector<1x128xf32>
    %85 = vector.broadcast %84 : vector<1x128xf32> to vector<32x128xf32>
    %86 = arith.addf %83, %85 : vector<32x128xf32>
    %cst_64 = arith.constant dense<0.000000e+00> : vector<128xf32>
    %87 = vector.multi_reduction <add>, %86, %cst_64 [0] : vector<32x128xf32> to vector<128xf32>
    %88 = vector.shape_cast %87 : vector<128xf32> to vector<1x128xf32>
    %89 = arith.mulf %86, %86 : vector<32x128xf32>
    %cst_65 = arith.constant dense<0.000000e+00> : vector<128xf32>
    %90 = vector.multi_reduction <add>, %89, %cst_65 [0] : vector<32x128xf32> to vector<128xf32>
    %91 = vector.shape_cast %90 : vector<128xf32> to vector<1x128xf32>
    %c0_66 = arith.constant 0 : index
    %c0_67 = arith.constant 0 : index
    %92 = vector.load %arg9[%c0_66, %c0_67] : memref<128x128xf32, #tpu.memory_space<vmem>>, vector<128x128xf32>
    %cst_68 = arith.constant dense<0.000000e+00> : vector<1x128xf32>
    %93 = tpu.matmul %88, %92, %cst_68 {dimension_numbers = #tpu.dot_dimension_numbers<[1], [0], [0], [1], [0, 0, 1, 1], [], []>} : vector<1x128xf32>, vector<128x128xf32>, vector<1x128xf32> -> vector<1x128xf32>
    %cst_69 = arith.constant 5.120000e+02 : f32
    %94 = vector.broadcast %cst_69 : f32 to vector<1x128xf32>
    %95 = arith.divf %93, %94 : vector<1x128xf32>
    %c0_70 = arith.constant 0 : index
    %c0_71 = arith.constant 0 : index
    %96 = vector.load %arg9[%c0_70, %c0_71] : memref<128x128xf32, #tpu.memory_space<vmem>>, vector<128x128xf32>
    %cst_72 = arith.constant dense<0.000000e+00> : vector<1x128xf32>
    %97 = tpu.matmul %91, %96, %cst_72 {dimension_numbers = #tpu.dot_dimension_numbers<[1], [0], [0], [1], [0, 0, 1, 1], [], []>} : vector<1x128xf32>, vector<128x128xf32>, vector<1x128xf32> -> vector<1x128xf32>
    %cst_73 = arith.constant 5.120000e+02 : f32
    %98 = vector.broadcast %cst_73 : f32 to vector<1x128xf32>
    %99 = arith.divf %97, %98 : vector<1x128xf32>
    %100 = arith.mulf %95, %95 : vector<1x128xf32>
    %101 = arith.subf %99, %100 : vector<1x128xf32>
    %cst_74 = arith.constant 0.000000e+00 : f32
    %102 = vector.broadcast %cst_74 : f32 to vector<1x128xf32>
    %103 = arith.maximumf %101, %102 : vector<1x128xf32>
    %104 = vector.broadcast %95 : vector<1x128xf32> to vector<32x128xf32>
    %105 = arith.subf %86, %104 : vector<32x128xf32>
    %cst_75 = arith.constant 9.99999974E-6 : f32
    %106 = vector.broadcast %cst_75 : f32 to vector<1x128xf32>
    %107 = arith.addf %103, %106 : vector<1x128xf32>
    %108 = math.rsqrt %107 : vector<1x128xf32>
    %109 = vector.broadcast %108 : vector<1x128xf32> to vector<32x128xf32>
    %110 = arith.mulf %105, %109 : vector<32x128xf32>
    %c0_76 = arith.constant 0 : index
    %c0_77 = arith.constant 0 : index
    %111 = vector.load %arg26[%c0_76, %c0_77] : memref<1x128xf32, #tpu.memory_space<vmem>>, vector<1x128xf32>
    %112 = vector.broadcast %111 : vector<1x128xf32> to vector<32x128xf32>
    %113 = arith.mulf %110, %112 : vector<32x128xf32>
    %c0_78 = arith.constant 0 : index
    %c0_79 = arith.constant 0 : index
    %114 = vector.load %arg27[%c0_78, %c0_79] : memref<1x128xf32, #tpu.memory_space<vmem>>, vector<1x128xf32>
    %115 = vector.broadcast %114 : vector<1x128xf32> to vector<32x128xf32>
    %116 = arith.addf %113, %115 : vector<32x128xf32>
    %c0_80 = arith.constant 0 : index
    %c0_81 = arith.constant 0 : index
    %117 = vector.load %arg32[%c0_80, %c0_81] : memref<32x128xf32, #tpu.memory_space<vmem>>, vector<32x128xf32>
    tpu.vector_store %arg32[%c0_80, %c0_81], %116 {strides = array<i32>} : memref<32x128xf32, #tpu.memory_space<vmem>>, vector<32x128xf32>,
    %c0_82 = arith.constant 0 : index
    %c0_83 = arith.constant 0 : index
    %c0_84 = arith.constant 0 : index
    %118 = vector.load %arg5[%c0_82, %c0_83, %c0_84] : memref<2x16x32xf32, #tpu.memory_space<vmem>>, vector<1x16x32xf32>
    %119 = vector.shape_cast %118 : vector<1x16x32xf32> to vector<16x32xf32>
    %cst_85 = arith.constant dense<0.000000e+00> : vector<16x128xf32>
    %120 = tpu.matmul %119, %59, %cst_85 {dimension_numbers = #tpu.dot_dimension_numbers<[1], [0], [0], [1], [0, 0, 1, 1], [], []>} : vector<16x32xf32>, vector<32x128xf32>, vector<16x128xf32> -> vector<16x128xf32>
    %c1_86 = arith.constant 1 : index
    %c0_87 = arith.constant 0 : index
    %c0_88 = arith.constant 0 : index
    %121 = vector.load %arg5[%c1_86, %c0_87, %c0_88] : memref<2x16x32xf32, #tpu.memory_space<vmem>>, vector<1x16x32xf32>
    %122 = vector.shape_cast %121 : vector<1x16x32xf32> to vector<16x32xf32>
    %cst_89 = arith.constant dense<0.000000e+00> : vector<16x128xf32>
    %123 = tpu.matmul %122, %59, %cst_89 {dimension_numbers = #tpu.dot_dimension_numbers<[1], [0], [0], [1], [0, 0, 1, 1], [], []>} : vector<16x32xf32>, vector<32x128xf32>, vector<16x128xf32> -> vector<16x128xf32>
    %124 = arith.maximumf %120, %123 : vector<16x128xf32>
    %c0_90 = arith.constant 0 : index
    %c0_91 = arith.constant 0 : index
    %c0_92 = arith.constant 0 : index
    %125 = vector.load %arg6[%c0_90, %c0_91, %c0_92] : memref<2x128x64xf32, #tpu.memory_space<vmem>>, vector<1x128x64xf32>
    %126 = vector.shape_cast %125 : vector<1x128x64xf32> to vector<128x64xf32>
    %cst_93 = arith.constant dense<0.000000e+00> : vector<16x64xf32>
    %127 = tpu.matmul %124, %126, %cst_93 {dimension_numbers = #tpu.dot_dimension_numbers<[1], [0], [0], [1], [0, 0, 1, 1], [], []>} : vector<16x128xf32>, vector<128x64xf32>, vector<16x64xf32> -> vector<16x64xf32>
    %c1_94 = arith.constant 1 : index
    %c0_95 = arith.constant 0 : index
    %c0_96 = arith.constant 0 : index
    %128 = vector.load %arg6[%c1_94, %c0_95, %c0_96] : memref<2x128x64xf32, #tpu.memory_space<vmem>>, vector<1x128x64xf32>
    %129 = vector.shape_cast %128 : vector<1x128x64xf32> to vector<128x64xf32>
    %cst_97 = arith.constant dense<0.000000e+00> : vector<16x64xf32>
    %130 = tpu.matmul %124, %129, %cst_97 {dimension_numbers = #tpu.dot_dimension_numbers<[1], [0], [0], [1], [0, 0, 1, 1], [], []>} : vector<16x128xf32>, vector<128x64xf32>, vector<16x64xf32> -> vector<16x64xf32>
    %131 = arith.maximumf %127, %130 : vector<16x64xf32>
    %c1_i32_98 = arith.constant 1 : i32
    %132 = tpu.dynamic_rotate %131 by %c1_i32_98 dim 0 : vector<16x64xf32>, i32 -> vector<16x64xf32>
    %c0_99 = arith.constant 0 : index
    %c0_100 = arith.constant 0 : index
    %c0_101 = arith.constant 0 : index
    %133 = vector.load %arg3[%c0_99, %c0_100, %c0_101] : memref<2x16x1xf32, #tpu.memory_space<vmem>>, vector<1x16x1xf32>
    %134 = vector.shape_cast %133 : vector<1x16x1xf32> to vector<16x1xf32>
    %135 = vector.broadcast %134 : vector<16x1xf32> to vector<16x64xf32>
    %136 = arith.mulf %132, %135 : vector<16x64xf32>
    %c15_i32 = arith.constant 15 : i32
    %137 = tpu.dynamic_rotate %131 by %c15_i32 dim 0 : vector<16x64xf32>, i32 -> vector<16x64xf32>
    %c1_102 = arith.constant 1 : index
    %c0_103 = arith.constant 0 : index
    %c0_104 = arith.constant 0 : index
    %138 = vector.load %arg3[%c1_102, %c0_103, %c0_104] : memref<2x16x1xf32, #tpu.memory_space<vmem>>, vector<1x16x1xf32>
    %139 = vector.shape_cast %138 : vector<1x16x1xf32> to vector<16x1xf32>
    %140 = vector.broadcast %139 : vector<16x1xf32> to vector<16x64xf32>
    %141 = arith.mulf %137, %140 : vector<16x64xf32>
    %142 = arith.truncf %136 : vector<16x64xf32> to vector<16x64xbf16>
    %c0_105 = arith.constant 0 : index
    %c0_106 = arith.constant 0 : index
    %c0_107 = arith.constant 0 : index
    %143 = vector.load %arg14[%c0_105, %c0_106, %c0_107] : memref<3x64x128xbf16, #tpu.memory_space<vmem>>, vector<1x64x128xbf16>
    %144 = vector.shape_cast %143 : vector<1x64x128xbf16> to vector<64x128xbf16>
    %cst_108 = arith.constant dense<0.000000e+00> : vector<16x128xf32>
    %145 = tpu.matmul %142, %144, %cst_108 {dimension_numbers = #tpu.dot_dimension_numbers<[1], [0], [0], [1], [0, 0, 1, 1], [], []>} : vector<16x64xbf16>, vector<64x128xbf16>, vector<16x128xf32> -> vector<16x128xf32>
    %146 = arith.truncf %131 : vector<16x64xf32> to vector<16x64xbf16>
    %c1_109 = arith.constant 1 : index
    %c0_110 = arith.constant 0 : index
    %c0_111 = arith.constant 0 : index
    %147 = vector.load %arg14[%c1_109, %c0_110, %c0_111] : memref<3x64x128xbf16, #tpu.memory_space<vmem>>, vector<1x64x128xbf16>
    %148 = vector.shape_cast %147 : vector<1x64x128xbf16> to vector<64x128xbf16>
    %cst_112 = arith.constant dense<0.000000e+00> : vector<16x128xf32>
    %149 = tpu.matmul %146, %148, %cst_112 {dimension_numbers = #tpu.dot_dimension_numbers<[1], [0], [0], [1], [0, 0, 1, 1], [], []>} : vector<16x64xbf16>, vector<64x128xbf16>, vector<16x128xf32> -> vector<16x128xf32>
    %150 = arith.addf %145, %149 : vector<16x128xf32>
    %151 = arith.truncf %141 : vector<16x64xf32> to vector<16x64xbf16>
    %c2_113 = arith.constant 2 : index
    %c0_114 = arith.constant 0 : index
    %c0_115 = arith.constant 0 : index
    %152 = vector.load %arg14[%c2_113, %c0_114, %c0_115] : memref<3x64x128xbf16, #tpu.memory_space<vmem>>, vector<1x64x128xbf16>
    %153 = vector.shape_cast %152 : vector<1x64x128xbf16> to vector<64x128xbf16>
    %cst_116 = arith.constant dense<0.000000e+00> : vector<16x128xf32>
    %154 = tpu.matmul %151, %153, %cst_116 {dimension_numbers = #tpu.dot_dimension_numbers<[1], [0], [0], [1], [0, 0, 1, 1], [], []>} : vector<16x64xbf16>, vector<64x128xbf16>, vector<16x128xf32> -> vector<16x128xf32>
    %155 = arith.addf %150, %154 : vector<16x128xf32>
    %c0_117 = arith.constant 0 : index
    %c0_118 = arith.constant 0 : index
    %156 = vector.load %arg21[%c0_117, %c0_118] : memref<1x128xf32, #tpu.memory_space<vmem>>, vector<1x128xf32>
    %157 = vector.broadcast %156 : vector<1x128xf32> to vector<16x128xf32>
    %158 = arith.addf %155, %157 : vector<16x128xf32>
    %cst_119 = arith.constant 0.000000e+00 : f32
    %159 = vector.broadcast %cst_119 : f32 to vector<16x128xf32>
    %160 = arith.maximumf %158, %159 : vector<16x128xf32>
    %c1_i32_120 = arith.constant 1 : i32
    %161 = tpu.dynamic_rotate %160 by %c1_i32_120 dim 0 : vector<16x128xf32>, i32 -> vector<16x128xf32>
    %c0_121 = arith.constant 0 : index
    %c0_122 = arith.constant 0 : index
    %c0_123 = arith.constant 0 : index
    %162 = vector.load %arg3[%c0_121, %c0_122, %c0_123] : memref<2x16x1xf32, #tpu.memory_space<vmem>>, vector<1x16x1xf32>
    %163 = vector.shape_cast %162 : vector<1x16x1xf32> to vector<16x1xf32>
    %164 = vector.broadcast %163 : vector<16x1xf32> to vector<16x128xf32>
    %165 = arith.mulf %161, %164 : vector<16x128xf32>
    %c15_i32_124 = arith.constant 15 : i32
    %166 = tpu.dynamic_rotate %160 by %c15_i32_124 dim 0 : vector<16x128xf32>, i32 -> vector<16x128xf32>
    %c1_125 = arith.constant 1 : index
    %c0_126 = arith.constant 0 : index
    %c0_127 = arith.constant 0 : index
    %167 = vector.load %arg3[%c1_125, %c0_126, %c0_127] : memref<2x16x1xf32, #tpu.memory_space<vmem>>, vector<1x16x1xf32>
    %168 = vector.shape_cast %167 : vector<1x16x1xf32> to vector<16x1xf32>
    %169 = vector.broadcast %168 : vector<16x1xf32> to vector<16x128xf32>
    %170 = arith.mulf %166, %169 : vector<16x128xf32>
    %171 = arith.truncf %165 : vector<16x128xf32> to vector<16x128xbf16>
    %c0_128 = arith.constant 0 : index
    %c0_129 = arith.constant 0 : index
    %c0_130 = arith.constant 0 : index
    %172 = vector.load %arg17[%c0_128, %c0_129, %c0_130] : memref<3x128x128xbf16, #tpu.memory_space<vmem>>, vector<1x128x128xbf16>
    %173 = vector.shape_cast %172 : vector<1x128x128xbf16> to vector<128x128xbf16>
    %cst_131 = arith.constant dense<0.000000e+00> : vector<16x128xf32>
    %174 = tpu.matmul %171, %173, %cst_131 {dimension_numbers = #tpu.dot_dimension_numbers<[1], [0], [0], [1], [0, 0, 1, 1], [], []>} : vector<16x128xbf16>, vector<128x128xbf16>, vector<16x128xf32> -> vector<16x128xf32>
    %175 = arith.truncf %160 : vector<16x128xf32> to vector<16x128xbf16>
    %c1_132 = arith.constant 1 : index
    %c0_133 = arith.constant 0 : index
    %c0_134 = arith.constant 0 : index
    %176 = vector.load %arg17[%c1_132, %c0_133, %c0_134] : memref<3x128x128xbf16, #tpu.memory_space<vmem>>, vector<1x128x128xbf16>
    %177 = vector.shape_cast %176 : vector<1x128x128xbf16> to vector<128x128xbf16>
    %cst_135 = arith.constant dense<0.000000e+00> : vector<16x128xf32>
    %178 = tpu.matmul %175, %177, %cst_135 {dimension_numbers = #tpu.dot_dimension_numbers<[1], [0], [0], [1], [0, 0, 1, 1], [], []>} : vector<16x128xbf16>, vector<128x128xbf16>, vector<16x128xf32> -> vector<16x128xf32>
    %179 = arith.addf %174, %178 : vector<16x128xf32>
    %180 = arith.truncf %170 : vector<16x128xf32> to vector<16x128xbf16>
    %c2_136 = arith.constant 2 : index
    %c0_137 = arith.constant 0 : index
    %c0_138 = arith.constant 0 : index
    %181 = vector.load %arg17[%c2_136, %c0_137, %c0_138] : memref<3x128x128xbf16, #tpu.memory_space<vmem>>, vector<1x128x128xbf16>
    %182 = vector.shape_cast %181 : vector<1x128x128xbf16> to vector<128x128xbf16>
    %cst_139 = arith.constant dense<0.000000e+00> : vector<16x128xf32>
    %183 = tpu.matmul %180, %182, %cst_139 {dimension_numbers = #tpu.dot_dimension_numbers<[1], [0], [0], [1], [0, 0, 1, 1], [], []>} : vector<16x128xbf16>, vector<128x128xbf16>, vector<16x128xf32> -> vector<16x128xf32>
    %184 = arith.addf %179, %183 : vector<16x128xf32>
    %c0_140 = arith.constant 0 : index
    %c0_141 = arith.constant 0 : index
    %185 = vector.load %arg24[%c0_140, %c0_141] : memref<1x128xf32, #tpu.memory_space<vmem>>, vector<1x128xf32>
    %186 = vector.broadcast %185 : vector<1x128xf32> to vector<16x128xf32>
    %187 = arith.addf %184, %186 : vector<16x128xf32>
    %cst_142 = arith.constant dense<0.000000e+00> : vector<128xf32>
    %188 = vector.multi_reduction <add>, %187, %cst_142 [0] : vector<16x128xf32> to vector<128xf32>
    %189 = vector.shape_cast %188 : vector<128xf32> to vector<1x128xf32>
    %190 = arith.mulf %187, %187 : vector<16x128xf32>
    %cst_143 = arith.constant dense<0.000000e+00> : vector<128xf32>
    %191 = vector.multi_reduction <add>, %190, %cst_143 [0] : vector<16x128xf32> to vector<128xf32>
    %192 = vector.shape_cast %191 : vector<128xf32> to vector<1x128xf32>
    %c0_144 = arith.constant 0 : index
    %c0_145 = arith.constant 0 : index
    %193 = vector.load %arg10[%c0_144, %c0_145] : memref<128x128xf32, #tpu.memory_space<vmem>>, vector<128x128xf32>
    %cst_146 = arith.constant dense<0.000000e+00> : vector<1x128xf32>
    %194 = tpu.matmul %189, %193, %cst_146 {dimension_numbers = #tpu.dot_dimension_numbers<[1], [0], [0], [1], [0, 0, 1, 1], [], []>} : vector<1x128xf32>, vector<128x128xf32>, vector<1x128xf32> -> vector<1x128xf32>
    %cst_147 = arith.constant 1.280000e+02 : f32
    %195 = vector.broadcast %cst_147 : f32 to vector<1x128xf32>
    %196 = arith.divf %194, %195 : vector<1x128xf32>
    %c0_148 = arith.constant 0 : index
    %c0_149 = arith.constant 0 : index
    %197 = vector.load %arg10[%c0_148, %c0_149] : memref<128x128xf32, #tpu.memory_space<vmem>>, vector<128x128xf32>
    %cst_150 = arith.constant dense<0.000000e+00> : vector<1x128xf32>
    %198 = tpu.matmul %192, %197, %cst_150 {dimension_numbers = #tpu.dot_dimension_numbers<[1], [0], [0], [1], [0, 0, 1, 1], [], []>} : vector<1x128xf32>, vector<128x128xf32>, vector<1x128xf32> -> vector<1x128xf32>
    %cst_151 = arith.constant 1.280000e+02 : f32
    %199 = vector.broadcast %cst_151 : f32 to vector<1x128xf32>
    %200 = arith.divf %198, %199 : vector<1x128xf32>
    %201 = arith.mulf %196, %196 : vector<1x128xf32>
    %202 = arith.subf %200, %201 : vector<1x128xf32>
    %cst_152 = arith.constant 0.000000e+00 : f32
    %203 = vector.broadcast %cst_152 : f32 to vector<1x128xf32>
    %204 = arith.maximumf %202, %203 : vector<1x128xf32>
    %205 = vector.broadcast %196 : vector<1x128xf32> to vector<16x128xf32>
    %206 = arith.subf %187, %205 : vector<16x128xf32>
    %cst_153 = arith.constant 9.99999974E-6 : f32
    %207 = vector.broadcast %cst_153 : f32 to vector<1x128xf32>
    %208 = arith.addf %204, %207 : vector<1x128xf32>
    %209 = math.rsqrt %208 : vector<1x128xf32>
    %210 = vector.broadcast %209 : vector<1x128xf32> to vector<16x128xf32>
    %211 = arith.mulf %206, %210 : vector<16x128xf32>
    %c0_154 = arith.constant 0 : index
    %c0_155 = arith.constant 0 : index
    %212 = vector.load %arg28[%c0_154, %c0_155] : memref<1x128xf32, #tpu.memory_space<vmem>>, vector<1x128xf32>
    %213 = vector.broadcast %212 : vector<1x128xf32> to vector<16x128xf32>
    %214 = arith.mulf %211, %213 : vector<16x128xf32>
    %c0_156 = arith.constant 0 : index
    %c0_157 = arith.constant 0 : index
    %215 = vector.load %arg29[%c0_156, %c0_157] : memref<1x128xf32, #tpu.memory_space<vmem>>, vector<1x128xf32>
    %216 = vector.broadcast %215 : vector<1x128xf32> to vector<16x128xf32>
    %217 = arith.addf %214, %216 : vector<16x128xf32>
    %c0_158 = arith.constant 0 : index
    %c0_159 = arith.constant 0 : index
    %218 = vector.load %arg33[%c0_158, %c0_159] : memref<16x128xf32, #tpu.memory_space<vmem>>, vector<16x128xf32>
    tpu.vector_store %arg33[%c0_158, %c0_159], %217 {strides = array<i32>} : memref<16x128xf32, #tpu.memory_space<vmem>>, vector<16x128xf32>,
    %c0_160 = arith.constant 0 : index
    %c0_161 = arith.constant 0 : index
    %c0_162 = arith.constant 0 : index
    %219 = vector.load %arg7[%c0_160, %c0_161, %c0_162] : memref<2x8x16xf32, #tpu.memory_space<vmem>>, vector<1x8x16xf32>
    %220 = vector.shape_cast %219 : vector<1x8x16xf32> to vector<8x16xf32>
    %cst_163 = arith.constant dense<0.000000e+00> : vector<8x128xf32>
    %221 = tpu.matmul %220, %160, %cst_163 {dimension_numbers = #tpu.dot_dimension_numbers<[1], [0], [0], [1], [0, 0, 1, 1], [], []>} : vector<8x16xf32>, vector<16x128xf32>, vector<8x128xf32> -> vector<8x128xf32>
    %c1_164 = arith.constant 1 : index
    %c0_165 = arith.constant 0 : index
    %c0_166 = arith.constant 0 : index
    %222 = vector.load %arg7[%c1_164, %c0_165, %c0_166] : memref<2x8x16xf32, #tpu.memory_space<vmem>>, vector<1x8x16xf32>
    %223 = vector.shape_cast %222 : vector<1x8x16xf32> to vector<8x16xf32>
    %cst_167 = arith.constant dense<0.000000e+00> : vector<8x128xf32>
    %224 = tpu.matmul %223, %160, %cst_167 {dimension_numbers = #tpu.dot_dimension_numbers<[1], [0], [0], [1], [0, 0, 1, 1], [], []>} : vector<8x16xf32>, vector<16x128xf32>, vector<8x128xf32> -> vector<8x128xf32>
    %225 = arith.maximumf %221, %224 : vector<8x128xf32>
    %c0_168 = arith.constant 0 : index
    %c0_169 = arith.constant 0 : index
    %c0_170 = arith.constant 0 : index
    %226 = vector.load %arg8[%c0_168, %c0_169, %c0_170] : memref<2x128x64xf32, #tpu.memory_space<vmem>>, vector<1x128x64xf32>
    %227 = vector.shape_cast %226 : vector<1x128x64xf32> to vector<128x64xf32>
    %cst_171 = arith.constant dense<0.000000e+00> : vector<8x64xf32>
    %228 = tpu.matmul %225, %227, %cst_171 {dimension_numbers = #tpu.dot_dimension_numbers<[1], [0], [0], [1], [0, 0, 1, 1], [], []>} : vector<8x128xf32>, vector<128x64xf32>, vector<8x64xf32> -> vector<8x64xf32>
    %c1_172 = arith.constant 1 : index
    %c0_173 = arith.constant 0 : index
    %c0_174 = arith.constant 0 : index
    %229 = vector.load %arg8[%c1_172, %c0_173, %c0_174] : memref<2x128x64xf32, #tpu.memory_space<vmem>>, vector<1x128x64xf32>
    %230 = vector.shape_cast %229 : vector<1x128x64xf32> to vector<128x64xf32>
    %cst_175 = arith.constant dense<0.000000e+00> : vector<8x64xf32>
    %231 = tpu.matmul %225, %230, %cst_175 {dimension_numbers = #tpu.dot_dimension_numbers<[1], [0], [0], [1], [0, 0, 1, 1], [], []>} : vector<8x128xf32>, vector<128x64xf32>, vector<8x64xf32> -> vector<8x64xf32>
    %232 = arith.maximumf %228, %231 : vector<8x64xf32>
    %c1_i32_176 = arith.constant 1 : i32
    %233 = tpu.dynamic_rotate %232 by %c1_i32_176 dim 0 : vector<8x64xf32>, i32 -> vector<8x64xf32>
    %c0_177 = arith.constant 0 : index
    %c0_178 = arith.constant 0 : index
    %c0_179 = arith.constant 0 : index
    %234 = vector.load %arg4[%c0_177, %c0_178, %c0_179] : memref<2x8x1xf32, #tpu.memory_space<vmem>>, vector<1x8x1xf32>
    %235 = vector.shape_cast %234 : vector<1x8x1xf32> to vector<8x1xf32>
    %236 = vector.broadcast %235 : vector<8x1xf32> to vector<8x64xf32>
    %237 = arith.mulf %233, %236 : vector<8x64xf32>
    %c7_i32 = arith.constant 7 : i32
    %238 = tpu.dynamic_rotate %232 by %c7_i32 dim 0 : vector<8x64xf32>, i32 -> vector<8x64xf32>
    %c1_180 = arith.constant 1 : index
    %c0_181 = arith.constant 0 : index
    %c0_182 = arith.constant 0 : index
    %239 = vector.load %arg4[%c1_180, %c0_181, %c0_182] : memref<2x8x1xf32, #tpu.memory_space<vmem>>, vector<1x8x1xf32>
    %240 = vector.shape_cast %239 : vector<1x8x1xf32> to vector<8x1xf32>
    %241 = vector.broadcast %240 : vector<8x1xf32> to vector<8x64xf32>
    %242 = arith.mulf %238, %241 : vector<8x64xf32>
    %243 = arith.truncf %237 : vector<8x64xf32> to vector<8x64xbf16>
    %c0_183 = arith.constant 0 : index
    %c0_184 = arith.constant 0 : index
    %c0_185 = arith.constant 0 : index
    %244 = vector.load %arg15[%c0_183, %c0_184, %c0_185] : memref<3x64x128xbf16, #tpu.memory_space<vmem>>, vector<1x64x128xbf16>
    %245 = vector.shape_cast %244 : vector<1x64x128xbf16> to vector<64x128xbf16>
    %cst_186 = arith.constant dense<0.000000e+00> : vector<8x128xf32>
    %246 = tpu.matmul %243, %245, %cst_186 {dimension_numbers = #tpu.dot_dimension_numbers<[1], [0], [0], [1], [0, 0, 1, 1], [], []>} : vector<8x64xbf16>, vector<64x128xbf16>, vector<8x128xf32> -> vector<8x128xf32>
    %247 = arith.truncf %232 : vector<8x64xf32> to vector<8x64xbf16>
    %c1_187 = arith.constant 1 : index
    %c0_188 = arith.constant 0 : index
    %c0_189 = arith.constant 0 : index
    %248 = vector.load %arg15[%c1_187, %c0_188, %c0_189] : memref<3x64x128xbf16, #tpu.memory_space<vmem>>, vector<1x64x128xbf16>
    %249 = vector.shape_cast %248 : vector<1x64x128xbf16> to vector<64x128xbf16>
    %cst_190 = arith.constant dense<0.000000e+00> : vector<8x128xf32>
    %250 = tpu.matmul %247, %249, %cst_190 {dimension_numbers = #tpu.dot_dimension_numbers<[1], [0], [0], [1], [0, 0, 1, 1], [], []>} : vector<8x64xbf16>, vector<64x128xbf16>, vector<8x128xf32> -> vector<8x128xf32>
    %251 = arith.addf %246, %250 : vector<8x128xf32>
    %252 = arith.truncf %242 : vector<8x64xf32> to vector<8x64xbf16>
    %c2_191 = arith.constant 2 : index
    %c0_192 = arith.constant 0 : index
    %c0_193 = arith.constant 0 : index
    %253 = vector.load %arg15[%c2_191, %c0_192, %c0_193] : memref<3x64x128xbf16, #tpu.memory_space<vmem>>, vector<1x64x128xbf16>
    %254 = vector.shape_cast %253 : vector<1x64x128xbf16> to vector<64x128xbf16>
    %cst_194 = arith.constant dense<0.000000e+00> : vector<8x128xf32>
    %255 = tpu.matmul %252, %254, %cst_194 {dimension_numbers = #tpu.dot_dimension_numbers<[1], [0], [0], [1], [0, 0, 1, 1], [], []>} : vector<8x64xbf16>, vector<64x128xbf16>, vector<8x128xf32> -> vector<8x128xf32>
    %256 = arith.addf %251, %255 : vector<8x128xf32>
    %c0_195 = arith.constant 0 : index
    %c0_196 = arith.constant 0 : index
    %257 = vector.load %arg22[%c0_195, %c0_196] : memref<1x128xf32, #tpu.memory_space<vmem>>, vector<1x128xf32>
    %258 = vector.broadcast %257 : vector<1x128xf32> to vector<8x128xf32>
    %259 = arith.addf %256, %258 : vector<8x128xf32>
    %cst_197 = arith.constant 0.000000e+00 : f32
    %260 = vector.broadcast %cst_197 : f32 to vector<8x128xf32>
    %261 = arith.maximumf %259, %260 : vector<8x128xf32>
    %c1_i32_198 = arith.constant 1 : i32
    %262 = tpu.dynamic_rotate %261 by %c1_i32_198 dim 0 : vector<8x128xf32>, i32 -> vector<8x128xf32>
    %c0_199 = arith.constant 0 : index
    %c0_200 = arith.constant 0 : index
    %c0_201 = arith.constant 0 : index
    %263 = vector.load %arg4[%c0_199, %c0_200, %c0_201] : memref<2x8x1xf32, #tpu.memory_space<vmem>>, vector<1x8x1xf32>
    %264 = vector.shape_cast %263 : vector<1x8x1xf32> to vector<8x1xf32>
    %265 = vector.broadcast %264 : vector<8x1xf32> to vector<8x128xf32>
    %266 = arith.mulf %262, %265 : vector<8x128xf32>
    %c7_i32_202 = arith.constant 7 : i32
    %267 = tpu.dynamic_rotate %261 by %c7_i32_202 dim 0 : vector<8x128xf32>, i32 -> vector<8x128xf32>
    %c1_203 = arith.constant 1 : index
    %c0_204 = arith.constant 0 : index
    %c0_205 = arith.constant 0 : index
    %268 = vector.load %arg4[%c1_203, %c0_204, %c0_205] : memref<2x8x1xf32, #tpu.memory_space<vmem>>, vector<1x8x1xf32>
    %269 = vector.shape_cast %268 : vector<1x8x1xf32> to vector<8x1xf32>
    %270 = vector.broadcast %269 : vector<8x1xf32> to vector<8x128xf32>
    %271 = arith.mulf %267, %270 : vector<8x128xf32>
    %272 = arith.truncf %266 : vector<8x128xf32> to vector<8x128xbf16>
    %c0_206 = arith.constant 0 : index
    %c0_207 = arith.constant 0 : index
    %c0_208 = arith.constant 0 : index
    %273 = vector.load %arg18[%c0_206, %c0_207, %c0_208] : memref<3x128x64xbf16, #tpu.memory_space<vmem>>, vector<1x128x64xbf16>
    %274 = vector.shape_cast %273 : vector<1x128x64xbf16> to vector<128x64xbf16>
    %cst_209 = arith.constant dense<0.000000e+00> : vector<8x64xf32>
    %275 = tpu.matmul %272, %274, %cst_209 {dimension_numbers = #tpu.dot_dimension_numbers<[1], [0], [0], [1], [0, 0, 1, 1], [], []>} : vector<8x128xbf16>, vector<128x64xbf16>, vector<8x64xf32> -> vector<8x64xf32>
    %276 = arith.truncf %261 : vector<8x128xf32> to vector<8x128xbf16>
    %c1_210 = arith.constant 1 : index
    %c0_211 = arith.constant 0 : index
    %c0_212 = arith.constant 0 : index
    %277 = vector.load %arg18[%c1_210, %c0_211, %c0_212] : memref<3x128x64xbf16, #tpu.memory_space<vmem>>, vector<1x128x64xbf16>
    %278 = vector.shape_cast %277 : vector<1x128x64xbf16> to vector<128x64xbf16>
    %cst_213 = arith.constant dense<0.000000e+00> : vector<8x64xf32>
    %279 = tpu.matmul %276, %278, %cst_213 {dimension_numbers = #tpu.dot_dimension_numbers<[1], [0], [0], [1], [0, 0, 1, 1], [], []>} : vector<8x128xbf16>, vector<128x64xbf16>, vector<8x64xf32> -> vector<8x64xf32>
    %280 = arith.addf %275, %279 : vector<8x64xf32>
    %281 = arith.truncf %271 : vector<8x128xf32> to vector<8x128xbf16>
    %c2_214 = arith.constant 2 : index
    %c0_215 = arith.constant 0 : index
    %c0_216 = arith.constant 0 : index
    %282 = vector.load %arg18[%c2_214, %c0_215, %c0_216] : memref<3x128x64xbf16, #tpu.memory_space<vmem>>, vector<1x128x64xbf16>
    %283 = vector.shape_cast %282 : vector<1x128x64xbf16> to vector<128x64xbf16>
    %cst_217 = arith.constant dense<0.000000e+00> : vector<8x64xf32>
    %284 = tpu.matmul %281, %283, %cst_217 {dimension_numbers = #tpu.dot_dimension_numbers<[1], [0], [0], [1], [0, 0, 1, 1], [], []>} : vector<8x128xbf16>, vector<128x64xbf16>, vector<8x64xf32> -> vector<8x64xf32>
    %285 = arith.addf %280, %284 : vector<8x64xf32>
    %c0_218 = arith.constant 0 : index
    %c0_219 = arith.constant 0 : index
    %286 = vector.load %arg25[%c0_218, %c0_219] : memref<1x64xf32, #tpu.memory_space<vmem>>, vector<1x64xf32>
    %287 = vector.broadcast %286 : vector<1x64xf32> to vector<8x64xf32>
    %288 = arith.addf %285, %287 : vector<8x64xf32>
    %cst_220 = arith.constant dense<0.000000e+00> : vector<64xf32>
    %289 = vector.multi_reduction <add>, %288, %cst_220 [0] : vector<8x64xf32> to vector<64xf32>
    %290 = vector.shape_cast %289 : vector<64xf32> to vector<1x64xf32>
    %291 = arith.mulf %288, %288 : vector<8x64xf32>
    %cst_221 = arith.constant dense<0.000000e+00> : vector<64xf32>
    %292 = vector.multi_reduction <add>, %291, %cst_221 [0] : vector<8x64xf32> to vector<64xf32>
    %293 = vector.shape_cast %292 : vector<64xf32> to vector<1x64xf32>
    %c0_222 = arith.constant 0 : index
    %c0_223 = arith.constant 0 : index
    %294 = vector.load %arg11[%c0_222, %c0_223] : memref<64x64xf32, #tpu.memory_space<vmem>>, vector<64x64xf32>
    %cst_224 = arith.constant dense<0.000000e+00> : vector<1x64xf32>
    %295 = tpu.matmul %290, %294, %cst_224 {dimension_numbers = #tpu.dot_dimension_numbers<[1], [0], [0], [1], [0, 0, 1, 1], [], []>} : vector<1x64xf32>, vector<64x64xf32>, vector<1x64xf32> -> vector<1x64xf32>
    %cst_225 = arith.constant 3.200000e+01 : f32
    %296 = vector.broadcast %cst_225 : f32 to vector<1x64xf32>
    %297 = arith.divf %295, %296 : vector<1x64xf32>
    %c0_226 = arith.constant 0 : index
    %c0_227 = arith.constant 0 : index
    %298 = vector.load %arg11[%c0_226, %c0_227] : memref<64x64xf32, #tpu.memory_space<vmem>>, vector<64x64xf32>
    %cst_228 = arith.constant dense<0.000000e+00> : vector<1x64xf32>
    %299 = tpu.matmul %293, %298, %cst_228 {dimension_numbers = #tpu.dot_dimension_numbers<[1], [0], [0], [1], [0, 0, 1, 1], [], []>} : vector<1x64xf32>, vector<64x64xf32>, vector<1x64xf32> -> vector<1x64xf32>
    %cst_229 = arith.constant 3.200000e+01 : f32
    %300 = vector.broadcast %cst_229 : f32 to vector<1x64xf32>
    %301 = arith.divf %299, %300 : vector<1x64xf32>
    %302 = arith.mulf %297, %297 : vector<1x64xf32>
    %303 = arith.subf %301, %302 : vector<1x64xf32>
    %cst_230 = arith.constant 0.000000e+00 : f32
    %304 = vector.broadcast %cst_230 : f32 to vector<1x64xf32>
    %305 = arith.maximumf %303, %304 : vector<1x64xf32>
    %306 = vector.broadcast %297 : vector<1x64xf32> to vector<8x64xf32>
    %307 = arith.subf %288, %306 : vector<8x64xf32>
    %cst_231 = arith.constant 9.99999974E-6 : f32
    %308 = vector.broadcast %cst_231 : f32 to vector<1x64xf32>
    %309 = arith.addf %305, %308 : vector<1x64xf32>
    %310 = math.rsqrt %309 : vector<1x64xf32>
    %311 = vector.broadcast %310 : vector<1x64xf32> to vector<8x64xf32>
    %312 = arith.mulf %307, %311 : vector<8x64xf32>
    %c0_232 = arith.constant 0 : index
    %c0_233 = arith.constant 0 : index
    %313 = vector.load %arg30[%c0_232, %c0_233] : memref<1x64xf32, #tpu.memory_space<vmem>>, vector<1x64xf32>
    %314 = vector.broadcast %313 : vector<1x64xf32> to vector<8x64xf32>
    %315 = arith.mulf %312, %314 : vector<8x64xf32>
    %c0_234 = arith.constant 0 : index
    %c0_235 = arith.constant 0 : index
    %316 = vector.load %arg31[%c0_234, %c0_235] : memref<1x64xf32, #tpu.memory_space<vmem>>, vector<1x64xf32>
    %317 = vector.broadcast %316 : vector<1x64xf32> to vector<8x64xf32>
    %318 = arith.addf %315, %317 : vector<8x64xf32>
    %c0_236 = arith.constant 0 : index
    %c0_237 = arith.constant 0 : index
    %319 = vector.load %arg34[%c0_236, %c0_237] : memref<8x64xf32, #tpu.memory_space<vmem>>, vector<8x64xf32>
    tpu.vector_store %arg34[%c0_236, %c0_237], %318 {strides = array<i32>} : memref<8x64xf32, #tpu.memory_space<vmem>>, vector<8x64xf32>,
    return
  }
  func.func @transform_0(%arg0: i32) -> (i32, i32) {
    %c0_i32 = arith.constant 0 : i32
    %c0_i32_0 = arith.constant 0 : i32
    %c0_i32_1 = arith.constant 0 : i32
    return %c0_i32, %c0_i32_0 : i32, i32
  }
  func.func @transform_1(%arg0: i32) -> (i32, i32, i32) {
    %c0_i32 = arith.constant 0 : i32
    %c0_i32_0 = arith.constant 0 : i32
    %c0_i32_1 = arith.constant 0 : i32
    %c0_i32_2 = arith.constant 0 : i32
    return %c0_i32, %c0_i32_0, %c0_i32_1 : i32, i32, i32
  }
  func.func @transform_2(%arg0: i32) -> (i32, i32, i32) {
    %c0_i32 = arith.constant 0 : i32
    %c0_i32_0 = arith.constant 0 : i32
    %c0_i32_1 = arith.constant 0 : i32
    %c0_i32_2 = arith.constant 0 : i32
    return %c0_i32, %c0_i32_0, %c0_i32_1 : i32, i32, i32
  }
  func.func @transform_3(%arg0: i32) -> (i32, i32, i32) {
    %c0_i32 = arith.constant 0 : i32
    %c0_i32_0 = arith.constant 0 : i32
    %c0_i32_1 = arith.constant 0 : i32
    %c0_i32_2 = arith.constant 0 : i32
    return %c0_i32, %c0_i32_0, %c0_i32_1 : i32, i32, i32
  }
  func.func @transform_4(%arg0: i32) -> (i32, i32, i32) {
    %c0_i32 = arith.constant 0 : i32
    %c0_i32_0 = arith.constant 0 : i32
    %c0_i32_1 = arith.constant 0 : i32
    %c0_i32_2 = arith.constant 0 : i32
    return %c0_i32, %c0_i32_0, %c0_i32_1 : i32, i32, i32
  }
  func.func @transform_5(%arg0: i32) -> (i32, i32, i32) {
    %c0_i32 = arith.constant 0 : i32
    %c0_i32_0 = arith.constant 0 : i32
    %c0_i32_1 = arith.constant 0 : i32
    %c0_i32_2 = arith.constant 0 : i32
    return %c0_i32, %c0_i32_0, %c0_i32_1 : i32, i32, i32
  }
  func.func @transform_6(%arg0: i32) -> (i32, i32, i32) {
    %c0_i32 = arith.constant 0 : i32
    %c0_i32_0 = arith.constant 0 : i32
    %c0_i32_1 = arith.constant 0 : i32
    %c0_i32_2 = arith.constant 0 : i32
    return %c0_i32, %c0_i32_0, %c0_i32_1 : i32, i32, i32
  }
  func.func @transform_7(%arg0: i32) -> (i32, i32, i32) {
    %c0_i32 = arith.constant 0 : i32
    %c0_i32_0 = arith.constant 0 : i32
    %c0_i32_1 = arith.constant 0 : i32
    %c0_i32_2 = arith.constant 0 : i32
    return %c0_i32, %c0_i32_0, %c0_i32_1 : i32, i32, i32
  }
  func.func @transform_8(%arg0: i32) -> (i32, i32) {
    %c0_i32 = arith.constant 0 : i32
    %c0_i32_0 = arith.constant 0 : i32
    %c0_i32_1 = arith.constant 0 : i32
    return %c0_i32, %c0_i32_0 : i32, i32
  }
  func.func @transform_9(%arg0: i32) -> (i32, i32) {
    %c0_i32 = arith.constant 0 : i32
    %c0_i32_0 = arith.constant 0 : i32
    %c0_i32_1 = arith.constant 0 : i32
    return %c0_i32, %c0_i32_0 : i32, i32
  }
  func.func @transform_10(%arg0: i32) -> (i32, i32) {
    %c0_i32 = arith.constant 0 : i32
    %c0_i32_0 = arith.constant 0 : i32
    %c0_i32_1 = arith.constant 0 : i32
    return %c0_i32, %c0_i32_0 : i32, i32
  }
  func.func @transform_11(%arg0: i32) -> (i32, i32, i32) {
    %c0_i32 = arith.constant 0 : i32
    %c0_i32_0 = arith.constant 0 : i32
    %c0_i32_1 = arith.constant 0 : i32
    %c0_i32_2 = arith.constant 0 : i32
    return %c0_i32, %c0_i32_0, %c0_i32_1 : i32, i32, i32
  }
  func.func @transform_12(%arg0: i32) -> (i32, i32, i32) {
    %c0_i32 = arith.constant 0 : i32
    %c0_i32_0 = arith.constant 0 : i32
    %c0_i32_1 = arith.constant 0 : i32
    %c0_i32_2 = arith.constant 0 : i32
    return %c0_i32, %c0_i32_0, %c0_i32_1 : i32, i32, i32
  }
  func.func @transform_13(%arg0: i32) -> (i32, i32, i32) {
    %c0_i32 = arith.constant 0 : i32
    %c0_i32_0 = arith.constant 0 : i32
    %c0_i32_1 = arith.constant 0 : i32
    %c0_i32_2 = arith.constant 0 : i32
    return %c0_i32, %c0_i32_0, %c0_i32_1 : i32, i32, i32
  }
  func.func @transform_14(%arg0: i32) -> (i32, i32, i32) {
    %c0_i32 = arith.constant 0 : i32
    %c0_i32_0 = arith.constant 0 : i32
    %c0_i32_1 = arith.constant 0 : i32
    %c0_i32_2 = arith.constant 0 : i32
    return %c0_i32, %c0_i32_0, %c0_i32_1 : i32, i32, i32
  }
  func.func @transform_15(%arg0: i32) -> (i32, i32, i32) {
    %c0_i32 = arith.constant 0 : i32
    %c0_i32_0 = arith.constant 0 : i32
    %c0_i32_1 = arith.constant 0 : i32
    %c0_i32_2 = arith.constant 0 : i32
    return %c0_i32, %c0_i32_0, %c0_i32_1 : i32, i32, i32
  }
  func.func @transform_16(%arg0: i32) -> (i32, i32, i32) {
    %c0_i32 = arith.constant 0 : i32
    %c0_i32_0 = arith.constant 0 : i32
    %c0_i32_1 = arith.constant 0 : i32
    %c0_i32_2 = arith.constant 0 : i32
    return %c0_i32, %c0_i32_0, %c0_i32_1 : i32, i32, i32
  }
  func.func @transform_17(%arg0: i32) -> (i32, i32, i32) {
    %c0_i32 = arith.constant 0 : i32
    %c0_i32_0 = arith.constant 0 : i32
    %c0_i32_1 = arith.constant 0 : i32
    %c0_i32_2 = arith.constant 0 : i32
    return %c0_i32, %c0_i32_0, %c0_i32_1 : i32, i32, i32
  }
  func.func @transform_18(%arg0: i32) -> (i32, i32) {
    %c0_i32 = arith.constant 0 : i32
    %c0_i32_0 = arith.constant 0 : i32
    %c0_i32_1 = arith.constant 0 : i32
    return %c0_i32, %c0_i32_0 : i32, i32
  }
  func.func @transform_19(%arg0: i32) -> (i32, i32) {
    %c0_i32 = arith.constant 0 : i32
    %c0_i32_0 = arith.constant 0 : i32
    %c0_i32_1 = arith.constant 0 : i32
    return %c0_i32, %c0_i32_0 : i32, i32
  }
  func.func @transform_20(%arg0: i32) -> (i32, i32) {
    %c0_i32 = arith.constant 0 : i32
    %c0_i32_0 = arith.constant 0 : i32
    %c0_i32_1 = arith.constant 0 : i32
    return %c0_i32, %c0_i32_0 : i32, i32
  }
  func.func @transform_21(%arg0: i32) -> (i32, i32) {
    %c0_i32 = arith.constant 0 : i32
    %c0_i32_0 = arith.constant 0 : i32
    %c0_i32_1 = arith.constant 0 : i32
    return %c0_i32, %c0_i32_0 : i32, i32
  }
  func.func @transform_22(%arg0: i32) -> (i32, i32) {
    %c0_i32 = arith.constant 0 : i32
    %c0_i32_0 = arith.constant 0 : i32
    %c0_i32_1 = arith.constant 0 : i32
    return %c0_i32, %c0_i32_0 : i32, i32
  }
  func.func @transform_23(%arg0: i32) -> (i32, i32) {
    %c0_i32 = arith.constant 0 : i32
    %c0_i32_0 = arith.constant 0 : i32
    %c0_i32_1 = arith.constant 0 : i32
    return %c0_i32, %c0_i32_0 : i32, i32
  }
  func.func @transform_24(%arg0: i32) -> (i32, i32) {
    %c0_i32 = arith.constant 0 : i32
    %c0_i32_0 = arith.constant 0 : i32
    %c0_i32_1 = arith.constant 0 : i32
    return %c0_i32, %c0_i32_0 : i32, i32
  }
  func.func @transform_25(%arg0: i32) -> (i32, i32) {
    %c0_i32 = arith.constant 0 : i32
    %c0_i32_0 = arith.constant 0 : i32
    %c0_i32_1 = arith.constant 0 : i32
    return %c0_i32, %c0_i32_0 : i32, i32
  }
  func.func @transform_26(%arg0: i32) -> (i32, i32) {
    %c0_i32 = arith.constant 0 : i32
    %c0_i32_0 = arith.constant 0 : i32
    %c0_i32_1 = arith.constant 0 : i32
    return %c0_i32, %c0_i32_0 : i32, i32
  }
  func.func @transform_27(%arg0: i32) -> (i32, i32) {
    %c0_i32 = arith.constant 0 : i32
    %c0_i32_0 = arith.constant 0 : i32
    %c0_i32_1 = arith.constant 0 : i32
    return %c0_i32, %c0_i32_0 : i32, i32
  }
  func.func @transform_28(%arg0: i32) -> (i32, i32) {
    %c0_i32 = arith.constant 0 : i32
    %c0_i32_0 = arith.constant 0 : i32
    %c0_i32_1 = arith.constant 0 : i32
    return %c0_i32, %c0_i32_0 : i32, i32
  }
  func.func @transform_29(%arg0: i32) -> (i32, i32) {
    %c0_i32 = arith.constant 0 : i32
    %c0_i32_0 = arith.constant 0 : i32
    %c0_i32_1 = arith.constant 0 : i32
    return %c0_i32, %c0_i32_0 : i32, i32
  }
  func.func @transform_30(%arg0: i32) -> (i32, i32) {
    %c0_i32 = arith.constant 0 : i32
    %c0_i32_0 = arith.constant 0 : i32
    %c0_i32_1 = arith.constant 0 : i32
    return %c0_i32, %c0_i32_0 : i32, i32
  }
  func.func @transform_31(%arg0: i32) -> (i32, i32) {
    %c0_i32 = arith.constant 0 : i32
    %c0_i32_0 = arith.constant 0 : i32
    %c0_i32_1 = arith.constant 0 : i32
    return %c0_i32, %c0_i32_0 : i32, i32
  }
  func.func @transform_32(%arg0: i32) -> (i32, i32) {
    %c0_i32 = arith.constant 0 : i32
    %c0_i32_0 = arith.constant 0 : i32
    %c0_i32_1 = arith.constant 0 : i32
    return %c0_i32, %c0_i32_0 : i32, i32
  }
  func.func @transform_33(%arg0: i32) -> (i32, i32) {
    %c0_i32 = arith.constant 0 : i32
    %c0_i32_0 = arith.constant 0 : i32
    %c0_i32_1 = arith.constant 0 : i32
    return %c0_i32, %c0_i32_0 : i32, i32
  }
}

</mosaic_0001>

<llo_original>
// kernel: rvosnet_forward.2
$region0: #{rvosnet_forward.2}
  #allocation0 [shape = 'u32[]', space=smem, size = 0x4, offset = 0x4, fixed_abs, tag = 'smem constant byte address 0x4 - core index']
  #allocation1 [shape = 'u32[72,128]{1,0:T(1,128)}', space=vmem, size = 0x9000, scoped, tag = 'internal scratch']
  %s0 = inlined_call_operand.smem [shape: u32[34], index: -1, kind: input, shape index: {}]
  %s1 = sld [smem:[%s0]]
  %s2 = scalar_lea.smem %s0, 1
  %s3 = sld [smem:[%s2]]
  %s4 = scalar_lea.smem %s0, 2
  %s5 = sld [smem:[%s4]]
  %s6 = scalar_lea.smem %s0, 3
  %s7 = sld [smem:[%s6]]
  %s8 = scalar_lea.smem %s0, 4
  %s9 = sld [smem:[%s8]]
  %s10 = scalar_lea.smem %s0, 5
  %s11 = sld [smem:[%s10]]
  %s12 = scalar_lea.smem %s0, 6
  %s13 = sld [smem:[%s12]]
  %s14 = scalar_lea.smem %s0, 7
  %s15 = sld [smem:[%s14]]
  %s16 = scalar_lea.smem %s0, 8
  %s17 = sld [smem:[%s16]]
  %s18 = scalar_lea.smem %s0, 9
  %s19 = sld [smem:[%s18]]
  %s20 = scalar_lea.smem %s0, 10
  %s21 = sld [smem:[%s20]]
  %s22 = scalar_lea.smem %s0, 11
  %s23 = sld [smem:[%s22]]
  %s24 = scalar_lea.smem %s0, 12
  %s25 = sld [smem:[%s24]]
  %s26 = scalar_lea.smem %s0, 13
  %s27 = sld [smem:[%s26]]
  %s28 = scalar_lea.smem %s0, 14
  %s29 = sld [smem:[%s28]]
  %s30 = scalar_lea.smem %s0, 15
  %s31 = sld [smem:[%s30]]
  %s32 = scalar_lea.smem %s0, 16
  %s33 = sld [smem:[%s32]]
  %s34 = scalar_lea.smem %s0, 17
  %s35 = sld [smem:[%s34]]
  %s36 = scalar_lea.smem %s0, 18
  %s37 = sld [smem:[%s36]]
  %s38 = scalar_lea.smem %s0, 19
  %s39 = sld [smem:[%s38]]
  %s40 = scalar_lea.smem %s0, 20
  %s41 = sld [smem:[%s40]]
  %s42 = scalar_lea.smem %s0, 21
  %s43 = sld [smem:[%s42]]
  %s44 = scalar_lea.smem %s0, 22
  %s45 = sld [smem:[%s44]]
  %s46 = scalar_lea.smem %s0, 23
  %s47 = sld [smem:[%s46]]
  %s48 = scalar_lea.smem %s0, 24
  %s49 = sld [smem:[%s48]]
  %s50 = scalar_lea.smem %s0, 25
  %s51 = sld [smem:[%s50]]
  %s52 = scalar_lea.smem %s0, 26
  %s53 = sld [smem:[%s52]]
  %s54 = scalar_lea.smem %s0, 27
  %s55 = sld [smem:[%s54]]
  %s56 = scalar_lea.smem %s0, 28
  %s57 = sld [smem:[%s56]]
  %s58 = scalar_lea.smem %s0, 29
  %s59 = sld [smem:[%s58]]
  %s60 = scalar_lea.smem %s0, 30
  %s61 = sld [smem:[%s60]]
  %s62 = scalar_lea.smem %s0, 31
  %s63 = sld [smem:[%s62]]
  %s64 = scalar_lea.smem %s0, 32
  %s65 = sld [smem:[%s64]]
  %s66 = scalar_lea.smem %s0, 33
  %s67 = sld [smem:[%s66]]
  %68 = xla_tuple %s63, %s65, %s67
  %s69 = sld [smem:[#allocation0]]
  $region250: #{rvosnet_forward.2} parent=0
    _
  %s71 = ssub.s32 1, %s69
  %s72 = scalar_select 0, %s71, %s69
  $region1: #{rvosnet_forward.2} parent=0
    #allocation2 [shape = 'u8[16384]{0}', space=vmem, size = 0x4000, scoped, tag = 'input window, operand 0, single buffered']
    #allocation3 [shape = 's32[1]{0}', space=sflag, size = 0x4, scoped, tag = 'scoped memory for rvosnet_forward.2']
    #allocation4 [shape = 'u8[16384]{0}', space=vmem, size = 0x4000, scoped, tag = 'input window, operand 4, single buffered']
    #allocation5 [shape = 's32[1]{0}', space=sflag, size = 0x4, scoped, tag = 'scoped memory for rvosnet_forward.2']
    #allocation6 [shape = 'u8[8192]{0}', space=vmem, size = 0x2000, scoped, tag = 'input window, operand 6, single buffered']
    #allocation7 [shape = 'u8[65536]{0}', space=vmem, size = 0x10000, scoped, tag = 'input window, operand 8, single buffered']
    #allocation8 [shape = 's32[1]{0}', space=sflag, size = 0x4, scoped, tag = 'scoped memory for rvosnet_forward.2']
    #allocation9 [shape = 'u8[65536]{0}', space=vmem, size = 0x10000, scoped, tag = 'input window, operand 9, single buffered']
    #allocation10 [shape = 'u8[32768]{0}', space=vmem, size = 0x8000, scoped, tag = 'input window, operand 10, single buffered']
    #allocation11 [shape = 's32[1]{0}', space=sflag, size = 0x4, scoped, tag = 'scoped memory for rvosnet_forward.2']
    #allocation12 [shape = 'u8[12288]{0}', space=vmem, size = 0x3000, scoped, tag = 'input window, operand 11, single buffered']
    #allocation13 [shape = 'u8[98304]{0}', space=vmem, size = 0x18000, scoped, tag = 'input window, operand 12, single buffered']
    #allocation14 [shape = 's32[1]{0}', space=sflag, size = 0x4, scoped, tag = 'scoped memory for rvosnet_forward.2']
    #allocation15 [shape = 'u8[49152]{0}', space=vmem, size = 0xc000, scoped, tag = 'input window, operand 13, single buffered']
    #allocation16 [shape = 'u8[49152]{0}', space=vmem, size = 0xc000, scoped, tag = 'input window, operand 14, single buffered']
    #allocation17 [shape = 's32[1]{0}', space=sflag, size = 0x4, scoped, tag = 'scoped memory for rvosnet_forward.2']
    #allocation18 [shape = 'u8[98304]{0}', space=vmem, size = 0x18000, scoped, tag = 'input window, operand 15, single buffered']
    #allocation19 [shape = 'u8[98304]{0}', space=vmem, size = 0x18000, scoped, tag = 'input window, operand 16, single buffered']
    #allocation20 [shape = 's32[1]{0}', space=sflag, size = 0x4, scoped, tag = 'scoped memory for rvosnet_forward.2']
    #allocation21 [shape = 'u8[512]{0}', space=vmem, size = 0x400, scoped, tag = 'input window, operand 18, single buffered']
    #allocation22 [shape = 'u8[512]{0}', space=vmem, size = 0x400, scoped, tag = 'input window, operand 19, single buffered']
    #allocation23 [shape = 's32[1]{0}', space=sflag, size = 0x4, scoped, tag = 'scoped memory for rvosnet_forward.2']
    #allocation24 [shape = 'u8[512]{0}', space=vmem, size = 0x400, scoped, tag = 'input window, operand 20, single buffered']
    #allocation25 [shape = 'u8[512]{0}', space=vmem, size = 0x400, scoped, tag = 'input window, operand 21, single buffered']
    #allocation26 [shape = 's32[1]{0}', space=sflag, size = 0x4, scoped, tag = 'scoped memory for rvosnet_forward.2']
    #allocation27 [shape = 'u8[512]{0}', space=vmem, size = 0x400, scoped, tag = 'input window, operand 22, single buffered']
    #allocation28 [shape = 'u8[512]{0}', space=vmem, size = 0x400, scoped, tag = 'input window, operand 23, single buffered']
    #allocation29 [shape = 's32[1]{0}', space=sflag, size = 0x4, scoped, tag = 'scoped memory for rvosnet_forward.2']
    #allocation30 [shape = 'u8[512]{0}', space=vmem, size = 0x400, scoped, tag = 'input window, operand 24, single buffered']
    #allocation31 [shape = 'u8[512]{0}', space=vmem, size = 0x400, scoped, tag = 'input window, operand 25, single buffered']
    #allocation32 [shape = 's32[1]{0}', space=sflag, size = 0x4, scoped, tag = 'scoped memory for rvosnet_forward.2']
    #allocation33 [shape = 'u8[512]{0}', space=vmem, size = 0x400, scoped, tag = 'input window, operand 26, single buffered']
    #allocation34 [shape = 'u8[512]{0}', space=vmem, size = 0x400, scoped, tag = 'input window, operand 27, single buffered']
    #allocation35 [shape = 's32[1]{0}', space=sflag, size = 0x4, scoped, tag = 'scoped memory for rvosnet_forward.2']
    #allocation36 [shape = 'u8[512]{0}', space=vmem, size = 0x400, scoped, tag = 'input window, operand 28, single buffered']
    #allocation37 [shape = 'u8[512]{0}', space=vmem, size = 0x400, scoped, tag = 'input window, operand 29, single buffered']
    #allocation38 [shape = 's32[1]{0}', space=sflag, size = 0x4, scoped, tag = 'scoped memory for rvosnet_forward.2']
    #allocation39 [shape = 'u8[512]{0}', space=vmem, size = 0x400, scoped, tag = 'input window, operand 30, single buffered']
    %73 = vsyncpa [#allocation3], 0
    %74 = vsyncpa [#allocation5], 0
    %75 = vsyncpa [#allocation8], 0
    %76 = vsyncpa [#allocation11], 0
    %77 = vsyncpa [#allocation14], 0
    %78 = vsyncpa [#allocation17], 0
    %79 = vsyncpa [#allocation20], 0
    %80 = vsyncpa [#allocation23], 0
    %81 = vsyncpa [#allocation26], 0
    %82 = vsyncpa [#allocation29], 0
    %83 = vsyncpa [#allocation32], 0
    %84 = vsyncpa [#allocation35], 0
    %85 = vsyncpa [#allocation38], 0
    // Predicated region
    $region2: #{rvosnet_forward.2} parent=1 // pred_check
      _
    $region3: #{rvosnet_forward.2} parent=1 // pred_check_branch
      %87 = sbr.rel (0) target = $region5
    $region4: #{rvosnet_forward.2} parent=1 // pred_region
      %89 = vsyncadd [#allocation3], 0
      %s90 = sshll.u32 %s1, 4
      %s91 = int_to_ptr.hbm [resolvable:$true] %s90
      %s92 = sshll.u32 [#allocation2], 4
      %s93 = int_to_ptr.vmem [resolvable:$true] %s92
      %98 = dma.hbm_to_vmem [thread:$0]  %s91, 512, %s93, [#allocation3], 128, 128, 8
    $region5: #{rvosnet_forward.2} parent=1 // pred_fallthru
      _
    // Predicated region
    $region6: #{rvosnet_forward.2} parent=1 // pred_check
      _
    $region7: #{rvosnet_forward.2} parent=1 // pred_check_branch
      %100 = sbr.rel (0) target = $region9
    $region8: #{rvosnet_forward.2} parent=1 // pred_region
      _
    $region9: #{rvosnet_forward.2} parent=1 // pred_fallthru
      _
    // Predicated region
    $region10: #{rvosnet_forward.2} parent=1 // pred_check
      _
    $region11: #{rvosnet_forward.2} parent=1 // pred_check_branch
      %102 = sbr.rel (0) target = $region13
    $region12: #{rvosnet_forward.2} parent=1 // pred_region
      _
    $region13: #{rvosnet_forward.2} parent=1 // pred_fallthru
      _
    // Predicated region
    $region14: #{rvosnet_forward.2} parent=1 // pred_check
      _
    $region15: #{rvosnet_forward.2} parent=1 // pred_check_branch
      %104 = sbr.rel (0) target = $region17
    $region16: #{rvosnet_forward.2} parent=1 // pred_region
      _
    $region17: #{rvosnet_forward.2} parent=1 // pred_fallthru
      _
    // Predicated region
    $region18: #{rvosnet_forward.2} parent=1 // pred_check
      _
    $region19: #{rvosnet_forward.2} parent=1 // pred_check_branch
      %106 = sbr.rel (0) target = $region21
    $region20: #{rvosnet_forward.2} parent=1 // pred_region
      %108 = vsyncadd [#allocation5], 0
      %s109 = sshll.u32 %s9, 4
      %s110 = int_to_ptr.hbm [resolvable:$true] %s109
      %s111 = sshll.u32 [#allocation4], 4
      %s112 = int_to_ptr.vmem [resolvable:$true] %s111
      %117 = dma.hbm_to_vmem [thread:$0]  %s110, 512, %s112, [#allocation5], 128, 128, 8
    $region21: #{rvosnet_forward.2} parent=1 // pred_fallthru
      _
    // Predicated region
    $region22: #{rvosnet_forward.2} parent=1 // pred_check
      _
    $region23: #{rvosnet_forward.2} parent=1 // pred_check_branch
      %119 = sbr.rel (0) target = $region25
    $region24: #{rvosnet_forward.2} parent=1 // pred_region
      _
    $region25: #{rvosnet_forward.2} parent=1 // pred_fallthru
      _
    // Predicated region
    $region26: #{rvosnet_forward.2} parent=1 // pred_check
      _
    $region27: #{rvosnet_forward.2} parent=1 // pred_check_branch
      %121 = sbr.rel (0) target = $region29
    $region28: #{rvosnet_forward.2} parent=1 // pred_region
      %123 = vsyncadd [#allocation5], 0
      %s124 = sshll.u32 %s13, 4
      %s125 = int_to_ptr.hbm [resolvable:$true] %s124
      %s126 = sshll.u32 [#allocation6], 4
      %s127 = int_to_ptr.vmem [resolvable:$true] %s126
      %132 = dma.hbm_to_vmem [thread:$0]  %s125, 256, %s127, [#allocation5], 128, 128, 8
    $region29: #{rvosnet_forward.2} parent=1 // pred_fallthru
      _
    // Predicated region
    $region30: #{rvosnet_forward.2} parent=1 // pred_check
      _
    $region31: #{rvosnet_forward.2} parent=1 // pred_check_branch
      %134 = sbr.rel (0) target = $region33
    $region32: #{rvosnet_forward.2} parent=1 // pred_region
      _
    $region33: #{rvosnet_forward.2} parent=1 // pred_fallthru
      _
    // Predicated region
    $region34: #{rvosnet_forward.2} parent=1 // pred_check
      _
    $region35: #{rvosnet_forward.2} parent=1 // pred_check_branch
      %136 = sbr.rel (0) target = $region37
    $region36: #{rvosnet_forward.2} parent=1 // pred_region
      %138 = vsyncadd [#allocation8], 0
      %s139 = sshll.u32 %s17, 4
      %s140 = int_to_ptr.hbm [resolvable:$true] %s139
      %s141 = sshll.u32 [#allocation7], 4
      %s142 = int_to_ptr.vmem [resolvable:$true] %s141
      %147 = dma.hbm_to_vmem [thread:$0]  %s140, 2048, %s142, [#allocation8], 128, 128, 8
    $region37: #{rvosnet_forward.2} parent=1 // pred_fallthru
      _
    // Predicated region
    $region38: #{rvosnet_forward.2} parent=1 // pred_check
      _
    $region39: #{rvosnet_forward.2} parent=1 // pred_check_branch
      %149 = sbr.rel (0) target = $region41
    $region40: #{rvosnet_forward.2} parent=1 // pred_region
      %151 = vsyncadd [#allocation8], 0
      %s152 = sshll.u32 %s19, 4
      %s153 = int_to_ptr.hbm [resolvable:$true] %s152
      %s154 = sshll.u32 [#allocation9], 4
      %s155 = int_to_ptr.vmem [resolvable:$true] %s154
      %160 = dma.hbm_to_vmem [thread:$0]  %s153, 2048, %s155, [#allocation8], 128, 128, 8
    $region41: #{rvosnet_forward.2} parent=1 // pred_fallthru
      _
    // Predicated region
    $region42: #{rvosnet_forward.2} parent=1 // pred_check
      _
    $region43: #{rvosnet_forward.2} parent=1 // pred_check_branch
      %162 = sbr.rel (0) target = $region45
    $region44: #{rvosnet_forward.2} parent=1 // pred_region
      %164 = vsyncadd [#allocation11], 0
      %s165 = sshll.u32 %s21, 4
      %s166 = int_to_ptr.hbm [resolvable:$true] %s165
      %s167 = sshll.u32 [#allocation10], 4
      %s168 = int_to_ptr.vmem [resolvable:$true] %s167
      %173 = dma.hbm_to_vmem [thread:$0]  %s166, 1024, %s168, [#allocation11], 128, 128, 8
    $region45: #{rvosnet_forward.2} parent=1 // pred_fallthru
      _
    // Predicated region
    $region46: #{rvosnet_forward.2} parent=1 // pred_check
      _
    $region47: #{rvosnet_forward.2} parent=1 // pred_check_branch
      %175 = sbr.rel (0) target = $region49
    $region48: #{rvosnet_forward.2} parent=1 // pred_region
      %177 = vsyncadd [#allocation11], 0
      %s178 = sshll.u32 %s23, 4
      %s179 = int_to_ptr.hbm [resolvable:$true] %s178
      %s180 = sshll.u32 [#allocation12], 4
      %s181 = int_to_ptr.vmem [resolvable:$true] %s180
      %186 = dma.hbm_to_vmem [thread:$0]  %s179, 384, %s181, [#allocation11], 64, 64, 4
    $region49: #{rvosnet_forward.2} parent=1 // pred_fallthru
      _
    // Predicated region
    $region50: #{rvosnet_forward.2} parent=1 // pred_check
      _
    $region51: #{rvosnet_forward.2} parent=1 // pred_check_branch
      %188 = sbr.rel (0) target = $region53
    $region52: #{rvosnet_forward.2} parent=1 // pred_region
      %190 = vsyncadd [#allocation14], 0
      %s191 = sshll.u32 %s25, 4
      %s192 = int_to_ptr.hbm [resolvable:$true] %s191
      %s193 = sshll.u32 [#allocation13], 4
      %s194 = int_to_ptr.vmem [resolvable:$true] %s193
      %199 = dma.hbm_to_vmem [thread:$0]  %s192, 3072, %s194, [#allocation14], 64, 64, 4
    $region53: #{rvosnet_forward.2} parent=1 // pred_fallthru
      _
    // Predicated region
    $region54: #{rvosnet_forward.2} parent=1 // pred_check
      _
    $region55: #{rvosnet_forward.2} parent=1 // pred_check_branch
      %201 = sbr.rel (0) target = $region57
    $region56: #{rvosnet_forward.2} parent=1 // pred_region
      %203 = vsyncadd [#allocation14], 0
      %s204 = sshll.u32 %s27, 4
      %s205 = int_to_ptr.hbm [resolvable:$true] %s204
      %s206 = sshll.u32 [#allocation15], 4
      %s207 = int_to_ptr.vmem [resolvable:$true] %s206
      %212 = dma.hbm_to_vmem [thread:$0]  %s205, 1536, %s207, [#allocation14], 64, 64, 4
    $region57: #{rvosnet_forward.2} parent=1 // pred_fallthru
      _
    // Predicated region
    $region58: #{rvosnet_forward.2} parent=1 // pred_check
      _
    $region59: #{rvosnet_forward.2} parent=1 // pred_check_branch
      %214 = sbr.rel (0) target = $region61
    $region60: #{rvosnet_forward.2} parent=1 // pred_region
      %216 = vsyncadd [#allocation17], 0
      %s217 = sshll.u32 %s29, 4
      %s218 = int_to_ptr.hbm [resolvable:$true] %s217
      %s219 = sshll.u32 [#allocation16], 4
      %s220 = int_to_ptr.vmem [resolvable:$true] %s219
      %225 = dma.hbm_to_vmem [thread:$0]  %s218, 1536, %s220, [#allocation17], 64, 64, 4
    $region61: #{rvosnet_forward.2} parent=1 // pred_fallthru
      _
    // Predicated region
    $region62: #{rvosnet_forward.2} parent=1 // pred_check
      _
    $region63: #{rvosnet_forward.2} parent=1 // pred_check_branch
      %227 = sbr.rel (0) target = $region65
    $region64: #{rvosnet_forward.2} parent=1 // pred_region
      %229 = vsyncadd [#allocation17], 0
      %s230 = sshll.u32 %s31, 4
      %s231 = int_to_ptr.hbm [resolvable:$true] %s230
      %s232 = sshll.u32 [#allocation18], 4
      %s233 = int_to_ptr.vmem [resolvable:$true] %s232
      %238 = dma.hbm_to_vmem [thread:$0]  %s231, 3072, %s233, [#allocation17], 64, 64, 4
    $region65: #{rvosnet_forward.2} parent=1 // pred_fallthru
      _
    // Predicated region
    $region66: #{rvosnet_forward.2} parent=1 // pred_check
      _
    $region67: #{rvosnet_forward.2} parent=1 // pred_check_branch
      %240 = sbr.rel (0) target = $region69
    $region68: #{rvosnet_forward.2} parent=1 // pred_region
      %242 = vsyncadd [#allocation20], 0
      %s243 = sshll.u32 %s33, 4
      %s244 = int_to_ptr.hbm [resolvable:$true] %s243
      %s245 = sshll.u32 [#allocation19], 4
      %s246 = int_to_ptr.vmem [resolvable:$true] %s245
      %251 = dma.hbm_to_vmem [thread:$0]  %s244, 3072, %s246, [#allocation20], 64, 64, 4
    $region69: #{rvosnet_forward.2} parent=1 // pred_fallthru
      _
    // Predicated region
    $region70: #{rvosnet_forward.2} parent=1 // pred_check
      _
    $region71: #{rvosnet_forward.2} parent=1 // pred_check_branch
      %253 = sbr.rel (0) target = $region73
    $region72: #{rvosnet_forward.2} parent=1 // pred_region
      _
    $region73: #{rvosnet_forward.2} parent=1 // pred_fallthru
      _
    // Predicated region
    $region74: #{rvosnet_forward.2} parent=1 // pred_check
      _
    $region75: #{rvosnet_forward.2} parent=1 // pred_check_branch
      %255 = sbr.rel (0) target = $region77
    $region76: #{rvosnet_forward.2} parent=1 // pred_region
      %257 = vsyncadd [#allocation20], 0
      %s259 = sshll.u32 %s37, 4
      %s260 = int_to_ptr.hbm [resolvable:$true] %s259
      %s261 = sshll.u32 [#allocation21], 4
      %s262 = int_to_ptr.vmem [resolvable:$true] %s261
      %264 = dma.hbm_to_vmem [thread:$0]  %s260, 16, %s262, [#allocation20]
    $region77: #{rvosnet_forward.2} parent=1 // pred_fallthru
      _
    // Predicated region
    $region78: #{rvosnet_forward.2} parent=1 // pred_check
      _
    $region79: #{rvosnet_forward.2} parent=1 // pred_check_branch
      %266 = sbr.rel (0) target = $region81
    $region80: #{rvosnet_forward.2} parent=1 // pred_region
      %268 = vsyncadd [#allocation23], 0
      %s270 = sshll.u32 %s39, 4
      %s271 = int_to_ptr.hbm [resolvable:$true] %s270
      %s272 = sshll.u32 [#allocation22], 4
      %s273 = int_to_ptr.vmem [resolvable:$true] %s272
      %275 = dma.hbm_to_vmem [thread:$0]  %s271, 16, %s273, [#allocation23]
    $region81: #{rvosnet_forward.2} parent=1 // pred_fallthru
      _
    // Predicated region
    $region82: #{rvosnet_forward.2} parent=1 // pred_check
      _
    $region83: #{rvosnet_forward.2} parent=1 // pred_check_branch
      %277 = sbr.rel (0) target = $region85
    $region84: #{rvosnet_forward.2} parent=1 // pred_region
      %279 = vsyncadd [#allocation23], 0
      %s281 = sshll.u32 %s41, 4
      %s282 = int_to_ptr.hbm [resolvable:$true] %s281
      %s283 = sshll.u32 [#allocation24], 4
      %s284 = int_to_ptr.vmem [resolvable:$true] %s283
      %286 = dma.hbm_to_vmem [thread:$0]  %s282, 16, %s284, [#allocation23]
    $region85: #{rvosnet_forward.2} parent=1 // pred_fallthru
      _
    // Predicated region
    $region86: #{rvosnet_forward.2} parent=1 // pred_check
      _
    $region87: #{rvosnet_forward.2} parent=1 // pred_check_branch
      %288 = sbr.rel (0) target = $region89
    $region88: #{rvosnet_forward.2} parent=1 // pred_region
      %290 = vsyncadd [#allocation26], 0
      %s292 = sshll.u32 %s43, 4
      %s293 = int_to_ptr.hbm [resolvable:$true] %s292
      %s294 = sshll.u32 [#allocation25], 4
      %s295 = int_to_ptr.vmem [resolvable:$true] %s294
      %297 = dma.hbm_to_vmem [thread:$0]  %s293, 16, %s295, [#allocation26]
    $region89: #{rvosnet_forward.2} parent=1 // pred_fallthru
      _
    // Predicated region
    $region90: #{rvosnet_forward.2} parent=1 // pred_check
      _
    $region91: #{rvosnet_forward.2} parent=1 // pred_check_branch
      %299 = sbr.rel (0) target = $region93
    $region92: #{rvosnet_forward.2} parent=1 // pred_region
      %301 = vsyncadd [#allocation26], 0
      %s303 = sshll.u32 %s45, 4
      %s304 = int_to_ptr.hbm [resolvable:$true] %s303
      %s305 = sshll.u32 [#allocation27], 4
      %s306 = int_to_ptr.vmem [resolvable:$true] %s305
      %308 = dma.hbm_to_vmem [thread:$0]  %s304, 16, %s306, [#allocation26]
    $region93: #{rvosnet_forward.2} parent=1 // pred_fallthru
      _
    // Predicated region
    $region94: #{rvosnet_forward.2} parent=1 // pred_check
      _
    $region95: #{rvosnet_forward.2} parent=1 // pred_check_branch
      %310 = sbr.rel (0) target = $region97
    $region96: #{rvosnet_forward.2} parent=1 // pred_region
      %312 = vsyncadd [#allocation29], 0
      %s314 = sshll.u32 %s47, 4
      %s315 = int_to_ptr.hbm [resolvable:$true] %s314
      %s316 = sshll.u32 [#allocation28], 4
      %s317 = int_to_ptr.vmem [resolvable:$true] %s316
      %319 = dma.hbm_to_vmem [thread:$0]  %s315, 16, %s317, [#allocation29]
    $region97: #{rvosnet_forward.2} parent=1 // pred_fallthru
      _
    // Predicated region
    $region98: #{rvosnet_forward.2} parent=1 // pred_check
      _
    $region99: #{rvosnet_forward.2} parent=1 // pred_check_branch
      %321 = sbr.rel (0) target = $region101
    $region100: #{rvosnet_forward.2} parent=1 // pred_region
      %323 = vsyncadd [#allocation29], 0
      %s325 = sshll.u32 %s49, 4
      %s326 = int_to_ptr.hbm [resolvable:$true] %s325
      %s327 = sshll.u32 [#allocation30], 4
      %s328 = int_to_ptr.vmem [resolvable:$true] %s327
      %330 = dma.hbm_to_vmem [thread:$0]  %s326, 16, %s328, [#allocation29]
    $region101: #{rvosnet_forward.2} parent=1 // pred_fallthru
      _
    // Predicated region
    $region102: #{rvosnet_forward.2} parent=1 // pred_check
      _
    $region103: #{rvosnet_forward.2} parent=1 // pred_check_branch
      %332 = sbr.rel (0) target = $region105
    $region104: #{rvosnet_forward.2} parent=1 // pred_region
      %334 = vsyncadd [#allocation32], 0
      %s336 = sshll.u32 %s51, 4
      %s337 = int_to_ptr.hbm [resolvable:$true] %s336
      %s338 = sshll.u32 [#allocation31], 4
      %s339 = int_to_ptr.vmem [resolvable:$true] %s338
      %341 = dma.hbm_to_vmem [thread:$0]  %s337, 16, %s339, [#allocation32]
    $region105: #{rvosnet_forward.2} parent=1 // pred_fallthru
      _
    // Predicated region
    $region106: #{rvosnet_forward.2} parent=1 // pred_check
      _
    $region107: #{rvosnet_forward.2} parent=1 // pred_check_branch
      %343 = sbr.rel (0) target = $region109
    $region108: #{rvosnet_forward.2} parent=1 // pred_region
      %345 = vsyncadd [#allocation32], 0
      %s347 = sshll.u32 %s53, 4
      %s348 = int_to_ptr.hbm [resolvable:$true] %s347
      %s349 = sshll.u32 [#allocation33], 4
      %s350 = int_to_ptr.vmem [resolvable:$true] %s349
      %352 = dma.hbm_to_vmem [thread:$0]  %s348, 16, %s350, [#allocation32]
    $region109: #{rvosnet_forward.2} parent=1 // pred_fallthru
      _
    // Predicated region
    $region110: #{rvosnet_forward.2} parent=1 // pred_check
      _
    $region111: #{rvosnet_forward.2} parent=1 // pred_check_branch
      %354 = sbr.rel (0) target = $region113
    $region112: #{rvosnet_forward.2} parent=1 // pred_region
      %356 = vsyncadd [#allocation35], 0
      %s358 = sshll.u32 %s55, 4
      %s359 = int_to_ptr.hbm [resolvable:$true] %s358
      %s360 = sshll.u32 [#allocation34], 4
      %s361 = int_to_ptr.vmem [resolvable:$true] %s360
      %363 = dma.hbm_to_vmem [thread:$0]  %s359, 16, %s361, [#allocation35]
    $region113: #{rvosnet_forward.2} parent=1 // pred_fallthru
      _
    // Predicated region
    $region114: #{rvosnet_forward.2} parent=1 // pred_check
      _
    $region115: #{rvosnet_forward.2} parent=1 // pred_check_branch
      %365 = sbr.rel (0) target = $region117
    $region116: #{rvosnet_forward.2} parent=1 // pred_region
      %367 = vsyncadd [#allocation35], 0
      %s369 = sshll.u32 %s57, 4
      %s370 = int_to_ptr.hbm [resolvable:$true] %s369
      %s371 = sshll.u32 [#allocation36], 4
      %s372 = int_to_ptr.vmem [resolvable:$true] %s371
      %374 = dma.hbm_to_vmem [thread:$0]  %s370, 16, %s372, [#allocation35]
    $region117: #{rvosnet_forward.2} parent=1 // pred_fallthru
      _
    // Predicated region
    $region118: #{rvosnet_forward.2} parent=1 // pred_check
      _
    $region119: #{rvosnet_forward.2} parent=1 // pred_check_branch
      %376 = sbr.rel (0) target = $region121
    $region120: #{rvosnet_forward.2} parent=1 // pred_region
      %378 = vsyncadd [#allocation38], 0
      %s380 = sshll.u32 %s59, 4
      %s381 = int_to_ptr.hbm [resolvable:$true] %s380
      %s382 = sshll.u32 [#allocation37], 4
      %s383 = int_to_ptr.vmem [resolvable:$true] %s382
      %385 = dma.hbm_to_vmem [thread:$0]  %s381, 16, %s383, [#allocation38]
    $region121: #{rvosnet_forward.2} parent=1 // pred_fallthru
      _
    // Predicated region
    $region122: #{rvosnet_forward.2} parent=1 // pred_check
      _
    $region123: #{rvosnet_forward.2} parent=1 // pred_check_branch
      %387 = sbr.rel (0) target = $region125
    $region124: #{rvosnet_forward.2} parent=1 // pred_region
      %389 = vsyncadd [#allocation38], 0
      %s391 = sshll.u32 %s61, 4
      %s392 = int_to_ptr.hbm [resolvable:$true] %s391
      %s393 = sshll.u32 [#allocation39], 4
      %s394 = int_to_ptr.vmem [resolvable:$true] %s393
      %396 = dma.hbm_to_vmem [thread:$0]  %s392, 16, %s394, [#allocation38]
    $region125: #{rvosnet_forward.2} parent=1 // pred_fallthru
      _
    // Predicated region
    $region126: #{rvosnet_forward.2} parent=1 // pred_check
      _
    $region127: #{rvosnet_forward.2} parent=1 // pred_check_branch
      %398 = sbr.rel (0) target = $region129
    $region128: #{rvosnet_forward.2} parent=1 // pred_region
      %400 = dma.done [#allocation3], 512
    $region129: #{rvosnet_forward.2} parent=1 // pred_fallthru
      _
    // Predicated region
    $region130: #{rvosnet_forward.2} parent=1 // pred_check
      _
    $region131: #{rvosnet_forward.2} parent=1 // pred_check_branch
      %402 = sbr.rel (0) target = $region133
    $region132: #{rvosnet_forward.2} parent=1 // pred_region
      %404 = dma.done [#allocation5], 512
    $region133: #{rvosnet_forward.2} parent=1 // pred_fallthru
      _
    // Predicated region
    $region134: #{rvosnet_forward.2} parent=1 // pred_check
      _
    $region135: #{rvosnet_forward.2} parent=1 // pred_check_branch
      %406 = sbr.rel (0) target = $region137
    $region136: #{rvosnet_forward.2} parent=1 // pred_region
      %408 = dma.done [#allocation5], 256
    $region137: #{rvosnet_forward.2} parent=1 // pred_fallthru
      _
    // Predicated region
    $region138: #{rvosnet_forward.2} parent=1 // pred_check
      _
    $region139: #{rvosnet_forward.2} parent=1 // pred_check_branch
      %410 = sbr.rel (0) target = $region141
    $region140: #{rvosnet_forward.2} parent=1 // pred_region
      %412 = dma.done [#allocation8], 2048
    $region141: #{rvosnet_forward.2} parent=1 // pred_fallthru
      _
    // Predicated region
    $region142: #{rvosnet_forward.2} parent=1 // pred_check
      _
    $region143: #{rvosnet_forward.2} parent=1 // pred_check_branch
      %414 = sbr.rel (0) target = $region145
    $region144: #{rvosnet_forward.2} parent=1 // pred_region
      %416 = dma.done [#allocation8], 2048
    $region145: #{rvosnet_forward.2} parent=1 // pred_fallthru
      _
    // Predicated region
    $region146: #{rvosnet_forward.2} parent=1 // pred_check
      _
    $region147: #{rvosnet_forward.2} parent=1 // pred_check_branch
      %418 = sbr.rel (0) target = $region149
    $region148: #{rvosnet_forward.2} parent=1 // pred_region
      %420 = dma.done [#allocation11], 1024
    $region149: #{rvosnet_forward.2} parent=1 // pred_fallthru
      _
    // Predicated region
    $region150: #{rvosnet_forward.2} parent=1 // pred_check
      _
    $region151: #{rvosnet_forward.2} parent=1 // pred_check_branch
      %422 = sbr.rel (0) target = $region153
    $region152: #{rvosnet_forward.2} parent=1 // pred_region
      %424 = dma.done [#allocation11], 384
    $region153: #{rvosnet_forward.2} parent=1 // pred_fallthru
      _
    // Predicated region
    $region154: #{rvosnet_forward.2} parent=1 // pred_check
      _
    $region155: #{rvosnet_forward.2} parent=1 // pred_check_branch
      %426 = sbr.rel (0) target = $region157
    $region156: #{rvosnet_forward.2} parent=1 // pred_region
      %428 = dma.done [#allocation14], 3072
    $region157: #{rvosnet_forward.2} parent=1 // pred_fallthru
      _
    // Predicated region
    $region158: #{rvosnet_forward.2} parent=1 // pred_check
      _
    $region159: #{rvosnet_forward.2} parent=1 // pred_check_branch
      %430 = sbr.rel (0) target = $region161
    $region160: #{rvosnet_forward.2} parent=1 // pred_region
      %432 = dma.done [#allocation14], 1536
    $region161: #{rvosnet_forward.2} parent=1 // pred_fallthru
      _
    // Predicated region
    $region162: #{rvosnet_forward.2} parent=1 // pred_check
      _
    $region163: #{rvosnet_forward.2} parent=1 // pred_check_branch
      %434 = sbr.rel (0) target = $region165
    $region164: #{rvosnet_forward.2} parent=1 // pred_region
      %436 = dma.done [#allocation17], 1536
    $region165: #{rvosnet_forward.2} parent=1 // pred_fallthru
      _
    // Predicated region
    $region166: #{rvosnet_forward.2} parent=1 // pred_check
      _
    $region167: #{rvosnet_forward.2} parent=1 // pred_check_branch
      %438 = sbr.rel (0) target = $region169
    $region168: #{rvosnet_forward.2} parent=1 // pred_region
      %440 = dma.done [#allocation17], 3072
    $region169: #{rvosnet_forward.2} parent=1 // pred_fallthru
      _
    // Predicated region
    $region170: #{rvosnet_forward.2} parent=1 // pred_check
      _
    $region171: #{rvosnet_forward.2} parent=1 // pred_check_branch
      %442 = sbr.rel (0) target = $region173
    $region172: #{rvosnet_forward.2} parent=1 // pred_region
      %444 = dma.done [#allocation20], 3072
    $region173: #{rvosnet_forward.2} parent=1 // pred_fallthru
      _
    // Predicated region
    $region174: #{rvosnet_forward.2} parent=1 // pred_check
      _
    $region175: #{rvosnet_forward.2} parent=1 // pred_check_branch
      %446 = sbr.rel (0) target = $region177
    $region176: #{rvosnet_forward.2} parent=1 // pred_region
      %448 = dma.done [#allocation20], 16
    $region177: #{rvosnet_forward.2} parent=1 // pred_fallthru
      _
    // Predicated region
    $region178: #{rvosnet_forward.2} parent=1 // pred_check
      _
    $region179: #{rvosnet_forward.2} parent=1 // pred_check_branch
      %450 = sbr.rel (0) target = $region181
    $region180: #{rvosnet_forward.2} parent=1 // pred_region
      %452 = dma.done [#allocation23], 16
    $region181: #{rvosnet_forward.2} parent=1 // pred_fallthru
      _
    // Predicated region
    $region182: #{rvosnet_forward.2} parent=1 // pred_check
      _
    $region183: #{rvosnet_forward.2} parent=1 // pred_check_branch
      %454 = sbr.rel (0) target = $region185
    $region184: #{rvosnet_forward.2} parent=1 // pred_region
      %456 = dma.done [#allocation23], 16
    $region185: #{rvosnet_forward.2} parent=1 // pred_fallthru
      _
    // Predicated region
    $region186: #{rvosnet_forward.2} parent=1 // pred_check
      _
    $region187: #{rvosnet_forward.2} parent=1 // pred_check_branch
      %458 = sbr.rel (0) target = $region189
    $region188: #{rvosnet_forward.2} parent=1 // pred_region
      %460 = dma.done [#allocation26], 16
    $region189: #{rvosnet_forward.2} parent=1 // pred_fallthru
      _
    // Predicated region
    $region190: #{rvosnet_forward.2} parent=1 // pred_check
      _
    $region191: #{rvosnet_forward.2} parent=1 // pred_check_branch
      %462 = sbr.rel (0) target = $region193
    $region192: #{rvosnet_forward.2} parent=1 // pred_region
      %464 = dma.done [#allocation26], 16
    $region193: #{rvosnet_forward.2} parent=1 // pred_fallthru
      _
    // Predicated region
    $region194: #{rvosnet_forward.2} parent=1 // pred_check
      _
    $region195: #{rvosnet_forward.2} parent=1 // pred_check_branch
      %466 = sbr.rel (0) target = $region197
    $region196: #{rvosnet_forward.2} parent=1 // pred_region
      %468 = dma.done [#allocation29], 16
    $region197: #{rvosnet_forward.2} parent=1 // pred_fallthru
      _
    // Predicated region
    $region198: #{rvosnet_forward.2} parent=1 // pred_check
      _
    $region199: #{rvosnet_forward.2} parent=1 // pred_check_branch
      %470 = sbr.rel (0) target = $region201
    $region200: #{rvosnet_forward.2} parent=1 // pred_region
      %472 = dma.done [#allocation29], 16
    $region201: #{rvosnet_forward.2} parent=1 // pred_fallthru
      _
    // Predicated region
    $region202: #{rvosnet_forward.2} parent=1 // pred_check
      _
    $region203: #{rvosnet_forward.2} parent=1 // pred_check_branch
      %474 = sbr.rel (0) target = $region205
    $region204: #{rvosnet_forward.2} parent=1 // pred_region
      %476 = dma.done [#allocation32], 16
    $region205: #{rvosnet_forward.2} parent=1 // pred_fallthru
      _
    // Predicated region
    $region206: #{rvosnet_forward.2} parent=1 // pred_check
      _
    $region207: #{rvosnet_forward.2} parent=1 // pred_check_branch
      %478 = sbr.rel (0) target = $region209
    $region208: #{rvosnet_forward.2} parent=1 // pred_region
      %480 = dma.done [#allocation32], 16
    $region209: #{rvosnet_forward.2} parent=1 // pred_fallthru
      _
    // Predicated region
    $region210: #{rvosnet_forward.2} parent=1 // pred_check
      _
    $region211: #{rvosnet_forward.2} parent=1 // pred_check_branch
      %482 = sbr.rel (0) target = $region213
    $region212: #{rvosnet_forward.2} parent=1 // pred_region
      %484 = dma.done [#allocation35], 16
    $region213: #{rvosnet_forward.2} parent=1 // pred_fallthru
      _
    // Predicated region
    $region214: #{rvosnet_forward.2} parent=1 // pred_check
      _
    $region215: #{rvosnet_forward.2} parent=1 // pred_check_branch
      %486 = sbr.rel (0) target = $region217
    $region216: #{rvosnet_forward.2} parent=1 // pred_region
      %488 = dma.done [#allocation35], 16
    $region217: #{rvosnet_forward.2} parent=1 // pred_fallthru
      _
    // Predicated region
    $region218: #{rvosnet_forward.2} parent=1 // pred_check
      _
    $region219: #{rvosnet_forward.2} parent=1 // pred_check_branch
      %490 = sbr.rel (0) target = $region221
    $region220: #{rvosnet_forward.2} parent=1 // pred_region
      %492 = dma.done [#allocation38], 16
    $region221: #{rvosnet_forward.2} parent=1 // pred_fallthru
      _
    // Predicated region
    $region222: #{rvosnet_forward.2} parent=1 // pred_check
      _
    $region223: #{rvosnet_forward.2} parent=1 // pred_check_branch
      %494 = sbr.rel (0) target = $region225
    $region224: #{rvosnet_forward.2} parent=1 // pred_region
      %496 = dma.done [#allocation38], 16
    $region225: #{rvosnet_forward.2} parent=1 // pred_fallthru
      _
    %v498 = vld [vmem:[#allocation2] sm:$0xff]
    %v499 = vld [vmem:[#allocation2 + $0x8] sm:$0xff]
    %v500 = vld [vmem:[#allocation2 + $0x10] sm:$0xff]
    %v501 = vld [vmem:[#allocation2 + $0x18] sm:$0xff]
    %v502 = vrot.slane %v498, 7
    %v503 = vrot.slane %v499, 7
    %v504 = vrot.slane %v500, 7
    %v505 = vrot.slane %v501, 7
    %v506 = vlaneseq
    %v507 = vshrl.u32 %v506, 7
    %vm508 = vcmp.lt.s32.totalorder %v507, 1
    %v509 = vsel %vm508, %v504, %v505
    %v510 = vsel %vm508, %v503, %v504
    %v511 = vsel %vm508, %v502, %v503
    %v512 = vsel %vm508, %v505, %v502
    %v513 = vld [vmem:[%s3] sm:$0xff]
    %v514 = vld [vmem:[%s3 + $0x8] sm:$0xff]
    %v515 = vld [vmem:[%s3 + $0x10] sm:$0xff]
    %v516 = vld [vmem:[%s3 + $0x18] sm:$0xff]
    %518 = vset.pattern.permute.xlu0 0
    %519 = vperm.xlu0 %518, %v513
    %v520 = vpop.permute.xlu0 %519
    %523 = vset.pattern.permute.xlu0 0
    %524 = vperm.xlu0 %523, %v514
    %v525 = vpop.permute.xlu0 %524
    %528 = vset.pattern.permute.xlu0 0
    %529 = vperm.xlu0 %528, %v515
    %v530 = vpop.permute.xlu0 %529
    %533 = vset.pattern.permute.xlu0 0
    %534 = vperm.xlu0 %533, %v516
    %v535 = vpop.permute.xlu0 %534
    %v537 = vmul.f32 %v512, %v520
    %v538 = vmul.f32 %v511, %v525
    %v539 = vmul.f32 %v510, %v530
    %v540 = vmul.f32 %v509, %v535
    %v541 = vrot.slane %v498, 1
    %v542 = vrot.slane %v499, 1
    %v543 = vrot.slane %v500, 1
    %v544 = vrot.slane %v501, 1
    %vm545 = vcmp.lt.s32.totalorder %v507, 7
    %v546 = vsel %vm545, %v543, %v544
    %v547 = vsel %vm545, %v542, %v543
    %v548 = vsel %vm545, %v541, %v542
    %v549 = vsel %vm545, %v544, %v541
    %s550 = scalar_lea.vmem %s3, 32
    %v551 = vld [vmem:[%s550] sm:$0xff]
    %v552 = vld [vmem:[%s550 + $0x8] sm:$0xff]
    %v553 = vld [vmem:[%s550 + $0x10] sm:$0xff]
    %v554 = vld [vmem:[%s550 + $0x18] sm:$0xff]
    %556 = vset.pattern.permute.xlu0 0
    %557 = vperm.xlu0 %556, %v551
    %v558 = vpop.permute.xlu0 %557
    %561 = vset.pattern.permute.xlu0 0
    %562 = vperm.xlu0 %561, %v552
    %v563 = vpop.permute.xlu0 %562
    %566 = vset.pattern.permute.xlu0 0
    %567 = vperm.xlu0 %566, %v553
    %v568 = vpop.permute.xlu0 %567
    %571 = vset.pattern.permute.xlu0 0
    %572 = vperm.xlu0 %571, %v554
    %v573 = vpop.permute.xlu0 %572
    %v575 = vmul.f32 %v548, %v558
    %v576 = vmul.f32 %v547, %v563
    %v577 = vmul.f32 %v546, %v568
    %v578 = vmul.f32 %v549, %v573
    %v579 = vpack.c.bf16 %v538, %v537
    %v580 = vpack.c.bf16 %v540, %v539
    %v581 = vld [vmem:[#allocation12] sm:$0xf]
    %v582 = vld [vmem:[#allocation12 + $0x4] sm:$0xf]
    %v583 = vpack.c.bf16 %v499, %v498
    %v584 = vpack.c.bf16 %v501, %v500
    %s585 = scalar_lea.vmem [#allocation12], 8
    %v586 = vld [vmem:[%s585] sm:$0xf]
    %v587 = vld [vmem:[%s585 + $0x4] sm:$0xf]
    %v590 = vunpack.c.l.b16 %v586
    %v591 = vunpack.c.l.b16 %v587
    %v592 = vpack.c.b16 %v591, %v590
    %vm594 = vcmask 130048
    %v596 = vsel %vm594, %v583, 0
    %v599 = vsel %vm594, %v584, 0
    %601 = vmatpush.bf16.msra.mxu0 0
    %602 = vmatpush.bf16.msra.mxu0 0
    %603 = vmatpush.bf16.msra.mxu0 0
    %604 = vmatpush.bf16.msra.mxu0 0
    %605 = vmatpush.bf16.msra.mxu0 0
    %606 = vmatpush.bf16.msra.mxu0 0
    %607 = vmatpush.bf16.msra.mxu0 0
    %608 = vmatpush.bf16.msra.mxu0 %v592
    %609 = vmatmul.bf16.gmra.mxu0 %v596
    %v610 = vpop.f32.mrf.mxu0
    %v611 = vadd.f32 0.0, %v610
    %v612 = vpop.f32.mrf.mxu0
    %v613 = vadd.f32 0.0, %v612
    %614 = vmatmul.bf16.gmra.mxu0 %v599
    %v615 = vpop.f32.mrf.mxu0
    %v616 = vadd.f32 0.0, %v615
    %v617 = vpop.f32.mrf.mxu0
    %v618 = vadd.f32 0.0, %v617
    %619 = vdwg.mxu0
    %v622 = vunpack.c.l.b16 %v581
    %v623 = vunpack.c.l.b16 %v582
    %v624 = vpack.c.b16 %v623, %v622
    %v627 = vsel %vm594, %v579, 0
    %v630 = vsel %vm594, %v580, 0
    %632 = vmatpush.bf16.msra.mxu0 0
    %633 = vmatpush.bf16.msra.mxu0 0
    %634 = vmatpush.bf16.msra.mxu0 0
    %635 = vmatpush.bf16.msra.mxu0 0
    %636 = vmatpush.bf16.msra.mxu0 0
    %637 = vmatpush.bf16.msra.mxu0 0
    %638 = vmatpush.bf16.msra.mxu0 0
    %639 = vmatpush.bf16.msra.mxu0 %v624
    %640 = vmatmul.bf16.gmra.mxu0 %v627
    %v641 = vpop.f32.mrf.mxu0
    %v642 = vadd.f32 %v611, %v641
    %v643 = vpop.f32.mrf.mxu0
    %v644 = vadd.f32 %v613, %v643
    %645 = vmatmul.bf16.gmra.mxu0 %v630
    %v646 = vpop.f32.mrf.mxu0
    %v647 = vadd.f32 %v616, %v646
    %v648 = vpop.f32.mrf.mxu0
    %v649 = vadd.f32 %v618, %v648
    %650 = vdwg.mxu0
    %v651 = vpack.c.bf16 %v576, %v575
    %v652 = vpack.c.bf16 %v578, %v577
    %s653 = scalar_lea.vmem [#allocation12], 16
    %v654 = vld [vmem:[%s653] sm:$0xf]
    %v655 = vld [vmem:[%s653 + $0x4] sm:$0xf]
    %v658 = vunpack.c.l.b16 %v654
    %v659 = vunpack.c.l.b16 %v655
    %v660 = vpack.c.b16 %v659, %v658
    %v663 = vsel %vm594, %v651, 0
    %v666 = vsel %vm594, %v652, 0
    %668 = vmatpush.bf16.msra.mxu0 0
    %669 = vmatpush.bf16.msra.mxu0 0
    %670 = vmatpush.bf16.msra.mxu0 0
    %671 = vmatpush.bf16.msra.mxu0 0
    %672 = vmatpush.bf16.msra.mxu0 0
    %673 = vmatpush.bf16.msra.mxu0 0
    %674 = vmatpush.bf16.msra.mxu0 0
    %675 = vmatpush.bf16.msra.mxu0 %v660
    %676 = vmatmul.bf16.gmra.mxu0 %v663
    %v677 = vpop.f32.mrf.mxu0
    %v678 = vadd.f32 0.0, %v677
    %v679 = vpop.f32.mrf.mxu0
    %v680 = vadd.f32 0.0, %v679
    %681 = vmatmul.bf16.gmra.mxu0 %v666
    %v682 = vpop.f32.mrf.mxu0
    %v683 = vadd.f32 0.0, %v682
    %v684 = vpop.f32.mrf.mxu0
    %v685 = vadd.f32 0.0, %v684
    %686 = vdwg.mxu0
    %v687 = vadd.f32 %v642, %v678
    %v688 = vadd.f32 %v644, %v680
    %v689 = vadd.f32 %v647, %v683
    %v690 = vadd.f32 %v649, %v685
    %v691 = vld [vmem:[#allocation21] sm:$0x1]
    %v693 = vperm.slane %v691, 0
    %v695 = vadd.f32 %v687, %v693
    %v696 = vadd.f32 %v688, %v693
    %v697 = vadd.f32 %v689, %v693
    %v698 = vadd.f32 %v690, %v693
    %v699 = vmax.f32 %v695, 0.0
    %v700 = vmax.f32 %v696, 0.0
    %v701 = vmax.f32 %v697, 0.0
    %v702 = vmax.f32 %v698, 0.0
    %v703 = vrot.slane %v699, 7
    %v704 = vrot.slane %v700, 7
    %v705 = vrot.slane %v701, 7
    %v706 = vrot.slane %v702, 7
    %v707 = vsel %vm508, %v705, %v706
    %v708 = vsel %vm508, %v704, %v705
    %v709 = vsel %vm508, %v703, %v704
    %v710 = vsel %vm508, %v706, %v703
    %v711 = vmul.f32 %v710, %v520
    %v712 = vmul.f32 %v709, %v525
    %v713 = vmul.f32 %v708, %v530
    %v714 = vmul.f32 %v707, %v535
    %v715 = vrot.slane %v699, 1
    %v716 = vrot.slane %v700, 1
    %v717 = vrot.slane %v701, 1
    %v718 = vrot.slane %v702, 1
    %v719 = vsel %vm545, %v717, %v718
    %v720 = vsel %vm545, %v716, %v717
    %v721 = vsel %vm545, %v715, %v716
    %v722 = vsel %vm545, %v718, %v715
    %v723 = vmul.f32 %v721, %v558
    %v724 = vmul.f32 %v720, %v563
    %v725 = vmul.f32 %v719, %v568
    %v726 = vmul.f32 %v722, %v573
    %v727 = vpack.c.bf16 %v712, %v711
    %v728 = vpack.c.bf16 %v714, %v713
    %v729 = vld [vmem:[#allocation13] sm:$0xf]
    %v730 = vld [vmem:[#allocation13 + $0x4] sm:$0xf]
    %v731 = vld [vmem:[#allocation13 + $0x8] sm:$0xf]
    %v732 = vld [vmem:[#allocation13 + $0xc] sm:$0xf]
    %v733 = vld [vmem:[#allocation13 + $0x10] sm:$0xf]
    %v734 = vld [vmem:[#allocation13 + $0x14] sm:$0xf]
    %v735 = vld [vmem:[#allocation13 + $0x18] sm:$0xf]
    %v736 = vld [vmem:[#allocation13 + $0x1c] sm:$0xf]
    %v737 = vld [vmem:[#allocation13 + $0x20] sm:$0xf]
    %v738 = vld [vmem:[#allocation13 + $0x24] sm:$0xf]
    %v739 = vld [vmem:[#allocation13 + $0x28] sm:$0xf]
    %v740 = vld [vmem:[#allocation13 + $0x2c] sm:$0xf]
    %v741 = vld [vmem:[#allocation13 + $0x30] sm:$0xf]
    %v742 = vld [vmem:[#allocation13 + $0x34] sm:$0xf]
    %v743 = vld [vmem:[#allocation13 + $0x38] sm:$0xf]
    %v744 = vld [vmem:[#allocation13 + $0x3c] sm:$0xf]
    %v745 = vpack.c.bf16 %v700, %v699
    %v746 = vpack.c.bf16 %v702, %v701
    %s747 = scalar_lea.vmem [#allocation13], 64
    %v748 = vld [vmem:[%s747] sm:$0xf]
    %v749 = vld [vmem:[%s747 + $0x4] sm:$0xf]
    %v750 = vld [vmem:[%s747 + $0x8] sm:$0xf]
    %v751 = vld [vmem:[%s747 + $0xc] sm:$0xf]
    %v752 = vld [vmem:[%s747 + $0x10] sm:$0xf]
    %v753 = vld [vmem:[%s747 + $0x14] sm:$0xf]
    %v754 = vld [vmem:[%s747 + $0x18] sm:$0xf]
    %v755 = vld [vmem:[%s747 + $0x1c] sm:$0xf]
    %v756 = vld [vmem:[%s747 + $0x20] sm:$0xf]
    %v757 = vld [vmem:[%s747 + $0x24] sm:$0xf]
    %v758 = vld [vmem:[%s747 + $0x28] sm:$0xf]
    %v759 = vld [vmem:[%s747 + $0x2c] sm:$0xf]
    %v760 = vld [vmem:[%s747 + $0x30] sm:$0xf]
    %v761 = vld [vmem:[%s747 + $0x34] sm:$0xf]
    %v762 = vld [vmem:[%s747 + $0x38] sm:$0xf]
    %v763 = vld [vmem:[%s747 + $0x3c] sm:$0xf]
    %v780 = vunpack.c.l.b16 %v748
    %v781 = vunpack.c.l.b16 %v749
    %v782 = vunpack.c.l.b16 %v750
    %v783 = vunpack.c.l.b16 %v751
    %v784 = vunpack.c.l.b16 %v752
    %v785 = vunpack.c.l.b16 %v753
    %v786 = vunpack.c.l.b16 %v754
    %v787 = vunpack.c.l.b16 %v755
    %v788 = vunpack.c.l.b16 %v756
    %v789 = vunpack.c.l.b16 %v757
    %v790 = vunpack.c.l.b16 %v758
    %v791 = vunpack.c.l.b16 %v759
    %v792 = vunpack.c.l.b16 %v760
    %v793 = vunpack.c.l.b16 %v761
    %v794 = vunpack.c.l.b16 %v762
    %v795 = vunpack.c.l.b16 %v763
    %v796 = vpack.c.b16 %v781, %v780
    %v797 = vpack.c.b16 %v783, %v782
    %v798 = vpack.c.b16 %v785, %v784
    %v799 = vpack.c.b16 %v787, %v786
    %v800 = vpack.c.b16 %v789, %v788
    %v801 = vpack.c.b16 %v791, %v790
    %v802 = vpack.c.b16 %v793, %v792
    %v803 = vpack.c.b16 %v795, %v794
    %812 = vmatpush.bf16.msra.mxu0 %v803
    %813 = vmatpush.bf16.msra.mxu0 %v802
    %814 = vmatpush.bf16.msra.mxu0 %v801
    %815 = vmatpush.bf16.msra.mxu0 %v800
    %816 = vmatpush.bf16.msra.mxu0 %v799
    %817 = vmatpush.bf16.msra.mxu0 %v798
    %818 = vmatpush.bf16.msra.mxu0 %v797
    %819 = vmatpush.bf16.msra.mxu0 %v796
    %820 = vmatmul.bf16.gmra.mxu0 %v745
    %v821 = vpop.f32.mrf.mxu0
    %v822 = vadd.f32 0.0, %v821
    %v823 = vpop.f32.mrf.mxu0
    %v824 = vadd.f32 0.0, %v823
    %825 = vmatmul.bf16.gmra.mxu0 %v746
    %v826 = vpop.f32.mrf.mxu0
    %v827 = vadd.f32 0.0, %v826
    %v828 = vpop.f32.mrf.mxu0
    %v829 = vadd.f32 0.0, %v828
    %830 = vdwg.mxu0
    %v847 = vunpack.c.l.b16 %v729
    %v848 = vunpack.c.l.b16 %v730
    %v849 = vunpack.c.l.b16 %v731
    %v850 = vunpack.c.l.b16 %v732
    %v851 = vunpack.c.l.b16 %v733
    %v852 = vunpack.c.l.b16 %v734
    %v853 = vunpack.c.l.b16 %v735
    %v854 = vunpack.c.l.b16 %v736
    %v855 = vunpack.c.l.b16 %v737
    %v856 = vunpack.c.l.b16 %v738
    %v857 = vunpack.c.l.b16 %v739
    %v858 = vunpack.c.l.b16 %v740
    %v859 = vunpack.c.l.b16 %v741
    %v860 = vunpack.c.l.b16 %v742
    %v861 = vunpack.c.l.b16 %v743
    %v862 = vunpack.c.l.b16 %v744
    %v863 = vpack.c.b16 %v848, %v847
    %v864 = vpack.c.b16 %v850, %v849
    %v865 = vpack.c.b16 %v852, %v851
    %v866 = vpack.c.b16 %v854, %v853
    %v867 = vpack.c.b16 %v856, %v855
    %v868 = vpack.c.b16 %v858, %v857
    %v869 = vpack.c.b16 %v860, %v859
    %v870 = vpack.c.b16 %v862, %v861
    %879 = vmatpush.bf16.msra.mxu0 %v870
    %880 = vmatpush.bf16.msra.mxu0 %v869
    %881 = vmatpush.bf16.msra.mxu0 %v868
    %882 = vmatpush.bf16.msra.mxu0 %v867
    %883 = vmatpush.bf16.msra.mxu0 %v866
    %884 = vmatpush.bf16.msra.mxu0 %v865
    %885 = vmatpush.bf16.msra.mxu0 %v864
    %886 = vmatpush.bf16.msra.mxu0 %v863
    %887 = vmatmul.bf16.gmra.mxu0 %v727
    %v888 = vpop.f32.mrf.mxu0
    %v889 = vadd.f32 %v822, %v888
    %v890 = vpop.f32.mrf.mxu0
    %v891 = vadd.f32 %v824, %v890
    %892 = vmatmul.bf16.gmra.mxu0 %v728
    %v893 = vpop.f32.mrf.mxu0
    %v894 = vadd.f32 %v827, %v893
    %v895 = vpop.f32.mrf.mxu0
    %v896 = vadd.f32 %v829, %v895
    %897 = vdwg.mxu0
    %v898 = vpack.c.bf16 %v724, %v723
    %v899 = vpack.c.bf16 %v726, %v725
    %s900 = scalar_lea.vmem [#allocation13], 128
    %v901 = vld [vmem:[%s900] sm:$0xf]
    %v902 = vld [vmem:[%s900 + $0x4] sm:$0xf]
    %v903 = vld [vmem:[%s900 + $0x8] sm:$0xf]
    %v904 = vld [vmem:[%s900 + $0xc] sm:$0xf]
    %v905 = vld [vmem:[%s900 + $0x10] sm:$0xf]
    %v906 = vld [vmem:[%s900 + $0x14] sm:$0xf]
    %v907 = vld [vmem:[%s900 + $0x18] sm:$0xf]
    %v908 = vld [vmem:[%s900 + $0x1c] sm:$0xf]
    %v909 = vld [vmem:[%s900 + $0x20] sm:$0xf]
    %v910 = vld [vmem:[%s900 + $0x24] sm:$0xf]
    %v911 = vld [vmem:[%s900 + $0x28] sm:$0xf]
    %v912 = vld [vmem:[%s900 + $0x2c] sm:$0xf]
    %v913 = vld [vmem:[%s900 + $0x30] sm:$0xf]
    %v914 = vld [vmem:[%s900 + $0x34] sm:$0xf]
    %v915 = vld [vmem:[%s900 + $0x38] sm:$0xf]
    %v916 = vld [vmem:[%s900 + $0x3c] sm:$0xf]
    %v933 = vunpack.c.l.b16 %v901
    %v934 = vunpack.c.l.b16 %v902
    %v935 = vunpack.c.l.b16 %v903
    %v936 = vunpack.c.l.b16 %v904
    %v937 = vunpack.c.l.b16 %v905
    %v938 = vunpack.c.l.b16 %v906
    %v939 = vunpack.c.l.b16 %v907
    %v940 = vunpack.c.l.b16 %v908
    %v941 = vunpack.c.l.b16 %v909
    %v942 = vunpack.c.l.b16 %v910
    %v943 = vunpack.c.l.b16 %v911
    %v944 = vunpack.c.l.b16 %v912
    %v945 = vunpack.c.l.b16 %v913
    %v946 = vunpack.c.l.b16 %v914
    %v947 = vunpack.c.l.b16 %v915
    %v948 = vunpack.c.l.b16 %v916
    %v949 = vpack.c.b16 %v934, %v933
    %v950 = vpack.c.b16 %v936, %v935
    %v951 = vpack.c.b16 %v938, %v937
    %v952 = vpack.c.b16 %v940, %v939
    %v953 = vpack.c.b16 %v942, %v941
    %v954 = vpack.c.b16 %v944, %v943
    %v955 = vpack.c.b16 %v946, %v945
    %v956 = vpack.c.b16 %v948, %v947
    %965 = vmatpush.bf16.msra.mxu0 %v956
    %966 = vmatpush.bf16.msra.mxu0 %v955
    %967 = vmatpush.bf16.msra.mxu0 %v954
    %968 = vmatpush.bf16.msra.mxu0 %v953
    %969 = vmatpush.bf16.msra.mxu0 %v952
    %970 = vmatpush.bf16.msra.mxu0 %v951
    %971 = vmatpush.bf16.msra.mxu0 %v950
    %972 = vmatpush.bf16.msra.mxu0 %v949
    %973 = vmatmul.bf16.gmra.mxu0 %v898
    %v974 = vpop.f32.mrf.mxu0
    %v975 = vadd.f32 0.0, %v974
    %v976 = vpop.f32.mrf.mxu0
    %v977 = vadd.f32 0.0, %v976
    %978 = vmatmul.bf16.gmra.mxu0 %v899
    %v979 = vpop.f32.mrf.mxu0
    %v980 = vadd.f32 0.0, %v979
    %v981 = vpop.f32.mrf.mxu0
    %v982 = vadd.f32 0.0, %v981
    %983 = vdwg.mxu0
    %v984 = vadd.f32 %v889, %v975
    %v985 = vadd.f32 %v891, %v977
    %v986 = vadd.f32 %v894, %v980
    %v987 = vadd.f32 %v896, %v982
    %v988 = vld [vmem:[#allocation22] sm:$0x1]
    %v990 = vperm.slane %v988, 0
    %v992 = vadd.f32 %v984, %v990
    %v993 = vadd.f32 %v985, %v990
    %v994 = vadd.f32 %v986, %v990
    %v995 = vadd.f32 %v987, %v990
    %v996 = vadd.f32 %v699, %v992
    %v997 = vadd.f32 %v700, %v993
    %v998 = vadd.f32 %v701, %v994
    %v999 = vadd.f32 %v702, %v995
    %v1000 = vmax.f32 %v996, 0.0
    %v1001 = vmax.f32 %v997, 0.0
    %v1002 = vmax.f32 %v998, 0.0
    %v1003 = vmax.f32 %v999, 0.0
    %v1004 = vrot.slane %v1000, 7
    %v1005 = vrot.slane %v1001, 7
    %v1006 = vrot.slane %v1002, 7
    %v1007 = vrot.slane %v1003, 7
    %v1008 = vsel %vm508, %v1006, %v1007
    %v1009 = vsel %vm508, %v1005, %v1006
    %v1010 = vsel %vm508, %v1004, %v1005
    %v1011 = vsel %vm508, %v1007, %v1004
    %v1012 = vmul.f32 %v1011, %v520
    %v1013 = vmul.f32 %v1010, %v525
    %v1014 = vmul.f32 %v1009, %v530
    %v1015 = vmul.f32 %v1008, %v535
    %v1016 = vrot.slane %v1000, 1
    %v1017 = vrot.slane %v1001, 1
    %v1018 = vrot.slane %v1002, 1
    %v1019 = vrot.slane %v1003, 1
    %v1020 = vsel %vm545, %v1018, %v1019
    %v1021 = vsel %vm545, %v1017, %v1018
    %v1022 = vsel %vm545, %v1016, %v1017
    %v1023 = vsel %vm545, %v1019, %v1016
    %v1024 = vmul.f32 %v1022, %v558
    %v1025 = vmul.f32 %v1021, %v563
    %v1026 = vmul.f32 %v1020, %v568
    %v1027 = vmul.f32 %v1023, %v573
    %v1028 = vpack.c.bf16 %v1013, %v1012
    %v1029 = vpack.c.bf16 %v1015, %v1014
    %v1030 = vld [vmem:[#allocation18] sm:$0xf]
    %v1031 = vld [vmem:[#allocation18 + $0x4] sm:$0xf]
    %v1032 = vld [vmem:[#allocation18 + $0x8] sm:$0xf]
    %v1033 = vld [vmem:[#allocation18 + $0xc] sm:$0xf]
    %v1034 = vld [vmem:[#allocation18 + $0x10] sm:$0xf]
    %v1035 = vld [vmem:[#allocation18 + $0x14] sm:$0xf]
    %v1036 = vld [vmem:[#allocation18 + $0x18] sm:$0xf]
    %v1037 = vld [vmem:[#allocation18 + $0x1c] sm:$0xf]
    %v1038 = vld [vmem:[#allocation18 + $0x20] sm:$0xf]
    %v1039 = vld [vmem:[#allocation18 + $0x24] sm:$0xf]
    %v1040 = vld [vmem:[#allocation18 + $0x28] sm:$0xf]
    %v1041 = vld [vmem:[#allocation18 + $0x2c] sm:$0xf]
    %v1042 = vld [vmem:[#allocation18 + $0x30] sm:$0xf]
    %v1043 = vld [vmem:[#allocation18 + $0x34] sm:$0xf]
    %v1044 = vld [vmem:[#allocation18 + $0x38] sm:$0xf]
    %v1045 = vld [vmem:[#allocation18 + $0x3c] sm:$0xf]
    %v1046 = vpack.c.bf16 %v1001, %v1000
    %v1047 = vpack.c.bf16 %v1003, %v1002
    %s1048 = scalar_lea.vmem [#allocation18], 64
    %v1049 = vld [vmem:[%s1048] sm:$0xf]
    %v1050 = vld [vmem:[%s1048 + $0x4] sm:$0xf]
    %v1051 = vld [vmem:[%s1048 + $0x8] sm:$0xf]
    %v1052 = vld [vmem:[%s1048 + $0xc] sm:$0xf]
    %v1053 = vld [vmem:[%s1048 + $0x10] sm:$0xf]
    %v1054 = vld [vmem:[%s1048 + $0x14] sm:$0xf]
    %v1055 = vld [vmem:[%s1048 + $0x18] sm:$0xf]
    %v1056 = vld [vmem:[%s1048 + $0x1c] sm:$0xf]
    %v1057 = vld [vmem:[%s1048 + $0x20] sm:$0xf]
    %v1058 = vld [vmem:[%s1048 + $0x24] sm:$0xf]
    %v1059 = vld [vmem:[%s1048 + $0x28] sm:$0xf]
    %v1060 = vld [vmem:[%s1048 + $0x2c] sm:$0xf]
    %v1061 = vld [vmem:[%s1048 + $0x30] sm:$0xf]
    %v1062 = vld [vmem:[%s1048 + $0x34] sm:$0xf]
    %v1063 = vld [vmem:[%s1048 + $0x38] sm:$0xf]
    %v1064 = vld [vmem:[%s1048 + $0x3c] sm:$0xf]
    %v1081 = vunpack.c.l.b16 %v1049
    %v1082 = vunpack.c.l.b16 %v1050
    %v1083 = vunpack.c.l.b16 %v1051
    %v1084 = vunpack.c.l.b16 %v1052
    %v1085 = vunpack.c.l.b16 %v1053
    %v1086 = vunpack.c.l.b16 %v1054
    %v1087 = vunpack.c.l.b16 %v1055
    %v1088 = vunpack.c.l.b16 %v1056
    %v1089 = vunpack.c.l.b16 %v1057
    %v1090 = vunpack.c.l.b16 %v1058
    %v1091 = vunpack.c.l.b16 %v1059
    %v1092 = vunpack.c.l.b16 %v1060
    %v1093 = vunpack.c.l.b16 %v1061
    %v1094 = vunpack.c.l.b16 %v1062
    %v1095 = vunpack.c.l.b16 %v1063
    %v1096 = vunpack.c.l.b16 %v1064
    %v1097 = vpack.c.b16 %v1082, %v1081
    %v1098 = vpack.c.b16 %v1084, %v1083
    %v1099 = vpack.c.b16 %v1086, %v1085
    %v1100 = vpack.c.b16 %v1088, %v1087
    %v1101 = vpack.c.b16 %v1090, %v1089
    %v1102 = vpack.c.b16 %v1092, %v1091
    %v1103 = vpack.c.b16 %v1094, %v1093
    %v1104 = vpack.c.b16 %v1096, %v1095
    %1113 = vmatpush.bf16.msra.mxu0 %v1104
    %1114 = vmatpush.bf16.msra.mxu0 %v1103
    %1115 = vmatpush.bf16.msra.mxu0 %v1102
    %1116 = vmatpush.bf16.msra.mxu0 %v1101
    %1117 = vmatpush.bf16.msra.mxu0 %v1100
    %1118 = vmatpush.bf16.msra.mxu0 %v1099
    %1119 = vmatpush.bf16.msra.mxu0 %v1098
    %1120 = vmatpush.bf16.msra.mxu0 %v1097
    %1121 = vmatmul.bf16.gmra.mxu0 %v1046
    %v1122 = vpop.f32.mrf.mxu0
    %v1123 = vadd.f32 0.0, %v1122
    %v1124 = vpop.f32.mrf.mxu0
    %v1125 = vadd.f32 0.0, %v1124
    %1126 = vmatmul.bf16.gmra.mxu0 %v1047
    %v1127 = vpop.f32.mrf.mxu0
    %v1128 = vadd.f32 0.0, %v1127
    %v1129 = vpop.f32.mrf.mxu0
    %v1130 = vadd.f32 0.0, %v1129
    %1131 = vdwg.mxu0
    %v1148 = vunpack.c.l.b16 %v1030
    %v1149 = vunpack.c.l.b16 %v1031
    %v1150 = vunpack.c.l.b16 %v1032
    %v1151 = vunpack.c.l.b16 %v1033
    %v1152 = vunpack.c.l.b16 %v1034
    %v1153 = vunpack.c.l.b16 %v1035
    %v1154 = vunpack.c.l.b16 %v1036
    %v1155 = vunpack.c.l.b16 %v1037
    %v1156 = vunpack.c.l.b16 %v1038
    %v1157 = vunpack.c.l.b16 %v1039
    %v1158 = vunpack.c.l.b16 %v1040
    %v1159 = vunpack.c.l.b16 %v1041
    %v1160 = vunpack.c.l.b16 %v1042
    %v1161 = vunpack.c.l.b16 %v1043
    %v1162 = vunpack.c.l.b16 %v1044
    %v1163 = vunpack.c.l.b16 %v1045
    %v1164 = vpack.c.b16 %v1149, %v1148
    %v1165 = vpack.c.b16 %v1151, %v1150
    %v1166 = vpack.c.b16 %v1153, %v1152
    %v1167 = vpack.c.b16 %v1155, %v1154
    %v1168 = vpack.c.b16 %v1157, %v1156
    %v1169 = vpack.c.b16 %v1159, %v1158
    %v1170 = vpack.c.b16 %v1161, %v1160
    %v1171 = vpack.c.b16 %v1163, %v1162
    %1180 = vmatpush.bf16.msra.mxu0 %v1171
    %1181 = vmatpush.bf16.msra.mxu0 %v1170
    %1182 = vmatpush.bf16.msra.mxu0 %v1169
    %1183 = vmatpush.bf16.msra.mxu0 %v1168
    %1184 = vmatpush.bf16.msra.mxu0 %v1167
    %1185 = vmatpush.bf16.msra.mxu0 %v1166
    %1186 = vmatpush.bf16.msra.mxu0 %v1165
    %1187 = vmatpush.bf16.msra.mxu0 %v1164
    %1188 = vmatmul.bf16.gmra.mxu0 %v1028
    %v1189 = vpop.f32.mrf.mxu0
    %v1190 = vadd.f32 %v1123, %v1189
    %v1191 = vpop.f32.mrf.mxu0
    %v1192 = vadd.f32 %v1125, %v1191
    %1193 = vmatmul.bf16.gmra.mxu0 %v1029
    %v1194 = vpop.f32.mrf.mxu0
    %v1195 = vadd.f32 %v1128, %v1194
    %v1196 = vpop.f32.mrf.mxu0
    %v1197 = vadd.f32 %v1130, %v1196
    %1198 = vdwg.mxu0
    %v1199 = vpack.c.bf16 %v1025, %v1024
    %v1200 = vpack.c.bf16 %v1027, %v1026
    %s1201 = scalar_lea.vmem [#allocation18], 128
    %v1202 = vld [vmem:[%s1201] sm:$0xf]
    %v1203 = vld [vmem:[%s1201 + $0x4] sm:$0xf]
    %v1204 = vld [vmem:[%s1201 + $0x8] sm:$0xf]
    %v1205 = vld [vmem:[%s1201 + $0xc] sm:$0xf]
    %v1206 = vld [vmem:[%s1201 + $0x10] sm:$0xf]
    %v1207 = vld [vmem:[%s1201 + $0x14] sm:$0xf]
    %v1208 = vld [vmem:[%s1201 + $0x18] sm:$0xf]
    %v1209 = vld [vmem:[%s1201 + $0x1c] sm:$0xf]
    %v1210 = vld [vmem:[%s1201 + $0x20] sm:$0xf]
    %v1211 = vld [vmem:[%s1201 + $0x24] sm:$0xf]
    %v1212 = vld [vmem:[%s1201 + $0x28] sm:$0xf]
    %v1213 = vld [vmem:[%s1201 + $0x2c] sm:$0xf]
    %v1214 = vld [vmem:[%s1201 + $0x30] sm:$0xf]
    %v1215 = vld [vmem:[%s1201 + $0x34] sm:$0xf]
    %v1216 = vld [vmem:[%s1201 + $0x38] sm:$0xf]
    %v1217 = vld [vmem:[%s1201 + $0x3c] sm:$0xf]
    %v1234 = vunpack.c.l.b16 %v1202
    %v1235 = vunpack.c.l.b16 %v1203
    %v1236 = vunpack.c.l.b16 %v1204
    %v1237 = vunpack.c.l.b16 %v1205
    %v1238 = vunpack.c.l.b16 %v1206
    %v1239 = vunpack.c.l.b16 %v1207
    %v1240 = vunpack.c.l.b16 %v1208
    %v1241 = vunpack.c.l.b16 %v1209
    %v1242 = vunpack.c.l.b16 %v1210
    %v1243 = vunpack.c.l.b16 %v1211
    %v1244 = vunpack.c.l.b16 %v1212
    %v1245 = vunpack.c.l.b16 %v1213
    %v1246 = vunpack.c.l.b16 %v1214
    %v1247 = vunpack.c.l.b16 %v1215
    %v1248 = vunpack.c.l.b16 %v1216
    %v1249 = vunpack.c.l.b16 %v1217
    %v1250 = vpack.c.b16 %v1235, %v1234
    %v1251 = vpack.c.b16 %v1237, %v1236
    %v1252 = vpack.c.b16 %v1239, %v1238
    %v1253 = vpack.c.b16 %v1241, %v1240
    %v1254 = vpack.c.b16 %v1243, %v1242
    %v1255 = vpack.c.b16 %v1245, %v1244
    %v1256 = vpack.c.b16 %v1247, %v1246
    %v1257 = vpack.c.b16 %v1249, %v1248
    %1266 = vmatpush.bf16.msra.mxu0 %v1257
    %1267 = vmatpush.bf16.msra.mxu0 %v1256
    %1268 = vmatpush.bf16.msra.mxu0 %v1255
    %1269 = vmatpush.bf16.msra.mxu0 %v1254
    %1270 = vmatpush.bf16.msra.mxu0 %v1253
    %1271 = vmatpush.bf16.msra.mxu0 %v1252
    %1272 = vmatpush.bf16.msra.mxu0 %v1251
    %1273 = vmatpush.bf16.msra.mxu0 %v1250
    %1274 = vmatmul.bf16.gmra.mxu0 %v1199
    %v1275 = vpop.f32.mrf.mxu0
    %v1276 = vadd.f32 0.0, %v1275
    %v1277 = vpop.f32.mrf.mxu0
    %v1278 = vadd.f32 0.0, %v1277
    %1279 = vmatmul.bf16.gmra.mxu0 %v1200
    %v1280 = vpop.f32.mrf.mxu0
    %v1281 = vadd.f32 0.0, %v1280
    %v1282 = vpop.f32.mrf.mxu0
    %v1283 = vadd.f32 0.0, %v1282
    %1284 = vdwg.mxu0
    %v1285 = vadd.f32 %v1190, %v1276
    %v1286 = vadd.f32 %v1192, %v1278
    %v1287 = vadd.f32 %v1195, %v1281
    %v1288 = vadd.f32 %v1197, %v1283
    %v1289 = vld [vmem:[#allocation27] sm:$0x1]
    %v1291 = vperm.slane %v1289, 0
    %v1293 = vadd.f32 %v1285, %v1291
    %v1294 = vadd.f32 %v1286, %v1291
    %v1295 = vadd.f32 %v1287, %v1291
    %v1296 = vadd.f32 %v1288, %v1291
    %v1297 = vadd.f32 %v1293, %v1294
    %v1298 = vadd.f32 %v1297, %v1295
    %v1299 = vadd.f32 %v1298, %v1296
    %v1300 = vrot.slane %v1299, 4
    %v1301 = vadd.f32 %v1299, %v1300
    %v1302 = vrot.slane %v1301, 2
    %v1303 = vadd.f32 %v1301, %v1302
    %v1304 = vrot.slane %v1303, 1
    %v1305 = vadd.f32 %v1303, %v1304
    %v1306 = vmul.f32 %v1293, %v1293
    %v1307 = vmul.f32 %v1294, %v1294
    %v1308 = vmul.f32 %v1295, %v1295
    %v1309 = vmul.f32 %v1296, %v1296
    %v1310 = vadd.f32 %v1306, %v1307
    %v1311 = vadd.f32 %v1310, %v1308
    %v1312 = vadd.f32 %v1311, %v1309
    %v1313 = vrot.slane %v1312, 4
    %v1314 = vadd.f32 %v1312, %v1313
    %v1315 = vrot.slane %v1314, 2
    %v1316 = vadd.f32 %v1314, %v1315
    %v1317 = vrot.slane %v1316, 1
    %v1318 = vadd.f32 %v1316, %v1317
    %v1319 = vld [vmem:[#allocation7] sm:$0xff]
    %v1320 = vld [vmem:[#allocation7 + $0x8] sm:$0xff]
    %v1321 = vld [vmem:[#allocation7 + $0x10] sm:$0xff]
    %v1322 = vld [vmem:[#allocation7 + $0x18] sm:$0xff]
    %v1323 = vld [vmem:[#allocation7 + $0x20] sm:$0xff]
    %v1324 = vld [vmem:[#allocation7 + $0x28] sm:$0xff]
    %v1325 = vld [vmem:[#allocation7 + $0x30] sm:$0xff]
    %v1326 = vld [vmem:[#allocation7 + $0x38] sm:$0xff]
    %v1327 = vld [vmem:[#allocation7 + $0x40] sm:$0xff]
    %v1328 = vld [vmem:[#allocation7 + $0x48] sm:$0xff]
    %v1329 = vld [vmem:[#allocation7 + $0x50] sm:$0xff]
    %v1330 = vld [vmem:[#allocation7 + $0x58] sm:$0xff]
    %v1331 = vld [vmem:[#allocation7 + $0x60] sm:$0xff]
    %v1332 = vld [vmem:[#allocation7 + $0x68] sm:$0xff]
    %v1333 = vld [vmem:[#allocation7 + $0x70] sm:$0xff]
    %v1334 = vld [vmem:[#allocation7 + $0x78] sm:$0xff]
    %1335 = vmatpush.msra.mxu0 %v1334
    %1336 = vmatpush.msra.mxu0 %v1333
    %1337 = vmatpush.msra.mxu0 %v1332
    %1338 = vmatpush.msra.mxu0 %v1331
    %1339 = vmatpush.msra.mxu0 %v1330
    %1340 = vmatpush.msra.mxu0 %v1329
    %1341 = vmatpush.msra.mxu0 %v1328
    %1342 = vmatpush.msra.mxu0 %v1327
    %1343 = vmatpush.msra.mxu0 %v1326
    %1344 = vmatpush.msra.mxu0 %v1325
    %1345 = vmatpush.msra.mxu0 %v1324
    %1346 = vmatpush.msra.mxu0 %v1323
    %1347 = vmatpush.msra.mxu0 %v1322
    %1348 = vmatpush.msra.mxu0 %v1321
    %1349 = vmatpush.msra.mxu0 %v1320
    %1350 = vmatpush.msra.mxu0 %v1319
    %1351 = vmatmul.f32.gmra.mxu0 %v1305
    %v1352 = vpop.f32.mrf.mxu0
    %v1353 = vadd.f32 0.0, %v1352
    %1354 = vdwg.mxu0
    %v1355 = vrcp.pop 512.0
    %v1356 = vmul.f32 512.0, %v1355
    %v1357 = vsub.f32 1.0, %v1356
    %v1358 = vmul.f32 %v1355, %v1357
    %v1359 = vadd.f32 %v1355, %v1358
    %vm1360 = vweird.f32 %v1355
    %v1361 = vsel %vm1360, %v1355, %v1359
    %v1362 = vmul.f32 %v1353, %v1361
    %1363 = vmatpush.msra.mxu0 %v1334
    %1364 = vmatpush.msra.mxu0 %v1333
    %1365 = vmatpush.msra.mxu0 %v1332
    %1366 = vmatpush.msra.mxu0 %v1331
    %1367 = vmatpush.msra.mxu0 %v1330
    %1368 = vmatpush.msra.mxu0 %v1329
    %1369 = vmatpush.msra.mxu0 %v1328
    %1370 = vmatpush.msra.mxu0 %v1327
    %1371 = vmatpush.msra.mxu0 %v1326
    %1372 = vmatpush.msra.mxu0 %v1325
    %1373 = vmatpush.msra.mxu0 %v1324
    %1374 = vmatpush.msra.mxu0 %v1323
    %1375 = vmatpush.msra.mxu0 %v1322
    %1376 = vmatpush.msra.mxu0 %v1321
    %1377 = vmatpush.msra.mxu0 %v1320
    %1378 = vmatpush.msra.mxu0 %v1319
    %1379 = vmatmul.f32.gmra.mxu0 %v1318
    %v1380 = vpop.f32.mrf.mxu0
    %v1381 = vadd.f32 0.0, %v1380
    %1382 = vdwg.mxu0
    %v1383 = vmul.f32 %v1381, %v1361
    %v1384 = vmul.f32 %v1362, %v1362
    %v1385 = vsub.f32 %v1383, %v1384
    %v1386 = vmax.f32 %v1385, 0.0
    %v1387 = vperm.slane %v1362, 0
    %v1388 = vsub.f32 %v1293, %v1387
    %v1389 = vsub.f32 %v1294, %v1387
    %v1390 = vsub.f32 %v1295, %v1387
    %v1391 = vsub.f32 %v1296, %v1387
    %v1392 = vadd.f32 %v1386, 1e-05
    %v1393 = vrsqrt.pop %v1392
    %v1394 = vmul.f32 %v1393, %v1392
    %v1395 = vmul.f32 %v1394, %v1393
    %v1396 = vmul.f32 0.5, %v1395
    %v1397 = vsub.f32 1.5, %v1396
    %v1398 = vmul.f32 %v1393, %v1397
    %vm1399 = vweird.f32 %v1392
    %vm1400 = vweird.f32 %v1393
    %vm1401 = vmor %vm1399, %vm1400
    %v1402 = vsel %vm1401, %v1393, %v1398
    %v1403 = vperm.slane %v1402, 0
    %v1404 = vmul.f32 %v1388, %v1403
    %v1405 = vmul.f32 %v1389, %v1403
    %v1406 = vmul.f32 %v1390, %v1403
    %v1407 = vmul.f32 %v1391, %v1403
    %v1408 = vld [vmem:[#allocation31] sm:$0x1]
    %v1410 = vperm.slane %v1408, 0
    %v1412 = vmul.f32 %v1404, %v1410
    %v1413 = vmul.f32 %v1405, %v1410
    %v1414 = vmul.f32 %v1406, %v1410
    %v1415 = vmul.f32 %v1407, %v1410
    %v1416 = vld [vmem:[#allocation33] sm:$0x1]
    %v1418 = vperm.slane %v1416, 0
    %v1420 = vadd.f32 %v1412, %v1418
    %v1421 = vadd.f32 %v1413, %v1418
    %v1422 = vadd.f32 %v1414, %v1418
    %v1423 = vadd.f32 %v1415, %v1418
    %1424 = vst [vmem:[%s63] sm:$0xff] %v1420
    %1425 = vst [vmem:[%s63 + $0x8] sm:$0xff] %v1421
    %1426 = vst [vmem:[%s63 + $0x10] sm:$0xff] %v1422
    %1427 = vst [vmem:[%s63 + $0x18] sm:$0xff] %v1423
    %v1428 = vld [vmem:[#allocation4] sm:$0xff]
    %v1429 = vld [vmem:[#allocation4 + $0x8] sm:$0xff]
    %vm1430 = vcmask 261120
    %v1432 = vsel %vm1430, %v1428, 0
    %v1435 = vsel %vm1430, %v1429, 0
    %1437 = vmatpush.msra.mxu0 0.0
    %1438 = vmatpush.msra.mxu0 0.0
    %1439 = vmatpush.msra.mxu0 0.0
    %1440 = vmatpush.msra.mxu0 0.0
    %1441 = vmatpush.msra.mxu0 0.0
    %1442 = vmatpush.msra.mxu0 0.0
    %1443 = vmatpush.msra.mxu0 0.0
    %1444 = vmatpush.msra.mxu0 0.0
    %1445 = vmatpush.msra.mxu0 0.0
    %1446 = vmatpush.msra.mxu0 0.0
    %1447 = vmatpush.msra.mxu0 0.0
    %1448 = vmatpush.msra.mxu0 0.0
    %1449 = vmatpush.msra.mxu0 %v1003
    %1450 = vmatpush.msra.mxu0 %v1002
    %1451 = vmatpush.msra.mxu0 %v1001
    %1452 = vmatpush.msra.mxu0 %v1000
    %1453 = vmatmul.f32.gmra.mxu0 %v1432
    %v1454 = vpop.f32.mrf.mxu0
    %v1455 = vadd.f32 0.0, %v1454
    %1456 = vmatmul.f32.gmra.mxu0 %v1435
    %v1457 = vpop.f32.mrf.mxu0
    %v1458 = vadd.f32 0.0, %v1457
    %1459 = vdwg.mxu0
    %s1460 = scalar_lea.vmem [#allocation4], 16
    %v1461 = vld [vmem:[%s1460] sm:$0xff]
    %v1462 = vld [vmem:[%s1460 + $0x8] sm:$0xff]
    %v1464 = vsel %vm1430, %v1461, 0
    %v1467 = vsel %vm1430, %v1462, 0
    %1469 = vmatpush.msra.mxu0 0.0
    %1470 = vmatpush.msra.mxu0 0.0
    %1471 = vmatpush.msra.mxu0 0.0
    %1472 = vmatpush.msra.mxu0 0.0
    %1473 = vmatpush.msra.mxu0 0.0
    %1474 = vmatpush.msra.mxu0 0.0
    %1475 = vmatpush.msra.mxu0 0.0
    %1476 = vmatpush.msra.mxu0 0.0
    %1477 = vmatpush.msra.mxu0 0.0
    %1478 = vmatpush.msra.mxu0 0.0
    %1479 = vmatpush.msra.mxu0 0.0
    %1480 = vmatpush.msra.mxu0 0.0
    %1481 = vmatpush.msra.mxu0 %v1003
    %1482 = vmatpush.msra.mxu0 %v1002
    %1483 = vmatpush.msra.mxu0 %v1001
    %1484 = vmatpush.msra.mxu0 %v1000
    %1485 = vmatmul.f32.gmra.mxu0 %v1464
    %v1486 = vpop.f32.mrf.mxu0
    %v1487 = vadd.f32 0.0, %v1486
    %1488 = vmatmul.f32.gmra.mxu0 %v1467
    %v1489 = vpop.f32.mrf.mxu0
    %v1490 = vadd.f32 0.0, %v1489
    %1491 = vdwg.mxu0
    %v1492 = vmax.f32 %v1455, %v1487
    %v1493 = vmax.f32 %v1458, %v1490
    %v1494 = vld [vmem:[%s11] sm:$0xff]
    %v1495 = vld [vmem:[%s11 + $0x8] sm:$0xff]
    %v1496 = vld [vmem:[%s11 + $0x10] sm:$0xff]
    %v1497 = vld [vmem:[%s11 + $0x18] sm:$0xff]
    %v1498 = vld [vmem:[%s11 + $0x20] sm:$0xff]
    %v1499 = vld [vmem:[%s11 + $0x28] sm:$0xff]
    %v1500 = vld [vmem:[%s11 + $0x30] sm:$0xff]
    %v1501 = vld [vmem:[%s11 + $0x38] sm:$0xff]
    %v1502 = vld [vmem:[%s11 + $0x40] sm:$0xff]
    %v1503 = vld [vmem:[%s11 + $0x48] sm:$0xff]
    %v1504 = vld [vmem:[%s11 + $0x50] sm:$0xff]
    %v1505 = vld [vmem:[%s11 + $0x58] sm:$0xff]
    %v1506 = vld [vmem:[%s11 + $0x60] sm:$0xff]
    %v1507 = vld [vmem:[%s11 + $0x68] sm:$0xff]
    %v1508 = vld [vmem:[%s11 + $0x70] sm:$0xff]
    %v1509 = vld [vmem:[%s11 + $0x78] sm:$0xff]
    %1510 = vmatpush.msra.mxu0 %v1509
    %1511 = vmatpush.msra.mxu0 %v1508
    %1512 = vmatpush.msra.mxu0 %v1507
    %1513 = vmatpush.msra.mxu0 %v1506
    %1514 = vmatpush.msra.mxu0 %v1505
    %1515 = vmatpush.msra.mxu0 %v1504
    %1516 = vmatpush.msra.mxu0 %v1503
    %1517 = vmatpush.msra.mxu0 %v1502
    %1518 = vmatpush.msra.mxu0 %v1501
    %1519 = vmatpush.msra.mxu0 %v1500
    %1520 = vmatpush.msra.mxu0 %v1499
    %1521 = vmatpush.msra.mxu0 %v1498
    %1522 = vmatpush.msra.mxu0 %v1497
    %1523 = vmatpush.msra.mxu0 %v1496
    %1524 = vmatpush.msra.mxu0 %v1495
    %1525 = vmatpush.msra.mxu0 %v1494
    %1526 = vmatmul.f32.gmra.mxu0 %v1492
    %v1527 = vpop.f32.mrf.mxu0
    %v1528 = vadd.f32 0.0, %v1527
    %1529 = vmatmul.f32.gmra.mxu0 %v1493
    %v1530 = vpop.f32.mrf.mxu0
    %v1531 = vadd.f32 0.0, %v1530
    %1532 = vdwg.mxu0
    %s1533 = scalar_lea.vmem %s11, 128
    %v1534 = vld [vmem:[%s1533] sm:$0xff]
    %v1535 = vld [vmem:[%s1533 + $0x8] sm:$0xff]
    %v1536 = vld [vmem:[%s1533 + $0x10] sm:$0xff]
    %v1537 = vld [vmem:[%s1533 + $0x18] sm:$0xff]
    %v1538 = vld [vmem:[%s1533 + $0x20] sm:$0xff]
    %v1539 = vld [vmem:[%s1533 + $0x28] sm:$0xff]
    %v1540 = vld [vmem:[%s1533 + $0x30] sm:$0xff]
    %v1541 = vld [vmem:[%s1533 + $0x38] sm:$0xff]
    %v1542 = vld [vmem:[%s1533 + $0x40] sm:$0xff]
    %v1543 = vld [vmem:[%s1533 + $0x48] sm:$0xff]
    %v1544 = vld [vmem:[%s1533 + $0x50] sm:$0xff]
    %v1545 = vld [vmem:[%s1533 + $0x58] sm:$0xff]
    %v1546 = vld [vmem:[%s1533 + $0x60] sm:$0xff]
    %v1547 = vld [vmem:[%s1533 + $0x68] sm:$0xff]
    %v1548 = vld [vmem:[%s1533 + $0x70] sm:$0xff]
    %v1549 = vld [vmem:[%s1533 + $0x78] sm:$0xff]
    %1550 = vmatpush.msra.mxu0 %v1549
    %1551 = vmatpush.msra.mxu0 %v1548
    %1552 = vmatpush.msra.mxu0 %v1547
    %1553 = vmatpush.msra.mxu0 %v1546
    %1554 = vmatpush.msra.mxu0 %v1545
    %1555 = vmatpush.msra.mxu0 %v1544
    %1556 = vmatpush.msra.mxu0 %v1543
    %1557 = vmatpush.msra.mxu0 %v1542
    %1558 = vmatpush.msra.mxu0 %v1541
    %1559 = vmatpush.msra.mxu0 %v1540
    %1560 = vmatpush.msra.mxu0 %v1539
    %1561 = vmatpush.msra.mxu0 %v1538
    %1562 = vmatpush.msra.mxu0 %v1537
    %1563 = vmatpush.msra.mxu0 %v1536
    %1564 = vmatpush.msra.mxu0 %v1535
    %1565 = vmatpush.msra.mxu0 %v1534
    %1566 = vmatmul.f32.gmra.mxu0 %v1492
    %v1567 = vpop.f32.mrf.mxu0
    %v1568 = vadd.f32 0.0, %v1567
    %1569 = vmatmul.f32.gmra.mxu0 %v1493
    %v1570 = vpop.f32.mrf.mxu0
    %v1571 = vadd.f32 0.0, %v1570
    %1572 = vdwg.mxu0
    %v1573 = vmax.f32 %v1528, %v1568
    %v1574 = vmax.f32 %v1531, %v1571
    %v1575 = vrot.slane %v1573, 7
    %v1576 = vrot.slane %v1574, 7
    %v1577 = vsel %vm508, %v1575, %v1576
    %v1578 = vsel %vm508, %v1576, %v1575
    %v1579 = vld [vmem:[%s5] sm:$0xff]
    %v1580 = vld [vmem:[%s5 + $0x8] sm:$0xff]
    %1582 = vset.pattern.permute.xlu0 0
    %1583 = vperm.xlu0 %1582, %v1579
    %v1584 = vpop.permute.xlu0 %1583
    %1587 = vset.pattern.permute.xlu0 0
    %1588 = vperm.xlu0 %1587, %v1580
    %v1589 = vpop.permute.xlu0 %1588
    %v1591 = vmul.f32 %v1578, %v1584
    %v1592 = vmul.f32 %v1577, %v1589
    %v1593 = vrot.slane %v1573, 1
    %v1594 = vrot.slane %v1574, 1
    %v1595 = vsel %vm545, %v1593, %v1594
    %v1596 = vsel %vm545, %v1594, %v1593
    %s1597 = scalar_lea.vmem %s5, 16
    %v1598 = vld [vmem:[%s1597] sm:$0xff]
    %v1599 = vld [vmem:[%s1597 + $0x8] sm:$0xff]
    %1601 = vset.pattern.permute.xlu0 0
    %1602 = vperm.xlu0 %1601, %v1598
    %v1603 = vpop.permute.xlu0 %1602
    %1606 = vset.pattern.permute.xlu0 0
    %1607 = vperm.xlu0 %1606, %v1599
    %v1608 = vpop.permute.xlu0 %1607
    %v1610 = vmul.f32 %v1595, %v1603
    %v1611 = vmul.f32 %v1596, %v1608
    %v1612 = vpack.c.bf16 %v1592, %v1591
    %v1613 = vld [vmem:[#allocation15] sm:$0xf]
    %v1614 = vld [vmem:[#allocation15 + $0x4] sm:$0xf]
    %v1615 = vld [vmem:[#allocation15 + $0x8] sm:$0xf]
    %v1616 = vld [vmem:[#allocation15 + $0xc] sm:$0xf]
    %v1617 = vld [vmem:[#allocation15 + $0x10] sm:$0xf]
    %v1618 = vld [vmem:[#allocation15 + $0x14] sm:$0xf]
    %v1619 = vld [vmem:[#allocation15 + $0x18] sm:$0xf]
    %v1620 = vld [vmem:[#allocation15 + $0x1c] sm:$0xf]
    %v1621 = vpack.c.bf16 %v1574, %v1573
    %s1622 = scalar_lea.vmem [#allocation15], 32
    %v1623 = vld [vmem:[%s1622] sm:$0xf]
    %v1624 = vld [vmem:[%s1622 + $0x4] sm:$0xf]
    %v1625 = vld [vmem:[%s1622 + $0x8] sm:$0xf]
    %v1626 = vld [vmem:[%s1622 + $0xc] sm:$0xf]
    %v1627 = vld [vmem:[%s1622 + $0x10] sm:$0xf]
    %v1628 = vld [vmem:[%s1622 + $0x14] sm:$0xf]
    %v1629 = vld [vmem:[%s1622 + $0x18] sm:$0xf]
    %v1630 = vld [vmem:[%s1622 + $0x1c] sm:$0xf]
    %v1639 = vunpack.c.l.b16 %v1623
    %v1640 = vunpack.c.l.b16 %v1624
    %v1641 = vunpack.c.l.b16 %v1625
    %v1642 = vunpack.c.l.b16 %v1626
    %v1643 = vunpack.c.l.b16 %v1627
    %v1644 = vunpack.c.l.b16 %v1628
    %v1645 = vunpack.c.l.b16 %v1629
    %v1646 = vunpack.c.l.b16 %v1630
    %v1647 = vpack.c.b16 %v1640, %v1639
    %v1648 = vpack.c.b16 %v1642, %v1641
    %v1649 = vpack.c.b16 %v1644, %v1643
    %v1650 = vpack.c.b16 %v1646, %v1645
    %vm1655 = vcmask 523264
    %v1657 = vsel %vm1655, %v1621, 0
    %1659 = vmatpush.bf16.msra.mxu0 0
    %1660 = vmatpush.bf16.msra.mxu0 0
    %1661 = vmatpush.bf16.msra.mxu0 0
    %1662 = vmatpush.bf16.msra.mxu0 0
    %1663 = vmatpush.bf16.msra.mxu0 %v1650
    %1664 = vmatpush.bf16.msra.mxu0 %v1649
    %1665 = vmatpush.bf16.msra.mxu0 %v1648
    %1666 = vmatpush.bf16.msra.mxu0 %v1647
    %1667 = vmatmul.bf16.gmra.mxu0 %v1657
    %v1668 = vpop.f32.mrf.mxu0
    %v1669 = vadd.f32 0.0, %v1668
    %v1670 = vpop.f32.mrf.mxu0
    %v1671 = vadd.f32 0.0, %v1670
    %1672 = vdwg.mxu0
    %v1681 = vunpack.c.l.b16 %v1613
    %v1682 = vunpack.c.l.b16 %v1614
    %v1683 = vunpack.c.l.b16 %v1615
    %v1684 = vunpack.c.l.b16 %v1616
    %v1685 = vunpack.c.l.b16 %v1617
    %v1686 = vunpack.c.l.b16 %v1618
    %v1687 = vunpack.c.l.b16 %v1619
    %v1688 = vunpack.c.l.b16 %v1620
    %v1689 = vpack.c.b16 %v1682, %v1681
    %v1690 = vpack.c.b16 %v1684, %v1683
    %v1691 = vpack.c.b16 %v1686, %v1685
    %v1692 = vpack.c.b16 %v1688, %v1687
    %v1698 = vsel %vm1655, %v1612, 0
    %1700 = vmatpush.bf16.msra.mxu0 0
    %1701 = vmatpush.bf16.msra.mxu0 0
    %1702 = vmatpush.bf16.msra.mxu0 0
    %1703 = vmatpush.bf16.msra.mxu0 0
    %1704 = vmatpush.bf16.msra.mxu0 %v1692
    %1705 = vmatpush.bf16.msra.mxu0 %v1691
    %1706 = vmatpush.bf16.msra.mxu0 %v1690
    %1707 = vmatpush.bf16.msra.mxu0 %v1689
    %1708 = vmatmul.bf16.gmra.mxu0 %v1698
    %v1709 = vpop.f32.mrf.mxu0
    %v1710 = vadd.f32 %v1669, %v1709
    %v1711 = vpop.f32.mrf.mxu0
    %v1712 = vadd.f32 %v1671, %v1711
    %1713 = vdwg.mxu0
    %v1714 = vpack.c.bf16 %v1611, %v1610
    %s1715 = scalar_lea.vmem [#allocation15], 64
    %v1716 = vld [vmem:[%s1715] sm:$0xf]
    %v1717 = vld [vmem:[%s1715 + $0x4] sm:$0xf]
    %v1718 = vld [vmem:[%s1715 + $0x8] sm:$0xf]
    %v1719 = vld [vmem:[%s1715 + $0xc] sm:$0xf]
    %v1720 = vld [vmem:[%s1715 + $0x10] sm:$0xf]
    %v1721 = vld [vmem:[%s1715 + $0x14] sm:$0xf]
    %v1722 = vld [vmem:[%s1715 + $0x18] sm:$0xf]
    %v1723 = vld [vmem:[%s1715 + $0x1c] sm:$0xf]
    %v1732 = vunpack.c.l.b16 %v1716
    %v1733 = vunpack.c.l.b16 %v1717
    %v1734 = vunpack.c.l.b16 %v1718
    %v1735 = vunpack.c.l.b16 %v1719
    %v1736 = vunpack.c.l.b16 %v1720
    %v1737 = vunpack.c.l.b16 %v1721
    %v1738 = vunpack.c.l.b16 %v1722
    %v1739 = vunpack.c.l.b16 %v1723
    %v1740 = vpack.c.b16 %v1733, %v1732
    %v1741 = vpack.c.b16 %v1735, %v1734
    %v1742 = vpack.c.b16 %v1737, %v1736
    %v1743 = vpack.c.b16 %v1739, %v1738
    %v1749 = vsel %vm1655, %v1714, 0
    %1751 = vmatpush.bf16.msra.mxu0 0
    %1752 = vmatpush.bf16.msra.mxu0 0
    %1753 = vmatpush.bf16.msra.mxu0 0
    %1754 = vmatpush.bf16.msra.mxu0 0
    %1755 = vmatpush.bf16.msra.mxu0 %v1743
    %1756 = vmatpush.bf16.msra.mxu0 %v1742
    %1757 = vmatpush.bf16.msra.mxu0 %v1741
    %1758 = vmatpush.bf16.msra.mxu0 %v1740
    %1759 = vmatmul.bf16.gmra.mxu0 %v1749
    %v1760 = vpop.f32.mrf.mxu0
    %v1761 = vadd.f32 0.0, %v1760
    %v1762 = vpop.f32.mrf.mxu0
    %v1763 = vadd.f32 0.0, %v1762
    %1764 = vdwg.mxu0
    %v1765 = vadd.f32 %v1710, %v1761
    %v1766 = vadd.f32 %v1712, %v1763
    %v1767 = vld [vmem:[#allocation24] sm:$0x1]
    %v1769 = vperm.slane %v1767, 0
    %v1771 = vadd.f32 %v1765, %v1769
    %v1772 = vadd.f32 %v1766, %v1769
    %v1773 = vmax.f32 %v1771, 0.0
    %v1774 = vmax.f32 %v1772, 0.0
    %v1775 = vrot.slane %v1773, 7
    %v1776 = vrot.slane %v1774, 7
    %v1777 = vsel %vm508, %v1775, %v1776
    %v1778 = vsel %vm508, %v1776, %v1775
    %v1779 = vmul.f32 %v1778, %v1584
    %v1780 = vmul.f32 %v1777, %v1589
    %v1781 = vrot.slane %v1773, 1
    %v1782 = vrot.slane %v1774, 1
    %v1783 = vsel %vm545, %v1781, %v1782
    %v1784 = vsel %vm545, %v1782, %v1781
    %v1785 = vmul.f32 %v1783, %v1603
    %v1786 = vmul.f32 %v1784, %v1608
    %v1787 = vpack.c.bf16 %v1780, %v1779
    %v1788 = vld [vmem:[#allocation19] sm:$0xf]
    %v1789 = vld [vmem:[#allocation19 + $0x4] sm:$0xf]
    %v1790 = vld [vmem:[#allocation19 + $0x8] sm:$0xf]
    %v1791 = vld [vmem:[#allocation19 + $0xc] sm:$0xf]
    %v1792 = vld [vmem:[#allocation19 + $0x10] sm:$0xf]
    %v1793 = vld [vmem:[#allocation19 + $0x14] sm:$0xf]
    %v1794 = vld [vmem:[#allocation19 + $0x18] sm:$0xf]
    %v1795 = vld [vmem:[#allocation19 + $0x1c] sm:$0xf]
    %v1796 = vld [vmem:[#allocation19 + $0x20] sm:$0xf]
    %v1797 = vld [vmem:[#allocation19 + $0x24] sm:$0xf]
    %v1798 = vld [vmem:[#allocation19 + $0x28] sm:$0xf]
    %v1799 = vld [vmem:[#allocation19 + $0x2c] sm:$0xf]
    %v1800 = vld [vmem:[#allocation19 + $0x30] sm:$0xf]
    %v1801 = vld [vmem:[#allocation19 + $0x34] sm:$0xf]
    %v1802 = vld [vmem:[#allocation19 + $0x38] sm:$0xf]
    %v1803 = vld [vmem:[#allocation19 + $0x3c] sm:$0xf]
    %v1804 = vpack.c.bf16 %v1774, %v1773
    %s1805 = scalar_lea.vmem [#allocation19], 64
    %v1806 = vld [vmem:[%s1805] sm:$0xf]
    %v1807 = vld [vmem:[%s1805 + $0x4] sm:$0xf]
    %v1808 = vld [vmem:[%s1805 + $0x8] sm:$0xf]
    %v1809 = vld [vmem:[%s1805 + $0xc] sm:$0xf]
    %v1810 = vld [vmem:[%s1805 + $0x10] sm:$0xf]
    %v1811 = vld [vmem:[%s1805 + $0x14] sm:$0xf]
    %v1812 = vld [vmem:[%s1805 + $0x18] sm:$0xf]
    %v1813 = vld [vmem:[%s1805 + $0x1c] sm:$0xf]
    %v1814 = vld [vmem:[%s1805 + $0x20] sm:$0xf]
    %v1815 = vld [vmem:[%s1805 + $0x24] sm:$0xf]
    %v1816 = vld [vmem:[%s1805 + $0x28] sm:$0xf]
    %v1817 = vld [vmem:[%s1805 + $0x2c] sm:$0xf]
    %v1818 = vld [vmem:[%s1805 + $0x30] sm:$0xf]
    %v1819 = vld [vmem:[%s1805 + $0x34] sm:$0xf]
    %v1820 = vld [vmem:[%s1805 + $0x38] sm:$0xf]
    %v1821 = vld [vmem:[%s1805 + $0x3c] sm:$0xf]
    %v1838 = vunpack.c.l.b16 %v1806
    %v1839 = vunpack.c.l.b16 %v1807
    %v1840 = vunpack.c.l.b16 %v1808
    %v1841 = vunpack.c.l.b16 %v1809
    %v1842 = vunpack.c.l.b16 %v1810
    %v1843 = vunpack.c.l.b16 %v1811
    %v1844 = vunpack.c.l.b16 %v1812
    %v1845 = vunpack.c.l.b16 %v1813
    %v1846 = vunpack.c.l.b16 %v1814
    %v1847 = vunpack.c.l.b16 %v1815
    %v1848 = vunpack.c.l.b16 %v1816
    %v1849 = vunpack.c.l.b16 %v1817
    %v1850 = vunpack.c.l.b16 %v1818
    %v1851 = vunpack.c.l.b16 %v1819
    %v1852 = vunpack.c.l.b16 %v1820
    %v1853 = vunpack.c.l.b16 %v1821
    %v1854 = vpack.c.b16 %v1839, %v1838
    %v1855 = vpack.c.b16 %v1841, %v1840
    %v1856 = vpack.c.b16 %v1843, %v1842
    %v1857 = vpack.c.b16 %v1845, %v1844
    %v1858 = vpack.c.b16 %v1847, %v1846
    %v1859 = vpack.c.b16 %v1849, %v1848
    %v1860 = vpack.c.b16 %v1851, %v1850
    %v1861 = vpack.c.b16 %v1853, %v1852
    %1870 = vmatpush.bf16.msra.mxu0 %v1861
    %1871 = vmatpush.bf16.msra.mxu0 %v1860
    %1872 = vmatpush.bf16.msra.mxu0 %v1859
    %1873 = vmatpush.bf16.msra.mxu0 %v1858
    %1874 = vmatpush.bf16.msra.mxu0 %v1857
    %1875 = vmatpush.bf16.msra.mxu0 %v1856
    %1876 = vmatpush.bf16.msra.mxu0 %v1855
    %1877 = vmatpush.bf16.msra.mxu0 %v1854
    %1878 = vmatmul.bf16.gmra.mxu0 %v1804
    %v1879 = vpop.f32.mrf.mxu0
    %v1880 = vadd.f32 0.0, %v1879
    %v1881 = vpop.f32.mrf.mxu0
    %v1882 = vadd.f32 0.0, %v1881
    %1883 = vdwg.mxu0
    %v1900 = vunpack.c.l.b16 %v1788
    %v1901 = vunpack.c.l.b16 %v1789
    %v1902 = vunpack.c.l.b16 %v1790
    %v1903 = vunpack.c.l.b16 %v1791
    %v1904 = vunpack.c.l.b16 %v1792
    %v1905 = vunpack.c.l.b16 %v1793
    %v1906 = vunpack.c.l.b16 %v1794
    %v1907 = vunpack.c.l.b16 %v1795
    %v1908 = vunpack.c.l.b16 %v1796
    %v1909 = vunpack.c.l.b16 %v1797
    %v1910 = vunpack.c.l.b16 %v1798
    %v1911 = vunpack.c.l.b16 %v1799
    %v1912 = vunpack.c.l.b16 %v1800
    %v1913 = vunpack.c.l.b16 %v1801
    %v1914 = vunpack.c.l.b16 %v1802
    %v1915 = vunpack.c.l.b16 %v1803
    %v1916 = vpack.c.b16 %v1901, %v1900
    %v1917 = vpack.c.b16 %v1903, %v1902
    %v1918 = vpack.c.b16 %v1905, %v1904
    %v1919 = vpack.c.b16 %v1907, %v1906
    %v1920 = vpack.c.b16 %v1909, %v1908
    %v1921 = vpack.c.b16 %v1911, %v1910
    %v1922 = vpack.c.b16 %v1913, %v1912
    %v1923 = vpack.c.b16 %v1915, %v1914
    %1932 = vmatpush.bf16.msra.mxu0 %v1923
    %1933 = vmatpush.bf16.msra.mxu0 %v1922
    %1934 = vmatpush.bf16.msra.mxu0 %v1921
    %1935 = vmatpush.bf16.msra.mxu0 %v1920
    %1936 = vmatpush.bf16.msra.mxu0 %v1919
    %1937 = vmatpush.bf16.msra.mxu0 %v1918
    %1938 = vmatpush.bf16.msra.mxu0 %v1917
    %1939 = vmatpush.bf16.msra.mxu0 %v1916
    %1940 = vmatmul.bf16.gmra.mxu0 %v1787
    %v1941 = vpop.f32.mrf.mxu0
    %v1942 = vadd.f32 %v1880, %v1941
    %v1943 = vpop.f32.mrf.mxu0
    %v1944 = vadd.f32 %v1882, %v1943
    %1945 = vdwg.mxu0
    %v1946 = vpack.c.bf16 %v1786, %v1785
    %s1947 = scalar_lea.vmem [#allocation19], 128
    %v1948 = vld [vmem:[%s1947] sm:$0xf]
    %v1949 = vld [vmem:[%s1947 + $0x4] sm:$0xf]
    %v1950 = vld [vmem:[%s1947 + $0x8] sm:$0xf]
    %v1951 = vld [vmem:[%s1947 + $0xc] sm:$0xf]
    %v1952 = vld [vmem:[%s1947 + $0x10] sm:$0xf]
    %v1953 = vld [vmem:[%s1947 + $0x14] sm:$0xf]
    %v1954 = vld [vmem:[%s1947 + $0x18] sm:$0xf]
    %v1955 = vld [vmem:[%s1947 + $0x1c] sm:$0xf]
    %v1956 = vld [vmem:[%s1947 + $0x20] sm:$0xf]
    %v1957 = vld [vmem:[%s1947 + $0x24] sm:$0xf]
    %v1958 = vld [vmem:[%s1947 + $0x28] sm:$0xf]
    %v1959 = vld [vmem:[%s1947 + $0x2c] sm:$0xf]
    %v1960 = vld [vmem:[%s1947 + $0x30] sm:$0xf]
    %v1961 = vld [vmem:[%s1947 + $0x34] sm:$0xf]
    %v1962 = vld [vmem:[%s1947 + $0x38] sm:$0xf]
    %v1963 = vld [vmem:[%s1947 + $0x3c] sm:$0xf]
    %v1980 = vunpack.c.l.b16 %v1948
    %v1981 = vunpack.c.l.b16 %v1949
    %v1982 = vunpack.c.l.b16 %v1950
    %v1983 = vunpack.c.l.b16 %v1951
    %v1984 = vunpack.c.l.b16 %v1952
    %v1985 = vunpack.c.l.b16 %v1953
    %v1986 = vunpack.c.l.b16 %v1954
    %v1987 = vunpack.c.l.b16 %v1955
    %v1988 = vunpack.c.l.b16 %v1956
    %v1989 = vunpack.c.l.b16 %v1957
    %v1990 = vunpack.c.l.b16 %v1958
    %v1991 = vunpack.c.l.b16 %v1959
    %v1992 = vunpack.c.l.b16 %v1960
    %v1993 = vunpack.c.l.b16 %v1961
    %v1994 = vunpack.c.l.b16 %v1962
    %v1995 = vunpack.c.l.b16 %v1963
    %v1996 = vpack.c.b16 %v1981, %v1980
    %v1997 = vpack.c.b16 %v1983, %v1982
    %v1998 = vpack.c.b16 %v1985, %v1984
    %v1999 = vpack.c.b16 %v1987, %v1986
    %v2000 = vpack.c.b16 %v1989, %v1988
    %v2001 = vpack.c.b16 %v1991, %v1990
    %v2002 = vpack.c.b16 %v1993, %v1992
    %v2003 = vpack.c.b16 %v1995, %v1994
    %2012 = vmatpush.bf16.msra.mxu0 %v2003
    %2013 = vmatpush.bf16.msra.mxu0 %v2002
    %2014 = vmatpush.bf16.msra.mxu0 %v2001
    %2015 = vmatpush.bf16.msra.mxu0 %v2000
    %2016 = vmatpush.bf16.msra.mxu0 %v1999
    %2017 = vmatpush.bf16.msra.mxu0 %v1998
    %2018 = vmatpush.bf16.msra.mxu0 %v1997
    %2019 = vmatpush.bf16.msra.mxu0 %v1996
    %2020 = vmatmul.bf16.gmra.mxu0 %v1946
    %v2021 = vpop.f32.mrf.mxu0
    %v2022 = vadd.f32 0.0, %v2021
    %v2023 = vpop.f32.mrf.mxu0
    %v2024 = vadd.f32 0.0, %v2023
    %2025 = vdwg.mxu0
    %v2026 = vadd.f32 %v1942, %v2022
    %v2027 = vadd.f32 %v1944, %v2024
    %v2028 = vld [vmem:[#allocation28] sm:$0x1]
    %v2030 = vperm.slane %v2028, 0
    %v2032 = vadd.f32 %v2026, %v2030
    %v2033 = vadd.f32 %v2027, %v2030
    %v2034 = vadd.f32 %v2032, %v2033
    %v2035 = vrot.slane %v2034, 4
    %v2036 = vadd.f32 %v2034, %v2035
    %v2037 = vrot.slane %v2036, 2
    %v2038 = vadd.f32 %v2036, %v2037
    %v2039 = vrot.slane %v2038, 1
    %v2040 = vadd.f32 %v2038, %v2039
    %v2041 = vmul.f32 %v2032, %v2032
    %v2042 = vmul.f32 %v2033, %v2033
    %v2043 = vadd.f32 %v2041, %v2042
    %v2044 = vrot.slane %v2043, 4
    %v2045 = vadd.f32 %v2043, %v2044
    %v2046 = vrot.slane %v2045, 2
    %v2047 = vadd.f32 %v2045, %v2046
    %v2048 = vrot.slane %v2047, 1
    %v2049 = vadd.f32 %v2047, %v2048
    %v2050 = vld [vmem:[#allocation9] sm:$0xff]
    %v2051 = vld [vmem:[#allocation9 + $0x8] sm:$0xff]
    %v2052 = vld [vmem:[#allocation9 + $0x10] sm:$0xff]
    %v2053 = vld [vmem:[#allocation9 + $0x18] sm:$0xff]
    %v2054 = vld [vmem:[#allocation9 + $0x20] sm:$0xff]
    %v2055 = vld [vmem:[#allocation9 + $0x28] sm:$0xff]
    %v2056 = vld [vmem:[#allocation9 + $0x30] sm:$0xff]
    %v2057 = vld [vmem:[#allocation9 + $0x38] sm:$0xff]
    %v2058 = vld [vmem:[#allocation9 + $0x40] sm:$0xff]
    %v2059 = vld [vmem:[#allocation9 + $0x48] sm:$0xff]
    %v2060 = vld [vmem:[#allocation9 + $0x50] sm:$0xff]
    %v2061 = vld [vmem:[#allocation9 + $0x58] sm:$0xff]
    %v2062 = vld [vmem:[#allocation9 + $0x60] sm:$0xff]
    %v2063 = vld [vmem:[#allocation9 + $0x68] sm:$0xff]
    %v2064 = vld [vmem:[#allocation9 + $0x70] sm:$0xff]
    %v2065 = vld [vmem:[#allocation9 + $0x78] sm:$0xff]
    %2066 = vmatpush.msra.mxu0 %v2065
    %2067 = vmatpush.msra.mxu0 %v2064
    %2068 = vmatpush.msra.mxu0 %v2063
    %2069 = vmatpush.msra.mxu0 %v2062
    %2070 = vmatpush.msra.mxu0 %v2061
    %2071 = vmatpush.msra.mxu0 %v2060
    %2072 = vmatpush.msra.mxu0 %v2059
    %2073 = vmatpush.msra.mxu0 %v2058
    %2074 = vmatpush.msra.mxu0 %v2057
    %2075 = vmatpush.msra.mxu0 %v2056
    %2076 = vmatpush.msra.mxu0 %v2055
    %2077 = vmatpush.msra.mxu0 %v2054
    %2078 = vmatpush.msra.mxu0 %v2053
    %2079 = vmatpush.msra.mxu0 %v2052
    %2080 = vmatpush.msra.mxu0 %v2051
    %2081 = vmatpush.msra.mxu0 %v2050
    %2082 = vmatmul.f32.gmra.mxu0 %v2040
    %v2083 = vpop.f32.mrf.mxu0
    %v2084 = vadd.f32 0.0, %v2083
    %2085 = vdwg.mxu0
    %v2086 = vrcp.pop 128.0
    %v2087 = vmul.f32 128.0, %v2086
    %v2088 = vsub.f32 1.0, %v2087
    %v2089 = vmul.f32 %v2086, %v2088
    %v2090 = vadd.f32 %v2086, %v2089
    %vm2091 = vweird.f32 %v2086
    %v2092 = vsel %vm2091, %v2086, %v2090
    %v2093 = vmul.f32 %v2084, %v2092
    %2094 = vmatpush.msra.mxu0 %v2065
    %2095 = vmatpush.msra.mxu0 %v2064
    %2096 = vmatpush.msra.mxu0 %v2063
    %2097 = vmatpush.msra.mxu0 %v2062
    %2098 = vmatpush.msra.mxu0 %v2061
    %2099 = vmatpush.msra.mxu0 %v2060
    %2100 = vmatpush.msra.mxu0 %v2059
    %2101 = vmatpush.msra.mxu0 %v2058
    %2102 = vmatpush.msra.mxu0 %v2057
    %2103 = vmatpush.msra.mxu0 %v2056
    %2104 = vmatpush.msra.mxu0 %v2055
    %2105 = vmatpush.msra.mxu0 %v2054
    %2106 = vmatpush.msra.mxu0 %v2053
    %2107 = vmatpush.msra.mxu0 %v2052
    %2108 = vmatpush.msra.mxu0 %v2051
    %2109 = vmatpush.msra.mxu0 %v2050
    %2110 = vmatmul.f32.gmra.mxu0 %v2049
    %v2111 = vpop.f32.mrf.mxu0
    %v2112 = vadd.f32 0.0, %v2111
    %2113 = vdwg.mxu0
    %v2114 = vmul.f32 %v2112, %v2092
    %v2115 = vmul.f32 %v2093, %v2093
    %v2116 = vsub.f32 %v2114, %v2115
    %v2117 = vmax.f32 %v2116, 0.0
    %v2118 = vperm.slane %v2093, 0
    %v2119 = vsub.f32 %v2032, %v2118
    %v2120 = vsub.f32 %v2033, %v2118
    %v2121 = vadd.f32 %v2117, 1e-05
    %v2122 = vrsqrt.pop %v2121
    %v2123 = vmul.f32 %v2122, %v2121
    %v2124 = vmul.f32 %v2123, %v2122
    %v2125 = vmul.f32 0.5, %v2124
    %v2126 = vsub.f32 1.5, %v2125
    %v2127 = vmul.f32 %v2122, %v2126
    %vm2128 = vweird.f32 %v2121
    %vm2129 = vweird.f32 %v2122
    %vm2130 = vmor %vm2128, %vm2129
    %v2131 = vsel %vm2130, %v2122, %v2127
    %v2132 = vperm.slane %v2131, 0
    %v2133 = vmul.f32 %v2119, %v2132
    %v2134 = vmul.f32 %v2120, %v2132
    %v2135 = vld [vmem:[#allocation34] sm:$0x1]
    %v2137 = vperm.slane %v2135, 0
    %v2139 = vmul.f32 %v2133, %v2137
    %v2140 = vmul.f32 %v2134, %v2137
    %v2141 = vld [vmem:[#allocation36] sm:$0x1]
    %v2143 = vperm.slane %v2141, 0
    %v2145 = vadd.f32 %v2139, %v2143
    %v2146 = vadd.f32 %v2140, %v2143
    %2147 = vst [vmem:[%s65] sm:$0xff] %v2145
    %2148 = vst [vmem:[%s65 + $0x8] sm:$0xff] %v2146
    %v2149 = vld [vmem:[#allocation6] sm:$0xff]
    %v2151 = vsel %vm594, %v2149, 0
    %2153 = vmatpush.msra.mxu0 0.0
    %2154 = vmatpush.msra.mxu0 0.0
    %2155 = vmatpush.msra.mxu0 0.0
    %2156 = vmatpush.msra.mxu0 0.0
    %2157 = vmatpush.msra.mxu0 0.0
    %2158 = vmatpush.msra.mxu0 0.0
    %2159 = vmatpush.msra.mxu0 0.0
    %2160 = vmatpush.msra.mxu0 0.0
    %2161 = vmatpush.msra.mxu0 0.0
    %2162 = vmatpush.msra.mxu0 0.0
    %2163 = vmatpush.msra.mxu0 0.0
    %2164 = vmatpush.msra.mxu0 0.0
    %2165 = vmatpush.msra.mxu0 0.0
    %2166 = vmatpush.msra.mxu0 0.0
    %2167 = vmatpush.msra.mxu0 %v1774
    %2168 = vmatpush.msra.mxu0 %v1773
    %2169 = vmatmul.f32.gmra.mxu0 %v2151
    %v2170 = vpop.f32.mrf.mxu0
    %v2171 = vadd.f32 0.0, %v2170
    %2172 = vdwg.mxu0
    %s2173 = scalar_lea.vmem [#allocation6], 8
    %v2174 = vld [vmem:[%s2173] sm:$0xff]
    %v2176 = vsel %vm594, %v2174, 0
    %2178 = vmatpush.msra.mxu0 0.0
    %2179 = vmatpush.msra.mxu0 0.0
    %2180 = vmatpush.msra.mxu0 0.0
    %2181 = vmatpush.msra.mxu0 0.0
    %2182 = vmatpush.msra.mxu0 0.0
    %2183 = vmatpush.msra.mxu0 0.0
    %2184 = vmatpush.msra.mxu0 0.0
    %2185 = vmatpush.msra.mxu0 0.0
    %2186 = vmatpush.msra.mxu0 0.0
    %2187 = vmatpush.msra.mxu0 0.0
    %2188 = vmatpush.msra.mxu0 0.0
    %2189 = vmatpush.msra.mxu0 0.0
    %2190 = vmatpush.msra.mxu0 0.0
    %2191 = vmatpush.msra.mxu0 0.0
    %2192 = vmatpush.msra.mxu0 %v1774
    %2193 = vmatpush.msra.mxu0 %v1773
    %2194 = vmatmul.f32.gmra.mxu0 %v2176
    %v2195 = vpop.f32.mrf.mxu0
    %v2196 = vadd.f32 0.0, %v2195
    %2197 = vdwg.mxu0
    %v2198 = vmax.f32 %v2171, %v2196
    %v2199 = vld [vmem:[%s15] sm:$0xff]
    %v2200 = vld [vmem:[%s15 + $0x8] sm:$0xff]
    %v2201 = vld [vmem:[%s15 + $0x10] sm:$0xff]
    %v2202 = vld [vmem:[%s15 + $0x18] sm:$0xff]
    %v2203 = vld [vmem:[%s15 + $0x20] sm:$0xff]
    %v2204 = vld [vmem:[%s15 + $0x28] sm:$0xff]
    %v2205 = vld [vmem:[%s15 + $0x30] sm:$0xff]
    %v2206 = vld [vmem:[%s15 + $0x38] sm:$0xff]
    %v2207 = vld [vmem:[%s15 + $0x40] sm:$0xff]
    %v2208 = vld [vmem:[%s15 + $0x48] sm:$0xff]
    %v2209 = vld [vmem:[%s15 + $0x50] sm:$0xff]
    %v2210 = vld [vmem:[%s15 + $0x58] sm:$0xff]
    %v2211 = vld [vmem:[%s15 + $0x60] sm:$0xff]
    %v2212 = vld [vmem:[%s15 + $0x68] sm:$0xff]
    %v2213 = vld [vmem:[%s15 + $0x70] sm:$0xff]
    %v2214 = vld [vmem:[%s15 + $0x78] sm:$0xff]
    %2215 = vmatpush.msra.mxu0 %v2214
    %2216 = vmatpush.msra.mxu0 %v2213
    %2217 = vmatpush.msra.mxu0 %v2212
    %2218 = vmatpush.msra.mxu0 %v2211
    %2219 = vmatpush.msra.mxu0 %v2210
    %2220 = vmatpush.msra.mxu0 %v2209
    %2221 = vmatpush.msra.mxu0 %v2208
    %2222 = vmatpush.msra.mxu0 %v2207
    %2223 = vmatpush.msra.mxu0 %v2206
    %2224 = vmatpush.msra.mxu0 %v2205
    %2225 = vmatpush.msra.mxu0 %v2204
    %2226 = vmatpush.msra.mxu0 %v2203
    %2227 = vmatpush.msra.mxu0 %v2202
    %2228 = vmatpush.msra.mxu0 %v2201
    %2229 = vmatpush.msra.mxu0 %v2200
    %2230 = vmatpush.msra.mxu0 %v2199
    %2231 = vmatmul.f32.gmra.mxu0 %v2198
    %v2232 = vpop.f32.mrf.mxu0
    %v2233 = vadd.f32 0.0, %v2232
    %2234 = vdwg.mxu0
    %s2235 = scalar_lea.vmem %s15, 128
    %v2236 = vld [vmem:[%s2235] sm:$0xff]
    %v2237 = vld [vmem:[%s2235 + $0x8] sm:$0xff]
    %v2238 = vld [vmem:[%s2235 + $0x10] sm:$0xff]
    %v2239 = vld [vmem:[%s2235 + $0x18] sm:$0xff]
    %v2240 = vld [vmem:[%s2235 + $0x20] sm:$0xff]
    %v2241 = vld [vmem:[%s2235 + $0x28] sm:$0xff]
    %v2242 = vld [vmem:[%s2235 + $0x30] sm:$0xff]
    %v2243 = vld [vmem:[%s2235 + $0x38] sm:$0xff]
    %v2244 = vld [vmem:[%s2235 + $0x40] sm:$0xff]
    %v2245 = vld [vmem:[%s2235 + $0x48] sm:$0xff]
    %v2246 = vld [vmem:[%s2235 + $0x50] sm:$0xff]
    %v2247 = vld [vmem:[%s2235 + $0x58] sm:$0xff]
    %v2248 = vld [vmem:[%s2235 + $0x60] sm:$0xff]
    %v2249 = vld [vmem:[%s2235 + $0x68] sm:$0xff]
    %v2250 = vld [vmem:[%s2235 + $0x70] sm:$0xff]
    %v2251 = vld [vmem:[%s2235 + $0x78] sm:$0xff]
    %2252 = vmatpush.msra.mxu0 %v2251
    %2253 = vmatpush.msra.mxu0 %v2250
    %2254 = vmatpush.msra.mxu0 %v2249
    %2255 = vmatpush.msra.mxu0 %v2248
    %2256 = vmatpush.msra.mxu0 %v2247
    %2257 = vmatpush.msra.mxu0 %v2246
    %2258 = vmatpush.msra.mxu0 %v2245
    %2259 = vmatpush.msra.mxu0 %v2244
    %2260 = vmatpush.msra.mxu0 %v2243
    %2261 = vmatpush.msra.mxu0 %v2242
    %2262 = vmatpush.msra.mxu0 %v2241
    %2263 = vmatpush.msra.mxu0 %v2240
    %2264 = vmatpush.msra.mxu0 %v2239
    %2265 = vmatpush.msra.mxu0 %v2238
    %2266 = vmatpush.msra.mxu0 %v2237
    %2267 = vmatpush.msra.mxu0 %v2236
    %2268 = vmatmul.f32.gmra.mxu0 %v2198
    %v2269 = vpop.f32.mrf.mxu0
    %v2270 = vadd.f32 0.0, %v2269
    %2271 = vdwg.mxu0
    %v2272 = vmax.f32 %v2233, %v2270
    %v2273 = vrot.slane %v2272, 7
    %v2274 = vld [vmem:[%s7] sm:$0xff]
    %2276 = vset.pattern.permute.xlu0 0
    %2277 = vperm.xlu0 %2276, %v2274
    %v2278 = vpop.permute.xlu0 %2277
    %v2280 = vmul.f32 %v2273, %v2278
    %v2281 = vrot.slane %v2272, 1
    %s2282 = scalar_lea.vmem %s7, 8
    %v2283 = vld [vmem:[%s2282] sm:$0xff]
    %2285 = vset.pattern.permute.xlu0 0
    %2286 = vperm.xlu0 %2285, %v2283
    %v2287 = vpop.permute.xlu0 %2286
    %v2289 = vmul.f32 %v2281, %v2287
    %v2290 = vpack.c.bf16 %v2280, %v2280
    %v2291 = vld [vmem:[#allocation16] sm:$0xf]
    %v2292 = vld [vmem:[#allocation16 + $0x4] sm:$0xf]
    %v2293 = vld [vmem:[#allocation16 + $0x8] sm:$0xf]
    %v2294 = vld [vmem:[#allocation16 + $0xc] sm:$0xf]
    %v2295 = vld [vmem:[#allocation16 + $0x10] sm:$0xf]
    %v2296 = vld [vmem:[#allocation16 + $0x14] sm:$0xf]
    %v2297 = vld [vmem:[#allocation16 + $0x18] sm:$0xf]
    %v2298 = vld [vmem:[#allocation16 + $0x1c] sm:$0xf]
    %v2299 = vpack.c.bf16 %v2272, %v2272
    %s2300 = scalar_lea.vmem [#allocation16], 32
    %v2301 = vld [vmem:[%s2300] sm:$0xf]
    %v2302 = vld [vmem:[%s2300 + $0x4] sm:$0xf]
    %v2303 = vld [vmem:[%s2300 + $0x8] sm:$0xf]
    %v2304 = vld [vmem:[%s2300 + $0xc] sm:$0xf]
    %v2305 = vld [vmem:[%s2300 + $0x10] sm:$0xf]
    %v2306 = vld [vmem:[%s2300 + $0x14] sm:$0xf]
    %v2307 = vld [vmem:[%s2300 + $0x18] sm:$0xf]
    %v2308 = vld [vmem:[%s2300 + $0x1c] sm:$0xf]
    %v2317 = vunpack.c.l.b16 %v2301
    %v2318 = vunpack.c.l.b16 %v2302
    %v2319 = vunpack.c.l.b16 %v2303
    %v2320 = vunpack.c.l.b16 %v2304
    %v2321 = vunpack.c.l.b16 %v2305
    %v2322 = vunpack.c.l.b16 %v2306
    %v2323 = vunpack.c.l.b16 %v2307
    %v2324 = vunpack.c.l.b16 %v2308
    %v2325 = vpack.c.b16 %v2318, %v2317
    %v2326 = vpack.c.b16 %v2320, %v2319
    %v2327 = vpack.c.b16 %v2322, %v2321
    %v2328 = vpack.c.b16 %v2324, %v2323
    %v2334 = vsel %vm1655, %v2299, 0
    %2336 = vmatpush.bf16.msra.mxu0 0
    %2337 = vmatpush.bf16.msra.mxu0 0
    %2338 = vmatpush.bf16.msra.mxu0 0
    %2339 = vmatpush.bf16.msra.mxu0 0
    %2340 = vmatpush.bf16.msra.mxu0 %v2328
    %2341 = vmatpush.bf16.msra.mxu0 %v2327
    %2342 = vmatpush.bf16.msra.mxu0 %v2326
    %2343 = vmatpush.bf16.msra.mxu0 %v2325
    %2344 = vmatmul.bf16.gmra.mxu0 %v2334
    %v2345 = vpop.f32.mrf.mxu0
    %v2346 = vadd.f32 0.0, %v2345
    %v2347 = vpop.f32.mrf.mxu0
    %2348 = vdwg.mxu0
    %v2357 = vunpack.c.l.b16 %v2291
    %v2358 = vunpack.c.l.b16 %v2292
    %v2359 = vunpack.c.l.b16 %v2293
    %v2360 = vunpack.c.l.b16 %v2294
    %v2361 = vunpack.c.l.b16 %v2295
    %v2362 = vunpack.c.l.b16 %v2296
    %v2363 = vunpack.c.l.b16 %v2297
    %v2364 = vunpack.c.l.b16 %v2298
    %v2365 = vpack.c.b16 %v2358, %v2357
    %v2366 = vpack.c.b16 %v2360, %v2359
    %v2367 = vpack.c.b16 %v2362, %v2361
    %v2368 = vpack.c.b16 %v2364, %v2363
    %v2374 = vsel %vm1655, %v2290, 0
    %2376 = vmatpush.bf16.msra.mxu0 0
    %2377 = vmatpush.bf16.msra.mxu0 0
    %2378 = vmatpush.bf16.msra.mxu0 0
    %2379 = vmatpush.bf16.msra.mxu0 0
    %2380 = vmatpush.bf16.msra.mxu0 %v2368
    %2381 = vmatpush.bf16.msra.mxu0 %v2367
    %2382 = vmatpush.bf16.msra.mxu0 %v2366
    %2383 = vmatpush.bf16.msra.mxu0 %v2365
    %2384 = vmatmul.bf16.gmra.mxu0 %v2374
    %v2385 = vpop.f32.mrf.mxu0
    %v2386 = vadd.f32 %v2346, %v2385
    %v2387 = vpop.f32.mrf.mxu0
    %2388 = vdwg.mxu0
    %v2389 = vpack.c.bf16 %v2289, %v2289
    %s2390 = scalar_lea.vmem [#allocation16], 64
    %v2391 = vld [vmem:[%s2390] sm:$0xf]
    %v2392 = vld [vmem:[%s2390 + $0x4] sm:$0xf]
    %v2393 = vld [vmem:[%s2390 + $0x8] sm:$0xf]
    %v2394 = vld [vmem:[%s2390 + $0xc] sm:$0xf]
    %v2395 = vld [vmem:[%s2390 + $0x10] sm:$0xf]
    %v2396 = vld [vmem:[%s2390 + $0x14] sm:$0xf]
    %v2397 = vld [vmem:[%s2390 + $0x18] sm:$0xf]
    %v2398 = vld [vmem:[%s2390 + $0x1c] sm:$0xf]
    %v2407 = vunpack.c.l.b16 %v2391
    %v2408 = vunpack.c.l.b16 %v2392
    %v2409 = vunpack.c.l.b16 %v2393
    %v2410 = vunpack.c.l.b16 %v2394
    %v2411 = vunpack.c.l.b16 %v2395
    %v2412 = vunpack.c.l.b16 %v2396
    %v2413 = vunpack.c.l.b16 %v2397
    %v2414 = vunpack.c.l.b16 %v2398
    %v2415 = vpack.c.b16 %v2408, %v2407
    %v2416 = vpack.c.b16 %v2410, %v2409
    %v2417 = vpack.c.b16 %v2412, %v2411
    %v2418 = vpack.c.b16 %v2414, %v2413
    %v2424 = vsel %vm1655, %v2389, 0
    %2426 = vmatpush.bf16.msra.mxu0 0
    %2427 = vmatpush.bf16.msra.mxu0 0
    %2428 = vmatpush.bf16.msra.mxu0 0
    %2429 = vmatpush.bf16.msra.mxu0 0
    %2430 = vmatpush.bf16.msra.mxu0 %v2418
    %2431 = vmatpush.bf16.msra.mxu0 %v2417
    %2432 = vmatpush.bf16.msra.mxu0 %v2416
    %2433 = vmatpush.bf16.msra.mxu0 %v2415
    %2434 = vmatmul.bf16.gmra.mxu0 %v2424
    %v2435 = vpop.f32.mrf.mxu0
    %v2436 = vadd.f32 0.0, %v2435
    %v2437 = vpop.f32.mrf.mxu0
    %2438 = vdwg.mxu0
    %v2439 = vadd.f32 %v2386, %v2436
    %v2440 = vld [vmem:[#allocation25] sm:$0x1]
    %v2442 = vperm.slane %v2440, 0
    %v2444 = vadd.f32 %v2439, %v2442
    %v2445 = vmax.f32 %v2444, 0.0
    %v2446 = vrot.slane %v2445, 7
    %v2447 = vmul.f32 %v2446, %v2278
    %v2448 = vrot.slane %v2445, 1
    %v2449 = vmul.f32 %v2448, %v2287
    %v2450 = vpack.c.bf16 %v2447, %v2447
    %v2451 = vld [vmem:[%s35] sm:$0xf]
    %v2452 = vld [vmem:[%s35 + $0x4] sm:$0xf]
    %v2453 = vld [vmem:[%s35 + $0x8] sm:$0xf]
    %v2454 = vld [vmem:[%s35 + $0xc] sm:$0xf]
    %v2455 = vld [vmem:[%s35 + $0x10] sm:$0xf]
    %v2456 = vld [vmem:[%s35 + $0x14] sm:$0xf]
    %v2457 = vld [vmem:[%s35 + $0x18] sm:$0xf]
    %v2458 = vld [vmem:[%s35 + $0x1c] sm:$0xf]
    %v2459 = vld [vmem:[%s35 + $0x20] sm:$0xf]
    %v2460 = vld [vmem:[%s35 + $0x24] sm:$0xf]
    %v2461 = vld [vmem:[%s35 + $0x28] sm:$0xf]
    %v2462 = vld [vmem:[%s35 + $0x2c] sm:$0xf]
    %v2463 = vld [vmem:[%s35 + $0x30] sm:$0xf]
    %v2464 = vld [vmem:[%s35 + $0x34] sm:$0xf]
    %v2465 = vld [vmem:[%s35 + $0x38] sm:$0xf]
    %v2466 = vld [vmem:[%s35 + $0x3c] sm:$0xf]
    %v2467 = vpack.c.bf16 %v2445, %v2445
    %s2468 = scalar_lea.vmem %s35, 64
    %v2469 = vld [vmem:[%s2468] sm:$0xf]
    %v2470 = vld [vmem:[%s2468 + $0x4] sm:$0xf]
    %v2471 = vld [vmem:[%s2468 + $0x8] sm:$0xf]
    %v2472 = vld [vmem:[%s2468 + $0xc] sm:$0xf]
    %v2473 = vld [vmem:[%s2468 + $0x10] sm:$0xf]
    %v2474 = vld [vmem:[%s2468 + $0x14] sm:$0xf]
    %v2475 = vld [vmem:[%s2468 + $0x18] sm:$0xf]
    %v2476 = vld [vmem:[%s2468 + $0x1c] sm:$0xf]
    %v2477 = vld [vmem:[%s2468 + $0x20] sm:$0xf]
    %v2478 = vld [vmem:[%s2468 + $0x24] sm:$0xf]
    %v2479 = vld [vmem:[%s2468 + $0x28] sm:$0xf]
    %v2480 = vld [vmem:[%s2468 + $0x2c] sm:$0xf]
    %v2481 = vld [vmem:[%s2468 + $0x30] sm:$0xf]
    %v2482 = vld [vmem:[%s2468 + $0x34] sm:$0xf]
    %v2483 = vld [vmem:[%s2468 + $0x38] sm:$0xf]
    %v2484 = vld [vmem:[%s2468 + $0x3c] sm:$0xf]
    %v2501 = vunpack.c.l.b16 %v2469
    %v2502 = vunpack.c.l.b16 %v2470
    %v2503 = vunpack.c.l.b16 %v2471
    %v2504 = vunpack.c.l.b16 %v2472
    %v2505 = vunpack.c.l.b16 %v2473
    %v2506 = vunpack.c.l.b16 %v2474
    %v2507 = vunpack.c.l.b16 %v2475
    %v2508 = vunpack.c.l.b16 %v2476
    %v2509 = vunpack.c.l.b16 %v2477
    %v2510 = vunpack.c.l.b16 %v2478
    %v2511 = vunpack.c.l.b16 %v2479
    %v2512 = vunpack.c.l.b16 %v2480
    %v2513 = vunpack.c.l.b16 %v2481
    %v2514 = vunpack.c.l.b16 %v2482
    %v2515 = vunpack.c.l.b16 %v2483
    %v2516 = vunpack.c.l.b16 %v2484
    %v2517 = vpack.c.b16 %v2502, %v2501
    %v2518 = vpack.c.b16 %v2504, %v2503
    %v2519 = vpack.c.b16 %v2506, %v2505
    %v2520 = vpack.c.b16 %v2508, %v2507
    %v2521 = vpack.c.b16 %v2510, %v2509
    %v2522 = vpack.c.b16 %v2512, %v2511
    %v2523 = vpack.c.b16 %v2514, %v2513
    %v2524 = vpack.c.b16 %v2516, %v2515
    %2533 = vmatpush.bf16.msra.mxu0 %v2524
    %2534 = vmatpush.bf16.msra.mxu0 %v2523
    %2535 = vmatpush.bf16.msra.mxu0 %v2522
    %2536 = vmatpush.bf16.msra.mxu0 %v2521
    %2537 = vmatpush.bf16.msra.mxu0 %v2520
    %2538 = vmatpush.bf16.msra.mxu0 %v2519
    %2539 = vmatpush.bf16.msra.mxu0 %v2518
    %2540 = vmatpush.bf16.msra.mxu0 %v2517
    %2541 = vmatmul.bf16.gmra.mxu0 %v2467
    %v2542 = vpop.f32.mrf.mxu0
    %v2543 = vadd.f32 0.0, %v2542
    %v2544 = vpop.f32.mrf.mxu0
    %2545 = vdwg.mxu0
    %v2562 = vunpack.c.l.b16 %v2451
    %v2563 = vunpack.c.l.b16 %v2452
    %v2564 = vunpack.c.l.b16 %v2453
    %v2565 = vunpack.c.l.b16 %v2454
    %v2566 = vunpack.c.l.b16 %v2455
    %v2567 = vunpack.c.l.b16 %v2456
    %v2568 = vunpack.c.l.b16 %v2457
    %v2569 = vunpack.c.l.b16 %v2458
    %v2570 = vunpack.c.l.b16 %v2459
    %v2571 = vunpack.c.l.b16 %v2460
    %v2572 = vunpack.c.l.b16 %v2461
    %v2573 = vunpack.c.l.b16 %v2462
    %v2574 = vunpack.c.l.b16 %v2463
    %v2575 = vunpack.c.l.b16 %v2464
    %v2576 = vunpack.c.l.b16 %v2465
    %v2577 = vunpack.c.l.b16 %v2466
    %v2578 = vpack.c.b16 %v2563, %v2562
    %v2579 = vpack.c.b16 %v2565, %v2564
    %v2580 = vpack.c.b16 %v2567, %v2566
    %v2581 = vpack.c.b16 %v2569, %v2568
    %v2582 = vpack.c.b16 %v2571, %v2570
    %v2583 = vpack.c.b16 %v2573, %v2572
    %v2584 = vpack.c.b16 %v2575, %v2574
    %v2585 = vpack.c.b16 %v2577, %v2576
    %2594 = vmatpush.bf16.msra.mxu0 %v2585
    %2595 = vmatpush.bf16.msra.mxu0 %v2584
    %2596 = vmatpush.bf16.msra.mxu0 %v2583
    %2597 = vmatpush.bf16.msra.mxu0 %v2582
    %2598 = vmatpush.bf16.msra.mxu0 %v2581
    %2599 = vmatpush.bf16.msra.mxu0 %v2580
    %2600 = vmatpush.bf16.msra.mxu0 %v2579
    %2601 = vmatpush.bf16.msra.mxu0 %v2578
    %2602 = vmatmul.bf16.gmra.mxu0 %v2450
    %v2603 = vpop.f32.mrf.mxu0
    %v2604 = vadd.f32 %v2543, %v2603
    %v2605 = vpop.f32.mrf.mxu0
    %2606 = vdwg.mxu0
    %v2607 = vpack.c.bf16 %v2449, %v2449
    %s2608 = scalar_lea.vmem %s35, 128
    %v2609 = vld [vmem:[%s2608] sm:$0xf]
    %v2610 = vld [vmem:[%s2608 + $0x4] sm:$0xf]
    %v2611 = vld [vmem:[%s2608 + $0x8] sm:$0xf]
    %v2612 = vld [vmem:[%s2608 + $0xc] sm:$0xf]
    %v2613 = vld [vmem:[%s2608 + $0x10] sm:$0xf]
    %v2614 = vld [vmem:[%s2608 + $0x14] sm:$0xf]
    %v2615 = vld [vmem:[%s2608 + $0x18] sm:$0xf]
    %v2616 = vld [vmem:[%s2608 + $0x1c] sm:$0xf]
    %v2617 = vld [vmem:[%s2608 + $0x20] sm:$0xf]
    %v2618 = vld [vmem:[%s2608 + $0x24] sm:$0xf]
    %v2619 = vld [vmem:[%s2608 + $0x28] sm:$0xf]
    %v2620 = vld [vmem:[%s2608 + $0x2c] sm:$0xf]
    %v2621 = vld [vmem:[%s2608 + $0x30] sm:$0xf]
    %v2622 = vld [vmem:[%s2608 + $0x34] sm:$0xf]
    %v2623 = vld [vmem:[%s2608 + $0x38] sm:$0xf]
    %v2624 = vld [vmem:[%s2608 + $0x3c] sm:$0xf]
    %v2641 = vunpack.c.l.b16 %v2609
    %v2642 = vunpack.c.l.b16 %v2610
    %v2643 = vunpack.c.l.b16 %v2611
    %v2644 = vunpack.c.l.b16 %v2612
    %v2645 = vunpack.c.l.b16 %v2613
    %v2646 = vunpack.c.l.b16 %v2614
    %v2647 = vunpack.c.l.b16 %v2615
    %v2648 = vunpack.c.l.b16 %v2616
    %v2649 = vunpack.c.l.b16 %v2617
    %v2650 = vunpack.c.l.b16 %v2618
    %v2651 = vunpack.c.l.b16 %v2619
    %v2652 = vunpack.c.l.b16 %v2620
    %v2653 = vunpack.c.l.b16 %v2621
    %v2654 = vunpack.c.l.b16 %v2622
    %v2655 = vunpack.c.l.b16 %v2623
    %v2656 = vunpack.c.l.b16 %v2624
    %v2657 = vpack.c.b16 %v2642, %v2641
    %v2658 = vpack.c.b16 %v2644, %v2643
    %v2659 = vpack.c.b16 %v2646, %v2645
    %v2660 = vpack.c.b16 %v2648, %v2647
    %v2661 = vpack.c.b16 %v2650, %v2649
    %v2662 = vpack.c.b16 %v2652, %v2651
    %v2663 = vpack.c.b16 %v2654, %v2653
    %v2664 = vpack.c.b16 %v2656, %v2655
    %2673 = vmatpush.bf16.msra.mxu0 %v2664
    %2674 = vmatpush.bf16.msra.mxu0 %v2663
    %2675 = vmatpush.bf16.msra.mxu0 %v2662
    %2676 = vmatpush.bf16.msra.mxu0 %v2661
    %2677 = vmatpush.bf16.msra.mxu0 %v2660
    %2678 = vmatpush.bf16.msra.mxu0 %v2659
    %2679 = vmatpush.bf16.msra.mxu0 %v2658
    %2680 = vmatpush.bf16.msra.mxu0 %v2657
    %2681 = vmatmul.bf16.gmra.mxu0 %v2607
    %v2682 = vpop.f32.mrf.mxu0
    %v2683 = vadd.f32 0.0, %v2682
    %v2684 = vpop.f32.mrf.mxu0
    %2685 = vdwg.mxu0
    %v2686 = vadd.f32 %v2604, %v2683
    %v2687 = vld [vmem:[#allocation30] sm:$0x1]
    %v2689 = vperm.slane %v2687, 0
    %v2691 = vadd.f32 %v2686, %v2689
    %v2692 = vsel %vm1655, %v2691, 0.0
    %v2693 = vrot.slane %v2692, 4
    %v2694 = vadd.f32 %v2692, %v2693
    %v2695 = vrot.slane %v2694, 2
    %v2696 = vadd.f32 %v2694, %v2695
    %v2697 = vrot.slane %v2696, 1
    %v2698 = vadd.f32 %v2696, %v2697
    %v2699 = vmul.f32 %v2691, %v2691
    %v2700 = vsel %vm1655, %v2699, 0.0
    %v2701 = vrot.slane %v2700, 4
    %v2702 = vadd.f32 %v2700, %v2701
    %v2703 = vrot.slane %v2702, 2
    %v2704 = vadd.f32 %v2702, %v2703
    %v2705 = vrot.slane %v2704, 1
    %v2706 = vadd.f32 %v2704, %v2705
    %v2707 = vld [vmem:[#allocation10] sm:$0xff]
    %v2708 = vld [vmem:[#allocation10 + $0x8] sm:$0xff]
    %v2709 = vld [vmem:[#allocation10 + $0x10] sm:$0xff]
    %v2710 = vld [vmem:[#allocation10 + $0x18] sm:$0xff]
    %v2711 = vld [vmem:[#allocation10 + $0x20] sm:$0xff]
    %v2712 = vld [vmem:[#allocation10 + $0x28] sm:$0xff]
    %v2713 = vld [vmem:[#allocation10 + $0x30] sm:$0xff]
    %v2714 = vld [vmem:[#allocation10 + $0x38] sm:$0xff]
    %v2716 = vsel %vm1655, %v2698, 0
    %2718 = vmatpush.msra.mxu0 0.0
    %2719 = vmatpush.msra.mxu0 0.0
    %2720 = vmatpush.msra.mxu0 0.0
    %2721 = vmatpush.msra.mxu0 0.0
    %2722 = vmatpush.msra.mxu0 0.0
    %2723 = vmatpush.msra.mxu0 0.0
    %2724 = vmatpush.msra.mxu0 0.0
    %2725 = vmatpush.msra.mxu0 0.0
    %2726 = vmatpush.msra.mxu0 %v2714
    %2727 = vmatpush.msra.mxu0 %v2713
    %2728 = vmatpush.msra.mxu0 %v2712
    %2729 = vmatpush.msra.mxu0 %v2711
    %2730 = vmatpush.msra.mxu0 %v2710
    %2731 = vmatpush.msra.mxu0 %v2709
    %2732 = vmatpush.msra.mxu0 %v2708
    %2733 = vmatpush.msra.mxu0 %v2707
    %2734 = vmatmul.f32.gmra.mxu0 %v2716
    %v2735 = vpop.f32.mrf.mxu0
    %v2736 = vadd.f32 0.0, %v2735
    %2737 = vdwg.mxu0
    %v2738 = vrcp.pop 32.0
    %v2739 = vmul.f32 32.0, %v2738
    %v2740 = vsub.f32 1.0, %v2739
    %v2741 = vmul.f32 %v2738, %v2740
    %v2742 = vadd.f32 %v2738, %v2741
    %vm2743 = vweird.f32 %v2738
    %v2744 = vsel %vm2743, %v2738, %v2742
    %v2745 = vmul.f32 %v2736, %v2744
    %v2747 = vsel %vm1655, %v2706, 0
    %2749 = vmatpush.msra.mxu0 0.0
    %2750 = vmatpush.msra.mxu0 0.0
    %2751 = vmatpush.msra.mxu0 0.0
    %2752 = vmatpush.msra.mxu0 0.0
    %2753 = vmatpush.msra.mxu0 0.0
    %2754 = vmatpush.msra.mxu0 0.0
    %2755 = vmatpush.msra.mxu0 0.0
    %2756 = vmatpush.msra.mxu0 0.0
    %2757 = vmatpush.msra.mxu0 %v2714
    %2758 = vmatpush.msra.mxu0 %v2713
    %2759 = vmatpush.msra.mxu0 %v2712
    %2760 = vmatpush.msra.mxu0 %v2711
    %2761 = vmatpush.msra.mxu0 %v2710
    %2762 = vmatpush.msra.mxu0 %v2709
    %2763 = vmatpush.msra.mxu0 %v2708
    %2764 = vmatpush.msra.mxu0 %v2707
    %2765 = vmatmul.f32.gmra.mxu0 %v2747
    %v2766 = vpop.f32.mrf.mxu0
    %v2767 = vadd.f32 0.0, %v2766
    %2768 = vdwg.mxu0
    %v2769 = vmul.f32 %v2767, %v2744
    %v2770 = vmul.f32 %v2745, %v2745
    %v2771 = vsub.f32 %v2769, %v2770
    %v2772 = vmax.f32 %v2771, 0.0
    %v2773 = vperm.slane %v2745, 0
    %v2774 = vsub.f32 %v2691, %v2773
    %v2775 = vadd.f32 %v2772, 1e-05
    %v2776 = vrsqrt.pop %v2775
    %v2777 = vmul.f32 %v2776, %v2775
    %v2778 = vmul.f32 %v2777, %v2776
    %v2779 = vmul.f32 0.5, %v2778
    %v2780 = vsub.f32 1.5, %v2779
    %v2781 = vmul.f32 %v2776, %v2780
    %vm2782 = vweird.f32 %v2775
    %vm2783 = vweird.f32 %v2776
    %vm2784 = vmor %vm2782, %vm2783
    %v2785 = vsel %vm2784, %v2776, %v2781
    %v2786 = vperm.slane %v2785, 0
    %v2787 = vmul.f32 %v2774, %v2786
    %v2788 = vld [vmem:[#allocation37] sm:$0x1]
    %v2790 = vperm.slane %v2788, 0
    %v2792 = vmul.f32 %v2787, %v2790
    %v2793 = vld [vmem:[#allocation39] sm:$0x1]
    %v2795 = vperm.slane %v2793, 0
    %v2797 = vadd.f32 %v2792, %v2795
    %2798 = vst.msk [vmem:[%s67] sm:$0xff] %vm1655, %v2797
    // Predicated region
    $region226: #{rvosnet_forward.2} parent=1 // pred_check
      _
    $region227: #{rvosnet_forward.2} parent=1 // pred_check_branch
      %2800 = sbr.rel (0) target = $region229
    $region228: #{rvosnet_forward.2} parent=1 // pred_region
      _
    $region229: #{rvosnet_forward.2} parent=1 // pred_fallthru
      _
    // Predicated region
    $region230: #{rvosnet_forward.2} parent=1 // pred_check
      _
    $region231: #{rvosnet_forward.2} parent=1 // pred_check_branch
      %2802 = sbr.rel (0) target = $region233
    $region232: #{rvosnet_forward.2} parent=1 // pred_region
      _
    $region233: #{rvosnet_forward.2} parent=1 // pred_fallthru
      _
    // Predicated region
    $region234: #{rvosnet_forward.2} parent=1 // pred_check
      _
    $region235: #{rvosnet_forward.2} parent=1 // pred_check_branch
      %2804 = sbr.rel (0) target = $region237
    $region236: #{rvosnet_forward.2} parent=1 // pred_region
      _
    $region237: #{rvosnet_forward.2} parent=1 // pred_fallthru
      _
    // Predicated region
    $region238: #{rvosnet_forward.2} parent=1 // pred_check
      _
    $region239: #{rvosnet_forward.2} parent=1 // pred_check_branch
      %2806 = sbr.rel (0) target = $region241
    $region240: #{rvosnet_forward.2} parent=1 // pred_region
      _
    $region241: #{rvosnet_forward.2} parent=1 // pred_fallthru
      _
    // Predicated region
    $region242: #{rvosnet_forward.2} parent=1 // pred_check
      _
    $region243: #{rvosnet_forward.2} parent=1 // pred_check_branch
      %2808 = sbr.rel (0) target = $region245
    $region244: #{rvosnet_forward.2} parent=1 // pred_region
      _
    $region245: #{rvosnet_forward.2} parent=1 // pred_fallthru
      _
    // Predicated region
    $region246: #{rvosnet_forward.2} parent=1 // pred_check
      _
    $region247: #{rvosnet_forward.2} parent=1 // pred_check_branch
      %2810 = sbr.rel (0) target = $region249
    $region248: #{rvosnet_forward.2} parent=1 // pred_region
      _
    $region249: #{rvosnet_forward.2} parent=1 // pred_fallthru
      _
    %2811 = vsyncpa [#allocation3], 1
    %2812 = vsyncpa [#allocation5], 1
    %2813 = vsyncpa [#allocation8], 1
    %2814 = vsyncpa [#allocation11], 1
    %2815 = vsyncpa [#allocation14], 1
    %2816 = vsyncpa [#allocation17], 1
    %2817 = vsyncpa [#allocation20], 1
    %2818 = vsyncpa [#allocation23], 1
    %2819 = vsyncpa [#allocation26], 1
    %2820 = vsyncpa [#allocation29], 1
    %2821 = vsyncpa [#allocation32], 1
    %2822 = vsyncpa [#allocation35], 1
    %2823 = vsyncpa [#allocation38], 1

// kernel: rvosnet_forward.3
$region0: #{rvosnet_forward.3}
  #allocation0 [shape = 'u32[]', space=smem, size = 0x4, offset = 0x4, fixed_abs, tag = 'smem constant byte address 0x4 - core index']
  #allocation1 [shape = 'u32[72,128]{1,0:T(1,128)}', space=vmem, size = 0x9000, scoped, tag = 'internal scratch']
  #allocation2 [shape = 'f32[4,64]{1,0:T(4,128)}', space=vmem, size = 0x800, scoped, tag = 'scratch operand']
  #allocation3 [shape = 'f32[4,64]{1,0:T(4,128)}', space=vmem, size = 0x800, scoped, tag = 'scratch operand']
  #allocation4 [shape = 'f32[8,64]{1,0:T(8,128)}', space=vmem, size = 0x1000, scoped, tag = 'scratch operand']
  #allocation5 [shape = 'f32[8,64]{1,0:T(8,128)}', space=vmem, size = 0x1000, scoped, tag = 'scratch operand']
  #allocation6 [shape = 'f32[16,128]{1,0:T(8,128)}', space=vmem, size = 0x2000, scoped, tag = 'scratch operand']
  #allocation7 [shape = 'f32[16,128]{1,0:T(8,128)}', space=vmem, size = 0x2000, scoped, tag = 'scratch operand']
  #allocation8 [shape = 'f32[8,128]{1,0:T(8,128)}', space=vmem, size = 0x1000, scoped, tag = 'scratch operand']
  #allocation9 [shape = 'f32[8,320]{1,0:T(8,128)}', space=vmem, size = 0x3000, scoped, tag = 'scratch operand']
  #allocation10 [shape = 'f32[16,384]{1,0:T(8,128)}', space=vmem, size = 0x6000, scoped, tag = 'scratch operand']
  %s0 = inlined_call_operand.vmem [shape: f32[2,4,64], index: 0, kind: input, shape index: {}]
  %s1 = inlined_call_operand.vmem [shape: f32[16,128], index: 1, kind: input, shape index: {}]
  %s2 = inlined_call_operand.vmem [shape: f32[32,128], index: 2, kind: input, shape index: {}]
  %s3 = inlined_call_operand.vmem [shape: f32[2,8,1], index: 3, kind: input, shape index: {}]
  %s4 = inlined_call_operand.vmem [shape: f32[2,16,1], index: 4, kind: input, shape index: {}]
  %s5 = inlined_call_operand.vmem [shape: bf16[3,128,256], index: 5, kind: input, shape index: {}]
  %s6 = inlined_call_operand.hbm [shape: f32[1,256], index: 6, kind: input, shape index: {}]
  %s7 = inlined_call_operand.vmem [shape: bf16[2,64,128], index: 7, kind: input, shape index: {}]
  %s8 = inlined_call_operand.hbm [shape: f32[1,128], index: 8, kind: input, shape index: {}]
  %s9 = inlined_call_operand.vmem [shape: f32[2,8,4], index: 9, kind: input, shape index: {}]
  %s10 = inlined_call_operand.hbm [shape: bf16[3,320,256], index: 10, kind: input, shape index: {}]
  %s11 = inlined_call_operand.hbm [shape: f32[1,256], index: 11, kind: input, shape index: {}]
  %s12 = inlined_call_operand.vmem [shape: bf16[2,64,128], index: 12, kind: input, shape index: {}]
  %s13 = inlined_call_operand.hbm [shape: f32[1,128], index: 13, kind: input, shape index: {}]
  %s14 = inlined_call_operand.vmem [shape: f32[2,16,8], index: 14, kind: input, shape index: {}]
  %s15 = inlined_call_operand.vmem [shape: bf16[3,384,512], index: 15, kind: input, shape index: {}]
  %s16 = inlined_call_operand.hbm [shape: f32[1,512], index: 16, kind: input, shape index: {}]
  %s17 = inlined_call_operand.hbm [shape: bf16[3,128,128], index: 17, kind: input, shape index: {}]
  %s18 = inlined_call_operand.hbm [shape: f32[1,128], index: 18, kind: input, shape index: {}]
  %s19 = inlined_call_operand.vmem [shape: f32[32,128], index: 19, kind: output, shape index: {}]
  %s20 = sld [smem:[#allocation0]]
  $region145: #{rvosnet_forward.3} parent=0
    _
  %s22 = ssub.s32 1, %s20
  %s23 = scalar_select 0, %s22, %s20
  $region1: #{rvosnet_forward.3} parent=0
    #allocation11 [shape = 'u8[1024]{0}', space=vmem, size = 0x400, scoped, tag = 'input window, operand 6, single buffered']
    #allocation12 [shape = 's32[2]{0}', space=sflag, size = 0x8, scoped, tag = 'scoped memory for rvosnet_forward.3']
    #allocation13 [shape = 'u8[512]{0}', space=vmem, size = 0x400, scoped, tag = 'input window, operand 8, single buffered']
    #allocation14 [shape = 's32[1]{0}', space=sflag, size = 0x4, scoped, tag = 'scoped memory for rvosnet_forward.3']
    #allocation15 [shape = 'u8[491520]{0}', space=vmem, size = 0x78000, scoped, tag = 'input window, operand 10, single buffered']
    #allocation16 [shape = 'u8[1024]{0}', space=vmem, size = 0x400, scoped, tag = 'input window, operand 11, single buffered']
    #allocation17 [shape = 's32[1]{0}', space=sflag, size = 0x4, scoped, tag = 'scoped memory for rvosnet_forward.3']
    #allocation18 [shape = 'u8[512]{0}', space=vmem, size = 0x400, scoped, tag = 'input window, operand 13, single buffered']
    #allocation19 [shape = 'u8[2048]{0}', space=vmem, size = 0x800, scoped, tag = 'input window, operand 16, single buffered']
    #allocation20 [shape = 's32[1]{0}', space=sflag, size = 0x4, scoped, tag = 'scoped memory for rvosnet_forward.3']
    #allocation21 [shape = 'u8[98304]{0}', space=vmem, size = 0x18000, scoped, tag = 'input window, operand 17, single buffered']
    #allocation22 [shape = 'u8[512]{0}', space=vmem, size = 0x400, scoped, tag = 'input window, operand 18, single buffered']
    #allocation23 [shape = 's32[1]{0}', space=sflag, size = 0x4, scoped, tag = 'scoped memory for rvosnet_forward.3']
    %24 = vsyncpa [#allocation12], 0
    %25 = vsyncpa [#allocation14], 0
    %26 = vsyncpa [#allocation17], 0
    %27 = vsyncpa [#allocation20], 0
    %28 = vsyncpa [#allocation23], 0
    loop: start=0, step=1, limit=4
    $region2: #{rvosnet_forward.3} parent=1 // loop_pre_header
      _
    $region3: #{rvosnet_forward.3} parent=1 // loop_header
      %s30 = sphi 0, %s34
      %p31 = scmp.ge.s32.totalorder %s30, 4
      %s40 = sphi 0, %s42
      %s43 = sphi 0, %s40
      %s44 = sphi 0, %s43
      %s60 = sphi 0, %s44
      %s66 = sphi 0, %s68
      %s69 = sphi 0, %s66
      %s70 = sphi 0, %s69
      %s86 = sphi 0, %s70
      %s92 = sphi 0, %s94
      %s95 = sphi 0, %s92
      %s96 = sphi 0, %s95
      %s112 = sphi 0, %s96
      %s116 = sphi 0, %s116
      %s118 = sphi 0, %s116
      %s119 = sphi 0, %s118
      %s133 = sphi 0, %s119
      %s137 = sphi 0, %s137
      %s139 = sphi 0, %s137
      %s140 = sphi 0, %s139
      %s154 = sphi 0, %s140
      %s158 = sphi 0, %s158
      %s160 = sphi 0, %s158
      %s161 = sphi 0, %s160
      %s175 = sphi 0, %s161
      %s179 = sphi 0, %s179
      %s181 = sphi 0, %s179
      %s182 = sphi 0, %s181
      %s196 = sphi 0, %s182
      %s200 = sphi 0, %s200
      %s202 = sphi 0, %s200
      %s203 = sphi 0, %s202
      %s217 = sphi 0, %s203
      %s221 = sphi 0, %s221
      %s223 = sphi 0, %s221
      %s224 = sphi 0, %s223
      %s238 = sphi 0, %s224
      %s242 = sphi 0, %s242
      %s244 = sphi 0, %s242
      %s245 = sphi 0, %s244
      %s259 = sphi 0, %s245
      %s263 = sphi 0, %s263
      %s265 = sphi 0, %s263
      %s266 = sphi 0, %s265
      %s280 = sphi 0, %s266
      %s284 = sphi 0, %s284
      %s286 = sphi 0, %s284
      %s287 = sphi 0, %s286
      %s301 = sphi 0, %s287
      %s305 = sphi 0, %s305
      %s307 = sphi 0, %s305
      %s308 = sphi 0, %s307
      %s322 = sphi 0, %s308
      %s326 = sphi 0, %s326
      %s328 = sphi 0, %s326
      %s329 = sphi 0, %s328
      %s343 = sphi 0, %s329
      %s347 = sphi 0, %s347
      %s349 = sphi 0, %s347
      %s350 = sphi 0, %s349
      %s364 = sphi 0, %s350
      %s368 = sphi 0, %s368
      %s370 = sphi 0, %s368
      %s371 = sphi 0, %s370
      %s385 = sphi 0, %s371
      %s389 = sphi 0, %s389
      %s391 = sphi 0, %s389
      %s392 = sphi 0, %s391
      %s406 = sphi 0, %s392
      %s410 = sphi 0, %s410
      %s412 = sphi 0, %s410
      %s413 = sphi 0, %s412
      %s427 = sphi 0, %s413
      %s431 = sphi 0, %s431
      %s433 = sphi 0, %s431
      %s434 = sphi 0, %s433
      %s448 = sphi 0, %s434
      %s454 = sphi 0, %s456
      %s457 = sphi 0, %s454
      %s458 = sphi 0, %s457
      %s474 = sphi 0, %s458
    $region4: #{rvosnet_forward.3} parent=1 // loop_header_branch
      %33 = sbr.rel (%p31) target = $region8
    $region5: #{rvosnet_forward.3} parent=1 // loop_body
      %s35 = ssub.s32 %s30, 1
      %s36 = ssub.s32 %s30, 2
      %s37 = sadd.s32 %s30, 1
      %s38 = ssub.s32 %s30, %s37
      %p39 = scmp.eq.s32.totalorder %s38, 0
      %s41 = sadd.s32 %s40, 1
      %s42 = scalar_select %p39, %s40, %s41
      %p45 = pneg %p39
      %p46 = scmp.eq.s32.totalorder %s30, 1
      %p47 = por %p45, %p46
      %p48 = scmp.ne.s32.totalorder %s40, %s43
      %p49 = scmp.eq.s32.totalorder %s30, 0
      %p50 = por %p48, %p49
      %p51 = scmp.ne.s32.totalorder %s40, %s43
      %p52 = scmp.eq.s32.totalorder %s35, 1
      %p53 = por %p51, %p52
      %p54 = scmp.ne.s32.totalorder %s43, %s44
      %p55 = scmp.eq.s32.totalorder %s35, 0
      %p56 = por %p54, %p55
      %p57 = scmp.ne.s32.totalorder %s43, %s44
      %p58 = scmp.eq.s32.totalorder %s36, 1
      %p59 = por %p57, %p58
      %p61 = scmp.ne.s32.totalorder %s44, %s60
      %p62 = scmp.eq.s32.totalorder %s36, 0
      %p63 = por %p61, %p62
      %s64 = ssub.s32 %s30, %s37
      %p65 = scmp.eq.s32.totalorder %s64, 0
      %s67 = sadd.s32 %s66, 1
      %s68 = scalar_select %p65, %s66, %s67
      %p71 = pneg %p65
      %p72 = scmp.eq.s32.totalorder %s30, 1
      %p73 = por %p71, %p72
      %p74 = scmp.ne.s32.totalorder %s66, %s69
      %p75 = scmp.eq.s32.totalorder %s30, 0
      %p76 = por %p74, %p75
      %p77 = scmp.ne.s32.totalorder %s66, %s69
      %p78 = scmp.eq.s32.totalorder %s35, 1
      %p79 = por %p77, %p78
      %p80 = scmp.ne.s32.totalorder %s69, %s70
      %p81 = scmp.eq.s32.totalorder %s35, 0
      %p82 = por %p80, %p81
      %p83 = scmp.ne.s32.totalorder %s69, %s70
      %p84 = scmp.eq.s32.totalorder %s36, 1
      %p85 = por %p83, %p84
      %p87 = scmp.ne.s32.totalorder %s70, %s86
      %p88 = scmp.eq.s32.totalorder %s36, 0
      %p89 = por %p87, %p88
      %s90 = ssub.s32 %s30, %s37
      %p91 = scmp.eq.s32.totalorder %s90, 0
      %s93 = sadd.s32 %s92, 1
      %s94 = scalar_select %p91, %s92, %s93
      %p97 = pneg %p91
      %p98 = scmp.eq.s32.totalorder %s30, 1
      %p99 = por %p97, %p98
      %p100 = scmp.ne.s32.totalorder %s92, %s95
      %p101 = scmp.eq.s32.totalorder %s30, 0
      %p102 = por %p100, %p101
      %p103 = scmp.ne.s32.totalorder %s92, %s95
      %p104 = scmp.eq.s32.totalorder %s35, 1
      %p105 = por %p103, %p104
      %p106 = scmp.ne.s32.totalorder %s95, %s96
      %p107 = scmp.eq.s32.totalorder %s35, 0
      %p108 = por %p106, %p107
      %p109 = scmp.ne.s32.totalorder %s95, %s96
      %p110 = scmp.eq.s32.totalorder %s36, 1
      %p111 = por %p109, %p110
      %p113 = scmp.ne.s32.totalorder %s96, %s112
      %p114 = scmp.eq.s32.totalorder %s36, 0
      %p115 = por %p113, %p114
      %s117 = sadd.s32 %s116, 1
      %p120 = scmp.eq.s32.totalorder %s30, 1
      %p121 = scmp.ne.s32.totalorder %s116, %s118
      %p122 = scmp.eq.s32.totalorder %s30, 0
      %p123 = por %p121, %p122
      %p124 = scmp.ne.s32.totalorder %s116, %s118
      %p125 = scmp.eq.s32.totalorder %s35, 1
      %p126 = por %p124, %p125
      %p127 = scmp.ne.s32.totalorder %s118, %s119
      %p128 = scmp.eq.s32.totalorder %s35, 0
      %p129 = por %p127, %p128
      %p130 = scmp.ne.s32.totalorder %s118, %s119
      %p131 = scmp.eq.s32.totalorder %s36, 1
      %p132 = por %p130, %p131
      %p134 = scmp.ne.s32.totalorder %s119, %s133
      %p135 = scmp.eq.s32.totalorder %s36, 0
      %p136 = por %p134, %p135
      %s138 = sadd.s32 %s137, 1
      %p141 = scmp.eq.s32.totalorder %s30, 1
      %p142 = scmp.ne.s32.totalorder %s137, %s139
      %p143 = scmp.eq.s32.totalorder %s30, 0
      %p144 = por %p142, %p143
      %p145 = scmp.ne.s32.totalorder %s137, %s139
      %p146 = scmp.eq.s32.totalorder %s35, 1
      %p147 = por %p145, %p146
      %p148 = scmp.ne.s32.totalorder %s139, %s140
      %p149 = scmp.eq.s32.totalorder %s35, 0
      %p150 = por %p148, %p149
      %p151 = scmp.ne.s32.totalorder %s139, %s140
      %p152 = scmp.eq.s32.totalorder %s36, 1
      %p153 = por %p151, %p152
      %p155 = scmp.ne.s32.totalorder %s140, %s154
      %p156 = scmp.eq.s32.totalorder %s36, 0
      %p157 = por %p155, %p156
      %s159 = sadd.s32 %s158, 1
      %p162 = scmp.eq.s32.totalorder %s30, 1
      %p163 = scmp.ne.s32.totalorder %s158, %s160
      %p164 = scmp.eq.s32.totalorder %s30, 0
      %p165 = por %p163, %p164
      %p166 = scmp.ne.s32.totalorder %s158, %s160
      %p167 = scmp.eq.s32.totalorder %s35, 1
      %p168 = por %p166, %p167
      %p169 = scmp.ne.s32.totalorder %s160, %s161
      %p170 = scmp.eq.s32.totalorder %s35, 0
      %p171 = por %p169, %p170
      %p172 = scmp.ne.s32.totalorder %s160, %s161
      %p173 = scmp.eq.s32.totalorder %s36, 1
      %p174 = por %p172, %p173
      %p176 = scmp.ne.s32.totalorder %s161, %s175
      %p177 = scmp.eq.s32.totalorder %s36, 0
      %p178 = por %p176, %p177
      %s180 = sadd.s32 %s179, 1
      %p183 = scmp.eq.s32.totalorder %s30, 1
      %p184 = scmp.ne.s32.totalorder %s179, %s181
      %p185 = scmp.eq.s32.totalorder %s30, 0
      %p186 = por %p184, %p185
      %p187 = scmp.ne.s32.totalorder %s179, %s181
      %p188 = scmp.eq.s32.totalorder %s35, 1
      %p189 = por %p187, %p188
      %p190 = scmp.ne.s32.totalorder %s181, %s182
      %p191 = scmp.eq.s32.totalorder %s35, 0
      %p192 = por %p190, %p191
      %p193 = scmp.ne.s32.totalorder %s181, %s182
      %p194 = scmp.eq.s32.totalorder %s36, 1
      %p195 = por %p193, %p194
      %p197 = scmp.ne.s32.totalorder %s182, %s196
      %p198 = scmp.eq.s32.totalorder %s36, 0
      %p199 = por %p197, %p198
      %s201 = sadd.s32 %s200, 1
      %p204 = scmp.eq.s32.totalorder %s30, 1
      %p205 = scmp.ne.s32.totalorder %s200, %s202
      %p206 = scmp.eq.s32.totalorder %s30, 0
      %p207 = por %p205, %p206
      %p208 = scmp.ne.s32.totalorder %s200, %s202
      %p209 = scmp.eq.s32.totalorder %s35, 1
      %p210 = por %p208, %p209
      %p211 = scmp.ne.s32.totalorder %s202, %s203
      %p212 = scmp.eq.s32.totalorder %s35, 0
      %p213 = por %p211, %p212
      %p214 = scmp.ne.s32.totalorder %s202, %s203
      %p215 = scmp.eq.s32.totalorder %s36, 1
      %p216 = por %p214, %p215
      %p218 = scmp.ne.s32.totalorder %s203, %s217
      %p219 = scmp.eq.s32.totalorder %s36, 0
      %p220 = por %p218, %p219
      %s222 = sadd.s32 %s221, 1
      %p225 = scmp.eq.s32.totalorder %s30, 1
      %p226 = scmp.ne.s32.totalorder %s221, %s223
      %p227 = scmp.eq.s32.totalorder %s30, 0
      %p228 = por %p226, %p227
      %p229 = scmp.ne.s32.totalorder %s221, %s223
      %p230 = scmp.eq.s32.totalorder %s35, 1
      %p231 = por %p229, %p230
      %p232 = scmp.ne.s32.totalorder %s223, %s224
      %p233 = scmp.eq.s32.totalorder %s35, 0
      %p234 = por %p232, %p233
      %p235 = scmp.ne.s32.totalorder %s223, %s224
      %p236 = scmp.eq.s32.totalorder %s36, 1
      %p237 = por %p235, %p236
      %p239 = scmp.ne.s32.totalorder %s224, %s238
      %p240 = scmp.eq.s32.totalorder %s36, 0
      %p241 = por %p239, %p240
      %s243 = sadd.s32 %s242, 1
      %p246 = scmp.eq.s32.totalorder %s30, 1
      %p247 = scmp.ne.s32.totalorder %s242, %s244
      %p248 = scmp.eq.s32.totalorder %s30, 0
      %p249 = por %p247, %p248
      %p250 = scmp.ne.s32.totalorder %s242, %s244
      %p251 = scmp.eq.s32.totalorder %s35, 1
      %p252 = por %p250, %p251
      %p253 = scmp.ne.s32.totalorder %s244, %s245
      %p254 = scmp.eq.s32.totalorder %s35, 0
      %p255 = por %p253, %p254
      %p256 = scmp.ne.s32.totalorder %s244, %s245
      %p257 = scmp.eq.s32.totalorder %s36, 1
      %p258 = por %p256, %p257
      %p260 = scmp.ne.s32.totalorder %s245, %s259
      %p261 = scmp.eq.s32.totalorder %s36, 0
      %p262 = por %p260, %p261
      %s264 = sadd.s32 %s263, 1
      %p267 = scmp.eq.s32.totalorder %s30, 1
      %p268 = scmp.ne.s32.totalorder %s263, %s265
      %p269 = scmp.eq.s32.totalorder %s30, 0
      %p270 = por %p268, %p269
      %p271 = scmp.ne.s32.totalorder %s263, %s265
      %p272 = scmp.eq.s32.totalorder %s35, 1
      %p273 = por %p271, %p272
      %p274 = scmp.ne.s32.totalorder %s265, %s266
      %p275 = scmp.eq.s32.totalorder %s35, 0
      %p276 = por %p274, %p275
      %p277 = scmp.ne.s32.totalorder %s265, %s266
      %p278 = scmp.eq.s32.totalorder %s36, 1
      %p279 = por %p277, %p278
      %p281 = scmp.ne.s32.totalorder %s266, %s280
      %p282 = scmp.eq.s32.totalorder %s36, 0
      %p283 = por %p281, %p282
      %s285 = sadd.s32 %s284, 1
      %p288 = scmp.eq.s32.totalorder %s30, 1
      %p289 = scmp.ne.s32.totalorder %s284, %s286
      %p290 = scmp.eq.s32.totalorder %s30, 0
      %p291 = por %p289, %p290
      %p292 = scmp.ne.s32.totalorder %s284, %s286
      %p293 = scmp.eq.s32.totalorder %s35, 1
      %p294 = por %p292, %p293
      %p295 = scmp.ne.s32.totalorder %s286, %s287
      %p296 = scmp.eq.s32.totalorder %s35, 0
      %p297 = por %p295, %p296
      %p298 = scmp.ne.s32.totalorder %s286, %s287
      %p299 = scmp.eq.s32.totalorder %s36, 1
      %p300 = por %p298, %p299
      %p302 = scmp.ne.s32.totalorder %s287, %s301
      %p303 = scmp.eq.s32.totalorder %s36, 0
      %p304 = por %p302, %p303
      %s306 = sadd.s32 %s305, 1
      %p309 = scmp.eq.s32.totalorder %s30, 1
      %p310 = scmp.ne.s32.totalorder %s305, %s307
      %p311 = scmp.eq.s32.totalorder %s30, 0
      %p312 = por %p310, %p311
      %p313 = scmp.ne.s32.totalorder %s305, %s307
      %p314 = scmp.eq.s32.totalorder %s35, 1
      %p315 = por %p313, %p314
      %p316 = scmp.ne.s32.totalorder %s307, %s308
      %p317 = scmp.eq.s32.totalorder %s35, 0
      %p318 = por %p316, %p317
      %p319 = scmp.ne.s32.totalorder %s307, %s308
      %p320 = scmp.eq.s32.totalorder %s36, 1
      %p321 = por %p319, %p320
      %p323 = scmp.ne.s32.totalorder %s308, %s322
      %p324 = scmp.eq.s32.totalorder %s36, 0
      %p325 = por %p323, %p324
      %s327 = sadd.s32 %s326, 1
      %p330 = scmp.eq.s32.totalorder %s30, 1
      %p331 = scmp.ne.s32.totalorder %s326, %s328
      %p332 = scmp.eq.s32.totalorder %s30, 0
      %p333 = por %p331, %p332
      %p334 = scmp.ne.s32.totalorder %s326, %s328
      %p335 = scmp.eq.s32.totalorder %s35, 1
      %p336 = por %p334, %p335
      %p337 = scmp.ne.s32.totalorder %s328, %s329
      %p338 = scmp.eq.s32.totalorder %s35, 0
      %p339 = por %p337, %p338
      %p340 = scmp.ne.s32.totalorder %s328, %s329
      %p341 = scmp.eq.s32.totalorder %s36, 1
      %p342 = por %p340, %p341
      %p344 = scmp.ne.s32.totalorder %s329, %s343
      %p345 = scmp.eq.s32.totalorder %s36, 0
      %p346 = por %p344, %p345
      %s348 = sadd.s32 %s347, 1
      %p351 = scmp.eq.s32.totalorder %s30, 1
      %p352 = scmp.ne.s32.totalorder %s347, %s349
      %p353 = scmp.eq.s32.totalorder %s30, 0
      %p354 = por %p352, %p353
      %p355 = scmp.ne.s32.totalorder %s347, %s349
      %p356 = scmp.eq.s32.totalorder %s35, 1
      %p357 = por %p355, %p356
      %p358 = scmp.ne.s32.totalorder %s349, %s350
      %p359 = scmp.eq.s32.totalorder %s35, 0
      %p360 = por %p358, %p359
      %p361 = scmp.ne.s32.totalorder %s349, %s350
      %p362 = scmp.eq.s32.totalorder %s36, 1
      %p363 = por %p361, %p362
      %p365 = scmp.ne.s32.totalorder %s350, %s364
      %p366 = scmp.eq.s32.totalorder %s36, 0
      %p367 = por %p365, %p366
      %s369 = sadd.s32 %s368, 1
      %p372 = scmp.eq.s32.totalorder %s30, 1
      %p373 = scmp.ne.s32.totalorder %s368, %s370
      %p374 = scmp.eq.s32.totalorder %s30, 0
      %p375 = por %p373, %p374
      %p376 = scmp.ne.s32.totalorder %s368, %s370
      %p377 = scmp.eq.s32.totalorder %s35, 1
      %p378 = por %p376, %p377
      %p379 = scmp.ne.s32.totalorder %s370, %s371
      %p380 = scmp.eq.s32.totalorder %s35, 0
      %p381 = por %p379, %p380
      %p382 = scmp.ne.s32.totalorder %s370, %s371
      %p383 = scmp.eq.s32.totalorder %s36, 1
      %p384 = por %p382, %p383
      %p386 = scmp.ne.s32.totalorder %s371, %s385
      %p387 = scmp.eq.s32.totalorder %s36, 0
      %p388 = por %p386, %p387
      %s390 = sadd.s32 %s389, 1
      %p393 = scmp.eq.s32.totalorder %s30, 1
      %p394 = scmp.ne.s32.totalorder %s389, %s391
      %p395 = scmp.eq.s32.totalorder %s30, 0
      %p396 = por %p394, %p395
      %p397 = scmp.ne.s32.totalorder %s389, %s391
      %p398 = scmp.eq.s32.totalorder %s35, 1
      %p399 = por %p397, %p398
      %p400 = scmp.ne.s32.totalorder %s391, %s392
      %p401 = scmp.eq.s32.totalorder %s35, 0
      %p402 = por %p400, %p401
      %p403 = scmp.ne.s32.totalorder %s391, %s392
      %p404 = scmp.eq.s32.totalorder %s36, 1
      %p405 = por %p403, %p404
      %p407 = scmp.ne.s32.totalorder %s392, %s406
      %p408 = scmp.eq.s32.totalorder %s36, 0
      %p409 = por %p407, %p408
      %s411 = sadd.s32 %s410, 1
      %p414 = scmp.eq.s32.totalorder %s30, 1
      %p415 = scmp.ne.s32.totalorder %s410, %s412
      %p416 = scmp.eq.s32.totalorder %s30, 0
      %p417 = por %p415, %p416
      %p418 = scmp.ne.s32.totalorder %s410, %s412
      %p419 = scmp.eq.s32.totalorder %s35, 1
      %p420 = por %p418, %p419
      %p421 = scmp.ne.s32.totalorder %s412, %s413
      %p422 = scmp.eq.s32.totalorder %s35, 0
      %p423 = por %p421, %p422
      %p424 = scmp.ne.s32.totalorder %s412, %s413
      %p425 = scmp.eq.s32.totalorder %s36, 1
      %p426 = por %p424, %p425
      %p428 = scmp.ne.s32.totalorder %s413, %s427
      %p429 = scmp.eq.s32.totalorder %s36, 0
      %p430 = por %p428, %p429
      %s432 = sadd.s32 %s431, 1
      %p435 = scmp.eq.s32.totalorder %s30, 1
      %p436 = scmp.ne.s32.totalorder %s431, %s433
      %p437 = scmp.eq.s32.totalorder %s30, 0
      %p438 = por %p436, %p437
      %p439 = scmp.ne.s32.totalorder %s431, %s433
      %p440 = scmp.eq.s32.totalorder %s35, 1
      %p441 = por %p439, %p440
      %p442 = scmp.ne.s32.totalorder %s433, %s434
      %p443 = scmp.eq.s32.totalorder %s35, 0
      %p444 = por %p442, %p443
      %p445 = scmp.ne.s32.totalorder %s433, %s434
      %p446 = scmp.eq.s32.totalorder %s36, 1
      %p447 = por %p445, %p446
      %p449 = scmp.ne.s32.totalorder %s434, %s448
      %p450 = scmp.eq.s32.totalorder %s36, 0
      %p451 = por %p449, %p450
      %s452 = ssub.s32 %s30, %s37
      %p453 = scmp.eq.s32.totalorder %s452, 0
      %s455 = sadd.s32 %s454, 1
      %s456 = scalar_select %p453, %s454, %s455
      %p459 = pneg %p453
      %p460 = scmp.eq.s32.totalorder %s30, 1
      %p461 = por %p459, %p460
      %p462 = scmp.ne.s32.totalorder %s454, %s457
      %p463 = scmp.eq.s32.totalorder %s30, 0
      %p464 = por %p462, %p463
      %p465 = scmp.ne.s32.totalorder %s454, %s457
      %p466 = scmp.eq.s32.totalorder %s35, 1
      %p467 = por %p465, %p466
      %p468 = scmp.ne.s32.totalorder %s457, %s458
      %p469 = scmp.eq.s32.totalorder %s35, 0
      %p470 = por %p468, %p469
      %p471 = scmp.ne.s32.totalorder %s457, %s458
      %p472 = scmp.eq.s32.totalorder %s36, 1
      %p473 = por %p471, %p472
      %p475 = scmp.ne.s32.totalorder %s458, %s474
      %p476 = scmp.eq.s32.totalorder %s36, 0
      %p477 = por %p475, %p476
      %p478 = scmp.le.s32.totalorder 1, %s30
      %p479 = scmp.lt.s32.totalorder %s30, 3
      %p480 = pnand %p478, %p479
      %p481 = pneg %p480
      // Predicated region
      $region9: #{rvosnet_forward.3} parent=5 // pred_check
        _
      $region10: #{rvosnet_forward.3} parent=5 // pred_check_branch
        %483 = sbr.rel (%p480) target = $region12
      $region11: #{rvosnet_forward.3} parent=5 // pred_region
        %s484 = ssub.s32 %s30, 1
        // Predicated region
        $region13: #{rvosnet_forward.3} parent=11 // pred_check
          %p485 = pneg %p129
        $region14: #{rvosnet_forward.3} parent=11 // pred_check_branch
          %487 = sbr.rel (%p485) target = $region16
        $region15: #{rvosnet_forward.3} parent=11 // pred_region
          _
        $region16: #{rvosnet_forward.3} parent=11 // pred_fallthru
          _
        // Predicated region
        $region17: #{rvosnet_forward.3} parent=11 // pred_check
          %p488 = pneg %p150
        $region18: #{rvosnet_forward.3} parent=11 // pred_check_branch
          %490 = sbr.rel (%p488) target = $region20
        $region19: #{rvosnet_forward.3} parent=11 // pred_region
          _
        $region20: #{rvosnet_forward.3} parent=11 // pred_fallthru
          _
        // Predicated region
        $region21: #{rvosnet_forward.3} parent=11 // pred_check
          %p491 = pneg %p171
        $region22: #{rvosnet_forward.3} parent=11 // pred_check_branch
          %493 = sbr.rel (%p491) target = $region24
        $region23: #{rvosnet_forward.3} parent=11 // pred_region
          _
        $region24: #{rvosnet_forward.3} parent=11 // pred_fallthru
          _
        // Predicated region
        $region25: #{rvosnet_forward.3} parent=11 // pred_check
          %p494 = pneg %p192
        $region26: #{rvosnet_forward.3} parent=11 // pred_check_branch
          %496 = sbr.rel (%p494) target = $region28
        $region27: #{rvosnet_forward.3} parent=11 // pred_region
          %498 = vsyncadd [#allocation12], 0
          %s500 = sshll.u32 %s6, 4
          %s501 = int_to_ptr.hbm [resolvable:$true] %s500
          %s502 = sshll.u32 [#allocation11], 4
          %s503 = int_to_ptr.vmem [resolvable:$true] %s502
          %505 = dma.hbm_to_vmem [thread:$0]  %s501, 32, %s503, [#allocation12]
        $region28: #{rvosnet_forward.3} parent=11 // pred_fallthru
          _
        // Predicated region
        $region29: #{rvosnet_forward.3} parent=11 // pred_check
          %p506 = pneg %p213
        $region30: #{rvosnet_forward.3} parent=11 // pred_check_branch
          %508 = sbr.rel (%p506) target = $region32
        $region31: #{rvosnet_forward.3} parent=11 // pred_region
          _
        $region32: #{rvosnet_forward.3} parent=11 // pred_fallthru
          _
        // Predicated region
        $region33: #{rvosnet_forward.3} parent=11 // pred_check
          %p509 = pneg %p234
        $region34: #{rvosnet_forward.3} parent=11 // pred_check_branch
          %511 = sbr.rel (%p509) target = $region36
        $region35: #{rvosnet_forward.3} parent=11 // pred_region
          %513 = vsyncadd [#allocation14], 0
          %s515 = sshll.u32 %s8, 4
          %s516 = int_to_ptr.hbm [resolvable:$true] %s515
          %s517 = sshll.u32 [#allocation13], 4
          %s518 = int_to_ptr.vmem [resolvable:$true] %s517
          %520 = dma.hbm_to_vmem [thread:$0]  %s516, 16, %s518, [#allocation14]
        $region36: #{rvosnet_forward.3} parent=11 // pred_fallthru
          _
        // Predicated region
        $region37: #{rvosnet_forward.3} parent=11 // pred_check
          %p521 = pneg %p255
        $region38: #{rvosnet_forward.3} parent=11 // pred_check_branch
          %523 = sbr.rel (%p521) target = $region40
        $region39: #{rvosnet_forward.3} parent=11 // pred_region
          _
        $region40: #{rvosnet_forward.3} parent=11 // pred_fallthru
          _
        // Predicated region
        $region41: #{rvosnet_forward.3} parent=11 // pred_check
          %p524 = pneg %p276
        $region42: #{rvosnet_forward.3} parent=11 // pred_check_branch
          %526 = sbr.rel (%p524) target = $region44
        $region43: #{rvosnet_forward.3} parent=11 // pred_region
          %528 = vsyncadd [#allocation14], 0
          %s529 = sshll.u32 %s10, 4
          %s530 = int_to_ptr.hbm [resolvable:$true] %s529
          %s531 = sshll.u32 [#allocation15], 4
          %s532 = int_to_ptr.vmem [resolvable:$true] %s531
          %537 = dma.hbm_to_vmem [thread:$0]  %s530, 15360, %s532, [#allocation14], 128, 128, 8
        $region44: #{rvosnet_forward.3} parent=11 // pred_fallthru
          _
        // Predicated region
        $region45: #{rvosnet_forward.3} parent=11 // pred_check
          %p538 = pneg %p297
        $region46: #{rvosnet_forward.3} parent=11 // pred_check_branch
          %540 = sbr.rel (%p538) target = $region48
        $region47: #{rvosnet_forward.3} parent=11 // pred_region
          %542 = vsyncadd [#allocation17], 0
          %s544 = sshll.u32 %s11, 4
          %s545 = int_to_ptr.hbm [resolvable:$true] %s544
          %s546 = sshll.u32 [#allocation16], 4
          %s547 = int_to_ptr.vmem [resolvable:$true] %s546
          %549 = dma.hbm_to_vmem [thread:$0]  %s545, 32, %s547, [#allocation17]
        $region48: #{rvosnet_forward.3} parent=11 // pred_fallthru
          _
        // Predicated region
        $region49: #{rvosnet_forward.3} parent=11 // pred_check
          %p550 = pneg %p318
        $region50: #{rvosnet_forward.3} parent=11 // pred_check_branch
          %552 = sbr.rel (%p550) target = $region52
        $region51: #{rvosnet_forward.3} parent=11 // pred_region
          _
        $region52: #{rvosnet_forward.3} parent=11 // pred_fallthru
          _
        // Predicated region
        $region53: #{rvosnet_forward.3} parent=11 // pred_check
          %p553 = pneg %p339
        $region54: #{rvosnet_forward.3} parent=11 // pred_check_branch
          %555 = sbr.rel (%p553) target = $region56
        $region55: #{rvosnet_forward.3} parent=11 // pred_region
          %557 = vsyncadd [#allocation17], 0
          %s559 = sshll.u32 %s13, 4
          %s560 = int_to_ptr.hbm [resolvable:$true] %s559
          %s561 = sshll.u32 [#allocation18], 4
          %s562 = int_to_ptr.vmem [resolvable:$true] %s561
          %564 = dma.hbm_to_vmem [thread:$0]  %s560, 16, %s562, [#allocation17]
        $region56: #{rvosnet_forward.3} parent=11 // pred_fallthru
          _
        // Predicated region
        $region57: #{rvosnet_forward.3} parent=11 // pred_check
          %p565 = pneg %p360
        $region58: #{rvosnet_forward.3} parent=11 // pred_check_branch
          %567 = sbr.rel (%p565) target = $region60
        $region59: #{rvosnet_forward.3} parent=11 // pred_region
          _
        $region60: #{rvosnet_forward.3} parent=11 // pred_fallthru
          _
        // Predicated region
        $region61: #{rvosnet_forward.3} parent=11 // pred_check
          %p568 = pneg %p381
        $region62: #{rvosnet_forward.3} parent=11 // pred_check_branch
          %570 = sbr.rel (%p568) target = $region64
        $region63: #{rvosnet_forward.3} parent=11 // pred_region
          _
        $region64: #{rvosnet_forward.3} parent=11 // pred_fallthru
          _
        // Predicated region
        $region65: #{rvosnet_forward.3} parent=11 // pred_check
          %p571 = pneg %p402
        $region66: #{rvosnet_forward.3} parent=11 // pred_check_branch
          %573 = sbr.rel (%p571) target = $region68
        $region67: #{rvosnet_forward.3} parent=11 // pred_region
          %575 = vsyncadd [#allocation20], 0
          %s577 = sshll.u32 %s16, 4
          %s578 = int_to_ptr.hbm [resolvable:$true] %s577
          %s579 = sshll.u32 [#allocation19], 4
          %s580 = int_to_ptr.vmem [resolvable:$true] %s579
          %582 = dma.hbm_to_vmem [thread:$0]  %s578, 64, %s580, [#allocation20]
        $region68: #{rvosnet_forward.3} parent=11 // pred_fallthru
          _
        // Predicated region
        $region69: #{rvosnet_forward.3} parent=11 // pred_check
          %p583 = pneg %p423
        $region70: #{rvosnet_forward.3} parent=11 // pred_check_branch
          %585 = sbr.rel (%p583) target = $region72
        $region71: #{rvosnet_forward.3} parent=11 // pred_region
          %587 = vsyncadd [#allocation20], 0
          %s588 = sshll.u32 %s17, 4
          %s589 = int_to_ptr.hbm [resolvable:$true] %s588
          %s590 = sshll.u32 [#allocation21], 4
          %s591 = int_to_ptr.vmem [resolvable:$true] %s590
          %596 = dma.hbm_to_vmem [thread:$0]  %s589, 3072, %s591, [#allocation20], 64, 64, 4
        $region72: #{rvosnet_forward.3} parent=11 // pred_fallthru
          _
        // Predicated region
        $region73: #{rvosnet_forward.3} parent=11 // pred_check
          %p597 = pneg %p444
        $region74: #{rvosnet_forward.3} parent=11 // pred_check_branch
          %599 = sbr.rel (%p597) target = $region76
        $region75: #{rvosnet_forward.3} parent=11 // pred_region
          %601 = vsyncadd [#allocation23], 0
          %s603 = sshll.u32 %s18, 4
          %s604 = int_to_ptr.hbm [resolvable:$true] %s603
          %s605 = sshll.u32 [#allocation22], 4
          %s606 = int_to_ptr.vmem [resolvable:$true] %s605
          %608 = dma.hbm_to_vmem [thread:$0]  %s604, 16, %s606, [#allocation23]
        $region76: #{rvosnet_forward.3} parent=11 // pred_fallthru
          _
      $region12: #{rvosnet_forward.3} parent=5 // pred_fallthru
        _
      %p609 = scmp.lt.s32.totalorder %s30, 2
      // Predicated region
      $region77: #{rvosnet_forward.3} parent=5 // pred_check
        %p610 = pneg %p609
      $region78: #{rvosnet_forward.3} parent=5 // pred_check_branch
        %612 = sbr.rel (%p610) target = $region80
      $region79: #{rvosnet_forward.3} parent=5 // pred_region
        // Predicated region
        $region81: #{rvosnet_forward.3} parent=79 // pred_check
          %p613 = pneg %p50
        $region82: #{rvosnet_forward.3} parent=79 // pred_check_branch
          %615 = sbr.rel (%p613) target = $region84
        $region83: #{rvosnet_forward.3} parent=79 // pred_region
          %p616 = scmp.lt.s32.totalorder %s30, 1
          %s617 = scalar_select %p616, %s30, 1
          %s618 = smul.addr %s617, 4
          %s619 = scalar_lea.vmem %s0, %s618
        $region84: #{rvosnet_forward.3} parent=79 // pred_fallthru
          _
        // Predicated region
        $region85: #{rvosnet_forward.3} parent=79 // pred_check
          %p620 = pneg %p76
        $region86: #{rvosnet_forward.3} parent=79 // pred_check_branch
          %622 = sbr.rel (%p620) target = $region88
        $region87: #{rvosnet_forward.3} parent=79 // pred_region
          %p623 = scmp.lt.s32.totalorder %s30, 1
          %s624 = scalar_select %p623, %s30, 1
          %s625 = smul.addr %s624, 8
          %s626 = scalar_lea.vmem %s1, %s625
        $region88: #{rvosnet_forward.3} parent=79 // pred_fallthru
          _
        // Predicated region
        $region89: #{rvosnet_forward.3} parent=79 // pred_check
          %p627 = pneg %p102
        $region90: #{rvosnet_forward.3} parent=79 // pred_check_branch
          %629 = sbr.rel (%p627) target = $region92
        $region91: #{rvosnet_forward.3} parent=79 // pred_region
          %s630 = smul.u32 2, %s30
          %p631 = scmp.lt.s32.totalorder %s630, 3
          %s632 = scalar_select %p631, %s630, 3
          %s633 = smul.addr %s632, 8
          %s634 = scalar_lea.vmem %s2, %s633
          %s635 = smul.u32 2, %s30
        $region92: #{rvosnet_forward.3} parent=79 // pred_fallthru
          _
      $region80: #{rvosnet_forward.3} parent=5 // pred_fallthru
        _
      %p636 = scmp.le.s32.totalorder 1, %s30
      %p637 = scmp.lt.s32.totalorder %s30, 3
      %p638 = pnand %p636, %p637
      %p639 = pneg %p638
      // Predicated region
      $region93: #{rvosnet_forward.3} parent=5 // pred_check
        _
      $region94: #{rvosnet_forward.3} parent=5 // pred_check_branch
        %641 = sbr.rel (%p638) target = $region96
      $region95: #{rvosnet_forward.3} parent=5 // pred_region
        %s642 = ssub.s32 %s30, 1
        // Predicated region
        $region97: #{rvosnet_forward.3} parent=95 // pred_check
          %p643 = pneg %p192
        $region98: #{rvosnet_forward.3} parent=95 // pred_check_branch
          %645 = sbr.rel (%p643) target = $region100
        $region99: #{rvosnet_forward.3} parent=95 // pred_region
          %647 = dma.done [#allocation12], 32
        $region100: #{rvosnet_forward.3} parent=95 // pred_fallthru
          _
        // Predicated region
        $region101: #{rvosnet_forward.3} parent=95 // pred_check
          %p648 = pneg %p234
        $region102: #{rvosnet_forward.3} parent=95 // pred_check_branch
          %650 = sbr.rel (%p648) target = $region104
        $region103: #{rvosnet_forward.3} parent=95 // pred_region
          %652 = dma.done [#allocation14], 16
        $region104: #{rvosnet_forward.3} parent=95 // pred_fallthru
          _
        // Predicated region
        $region105: #{rvosnet_forward.3} parent=95 // pred_check
          %p653 = pneg %p276
        $region106: #{rvosnet_forward.3} parent=95 // pred_check_branch
          %655 = sbr.rel (%p653) target = $region108
        $region107: #{rvosnet_forward.3} parent=95 // pred_region
          %657 = dma.done [#allocation14], 15360
        $region108: #{rvosnet_forward.3} parent=95 // pred_fallthru
          _
        // Predicated region
        $region109: #{rvosnet_forward.3} parent=95 // pred_check
          %p658 = pneg %p297
        $region110: #{rvosnet_forward.3} parent=95 // pred_check_branch
          %660 = sbr.rel (%p658) target = $region112
        $region111: #{rvosnet_forward.3} parent=95 // pred_region
          %662 = dma.done [#allocation17], 32
        $region112: #{rvosnet_forward.3} parent=95 // pred_fallthru
          _
        // Predicated region
        $region113: #{rvosnet_forward.3} parent=95 // pred_check
          %p663 = pneg %p339
        $region114: #{rvosnet_forward.3} parent=95 // pred_check_branch
          %665 = sbr.rel (%p663) target = $region116
        $region115: #{rvosnet_forward.3} parent=95 // pred_region
          %667 = dma.done [#allocation17], 16
        $region116: #{rvosnet_forward.3} parent=95 // pred_fallthru
          _
        // Predicated region
        $region117: #{rvosnet_forward.3} parent=95 // pred_check
          %p668 = pneg %p402
        $region118: #{rvosnet_forward.3} parent=95 // pred_check_branch
          %670 = sbr.rel (%p668) target = $region120
        $region119: #{rvosnet_forward.3} parent=95 // pred_region
          %672 = dma.done [#allocation20], 64
        $region120: #{rvosnet_forward.3} parent=95 // pred_fallthru
          _
        // Predicated region
        $region121: #{rvosnet_forward.3} parent=95 // pred_check
          %p673 = pneg %p423
        $region122: #{rvosnet_forward.3} parent=95 // pred_check_branch
          %675 = sbr.rel (%p673) target = $region124
        $region123: #{rvosnet_forward.3} parent=95 // pred_region
          %677 = dma.done [#allocation20], 3072
        $region124: #{rvosnet_forward.3} parent=95 // pred_fallthru
          _
        // Predicated region
        $region125: #{rvosnet_forward.3} parent=95 // pred_check
          %p678 = pneg %p444
        $region126: #{rvosnet_forward.3} parent=95 // pred_check_branch
          %680 = sbr.rel (%p678) target = $region128
        $region127: #{rvosnet_forward.3} parent=95 // pred_region
          %682 = dma.done [#allocation23], 16
        $region128: #{rvosnet_forward.3} parent=95 // pred_fallthru
          _
        %p683 = scmp.lt.s32.totalorder %s35, 1
        %s684 = scalar_select %p683, %s35, 1
        %s685 = smul.addr %s684, 4
        %s686 = scalar_lea.vmem %s0, %s685
        %p687 = pneg %p56
        %p688 = pneg %p53
        %p689 = scmp.lt.s32.totalorder %s35, 1
        %s690 = scalar_select %p689, %s35, 1
        %s691 = smul.addr %s690, 8
        %s692 = scalar_lea.vmem %s1, %s691
        %p693 = pneg %p82
        %p694 = pneg %p79
        %s695 = smul.u32 2, %s35
        %p696 = scmp.lt.s32.totalorder %s695, 3
        %s697 = scalar_select %p696, %s695, 3
        %s698 = smul.addr %s697, 8
        %s699 = scalar_lea.vmem %s2, %s698
        %p700 = pneg %p108
        %p701 = pneg %p105
        %p702 = pneg %p129
        %p703 = pneg %p126
        %p704 = pneg %p150
        %p705 = pneg %p147
        %p706 = pneg %p171
        %p707 = pneg %p168
        %p708 = pneg %p192
        %p709 = pneg %p189
        %p710 = pneg %p213
        %p711 = pneg %p210
        %p712 = pneg %p234
        %p713 = pneg %p231
        %p714 = pneg %p255
        %p715 = pneg %p252
        %p716 = pneg %p276
        %p717 = pneg %p273
        %p718 = pneg %p297
        %p719 = pneg %p294
        %p720 = pneg %p318
        %p721 = pneg %p315
        %p722 = pneg %p339
        %p723 = pneg %p336
        %p724 = pneg %p360
        %p725 = pneg %p357
        %p726 = pneg %p381
        %p727 = pneg %p378
        %p728 = pneg %p402
        %p729 = pneg %p399
        %p730 = pneg %p423
        %p731 = pneg %p420
        %p732 = pneg %p444
        %p733 = pneg %p441
        %p734 = pneg %p470
        %p735 = pneg %p467
        %s736 = smul.u32 2, %s35
        %p737 = scmp.lt.s32.totalorder %s736, 3
        %s738 = scalar_select %p737, %s736, 3
        %s739 = smul.addr %s738, 8
        %s740 = scalar_lea.vmem %s19, %s739
        %p741 = scmp.lt.s32.totalorder %s35, 1
        %s742 = scalar_select %p741, %s35, 1
        %s743 = smul.addr %s742, 4
        %s744 = scalar_lea.vmem %s0, %s743
        %p745 = scmp.lt.s32.totalorder %s35, 1
        %s746 = scalar_select %p745, %s35, 1
        %s747 = smul.addr %s746, 8
        %s748 = scalar_lea.vmem %s1, %s747
        %s749 = smul.u32 2, %s35
        %p750 = scmp.lt.s32.totalorder %s749, 3
        %s751 = scalar_select %p750, %s749, 3
        %s752 = smul.addr %s751, 8
        %s753 = scalar_lea.vmem %s2, %s752
        %s754 = smul.u32 2, %s35
        %s755 = smul.u32 2, %s35
        %p756 = scmp.lt.s32.totalorder %s755, 3
        %s757 = scalar_select %p756, %s755, 3
        %s758 = smul.addr %s757, 8
        %s759 = scalar_lea.vmem %s19, %s758
        %s760 = smul.u32 2, %s35
        %p762 = scmp.eq.s32.totalorder %s35, 0
        // Predicated region
        $region129: #{rvosnet_forward.3} parent=95 // pred_check
          %p763 = pneg %p762
        $region130: #{rvosnet_forward.3} parent=95 // pred_check_branch
          %765 = sbr.rel (%p763) target = $region132
        $region131: #{rvosnet_forward.3} parent=95 // pred_region
          %vm766 = vcmask 519168
          %767 = vst.msk [vmem:[#allocation2] sm:$0xf] %vm766, 0.0
          %768 = vst.msk [vmem:[#allocation3] sm:$0xf] %vm766, 0.0
          %vm769 = vcmask 523264
          %770 = vst.msk [vmem:[#allocation4] sm:$0xff] %vm769, 0.0
          %771 = vst.msk [vmem:[#allocation5] sm:$0xff] %vm769, 0.0
          %772 = vst [vmem:[#allocation6] sm:$0xff] 0.0
          %773 = vst [vmem:[#allocation6 + $0x8] sm:$0xff] 0.0
          %774 = vst [vmem:[#allocation7] sm:$0xff] 0.0
          %775 = vst [vmem:[#allocation7 + $0x8] sm:$0xff] 0.0
          %776 = vst [vmem:[#allocation8] sm:$0xff] 0.0
        $region132: #{rvosnet_forward.3} parent=95 // pred_fallthru
          _
        %v777 = vld [vmem:[%s744] sm:$0xf]
        %vm778 = vcmask 519168
        %779 = vst.msk [vmem:[#allocation8] sm:$0xf] %vm778, %v777
        %v780 = vld [vmem:[#allocation2] sm:$0xf]
        %782 = vrot.lane.b32.xlu0 %v780, 64
        %v783 = vpop.permute.xlu0 %782
        %vm785 = vcmask 1043968
        %786 = vst.msk [vmem:[#allocation8] sm:$0xf] %vm785, %v783
        %v787 = vld [vmem:[#allocation8] sm:$0xff]
        %v788 = vrot.slane %v787, 7
        %v789 = vrot.slane %v787, 1
        %v790 = vpack.c.bf16 %v788, %v788
        %v791 = vld [vmem:[%s5] sm:$0xff]
        %v792 = vld [vmem:[%s5 + $0x8] sm:$0xff]
        %v793 = vld [vmem:[%s5 + $0x10] sm:$0xff]
        %v794 = vld [vmem:[%s5 + $0x18] sm:$0xff]
        %v795 = vld [vmem:[%s5 + $0x20] sm:$0xff]
        %v796 = vld [vmem:[%s5 + $0x28] sm:$0xff]
        %v797 = vld [vmem:[%s5 + $0x30] sm:$0xff]
        %v798 = vld [vmem:[%s5 + $0x38] sm:$0xff]
        %v799 = vld [vmem:[%s5 + $0x40] sm:$0xff]
        %v800 = vld [vmem:[%s5 + $0x48] sm:$0xff]
        %v801 = vld [vmem:[%s5 + $0x50] sm:$0xff]
        %v802 = vld [vmem:[%s5 + $0x58] sm:$0xff]
        %v803 = vld [vmem:[%s5 + $0x60] sm:$0xff]
        %v804 = vld [vmem:[%s5 + $0x68] sm:$0xff]
        %v805 = vld [vmem:[%s5 + $0x70] sm:$0xff]
        %v806 = vld [vmem:[%s5 + $0x78] sm:$0xff]
        %v807 = vpack.c.bf16 %v787, %v787
        %s808 = scalar_lea.vmem %s5, 128
        %v809 = vld [vmem:[%s808] sm:$0xff]
        %v810 = vld [vmem:[%s808 + $0x8] sm:$0xff]
        %v811 = vld [vmem:[%s808 + $0x10] sm:$0xff]
        %v812 = vld [vmem:[%s808 + $0x18] sm:$0xff]
        %v813 = vld [vmem:[%s808 + $0x20] sm:$0xff]
        %v814 = vld [vmem:[%s808 + $0x28] sm:$0xff]
        %v815 = vld [vmem:[%s808 + $0x30] sm:$0xff]
        %v816 = vld [vmem:[%s808 + $0x38] sm:$0xff]
        %v817 = vld [vmem:[%s808 + $0x40] sm:$0xff]
        %v818 = vld [vmem:[%s808 + $0x48] sm:$0xff]
        %v819 = vld [vmem:[%s808 + $0x50] sm:$0xff]
        %v820 = vld [vmem:[%s808 + $0x58] sm:$0xff]
        %v821 = vld [vmem:[%s808 + $0x60] sm:$0xff]
        %v822 = vld [vmem:[%s808 + $0x68] sm:$0xff]
        %v823 = vld [vmem:[%s808 + $0x70] sm:$0xff]
        %v824 = vld [vmem:[%s808 + $0x78] sm:$0xff]
        %v841 = vunpack.c.l.b16 %v809
        %v842 = vunpack.c.h.b16 %v809
        %v843 = vunpack.c.l.b16 %v810
        %v844 = vunpack.c.h.b16 %v810
        %v845 = vunpack.c.l.b16 %v811
        %v846 = vunpack.c.h.b16 %v811
        %v847 = vunpack.c.l.b16 %v812
        %v848 = vunpack.c.h.b16 %v812
        %v849 = vunpack.c.l.b16 %v813
        %v850 = vunpack.c.h.b16 %v813
        %v851 = vunpack.c.l.b16 %v814
        %v852 = vunpack.c.h.b16 %v814
        %v853 = vunpack.c.l.b16 %v815
        %v854 = vunpack.c.h.b16 %v815
        %v855 = vunpack.c.l.b16 %v816
        %v856 = vunpack.c.h.b16 %v816
        %v857 = vunpack.c.l.b16 %v817
        %v858 = vunpack.c.h.b16 %v817
        %v859 = vunpack.c.l.b16 %v818
        %v860 = vunpack.c.h.b16 %v818
        %v861 = vunpack.c.l.b16 %v819
        %v862 = vunpack.c.h.b16 %v819
        %v863 = vunpack.c.l.b16 %v820
        %v864 = vunpack.c.h.b16 %v820
        %v865 = vunpack.c.l.b16 %v821
        %v866 = vunpack.c.h.b16 %v821
        %v867 = vunpack.c.l.b16 %v822
        %v868 = vunpack.c.h.b16 %v822
        %v869 = vunpack.c.l.b16 %v823
        %v870 = vunpack.c.h.b16 %v823
        %v871 = vunpack.c.l.b16 %v824
        %v872 = vunpack.c.h.b16 %v824
        %v873 = vpack.c.b16 %v843, %v841
        %v874 = vpack.c.b16 %v844, %v842
        %v875 = vpack.c.b16 %v847, %v845
        %v876 = vpack.c.b16 %v848, %v846
        %v877 = vpack.c.b16 %v851, %v849
        %v878 = vpack.c.b16 %v852, %v850
        %v879 = vpack.c.b16 %v855, %v853
        %v880 = vpack.c.b16 %v856, %v854
        %v881 = vpack.c.b16 %v859, %v857
        %v882 = vpack.c.b16 %v860, %v858
        %v883 = vpack.c.b16 %v863, %v861
        %v884 = vpack.c.b16 %v864, %v862
        %v885 = vpack.c.b16 %v867, %v865
        %v886 = vpack.c.b16 %v868, %v866
        %v887 = vpack.c.b16 %v871, %v869
        %v888 = vpack.c.b16 %v872, %v870
        %905 = vmatpush.bf16.msra.mxu0 %v887
        %906 = vmatpush.bf16.msra.mxu0 %v885
        %907 = vmatpush.bf16.msra.mxu0 %v883
        %908 = vmatpush.bf16.msra.mxu0 %v881
        %909 = vmatpush.bf16.msra.mxu0 %v879
        %910 = vmatpush.bf16.msra.mxu0 %v877
        %911 = vmatpush.bf16.msra.mxu0 %v875
        %912 = vmatpush.bf16.msra.mxu0 %v873
        %913 = vmatmul.bf16.gmra.mxu0 %v807
        %v914 = vpop.f32.mrf.mxu0
        %v915 = vadd.f32 0.0, %v914
        %v916 = vpop.f32.mrf.mxu0
        %917 = vdwg.mxu0
        %918 = vmatpush.bf16.msra.mxu0 %v888
        %919 = vmatpush.bf16.msra.mxu0 %v886
        %920 = vmatpush.bf16.msra.mxu0 %v884
        %921 = vmatpush.bf16.msra.mxu0 %v882
        %922 = vmatpush.bf16.msra.mxu0 %v880
        %923 = vmatpush.bf16.msra.mxu0 %v878
        %924 = vmatpush.bf16.msra.mxu0 %v876
        %925 = vmatpush.bf16.msra.mxu0 %v874
        %926 = vmatmul.bf16.gmra.mxu0 %v807
        %v927 = vpop.f32.mrf.mxu0
        %v928 = vadd.f32 0.0, %v927
        %v929 = vpop.f32.mrf.mxu0
        %930 = vdwg.mxu0
        %v947 = vunpack.c.l.b16 %v791
        %v948 = vunpack.c.h.b16 %v791
        %v949 = vunpack.c.l.b16 %v792
        %v950 = vunpack.c.h.b16 %v792
        %v951 = vunpack.c.l.b16 %v793
        %v952 = vunpack.c.h.b16 %v793
        %v953 = vunpack.c.l.b16 %v794
        %v954 = vunpack.c.h.b16 %v794
        %v955 = vunpack.c.l.b16 %v795
        %v956 = vunpack.c.h.b16 %v795
        %v957 = vunpack.c.l.b16 %v796
        %v958 = vunpack.c.h.b16 %v796
        %v959 = vunpack.c.l.b16 %v797
        %v960 = vunpack.c.h.b16 %v797
        %v961 = vunpack.c.l.b16 %v798
        %v962 = vunpack.c.h.b16 %v798
        %v963 = vunpack.c.l.b16 %v799
        %v964 = vunpack.c.h.b16 %v799
        %v965 = vunpack.c.l.b16 %v800
        %v966 = vunpack.c.h.b16 %v800
        %v967 = vunpack.c.l.b16 %v801
        %v968 = vunpack.c.h.b16 %v801
        %v969 = vunpack.c.l.b16 %v802
        %v970 = vunpack.c.h.b16 %v802
        %v971 = vunpack.c.l.b16 %v803
        %v972 = vunpack.c.h.b16 %v803
        %v973 = vunpack.c.l.b16 %v804
        %v974 = vunpack.c.h.b16 %v804
        %v975 = vunpack.c.l.b16 %v805
        %v976 = vunpack.c.h.b16 %v805
        %v977 = vunpack.c.l.b16 %v806
        %v978 = vunpack.c.h.b16 %v806
        %v979 = vpack.c.b16 %v949, %v947
        %v980 = vpack.c.b16 %v950, %v948
        %v981 = vpack.c.b16 %v953, %v951
        %v982 = vpack.c.b16 %v954, %v952
        %v983 = vpack.c.b16 %v957, %v955
        %v984 = vpack.c.b16 %v958, %v956
        %v985 = vpack.c.b16 %v961, %v959
        %v986 = vpack.c.b16 %v962, %v960
        %v987 = vpack.c.b16 %v965, %v963
        %v988 = vpack.c.b16 %v966, %v964
        %v989 = vpack.c.b16 %v969, %v967
        %v990 = vpack.c.b16 %v970, %v968
        %v991 = vpack.c.b16 %v973, %v971
        %v992 = vpack.c.b16 %v974, %v972
        %v993 = vpack.c.b16 %v977, %v975
        %v994 = vpack.c.b16 %v978, %v976
        %1011 = vmatpush.bf16.msra.mxu0 %v993
        %1012 = vmatpush.bf16.msra.mxu0 %v991
        %1013 = vmatpush.bf16.msra.mxu0 %v989
        %1014 = vmatpush.bf16.msra.mxu0 %v987
        %1015 = vmatpush.bf16.msra.mxu0 %v985
        %1016 = vmatpush.bf16.msra.mxu0 %v983
        %1017 = vmatpush.bf16.msra.mxu0 %v981
        %1018 = vmatpush.bf16.msra.mxu0 %v979
        %1019 = vmatmul.bf16.gmra.mxu0 %v790
        %v1020 = vpop.f32.mrf.mxu0
        %v1021 = vadd.f32 %v915, %v1020
        %v1022 = vpop.f32.mrf.mxu0
        %1023 = vdwg.mxu0
        %1024 = vmatpush.bf16.msra.mxu0 %v994
        %1025 = vmatpush.bf16.msra.mxu0 %v992
        %1026 = vmatpush.bf16.msra.mxu0 %v990
        %1027 = vmatpush.bf16.msra.mxu0 %v988
        %1028 = vmatpush.bf16.msra.mxu0 %v986
        %1029 = vmatpush.bf16.msra.mxu0 %v984
        %1030 = vmatpush.bf16.msra.mxu0 %v982
        %1031 = vmatpush.bf16.msra.mxu0 %v980
        %1032 = vmatmul.bf16.gmra.mxu0 %v790
        %v1033 = vpop.f32.mrf.mxu0
        %v1034 = vadd.f32 %v928, %v1033
        %v1035 = vpop.f32.mrf.mxu0
        %1036 = vdwg.mxu0
        %v1037 = vpack.c.bf16 %v789, %v789
        %s1038 = scalar_lea.vmem %s5, 256
        %v1039 = vld [vmem:[%s1038] sm:$0xff]
        %v1040 = vld [vmem:[%s1038 + $0x8] sm:$0xff]
        %v1041 = vld [vmem:[%s1038 + $0x10] sm:$0xff]
        %v1042 = vld [vmem:[%s1038 + $0x18] sm:$0xff]
        %v1043 = vld [vmem:[%s1038 + $0x20] sm:$0xff]
        %v1044 = vld [vmem:[%s1038 + $0x28] sm:$0xff]
        %v1045 = vld [vmem:[%s1038 + $0x30] sm:$0xff]
        %v1046 = vld [vmem:[%s1038 + $0x38] sm:$0xff]
        %v1047 = vld [vmem:[%s1038 + $0x40] sm:$0xff]
        %v1048 = vld [vmem:[%s1038 + $0x48] sm:$0xff]
        %v1049 = vld [vmem:[%s1038 + $0x50] sm:$0xff]
        %v1050 = vld [vmem:[%s1038 + $0x58] sm:$0xff]
        %v1051 = vld [vmem:[%s1038 + $0x60] sm:$0xff]
        %v1052 = vld [vmem:[%s1038 + $0x68] sm:$0xff]
        %v1053 = vld [vmem:[%s1038 + $0x70] sm:$0xff]
        %v1054 = vld [vmem:[%s1038 + $0x78] sm:$0xff]
        %v1071 = vunpack.c.l.b16 %v1039
        %v1072 = vunpack.c.h.b16 %v1039
        %v1073 = vunpack.c.l.b16 %v1040
        %v1074 = vunpack.c.h.b16 %v1040
        %v1075 = vunpack.c.l.b16 %v1041
        %v1076 = vunpack.c.h.b16 %v1041
        %v1077 = vunpack.c.l.b16 %v1042
        %v1078 = vunpack.c.h.b16 %v1042
        %v1079 = vunpack.c.l.b16 %v1043
        %v1080 = vunpack.c.h.b16 %v1043
        %v1081 = vunpack.c.l.b16 %v1044
        %v1082 = vunpack.c.h.b16 %v1044
        %v1083 = vunpack.c.l.b16 %v1045
        %v1084 = vunpack.c.h.b16 %v1045
        %v1085 = vunpack.c.l.b16 %v1046
        %v1086 = vunpack.c.h.b16 %v1046
        %v1087 = vunpack.c.l.b16 %v1047
        %v1088 = vunpack.c.h.b16 %v1047
        %v1089 = vunpack.c.l.b16 %v1048
        %v1090 = vunpack.c.h.b16 %v1048
        %v1091 = vunpack.c.l.b16 %v1049
        %v1092 = vunpack.c.h.b16 %v1049
        %v1093 = vunpack.c.l.b16 %v1050
        %v1094 = vunpack.c.h.b16 %v1050
        %v1095 = vunpack.c.l.b16 %v1051
        %v1096 = vunpack.c.h.b16 %v1051
        %v1097 = vunpack.c.l.b16 %v1052
        %v1098 = vunpack.c.h.b16 %v1052
        %v1099 = vunpack.c.l.b16 %v1053
        %v1100 = vunpack.c.h.b16 %v1053
        %v1101 = vunpack.c.l.b16 %v1054
        %v1102 = vunpack.c.h.b16 %v1054
        %v1103 = vpack.c.b16 %v1073, %v1071
        %v1104 = vpack.c.b16 %v1074, %v1072
        %v1105 = vpack.c.b16 %v1077, %v1075
        %v1106 = vpack.c.b16 %v1078, %v1076
        %v1107 = vpack.c.b16 %v1081, %v1079
        %v1108 = vpack.c.b16 %v1082, %v1080
        %v1109 = vpack.c.b16 %v1085, %v1083
        %v1110 = vpack.c.b16 %v1086, %v1084
        %v1111 = vpack.c.b16 %v1089, %v1087
        %v1112 = vpack.c.b16 %v1090, %v1088
        %v1113 = vpack.c.b16 %v1093, %v1091
        %v1114 = vpack.c.b16 %v1094, %v1092
        %v1115 = vpack.c.b16 %v1097, %v1095
        %v1116 = vpack.c.b16 %v1098, %v1096
        %v1117 = vpack.c.b16 %v1101, %v1099
        %v1118 = vpack.c.b16 %v1102, %v1100
        %1135 = vmatpush.bf16.msra.mxu0 %v1117
        %1136 = vmatpush.bf16.msra.mxu0 %v1115
        %1137 = vmatpush.bf16.msra.mxu0 %v1113
        %1138 = vmatpush.bf16.msra.mxu0 %v1111
        %1139 = vmatpush.bf16.msra.mxu0 %v1109
        %1140 = vmatpush.bf16.msra.mxu0 %v1107
        %1141 = vmatpush.bf16.msra.mxu0 %v1105
        %1142 = vmatpush.bf16.msra.mxu0 %v1103
        %1143 = vmatmul.bf16.gmra.mxu0 %v1037
        %v1144 = vpop.f32.mrf.mxu0
        %v1145 = vadd.f32 0.0, %v1144
        %v1146 = vpop.f32.mrf.mxu0
        %1147 = vdwg.mxu0
        %1148 = vmatpush.bf16.msra.mxu0 %v1118
        %1149 = vmatpush.bf16.msra.mxu0 %v1116
        %1150 = vmatpush.bf16.msra.mxu0 %v1114
        %1151 = vmatpush.bf16.msra.mxu0 %v1112
        %1152 = vmatpush.bf16.msra.mxu0 %v1110
        %1153 = vmatpush.bf16.msra.mxu0 %v1108
        %1154 = vmatpush.bf16.msra.mxu0 %v1106
        %1155 = vmatpush.bf16.msra.mxu0 %v1104
        %1156 = vmatmul.bf16.gmra.mxu0 %v1037
        %v1157 = vpop.f32.mrf.mxu0
        %v1158 = vadd.f32 0.0, %v1157
        %v1159 = vpop.f32.mrf.mxu0
        %1160 = vdwg.mxu0
        %v1161 = vadd.f32 %v1021, %v1145
        %v1162 = vadd.f32 %v1034, %v1158
        %v1163 = vld [vmem:[#allocation11] sm:$0x3]
        %v1165 = vperm.slane %v1163, 0
        %v1166 = vperm.slane %v1163, 1
        %v1169 = vadd.f32 %v1161, %v1165
        %v1170 = vadd.f32 %v1162, %v1166
        %v1171 = vld [vmem:[#allocation3] sm:$0xf]
        %v1172 = vxor.u32 %v1169, 2147483648
        %v1173 = vmul.f32 %v1172, 1.442695
        %v1174 = vpow.pop %v1173
        %v1175 = vadd.f32 %v1174, 1.0
        %v1176 = vrcp.pop %v1175
        %v1177 = vmul.f32 %v1175, %v1176
        %v1178 = vsub.f32 1.0, %v1177
        %v1179 = vmul.f32 %v1176, %v1178
        %v1180 = vadd.f32 %v1176, %v1179
        %vm1181 = vweird.f32 %v1175
        %vm1182 = vweird.f32 %v1176
        %vm1183 = vmor %vm1181, %vm1182
        %v1184 = vsel %vm1183, %v1176, %v1180
        %v1185 = vand.u32 2147483647, %v1175
        %vm1186 = vcmp.eq.f32.partialorder %v1185, 8.507059e+37
        %v1187 = vand.u32 %v1175, 2147483648
        %v1188 = vor.u32 1.1754944e-38, %v1187
        %v1189 = vsel %vm1186, %v1188, %v1184
        %v1190 = vmul.f32 1.0, %v1189
        %v1191 = vxor.u32 %v1170, 2147483648
        %v1192 = vmul.f32 %v1191, 1.442695
        %v1193 = vpow.pop %v1192
        %v1194 = vadd.f32 %v1193, 1.0
        %v1195 = vrcp.pop %v1194
        %v1196 = vmul.f32 %v1194, %v1195
        %v1197 = vsub.f32 1.0, %v1196
        %v1198 = vmul.f32 %v1195, %v1197
        %v1199 = vadd.f32 %v1195, %v1198
        %vm1200 = vweird.f32 %v1194
        %vm1201 = vweird.f32 %v1195
        %vm1202 = vmor %vm1200, %vm1201
        %v1203 = vsel %vm1202, %v1195, %v1199
        %v1204 = vand.u32 2147483647, %v1194
        %vm1205 = vcmp.eq.f32.partialorder %v1204, 8.507059e+37
        %v1206 = vand.u32 %v1194, 2147483648
        %v1207 = vor.u32 1.1754944e-38, %v1206
        %v1208 = vsel %vm1205, %v1207, %v1203
        %v1209 = vmul.f32 1.0, %v1208
        %v1210 = vtanh.pop %v1170
        %1212 = vrot.lane.b32.xlu0 %v1171, 64
        %v1213 = vpop.permute.xlu0 %1212
        %v1215 = vmul.f32 %v1190, %v1213
        %1217 = vrot.lane.b32.xlu0 %v1210, 64
        %v1218 = vpop.permute.xlu0 %1217
        %v1220 = vmul.f32 %v1190, %v1218
        %1222 = vrot.lane.b32.xlu0 %v1220, 64
        %v1223 = vpop.permute.xlu0 %1222
        %v1225 = vadd.f32 %v1215, %v1223
        %v1226 = vtanh.pop %v1225
        %1228 = vrot.lane.b32.xlu0 %v1226, 64
        %v1229 = vpop.permute.xlu0 %1228
        %v1231 = vmul.f32 %v1209, %v1229
        %1232 = vst.msk [vmem:[#allocation2] sm:$0xf] %vm778, %v1231
        %1234 = vrot.lane.b32.xlu0 %v1225, 64
        %v1235 = vpop.permute.xlu0 %1234
        %1237 = vst.msk [vmem:[#allocation3] sm:$0xf] %vm778, %v1235
        %v1238 = vpack.c.bf16 %v1231, %v1231
        %v1239 = vld [vmem:[%s7] sm:$0xf]
        %v1240 = vld [vmem:[%s7 + $0x4] sm:$0xf]
        %v1241 = vld [vmem:[%s7 + $0x8] sm:$0xf]
        %v1242 = vld [vmem:[%s7 + $0xc] sm:$0xf]
        %v1243 = vld [vmem:[%s7 + $0x10] sm:$0xf]
        %v1244 = vld [vmem:[%s7 + $0x14] sm:$0xf]
        %v1245 = vld [vmem:[%s7 + $0x18] sm:$0xf]
        %v1246 = vld [vmem:[%s7 + $0x1c] sm:$0xf]
        %v1255 = vunpack.c.l.b16 %v1239
        %v1256 = vunpack.c.l.b16 %v1240
        %v1257 = vunpack.c.l.b16 %v1241
        %v1258 = vunpack.c.l.b16 %v1242
        %v1259 = vunpack.c.l.b16 %v1243
        %v1260 = vunpack.c.l.b16 %v1244
        %v1261 = vunpack.c.l.b16 %v1245
        %v1262 = vunpack.c.l.b16 %v1246
        %v1263 = vpack.c.b16 %v1256, %v1255
        %v1264 = vpack.c.b16 %v1258, %v1257
        %v1265 = vpack.c.b16 %v1260, %v1259
        %v1266 = vpack.c.b16 %v1262, %v1261
        %vm1271 = vcmask 523264
        %v1273 = vsel %vm1271, %v1238, 0
        %1275 = vmatpush.bf16.msra.mxu0 0
        %1276 = vmatpush.bf16.msra.mxu0 0
        %1277 = vmatpush.bf16.msra.mxu0 0
        %1278 = vmatpush.bf16.msra.mxu0 0
        %1279 = vmatpush.bf16.msra.mxu0 %v1266
        %1280 = vmatpush.bf16.msra.mxu0 %v1265
        %1281 = vmatpush.bf16.msra.mxu0 %v1264
        %1282 = vmatpush.bf16.msra.mxu0 %v1263
        %1283 = vmatmul.bf16.gmra.mxu0 %v1273
        %v1284 = vpop.f32.mrf.mxu0
        %v1285 = vadd.f32 0.0, %v1284
        %v1286 = vpop.f32.mrf.mxu0
        %1287 = vdwg.mxu0
        %s1288 = scalar_lea.vmem %s7, 32
        %v1289 = vld [vmem:[%s1288] sm:$0xf]
        %v1290 = vld [vmem:[%s1288 + $0x4] sm:$0xf]
        %v1291 = vld [vmem:[%s1288 + $0x8] sm:$0xf]
        %v1292 = vld [vmem:[%s1288 + $0xc] sm:$0xf]
        %v1293 = vld [vmem:[%s1288 + $0x10] sm:$0xf]
        %v1294 = vld [vmem:[%s1288 + $0x14] sm:$0xf]
        %v1295 = vld [vmem:[%s1288 + $0x18] sm:$0xf]
        %v1296 = vld [vmem:[%s1288 + $0x1c] sm:$0xf]
        %v1305 = vunpack.c.l.b16 %v1289
        %v1306 = vunpack.c.l.b16 %v1290
        %v1307 = vunpack.c.l.b16 %v1291
        %v1308 = vunpack.c.l.b16 %v1292
        %v1309 = vunpack.c.l.b16 %v1293
        %v1310 = vunpack.c.l.b16 %v1294
        %v1311 = vunpack.c.l.b16 %v1295
        %v1312 = vunpack.c.l.b16 %v1296
        %v1313 = vpack.c.b16 %v1306, %v1305
        %v1314 = vpack.c.b16 %v1308, %v1307
        %v1315 = vpack.c.b16 %v1310, %v1309
        %v1316 = vpack.c.b16 %v1312, %v1311
        %1321 = vmatpush.bf16.msra.mxu0 0
        %1322 = vmatpush.bf16.msra.mxu0 0
        %1323 = vmatpush.bf16.msra.mxu0 0
        %1324 = vmatpush.bf16.msra.mxu0 0
        %1325 = vmatpush.bf16.msra.mxu0 %v1316
        %1326 = vmatpush.bf16.msra.mxu0 %v1315
        %1327 = vmatpush.bf16.msra.mxu0 %v1314
        %1328 = vmatpush.bf16.msra.mxu0 %v1313
        %1329 = vmatmul.bf16.gmra.mxu0 %v1273
        %v1330 = vpop.f32.mrf.mxu0
        %v1331 = vadd.f32 0.0, %v1330
        %v1332 = vpop.f32.mrf.mxu0
        %1333 = vdwg.mxu0
        %v1334 = vld [vmem:[%s9] sm:$0xff]
        %s1335 = scalar_lea.vmem %s9, 8
        %v1336 = vld [vmem:[%s1335] sm:$0xff]
        %vm1337 = vcmask 31744
        %v1339 = vsel %vm1337, %v1336, 0
        %vm1341 = vcmask 1043456
        %v1343 = vsel %vm1341, %v1331, 0
        %1345 = vmatpush.msra.mxu0 0.0
        %1346 = vmatpush.msra.mxu0 0.0
        %1347 = vmatpush.msra.mxu0 0.0
        %1348 = vmatpush.msra.mxu0 0.0
        %1349 = vmatpush.msra.mxu0 0.0
        %1350 = vmatpush.msra.mxu0 0.0
        %1351 = vmatpush.msra.mxu0 0.0
        %1352 = vmatpush.msra.mxu0 0.0
        %1353 = vmatpush.msra.mxu0 0.0
        %1354 = vmatpush.msra.mxu0 0.0
        %1355 = vmatpush.msra.mxu0 0.0
        %1356 = vmatpush.msra.mxu0 0.0
        %1357 = vmatpush.msra.mxu0 0.0
        %1358 = vmatpush.msra.mxu0 0.0
        %1359 = vmatpush.msra.mxu0 0.0
        %1360 = vmatpush.msra.mxu0 %v1343
        %1361 = vmatmul.f32.gmra.mxu0 %v1339
        %v1362 = vpop.f32.mrf.mxu0
        %v1363 = vadd.f32 0.0, %v1362
        %1364 = vdwg.mxu0
        %v1366 = vsel %vm1337, %v1334, 0
        %v1369 = vsel %vm1341, %v1285, 0
        %1371 = vmatpush.msra.mxu0 0.0
        %1372 = vmatpush.msra.mxu0 0.0
        %1373 = vmatpush.msra.mxu0 0.0
        %1374 = vmatpush.msra.mxu0 0.0
        %1375 = vmatpush.msra.mxu0 0.0
        %1376 = vmatpush.msra.mxu0 0.0
        %1377 = vmatpush.msra.mxu0 0.0
        %1378 = vmatpush.msra.mxu0 0.0
        %1379 = vmatpush.msra.mxu0 0.0
        %1380 = vmatpush.msra.mxu0 0.0
        %1381 = vmatpush.msra.mxu0 0.0
        %1382 = vmatpush.msra.mxu0 0.0
        %1383 = vmatpush.msra.mxu0 0.0
        %1384 = vmatpush.msra.mxu0 0.0
        %1385 = vmatpush.msra.mxu0 0.0
        %1386 = vmatpush.msra.mxu0 %v1369
        %1387 = vmatmul.f32.gmra.mxu0 %v1366
        %v1388 = vpop.f32.mrf.mxu0
        %v1389 = vadd.f32 %v1363, %v1388
        %1390 = vdwg.mxu0
        %v1391 = vld [vmem:[#allocation13] sm:$0x1]
        %v1393 = vperm.slane %v1391, 0
        %v1395 = vadd.f32 %v1389, %v1393
        %1396 = vst [vmem:[#allocation9] sm:$0xff] %v1395
        %v1397 = vld [vmem:[%s748] sm:$0xff]
        %1398 = vst [vmem:[#allocation9 + $0x8] sm:$0xff] %v1397
        %v1399 = vld [vmem:[#allocation4] sm:$0xff]
        %1400 = vst.msk [vmem:[#allocation9 + $0x10] sm:$0xff] %vm1271, %v1399
        %v1401 = vld [vmem:[#allocation9] sm:$0xff]
        %v1402 = vld [vmem:[#allocation9 + $0x8] sm:$0xff]
        %v1403 = vld [vmem:[#allocation9 + $0x10] sm:$0xff]
        %v1404 = vrot.slane %v1401, 7
        %v1405 = vrot.slane %v1402, 7
        %v1406 = vrot.slane %v1403, 7
        %v1407 = vrot.slane %v1401, 1
        %v1408 = vrot.slane %v1402, 1
        %v1409 = vrot.slane %v1403, 1
        %v1410 = vld [vmem:[%s3] sm:$0xff]
        %1412 = vset.pattern.permute.xlu0 0
        %1413 = vperm.xlu0 %1412, %v1410
        %v1414 = vpop.permute.xlu0 %1413
        %v1416 = vmul.f32 %v1404, %v1414
        %v1417 = vmul.f32 %v1405, %v1414
        %v1418 = vmul.f32 %v1406, %v1414
        %s1419 = scalar_lea.vmem %s3, 8
        %v1420 = vld [vmem:[%s1419] sm:$0xff]
        %1422 = vset.pattern.permute.xlu0 0
        %1423 = vperm.xlu0 %1422, %v1420
        %v1424 = vpop.permute.xlu0 %1423
        %v1426 = vmul.f32 %v1407, %v1424
        %v1427 = vmul.f32 %v1408, %v1424
        %v1428 = vmul.f32 %v1409, %v1424
        %v1429 = vpack.c.bf16 %v1416, %v1416
        %v1430 = vpack.c.bf16 %v1417, %v1417
        %v1431 = vpack.c.bf16 %v1418, %v1418
        %v1432 = vld [vmem:[#allocation15] sm:$0xff]
        %v1433 = vld [vmem:[#allocation15 + $0x8] sm:$0xff]
        %v1434 = vld [vmem:[#allocation15 + $0x10] sm:$0xff]
        %v1435 = vld [vmem:[#allocation15 + $0x18] sm:$0xff]
        %v1436 = vld [vmem:[#allocation15 + $0x20] sm:$0xff]
        %v1437 = vld [vmem:[#allocation15 + $0x28] sm:$0xff]
        %v1438 = vld [vmem:[#allocation15 + $0x30] sm:$0xff]
        %v1439 = vld [vmem:[#allocation15 + $0x38] sm:$0xff]
        %v1440 = vld [vmem:[#allocation15 + $0x40] sm:$0xff]
        %v1441 = vld [vmem:[#allocation15 + $0x48] sm:$0xff]
        %v1442 = vld [vmem:[#allocation15 + $0x50] sm:$0xff]
        %v1443 = vld [vmem:[#allocation15 + $0x58] sm:$0xff]
        %v1444 = vld [vmem:[#allocation15 + $0x60] sm:$0xff]
        %v1445 = vld [vmem:[#allocation15 + $0x68] sm:$0xff]
        %v1446 = vld [vmem:[#allocation15 + $0x70] sm:$0xff]
        %v1447 = vld [vmem:[#allocation15 + $0x78] sm:$0xff]
        %v1448 = vld [vmem:[#allocation15 + $0x80] sm:$0xff]
        %v1449 = vld [vmem:[#allocation15 + $0x88] sm:$0xff]
        %v1450 = vld [vmem:[#allocation15 + $0x90] sm:$0xff]
        %v1451 = vld [vmem:[#allocation15 + $0x98] sm:$0xff]
        %v1452 = vld [vmem:[#allocation15 + $0xa0] sm:$0xff]
        %v1453 = vld [vmem:[#allocation15 + $0xa8] sm:$0xff]
        %v1454 = vld [vmem:[#allocation15 + $0xb0] sm:$0xff]
        %v1455 = vld [vmem:[#allocation15 + $0xb8] sm:$0xff]
        %v1456 = vld [vmem:[#allocation15 + $0xc0] sm:$0xff]
        %v1457 = vld [vmem:[#allocation15 + $0xc8] sm:$0xff]
        %v1458 = vld [vmem:[#allocation15 + $0xd0] sm:$0xff]
        %v1459 = vld [vmem:[#allocation15 + $0xd8] sm:$0xff]
        %v1460 = vld [vmem:[#allocation15 + $0xe0] sm:$0xff]
        %v1461 = vld [vmem:[#allocation15 + $0xe8] sm:$0xff]
        %v1462 = vld [vmem:[#allocation15 + $0xf0] sm:$0xff]
        %v1463 = vld [vmem:[#allocation15 + $0xf8] sm:$0xff]
        %v1464 = vld [vmem:[#allocation15 + $0x100] sm:$0xff]
        %v1465 = vld [vmem:[#allocation15 + $0x108] sm:$0xff]
        %v1466 = vld [vmem:[#allocation15 + $0x110] sm:$0xff]
        %v1467 = vld [vmem:[#allocation15 + $0x118] sm:$0xff]
        %v1468 = vld [vmem:[#allocation15 + $0x120] sm:$0xff]
        %v1469 = vld [vmem:[#allocation15 + $0x128] sm:$0xff]
        %v1470 = vld [vmem:[#allocation15 + $0x130] sm:$0xff]
        %v1471 = vld [vmem:[#allocation15 + $0x138] sm:$0xff]
        %v1472 = vpack.c.bf16 %v1401, %v1401
        %v1473 = vpack.c.bf16 %v1402, %v1402
        %v1474 = vpack.c.bf16 %v1403, %v1403
        %s1475 = scalar_lea.vmem [#allocation15], 320
        %v1476 = vld [vmem:[%s1475] sm:$0xff]
        %v1477 = vld [vmem:[%s1475 + $0x8] sm:$0xff]
        %v1478 = vld [vmem:[%s1475 + $0x10] sm:$0xff]
        %v1479 = vld [vmem:[%s1475 + $0x18] sm:$0xff]
        %v1480 = vld [vmem:[%s1475 + $0x20] sm:$0xff]
        %v1481 = vld [vmem:[%s1475 + $0x28] sm:$0xff]
        %v1482 = vld [vmem:[%s1475 + $0x30] sm:$0xff]
        %v1483 = vld [vmem:[%s1475 + $0x38] sm:$0xff]
        %v1484 = vld [vmem:[%s1475 + $0x40] sm:$0xff]
        %v1485 = vld [vmem:[%s1475 + $0x48] sm:$0xff]
        %v1486 = vld [vmem:[%s1475 + $0x50] sm:$0xff]
        %v1487 = vld [vmem:[%s1475 + $0x58] sm:$0xff]
        %v1488 = vld [vmem:[%s1475 + $0x60] sm:$0xff]
        %v1489 = vld [vmem:[%s1475 + $0x68] sm:$0xff]
        %v1490 = vld [vmem:[%s1475 + $0x70] sm:$0xff]
        %v1491 = vld [vmem:[%s1475 + $0x78] sm:$0xff]
        %v1492 = vld [vmem:[%s1475 + $0x80] sm:$0xff]
        %v1493 = vld [vmem:[%s1475 + $0x88] sm:$0xff]
        %v1494 = vld [vmem:[%s1475 + $0x90] sm:$0xff]
        %v1495 = vld [vmem:[%s1475 + $0x98] sm:$0xff]
        %v1496 = vld [vmem:[%s1475 + $0xa0] sm:$0xff]
        %v1497 = vld [vmem:[%s1475 + $0xa8] sm:$0xff]
        %v1498 = vld [vmem:[%s1475 + $0xb0] sm:$0xff]
        %v1499 = vld [vmem:[%s1475 + $0xb8] sm:$0xff]
        %v1500 = vld [vmem:[%s1475 + $0xc0] sm:$0xff]
        %v1501 = vld [vmem:[%s1475 + $0xc8] sm:$0xff]
        %v1502 = vld [vmem:[%s1475 + $0xd0] sm:$0xff]
        %v1503 = vld [vmem:[%s1475 + $0xd8] sm:$0xff]
        %v1504 = vld [vmem:[%s1475 + $0xe0] sm:$0xff]
        %v1505 = vld [vmem:[%s1475 + $0xe8] sm:$0xff]
        %v1506 = vld [vmem:[%s1475 + $0xf0] sm:$0xff]
        %v1507 = vld [vmem:[%s1475 + $0xf8] sm:$0xff]
        %v1508 = vld [vmem:[%s1475 + $0x100] sm:$0xff]
        %v1509 = vld [vmem:[%s1475 + $0x108] sm:$0xff]
        %v1510 = vld [vmem:[%s1475 + $0x110] sm:$0xff]
        %v1511 = vld [vmem:[%s1475 + $0x118] sm:$0xff]
        %v1512 = vld [vmem:[%s1475 + $0x120] sm:$0xff]
        %v1513 = vld [vmem:[%s1475 + $0x128] sm:$0xff]
        %v1514 = vld [vmem:[%s1475 + $0x130] sm:$0xff]
        %v1515 = vld [vmem:[%s1475 + $0x138] sm:$0xff]
        %v1556 = vunpack.c.l.b16 %v1476
        %v1557 = vunpack.c.h.b16 %v1476
        %v1558 = vunpack.c.l.b16 %v1477
        %v1559 = vunpack.c.h.b16 %v1477
        %v1560 = vunpack.c.l.b16 %v1478
        %v1561 = vunpack.c.h.b16 %v1478
        %v1562 = vunpack.c.l.b16 %v1479
        %v1563 = vunpack.c.h.b16 %v1479
        %v1564 = vunpack.c.l.b16 %v1480
        %v1565 = vunpack.c.h.b16 %v1480
        %v1566 = vunpack.c.l.b16 %v1481
        %v1567 = vunpack.c.h.b16 %v1481
        %v1568 = vunpack.c.l.b16 %v1482
        %v1569 = vunpack.c.h.b16 %v1482
        %v1570 = vunpack.c.l.b16 %v1483
        %v1571 = vunpack.c.h.b16 %v1483
        %v1572 = vunpack.c.l.b16 %v1484
        %v1573 = vunpack.c.h.b16 %v1484
        %v1574 = vunpack.c.l.b16 %v1485
        %v1575 = vunpack.c.h.b16 %v1485
        %v1576 = vunpack.c.l.b16 %v1486
        %v1577 = vunpack.c.h.b16 %v1486
        %v1578 = vunpack.c.l.b16 %v1487
        %v1579 = vunpack.c.h.b16 %v1487
        %v1580 = vunpack.c.l.b16 %v1488
        %v1581 = vunpack.c.h.b16 %v1488
        %v1582 = vunpack.c.l.b16 %v1489
        %v1583 = vunpack.c.h.b16 %v1489
        %v1584 = vunpack.c.l.b16 %v1490
        %v1585 = vunpack.c.h.b16 %v1490
        %v1586 = vunpack.c.l.b16 %v1491
        %v1587 = vunpack.c.h.b16 %v1491
        %v1588 = vunpack.c.l.b16 %v1492
        %v1589 = vunpack.c.h.b16 %v1492
        %v1590 = vunpack.c.l.b16 %v1493
        %v1591 = vunpack.c.h.b16 %v1493
        %v1592 = vunpack.c.l.b16 %v1494
        %v1593 = vunpack.c.h.b16 %v1494
        %v1594 = vunpack.c.l.b16 %v1495
        %v1595 = vunpack.c.h.b16 %v1495
        %v1596 = vunpack.c.l.b16 %v1496
        %v1597 = vunpack.c.h.b16 %v1496
        %v1598 = vunpack.c.l.b16 %v1497
        %v1599 = vunpack.c.h.b16 %v1497
        %v1600 = vunpack.c.l.b16 %v1498
        %v1601 = vunpack.c.h.b16 %v1498
        %v1602 = vunpack.c.l.b16 %v1499
        %v1603 = vunpack.c.h.b16 %v1499
        %v1604 = vunpack.c.l.b16 %v1500
        %v1605 = vunpack.c.h.b16 %v1500
        %v1606 = vunpack.c.l.b16 %v1501
        %v1607 = vunpack.c.h.b16 %v1501
        %v1608 = vunpack.c.l.b16 %v1502
        %v1609 = vunpack.c.h.b16 %v1502
        %v1610 = vunpack.c.l.b16 %v1503
        %v1611 = vunpack.c.h.b16 %v1503
        %v1612 = vunpack.c.l.b16 %v1504
        %v1613 = vunpack.c.h.b16 %v1504
        %v1614 = vunpack.c.l.b16 %v1505
        %v1615 = vunpack.c.h.b16 %v1505
        %v1616 = vunpack.c.l.b16 %v1506
        %v1617 = vunpack.c.h.b16 %v1506
        %v1618 = vunpack.c.l.b16 %v1507
        %v1619 = vunpack.c.h.b16 %v1507
        %v1620 = vunpack.c.l.b16 %v1508
        %v1621 = vunpack.c.h.b16 %v1508
        %v1622 = vunpack.c.l.b16 %v1509
        %v1623 = vunpack.c.h.b16 %v1509
        %v1624 = vunpack.c.l.b16 %v1510
        %v1625 = vunpack.c.h.b16 %v1510
        %v1626 = vunpack.c.l.b16 %v1511
        %v1627 = vunpack.c.h.b16 %v1511
        %v1628 = vunpack.c.l.b16 %v1512
        %v1629 = vunpack.c.h.b16 %v1512
        %v1630 = vunpack.c.l.b16 %v1513
        %v1631 = vunpack.c.h.b16 %v1513
        %v1632 = vunpack.c.l.b16 %v1514
        %v1633 = vunpack.c.h.b16 %v1514
        %v1634 = vunpack.c.l.b16 %v1515
        %v1635 = vunpack.c.h.b16 %v1515
        %v1636 = vpack.c.b16 %v1558, %v1556
        %v1637 = vpack.c.b16 %v1559, %v1557
        %v1638 = vpack.c.b16 %v1562, %v1560
        %v1639 = vpack.c.b16 %v1563, %v1561
        %v1640 = vpack.c.b16 %v1566, %v1564
        %v1641 = vpack.c.b16 %v1567, %v1565
        %v1642 = vpack.c.b16 %v1570, %v1568
        %v1643 = vpack.c.b16 %v1571, %v1569
        %v1644 = vpack.c.b16 %v1574, %v1572
        %v1645 = vpack.c.b16 %v1575, %v1573
        %v1646 = vpack.c.b16 %v1578, %v1576
        %v1647 = vpack.c.b16 %v1579, %v1577
        %v1648 = vpack.c.b16 %v1582, %v1580
        %v1649 = vpack.c.b16 %v1583, %v1581
        %v1650 = vpack.c.b16 %v1586, %v1584
        %v1651 = vpack.c.b16 %v1587, %v1585
        %v1652 = vpack.c.b16 %v1590, %v1588
        %v1653 = vpack.c.b16 %v1591, %v1589
        %v1654 = vpack.c.b16 %v1594, %v1592
        %v1655 = vpack.c.b16 %v1595, %v1593
        %v1656 = vpack.c.b16 %v1598, %v1596
        %v1657 = vpack.c.b16 %v1599, %v1597
        %v1658 = vpack.c.b16 %v1602, %v1600
        %v1659 = vpack.c.b16 %v1603, %v1601
        %v1660 = vpack.c.b16 %v1606, %v1604
        %v1661 = vpack.c.b16 %v1607, %v1605
        %v1662 = vpack.c.b16 %v1610, %v1608
        %v1663 = vpack.c.b16 %v1611, %v1609
        %v1664 = vpack.c.b16 %v1614, %v1612
        %v1665 = vpack.c.b16 %v1615, %v1613
        %v1666 = vpack.c.b16 %v1618, %v1616
        %v1667 = vpack.c.b16 %v1619, %v1617
        %v1668 = vpack.c.b16 %v1622, %v1620
        %v1669 = vpack.c.b16 %v1623, %v1621
        %v1670 = vpack.c.b16 %v1626, %v1624
        %v1671 = vpack.c.b16 %v1627, %v1625
        %v1672 = vpack.c.b16 %v1630, %v1628
        %v1673 = vpack.c.b16 %v1631, %v1629
        %v1674 = vpack.c.b16 %v1634, %v1632
        %v1675 = vpack.c.b16 %v1635, %v1633
        %v1717 = vsel %vm1271, %v1474, 0
        %1719 = vmatpush.bf16.msra.mxu0 %v1650
        %1720 = vmatpush.bf16.msra.mxu0 %v1648
        %1721 = vmatpush.bf16.msra.mxu0 %v1646
        %1722 = vmatpush.bf16.msra.mxu0 %v1644
        %1723 = vmatpush.bf16.msra.mxu0 %v1642
        %1724 = vmatpush.bf16.msra.mxu0 %v1640
        %1725 = vmatpush.bf16.msra.mxu0 %v1638
        %1726 = vmatpush.bf16.msra.mxu0 %v1636
        %1727 = vmatmul.bf16.gmra.mxu0 %v1472
        %v1728 = vpop.f32.mrf.mxu0
        %v1729 = vadd.f32 0.0, %v1728
        %v1730 = vpop.f32.mrf.mxu0
        %1731 = vdwg.mxu0
        %1732 = vmatpush.bf16.msra.mxu0 %v1666
        %1733 = vmatpush.bf16.msra.mxu0 %v1664
        %1734 = vmatpush.bf16.msra.mxu0 %v1662
        %1735 = vmatpush.bf16.msra.mxu0 %v1660
        %1736 = vmatpush.bf16.msra.mxu0 %v1658
        %1737 = vmatpush.bf16.msra.mxu0 %v1656
        %1738 = vmatpush.bf16.msra.mxu0 %v1654
        %1739 = vmatpush.bf16.msra.mxu0 %v1652
        %1740 = vmatmul.bf16.gmra.mxu0 %v1473
        %v1741 = vpop.f32.mrf.mxu0
        %v1742 = vadd.f32 %v1729, %v1741
        %v1743 = vpop.f32.mrf.mxu0
        %1744 = vdwg.mxu0
        %1745 = vmatpush.bf16.msra.mxu0 0
        %1746 = vmatpush.bf16.msra.mxu0 0
        %1747 = vmatpush.bf16.msra.mxu0 0
        %1748 = vmatpush.bf16.msra.mxu0 0
        %1749 = vmatpush.bf16.msra.mxu0 %v1674
        %1750 = vmatpush.bf16.msra.mxu0 %v1672
        %1751 = vmatpush.bf16.msra.mxu0 %v1670
        %1752 = vmatpush.bf16.msra.mxu0 %v1668
        %1753 = vmatmul.bf16.gmra.mxu0 %v1717
        %v1754 = vpop.f32.mrf.mxu0
        %v1755 = vadd.f32 %v1742, %v1754
        %v1756 = vpop.f32.mrf.mxu0
        %1757 = vdwg.mxu0
        %1758 = vmatpush.bf16.msra.mxu0 %v1651
        %1759 = vmatpush.bf16.msra.mxu0 %v1649
        %1760 = vmatpush.bf16.msra.mxu0 %v1647
        %1761 = vmatpush.bf16.msra.mxu0 %v1645
        %1762 = vmatpush.bf16.msra.mxu0 %v1643
        %1763 = vmatpush.bf16.msra.mxu0 %v1641
        %1764 = vmatpush.bf16.msra.mxu0 %v1639
        %1765 = vmatpush.bf16.msra.mxu0 %v1637
        %1766 = vmatmul.bf16.gmra.mxu0 %v1472
        %v1767 = vpop.f32.mrf.mxu0
        %v1768 = vadd.f32 0.0, %v1767
        %v1769 = vpop.f32.mrf.mxu0
        %1770 = vdwg.mxu0
        %1771 = vmatpush.bf16.msra.mxu0 %v1667
        %1772 = vmatpush.bf16.msra.mxu0 %v1665
        %1773 = vmatpush.bf16.msra.mxu0 %v1663
        %1774 = vmatpush.bf16.msra.mxu0 %v1661
        %1775 = vmatpush.bf16.msra.mxu0 %v1659
        %1776 = vmatpush.bf16.msra.mxu0 %v1657
        %1777 = vmatpush.bf16.msra.mxu0 %v1655
        %1778 = vmatpush.bf16.msra.mxu0 %v1653
        %1779 = vmatmul.bf16.gmra.mxu0 %v1473
        %v1780 = vpop.f32.mrf.mxu0
        %v1781 = vadd.f32 %v1768, %v1780
        %v1782 = vpop.f32.mrf.mxu0
        %1783 = vdwg.mxu0
        %1784 = vmatpush.bf16.msra.mxu0 0
        %1785 = vmatpush.bf16.msra.mxu0 0
        %1786 = vmatpush.bf16.msra.mxu0 0
        %1787 = vmatpush.bf16.msra.mxu0 0
        %1788 = vmatpush.bf16.msra.mxu0 %v1675
        %1789 = vmatpush.bf16.msra.mxu0 %v1673
        %1790 = vmatpush.bf16.msra.mxu0 %v1671
        %1791 = vmatpush.bf16.msra.mxu0 %v1669
        %1792 = vmatmul.bf16.gmra.mxu0 %v1717
        %v1793 = vpop.f32.mrf.mxu0
        %v1794 = vadd.f32 %v1781, %v1793
        %v1795 = vpop.f32.mrf.mxu0
        %1796 = vdwg.mxu0
        %v1837 = vunpack.c.l.b16 %v1432
        %v1838 = vunpack.c.h.b16 %v1432
        %v1839 = vunpack.c.l.b16 %v1433
        %v1840 = vunpack.c.h.b16 %v1433
        %v1841 = vunpack.c.l.b16 %v1434
        %v1842 = vunpack.c.h.b16 %v1434
        %v1843 = vunpack.c.l.b16 %v1435
        %v1844 = vunpack.c.h.b16 %v1435
        %v1845 = vunpack.c.l.b16 %v1436
        %v1846 = vunpack.c.h.b16 %v1436
        %v1847 = vunpack.c.l.b16 %v1437
        %v1848 = vunpack.c.h.b16 %v1437
        %v1849 = vunpack.c.l.b16 %v1438
        %v1850 = vunpack.c.h.b16 %v1438
        %v1851 = vunpack.c.l.b16 %v1439
        %v1852 = vunpack.c.h.b16 %v1439
        %v1853 = vunpack.c.l.b16 %v1440
        %v1854 = vunpack.c.h.b16 %v1440
        %v1855 = vunpack.c.l.b16 %v1441
        %v1856 = vunpack.c.h.b16 %v1441
        %v1857 = vunpack.c.l.b16 %v1442
        %v1858 = vunpack.c.h.b16 %v1442
        %v1859 = vunpack.c.l.b16 %v1443
        %v1860 = vunpack.c.h.b16 %v1443
        %v1861 = vunpack.c.l.b16 %v1444
        %v1862 = vunpack.c.h.b16 %v1444
        %v1863 = vunpack.c.l.b16 %v1445
        %v1864 = vunpack.c.h.b16 %v1445
        %v1865 = vunpack.c.l.b16 %v1446
        %v1866 = vunpack.c.h.b16 %v1446
        %v1867 = vunpack.c.l.b16 %v1447
        %v1868 = vunpack.c.h.b16 %v1447
        %v1869 = vunpack.c.l.b16 %v1448
        %v1870 = vunpack.c.h.b16 %v1448
        %v1871 = vunpack.c.l.b16 %v1449
        %v1872 = vunpack.c.h.b16 %v1449
        %v1873 = vunpack.c.l.b16 %v1450
        %v1874 = vunpack.c.h.b16 %v1450
        %v1875 = vunpack.c.l.b16 %v1451
        %v1876 = vunpack.c.h.b16 %v1451
        %v1877 = vunpack.c.l.b16 %v1452
        %v1878 = vunpack.c.h.b16 %v1452
        %v1879 = vunpack.c.l.b16 %v1453
        %v1880 = vunpack.c.h.b16 %v1453
        %v1881 = vunpack.c.l.b16 %v1454
        %v1882 = vunpack.c.h.b16 %v1454
        %v1883 = vunpack.c.l.b16 %v1455
        %v1884 = vunpack.c.h.b16 %v1455
        %v1885 = vunpack.c.l.b16 %v1456
        %v1886 = vunpack.c.h.b16 %v1456
        %v1887 = vunpack.c.l.b16 %v1457
        %v1888 = vunpack.c.h.b16 %v1457
        %v1889 = vunpack.c.l.b16 %v1458
        %v1890 = vunpack.c.h.b16 %v1458
        %v1891 = vunpack.c.l.b16 %v1459
        %v1892 = vunpack.c.h.b16 %v1459
        %v1893 = vunpack.c.l.b16 %v1460
        %v1894 = vunpack.c.h.b16 %v1460
        %v1895 = vunpack.c.l.b16 %v1461
        %v1896 = vunpack.c.h.b16 %v1461
        %v1897 = vunpack.c.l.b16 %v1462
        %v1898 = vunpack.c.h.b16 %v1462
        %v1899 = vunpack.c.l.b16 %v1463
        %v1900 = vunpack.c.h.b16 %v1463
        %v1901 = vunpack.c.l.b16 %v1464
        %v1902 = vunpack.c.h.b16 %v1464
        %v1903 = vunpack.c.l.b16 %v1465
        %v1904 = vunpack.c.h.b16 %v1465
        %v1905 = vunpack.c.l.b16 %v1466
        %v1906 = vunpack.c.h.b16 %v1466
        %v1907 = vunpack.c.l.b16 %v1467
        %v1908 = vunpack.c.h.b16 %v1467
        %v1909 = vunpack.c.l.b16 %v1468
        %v1910 = vunpack.c.h.b16 %v1468
        %v1911 = vunpack.c.l.b16 %v1469
        %v1912 = vunpack.c.h.b16 %v1469
        %v1913 = vunpack.c.l.b16 %v1470
        %v1914 = vunpack.c.h.b16 %v1470
        %v1915 = vunpack.c.l.b16 %v1471
        %v1916 = vunpack.c.h.b16 %v1471
        %v1917 = vpack.c.b16 %v1839, %v1837
        %v1918 = vpack.c.b16 %v1840, %v1838
        %v1919 = vpack.c.b16 %v1843, %v1841
        %v1920 = vpack.c.b16 %v1844, %v1842
        %v1921 = vpack.c.b16 %v1847, %v1845
        %v1922 = vpack.c.b16 %v1848, %v1846
        %v1923 = vpack.c.b16 %v1851, %v1849
        %v1924 = vpack.c.b16 %v1852, %v1850
        %v1925 = vpack.c.b16 %v1855, %v1853
        %v1926 = vpack.c.b16 %v1856, %v1854
        %v1927 = vpack.c.b16 %v1859, %v1857
        %v1928 = vpack.c.b16 %v1860, %v1858
        %v1929 = vpack.c.b16 %v1863, %v1861
        %v1930 = vpack.c.b16 %v1864, %v1862
        %v1931 = vpack.c.b16 %v1867, %v1865
        %v1932 = vpack.c.b16 %v1868, %v1866
        %v1933 = vpack.c.b16 %v1871, %v1869
        %v1934 = vpack.c.b16 %v1872, %v1870
        %v1935 = vpack.c.b16 %v1875, %v1873
        %v1936 = vpack.c.b16 %v1876, %v1874
        %v1937 = vpack.c.b16 %v1879, %v1877
        %v1938 = vpack.c.b16 %v1880, %v1878
        %v1939 = vpack.c.b16 %v1883, %v1881
        %v1940 = vpack.c.b16 %v1884, %v1882
        %v1941 = vpack.c.b16 %v1887, %v1885
        %v1942 = vpack.c.b16 %v1888, %v1886
        %v1943 = vpack.c.b16 %v1891, %v1889
        %v1944 = vpack.c.b16 %v1892, %v1890
        %v1945 = vpack.c.b16 %v1895, %v1893
        %v1946 = vpack.c.b16 %v1896, %v1894
        %v1947 = vpack.c.b16 %v1899, %v1897
        %v1948 = vpack.c.b16 %v1900, %v1898
        %v1949 = vpack.c.b16 %v1903, %v1901
        %v1950 = vpack.c.b16 %v1904, %v1902
        %v1951 = vpack.c.b16 %v1907, %v1905
        %v1952 = vpack.c.b16 %v1908, %v1906
        %v1953 = vpack.c.b16 %v1911, %v1909
        %v1954 = vpack.c.b16 %v1912, %v1910
        %v1955 = vpack.c.b16 %v1915, %v1913
        %v1956 = vpack.c.b16 %v1916, %v1914
        %v1998 = vsel %vm1271, %v1431, 0
        %2000 = vmatpush.bf16.msra.mxu0 %v1931
        %2001 = vmatpush.bf16.msra.mxu0 %v1929
        %2002 = vmatpush.bf16.msra.mxu0 %v1927
        %2003 = vmatpush.bf16.msra.mxu0 %v1925
        %2004 = vmatpush.bf16.msra.mxu0 %v1923
        %2005 = vmatpush.bf16.msra.mxu0 %v1921
        %2006 = vmatpush.bf16.msra.mxu0 %v1919
        %2007 = vmatpush.bf16.msra.mxu0 %v1917
        %2008 = vmatmul.bf16.gmra.mxu0 %v1429
        %v2009 = vpop.f32.mrf.mxu0
        %v2010 = vadd.f32 %v1755, %v2009
        %v2011 = vpop.f32.mrf.mxu0
        %2012 = vdwg.mxu0
        %2013 = vmatpush.bf16.msra.mxu0 %v1947
        %2014 = vmatpush.bf16.msra.mxu0 %v1945
        %2015 = vmatpush.bf16.msra.mxu0 %v1943
        %2016 = vmatpush.bf16.msra.mxu0 %v1941
        %2017 = vmatpush.bf16.msra.mxu0 %v1939
        %2018 = vmatpush.bf16.msra.mxu0 %v1937
        %2019 = vmatpush.bf16.msra.mxu0 %v1935
        %2020 = vmatpush.bf16.msra.mxu0 %v1933
        %2021 = vmatmul.bf16.gmra.mxu0 %v1430
        %v2022 = vpop.f32.mrf.mxu0
        %v2023 = vadd.f32 %v2010, %v2022
        %v2024 = vpop.f32.mrf.mxu0
        %2025 = vdwg.mxu0
        %2026 = vmatpush.bf16.msra.mxu0 0
        %2027 = vmatpush.bf16.msra.mxu0 0
        %2028 = vmatpush.bf16.msra.mxu0 0
        %2029 = vmatpush.bf16.msra.mxu0 0
        %2030 = vmatpush.bf16.msra.mxu0 %v1955
        %2031 = vmatpush.bf16.msra.mxu0 %v1953
        %2032 = vmatpush.bf16.msra.mxu0 %v1951
        %2033 = vmatpush.bf16.msra.mxu0 %v1949
        %2034 = vmatmul.bf16.gmra.mxu0 %v1998
        %v2035 = vpop.f32.mrf.mxu0
        %v2036 = vadd.f32 %v2023, %v2035
        %v2037 = vpop.f32.mrf.mxu0
        %2038 = vdwg.mxu0
        %2039 = vmatpush.bf16.msra.mxu0 %v1932
        %2040 = vmatpush.bf16.msra.mxu0 %v1930
        %2041 = vmatpush.bf16.msra.mxu0 %v1928
        %2042 = vmatpush.bf16.msra.mxu0 %v1926
        %2043 = vmatpush.bf16.msra.mxu0 %v1924
        %2044 = vmatpush.bf16.msra.mxu0 %v1922
        %2045 = vmatpush.bf16.msra.mxu0 %v1920
        %2046 = vmatpush.bf16.msra.mxu0 %v1918
        %2047 = vmatmul.bf16.gmra.mxu0 %v1429
        %v2048 = vpop.f32.mrf.mxu0
        %v2049 = vadd.f32 %v1794, %v2048
        %v2050 = vpop.f32.mrf.mxu0
        %2051 = vdwg.mxu0
        %2052 = vmatpush.bf16.msra.mxu0 %v1948
        %2053 = vmatpush.bf16.msra.mxu0 %v1946
        %2054 = vmatpush.bf16.msra.mxu0 %v1944
        %2055 = vmatpush.bf16.msra.mxu0 %v1942
        %2056 = vmatpush.bf16.msra.mxu0 %v1940
        %2057 = vmatpush.bf16.msra.mxu0 %v1938
        %2058 = vmatpush.bf16.msra.mxu0 %v1936
        %2059 = vmatpush.bf16.msra.mxu0 %v1934
        %2060 = vmatmul.bf16.gmra.mxu0 %v1430
        %v2061 = vpop.f32.mrf.mxu0
        %v2062 = vadd.f32 %v2049, %v2061
        %v2063 = vpop.f32.mrf.mxu0
        %2064 = vdwg.mxu0
        %2065 = vmatpush.bf16.msra.mxu0 0
        %2066 = vmatpush.bf16.msra.mxu0 0
        %2067 = vmatpush.bf16.msra.mxu0 0
        %2068 = vmatpush.bf16.msra.mxu0 0
        %2069 = vmatpush.bf16.msra.mxu0 %v1956
        %2070 = vmatpush.bf16.msra.mxu0 %v1954
        %2071 = vmatpush.bf16.msra.mxu0 %v1952
        %2072 = vmatpush.bf16.msra.mxu0 %v1950
        %2073 = vmatmul.bf16.gmra.mxu0 %v1998
        %v2074 = vpop.f32.mrf.mxu0
        %v2075 = vadd.f32 %v2062, %v2074
        %v2076 = vpop.f32.mrf.mxu0
        %2077 = vdwg.mxu0
        %v2078 = vpack.c.bf16 %v1426, %v1426
        %v2079 = vpack.c.bf16 %v1427, %v1427
        %v2080 = vpack.c.bf16 %v1428, %v1428
        %s2081 = scalar_lea.vmem [#allocation15], 640
        %v2082 = vld [vmem:[%s2081] sm:$0xff]
        %v2083 = vld [vmem:[%s2081 + $0x8] sm:$0xff]
        %v2084 = vld [vmem:[%s2081 + $0x10] sm:$0xff]
        %v2085 = vld [vmem:[%s2081 + $0x18] sm:$0xff]
        %v2086 = vld [vmem:[%s2081 + $0x20] sm:$0xff]
        %v2087 = vld [vmem:[%s2081 + $0x28] sm:$0xff]
        %v2088 = vld [vmem:[%s2081 + $0x30] sm:$0xff]
        %v2089 = vld [vmem:[%s2081 + $0x38] sm:$0xff]
        %v2090 = vld [vmem:[%s2081 + $0x40] sm:$0xff]
        %v2091 = vld [vmem:[%s2081 + $0x48] sm:$0xff]
        %v2092 = vld [vmem:[%s2081 + $0x50] sm:$0xff]
        %v2093 = vld [vmem:[%s2081 + $0x58] sm:$0xff]
        %v2094 = vld [vmem:[%s2081 + $0x60] sm:$0xff]
        %v2095 = vld [vmem:[%s2081 + $0x68] sm:$0xff]
        %v2096 = vld [vmem:[%s2081 + $0x70] sm:$0xff]
        %v2097 = vld [vmem:[%s2081 + $0x78] sm:$0xff]
        %v2098 = vld [vmem:[%s2081 + $0x80] sm:$0xff]
        %v2099 = vld [vmem:[%s2081 + $0x88] sm:$0xff]
        %v2100 = vld [vmem:[%s2081 + $0x90] sm:$0xff]
        %v2101 = vld [vmem:[%s2081 + $0x98] sm:$0xff]
        %v2102 = vld [vmem:[%s2081 + $0xa0] sm:$0xff]
        %v2103 = vld [vmem:[%s2081 + $0xa8] sm:$0xff]
        %v2104 = vld [vmem:[%s2081 + $0xb0] sm:$0xff]
        %v2105 = vld [vmem:[%s2081 + $0xb8] sm:$0xff]
        %v2106 = vld [vmem:[%s2081 + $0xc0] sm:$0xff]
        %v2107 = vld [vmem:[%s2081 + $0xc8] sm:$0xff]
        %v2108 = vld [vmem:[%s2081 + $0xd0] sm:$0xff]
        %v2109 = vld [vmem:[%s2081 + $0xd8] sm:$0xff]
        %v2110 = vld [vmem:[%s2081 + $0xe0] sm:$0xff]
        %v2111 = vld [vmem:[%s2081 + $0xe8] sm:$0xff]
        %v2112 = vld [vmem:[%s2081 + $0xf0] sm:$0xff]
        %v2113 = vld [vmem:[%s2081 + $0xf8] sm:$0xff]
        %v2114 = vld [vmem:[%s2081 + $0x100] sm:$0xff]
        %v2115 = vld [vmem:[%s2081 + $0x108] sm:$0xff]
        %v2116 = vld [vmem:[%s2081 + $0x110] sm:$0xff]
        %v2117 = vld [vmem:[%s2081 + $0x118] sm:$0xff]
        %v2118 = vld [vmem:[%s2081 + $0x120] sm:$0xff]
        %v2119 = vld [vmem:[%s2081 + $0x128] sm:$0xff]
        %v2120 = vld [vmem:[%s2081 + $0x130] sm:$0xff]
        %v2121 = vld [vmem:[%s2081 + $0x138] sm:$0xff]
        %v2162 = vunpack.c.l.b16 %v2082
        %v2163 = vunpack.c.h.b16 %v2082
        %v2164 = vunpack.c.l.b16 %v2083
        %v2165 = vunpack.c.h.b16 %v2083
        %v2166 = vunpack.c.l.b16 %v2084
        %v2167 = vunpack.c.h.b16 %v2084
        %v2168 = vunpack.c.l.b16 %v2085
        %v2169 = vunpack.c.h.b16 %v2085
        %v2170 = vunpack.c.l.b16 %v2086
        %v2171 = vunpack.c.h.b16 %v2086
        %v2172 = vunpack.c.l.b16 %v2087
        %v2173 = vunpack.c.h.b16 %v2087
        %v2174 = vunpack.c.l.b16 %v2088
        %v2175 = vunpack.c.h.b16 %v2088
        %v2176 = vunpack.c.l.b16 %v2089
        %v2177 = vunpack.c.h.b16 %v2089
        %v2178 = vunpack.c.l.b16 %v2090
        %v2179 = vunpack.c.h.b16 %v2090
        %v2180 = vunpack.c.l.b16 %v2091
        %v2181 = vunpack.c.h.b16 %v2091
        %v2182 = vunpack.c.l.b16 %v2092
        %v2183 = vunpack.c.h.b16 %v2092
        %v2184 = vunpack.c.l.b16 %v2093
        %v2185 = vunpack.c.h.b16 %v2093
        %v2186 = vunpack.c.l.b16 %v2094
        %v2187 = vunpack.c.h.b16 %v2094
        %v2188 = vunpack.c.l.b16 %v2095
        %v2189 = vunpack.c.h.b16 %v2095
        %v2190 = vunpack.c.l.b16 %v2096
        %v2191 = vunpack.c.h.b16 %v2096
        %v2192 = vunpack.c.l.b16 %v2097
        %v2193 = vunpack.c.h.b16 %v2097
        %v2194 = vunpack.c.l.b16 %v2098
        %v2195 = vunpack.c.h.b16 %v2098
        %v2196 = vunpack.c.l.b16 %v2099
        %v2197 = vunpack.c.h.b16 %v2099
        %v2198 = vunpack.c.l.b16 %v2100
        %v2199 = vunpack.c.h.b16 %v2100
        %v2200 = vunpack.c.l.b16 %v2101
        %v2201 = vunpack.c.h.b16 %v2101
        %v2202 = vunpack.c.l.b16 %v2102
        %v2203 = vunpack.c.h.b16 %v2102
        %v2204 = vunpack.c.l.b16 %v2103
        %v2205 = vunpack.c.h.b16 %v2103
        %v2206 = vunpack.c.l.b16 %v2104
        %v2207 = vunpack.c.h.b16 %v2104
        %v2208 = vunpack.c.l.b16 %v2105
        %v2209 = vunpack.c.h.b16 %v2105
        %v2210 = vunpack.c.l.b16 %v2106
        %v2211 = vunpack.c.h.b16 %v2106
        %v2212 = vunpack.c.l.b16 %v2107
        %v2213 = vunpack.c.h.b16 %v2107
        %v2214 = vunpack.c.l.b16 %v2108
        %v2215 = vunpack.c.h.b16 %v2108
        %v2216 = vunpack.c.l.b16 %v2109
        %v2217 = vunpack.c.h.b16 %v2109
        %v2218 = vunpack.c.l.b16 %v2110
        %v2219 = vunpack.c.h.b16 %v2110
        %v2220 = vunpack.c.l.b16 %v2111
        %v2221 = vunpack.c.h.b16 %v2111
        %v2222 = vunpack.c.l.b16 %v2112
        %v2223 = vunpack.c.h.b16 %v2112
        %v2224 = vunpack.c.l.b16 %v2113
        %v2225 = vunpack.c.h.b16 %v2113
        %v2226 = vunpack.c.l.b16 %v2114
        %v2227 = vunpack.c.h.b16 %v2114
        %v2228 = vunpack.c.l.b16 %v2115
        %v2229 = vunpack.c.h.b16 %v2115
        %v2230 = vunpack.c.l.b16 %v2116
        %v2231 = vunpack.c.h.b16 %v2116
        %v2232 = vunpack.c.l.b16 %v2117
        %v2233 = vunpack.c.h.b16 %v2117
        %v2234 = vunpack.c.l.b16 %v2118
        %v2235 = vunpack.c.h.b16 %v2118
        %v2236 = vunpack.c.l.b16 %v2119
        %v2237 = vunpack.c.h.b16 %v2119
        %v2238 = vunpack.c.l.b16 %v2120
        %v2239 = vunpack.c.h.b16 %v2120
        %v2240 = vunpack.c.l.b16 %v2121
        %v2241 = vunpack.c.h.b16 %v2121
        %v2242 = vpack.c.b16 %v2164, %v2162
        %v2243 = vpack.c.b16 %v2165, %v2163
        %v2244 = vpack.c.b16 %v2168, %v2166
        %v2245 = vpack.c.b16 %v2169, %v2167
        %v2246 = vpack.c.b16 %v2172, %v2170
        %v2247 = vpack.c.b16 %v2173, %v2171
        %v2248 = vpack.c.b16 %v2176, %v2174
        %v2249 = vpack.c.b16 %v2177, %v2175
        %v2250 = vpack.c.b16 %v2180, %v2178
        %v2251 = vpack.c.b16 %v2181, %v2179
        %v2252 = vpack.c.b16 %v2184, %v2182
        %v2253 = vpack.c.b16 %v2185, %v2183
        %v2254 = vpack.c.b16 %v2188, %v2186
        %v2255 = vpack.c.b16 %v2189, %v2187
        %v2256 = vpack.c.b16 %v2192, %v2190
        %v2257 = vpack.c.b16 %v2193, %v2191
        %v2258 = vpack.c.b16 %v2196, %v2194
        %v2259 = vpack.c.b16 %v2197, %v2195
        %v2260 = vpack.c.b16 %v2200, %v2198
        %v2261 = vpack.c.b16 %v2201, %v2199
        %v2262 = vpack.c.b16 %v2204, %v2202
        %v2263 = vpack.c.b16 %v2205, %v2203
        %v2264 = vpack.c.b16 %v2208, %v2206
        %v2265 = vpack.c.b16 %v2209, %v2207
        %v2266 = vpack.c.b16 %v2212, %v2210
        %v2267 = vpack.c.b16 %v2213, %v2211
        %v2268 = vpack.c.b16 %v2216, %v2214
        %v2269 = vpack.c.b16 %v2217, %v2215
        %v2270 = vpack.c.b16 %v2220, %v2218
        %v2271 = vpack.c.b16 %v2221, %v2219
        %v2272 = vpack.c.b16 %v2224, %v2222
        %v2273 = vpack.c.b16 %v2225, %v2223
        %v2274 = vpack.c.b16 %v2228, %v2226
        %v2275 = vpack.c.b16 %v2229, %v2227
        %v2276 = vpack.c.b16 %v2232, %v2230
        %v2277 = vpack.c.b16 %v2233, %v2231
        %v2278 = vpack.c.b16 %v2236, %v2234
        %v2279 = vpack.c.b16 %v2237, %v2235
        %v2280 = vpack.c.b16 %v2240, %v2238
        %v2281 = vpack.c.b16 %v2241, %v2239
        %v2323 = vsel %vm1271, %v2080, 0
        %2325 = vmatpush.bf16.msra.mxu0 %v2256
        %2326 = vmatpush.bf16.msra.mxu0 %v2254
        %2327 = vmatpush.bf16.msra.mxu0 %v2252
        %2328 = vmatpush.bf16.msra.mxu0 %v2250
        %2329 = vmatpush.bf16.msra.mxu0 %v2248
        %2330 = vmatpush.bf16.msra.mxu0 %v2246
        %2331 = vmatpush.bf16.msra.mxu0 %v2244
        %2332 = vmatpush.bf16.msra.mxu0 %v2242
        %2333 = vmatmul.bf16.gmra.mxu0 %v2078
        %v2334 = vpop.f32.mrf.mxu0
        %v2335 = vadd.f32 0.0, %v2334
        %v2336 = vpop.f32.mrf.mxu0
        %2337 = vdwg.mxu0
        %2338 = vmatpush.bf16.msra.mxu0 %v2272
        %2339 = vmatpush.bf16.msra.mxu0 %v2270
        %2340 = vmatpush.bf16.msra.mxu0 %v2268
        %2341 = vmatpush.bf16.msra.mxu0 %v2266
        %2342 = vmatpush.bf16.msra.mxu0 %v2264
        %2343 = vmatpush.bf16.msra.mxu0 %v2262
        %2344 = vmatpush.bf16.msra.mxu0 %v2260
        %2345 = vmatpush.bf16.msra.mxu0 %v2258
        %2346 = vmatmul.bf16.gmra.mxu0 %v2079
        %v2347 = vpop.f32.mrf.mxu0
        %v2348 = vadd.f32 %v2335, %v2347
        %v2349 = vpop.f32.mrf.mxu0
        %2350 = vdwg.mxu0
        %2351 = vmatpush.bf16.msra.mxu0 0
        %2352 = vmatpush.bf16.msra.mxu0 0
        %2353 = vmatpush.bf16.msra.mxu0 0
        %2354 = vmatpush.bf16.msra.mxu0 0
        %2355 = vmatpush.bf16.msra.mxu0 %v2280
        %2356 = vmatpush.bf16.msra.mxu0 %v2278
        %2357 = vmatpush.bf16.msra.mxu0 %v2276
        %2358 = vmatpush.bf16.msra.mxu0 %v2274
        %2359 = vmatmul.bf16.gmra.mxu0 %v2323
        %v2360 = vpop.f32.mrf.mxu0
        %v2361 = vadd.f32 %v2348, %v2360
        %v2362 = vpop.f32.mrf.mxu0
        %2363 = vdwg.mxu0
        %2364 = vmatpush.bf16.msra.mxu0 %v2257
        %2365 = vmatpush.bf16.msra.mxu0 %v2255
        %2366 = vmatpush.bf16.msra.mxu0 %v2253
        %2367 = vmatpush.bf16.msra.mxu0 %v2251
        %2368 = vmatpush.bf16.msra.mxu0 %v2249
        %2369 = vmatpush.bf16.msra.mxu0 %v2247
        %2370 = vmatpush.bf16.msra.mxu0 %v2245
        %2371 = vmatpush.bf16.msra.mxu0 %v2243
        %2372 = vmatmul.bf16.gmra.mxu0 %v2078
        %v2373 = vpop.f32.mrf.mxu0
        %v2374 = vadd.f32 0.0, %v2373
        %v2375 = vpop.f32.mrf.mxu0
        %2376 = vdwg.mxu0
        %2377 = vmatpush.bf16.msra.mxu0 %v2273
        %2378 = vmatpush.bf16.msra.mxu0 %v2271
        %2379 = vmatpush.bf16.msra.mxu0 %v2269
        %2380 = vmatpush.bf16.msra.mxu0 %v2267
        %2381 = vmatpush.bf16.msra.mxu0 %v2265
        %2382 = vmatpush.bf16.msra.mxu0 %v2263
        %2383 = vmatpush.bf16.msra.mxu0 %v2261
        %2384 = vmatpush.bf16.msra.mxu0 %v2259
        %2385 = vmatmul.bf16.gmra.mxu0 %v2079
        %v2386 = vpop.f32.mrf.mxu0
        %v2387 = vadd.f32 %v2374, %v2386
        %v2388 = vpop.f32.mrf.mxu0
        %2389 = vdwg.mxu0
        %2390 = vmatpush.bf16.msra.mxu0 0
        %2391 = vmatpush.bf16.msra.mxu0 0
        %2392 = vmatpush.bf16.msra.mxu0 0
        %2393 = vmatpush.bf16.msra.mxu0 0
        %2394 = vmatpush.bf16.msra.mxu0 %v2281
        %2395 = vmatpush.bf16.msra.mxu0 %v2279
        %2396 = vmatpush.bf16.msra.mxu0 %v2277
        %2397 = vmatpush.bf16.msra.mxu0 %v2275
        %2398 = vmatmul.bf16.gmra.mxu0 %v2323
        %v2399 = vpop.f32.mrf.mxu0
        %v2400 = vadd.f32 %v2387, %v2399
        %v2401 = vpop.f32.mrf.mxu0
        %2402 = vdwg.mxu0
        %v2403 = vadd.f32 %v2036, %v2361
        %v2404 = vadd.f32 %v2075, %v2400
        %v2405 = vld [vmem:[#allocation16] sm:$0x3]
        %v2407 = vperm.slane %v2405, 0
        %v2408 = vperm.slane %v2405, 1
        %v2411 = vadd.f32 %v2403, %v2407
        %v2412 = vadd.f32 %v2404, %v2408
        %v2413 = vld [vmem:[#allocation5] sm:$0xff]
        %v2414 = vxor.u32 %v2411, 2147483648
        %v2415 = vmul.f32 %v2414, 1.442695
        %v2416 = vpow.pop %v2415
        %v2417 = vadd.f32 %v2416, 1.0
        %v2418 = vrcp.pop %v2417
        %v2419 = vmul.f32 %v2417, %v2418
        %v2420 = vsub.f32 1.0, %v2419
        %v2421 = vmul.f32 %v2418, %v2420
        %v2422 = vadd.f32 %v2418, %v2421
        %vm2423 = vweird.f32 %v2417
        %vm2424 = vweird.f32 %v2418
        %vm2425 = vmor %vm2423, %vm2424
        %v2426 = vsel %vm2425, %v2418, %v2422
        %v2427 = vand.u32 2147483647, %v2417
        %vm2428 = vcmp.eq.f32.partialorder %v2427, 8.507059e+37
        %v2429 = vand.u32 %v2417, 2147483648
        %v2430 = vor.u32 1.1754944e-38, %v2429
        %v2431 = vsel %vm2428, %v2430, %v2426
        %v2432 = vmul.f32 1.0, %v2431
        %v2433 = vxor.u32 %v2412, 2147483648
        %v2434 = vmul.f32 %v2433, 1.442695
        %v2435 = vpow.pop %v2434
        %v2436 = vadd.f32 %v2435, 1.0
        %v2437 = vrcp.pop %v2436
        %v2438 = vmul.f32 %v2436, %v2437
        %v2439 = vsub.f32 1.0, %v2438
        %v2440 = vmul.f32 %v2437, %v2439
        %v2441 = vadd.f32 %v2437, %v2440
        %vm2442 = vweird.f32 %v2436
        %vm2443 = vweird.f32 %v2437
        %vm2444 = vmor %vm2442, %vm2443
        %v2445 = vsel %vm2444, %v2437, %v2441
        %v2446 = vand.u32 2147483647, %v2436
        %vm2447 = vcmp.eq.f32.partialorder %v2446, 8.507059e+37
        %v2448 = vand.u32 %v2436, 2147483648
        %v2449 = vor.u32 1.1754944e-38, %v2448
        %v2450 = vsel %vm2447, %v2449, %v2445
        %v2451 = vmul.f32 1.0, %v2450
        %v2452 = vtanh.pop %v2412
        %2454 = vrot.lane.b32.xlu0 %v2413, 64
        %v2455 = vpop.permute.xlu0 %2454
        %v2457 = vmul.f32 %v2432, %v2455
        %2459 = vrot.lane.b32.xlu0 %v2452, 64
        %v2460 = vpop.permute.xlu0 %2459
        %v2462 = vmul.f32 %v2432, %v2460
        %2464 = vrot.lane.b32.xlu0 %v2462, 64
        %v2465 = vpop.permute.xlu0 %2464
        %v2467 = vadd.f32 %v2457, %v2465
        %v2468 = vtanh.pop %v2467
        %2470 = vrot.lane.b32.xlu0 %v2468, 64
        %v2471 = vpop.permute.xlu0 %2470
        %v2473 = vmul.f32 %v2451, %v2471
        %2474 = vst.msk [vmem:[#allocation4] sm:$0xff] %vm1271, %v2473
        %2476 = vrot.lane.b32.xlu0 %v2467, 64
        %v2477 = vpop.permute.xlu0 %2476
        %2479 = vst.msk [vmem:[#allocation5] sm:$0xff] %vm1271, %v2477
        %v2480 = vpack.c.bf16 %v2473, %v2473
        %v2481 = vld [vmem:[%s12] sm:$0xf]
        %v2482 = vld [vmem:[%s12 + $0x4] sm:$0xf]
        %v2483 = vld [vmem:[%s12 + $0x8] sm:$0xf]
        %v2484 = vld [vmem:[%s12 + $0xc] sm:$0xf]
        %v2485 = vld [vmem:[%s12 + $0x10] sm:$0xf]
        %v2486 = vld [vmem:[%s12 + $0x14] sm:$0xf]
        %v2487 = vld [vmem:[%s12 + $0x18] sm:$0xf]
        %v2488 = vld [vmem:[%s12 + $0x1c] sm:$0xf]
        %v2497 = vunpack.c.l.b16 %v2481
        %v2498 = vunpack.c.l.b16 %v2482
        %v2499 = vunpack.c.l.b16 %v2483
        %v2500 = vunpack.c.l.b16 %v2484
        %v2501 = vunpack.c.l.b16 %v2485
        %v2502 = vunpack.c.l.b16 %v2486
        %v2503 = vunpack.c.l.b16 %v2487
        %v2504 = vunpack.c.l.b16 %v2488
        %v2505 = vpack.c.b16 %v2498, %v2497
        %v2506 = vpack.c.b16 %v2500, %v2499
        %v2507 = vpack.c.b16 %v2502, %v2501
        %v2508 = vpack.c.b16 %v2504, %v2503
        %v2514 = vsel %vm1271, %v2480, 0
        %2516 = vmatpush.bf16.msra.mxu0 0
        %2517 = vmatpush.bf16.msra.mxu0 0
        %2518 = vmatpush.bf16.msra.mxu0 0
        %2519 = vmatpush.bf16.msra.mxu0 0
        %2520 = vmatpush.bf16.msra.mxu0 %v2508
        %2521 = vmatpush.bf16.msra.mxu0 %v2507
        %2522 = vmatpush.bf16.msra.mxu0 %v2506
        %2523 = vmatpush.bf16.msra.mxu0 %v2505
        %2524 = vmatmul.bf16.gmra.mxu0 %v2514
        %v2525 = vpop.f32.mrf.mxu0
        %v2526 = vadd.f32 0.0, %v2525
        %v2527 = vpop.f32.mrf.mxu0
        %2528 = vdwg.mxu0
        %s2529 = scalar_lea.vmem %s12, 32
        %v2530 = vld [vmem:[%s2529] sm:$0xf]
        %v2531 = vld [vmem:[%s2529 + $0x4] sm:$0xf]
        %v2532 = vld [vmem:[%s2529 + $0x8] sm:$0xf]
        %v2533 = vld [vmem:[%s2529 + $0xc] sm:$0xf]
        %v2534 = vld [vmem:[%s2529 + $0x10] sm:$0xf]
        %v2535 = vld [vmem:[%s2529 + $0x14] sm:$0xf]
        %v2536 = vld [vmem:[%s2529 + $0x18] sm:$0xf]
        %v2537 = vld [vmem:[%s2529 + $0x1c] sm:$0xf]
        %v2546 = vunpack.c.l.b16 %v2530
        %v2547 = vunpack.c.l.b16 %v2531
        %v2548 = vunpack.c.l.b16 %v2532
        %v2549 = vunpack.c.l.b16 %v2533
        %v2550 = vunpack.c.l.b16 %v2534
        %v2551 = vunpack.c.l.b16 %v2535
        %v2552 = vunpack.c.l.b16 %v2536
        %v2553 = vunpack.c.l.b16 %v2537
        %v2554 = vpack.c.b16 %v2547, %v2546
        %v2555 = vpack.c.b16 %v2549, %v2548
        %v2556 = vpack.c.b16 %v2551, %v2550
        %v2557 = vpack.c.b16 %v2553, %v2552
        %2562 = vmatpush.bf16.msra.mxu0 0
        %2563 = vmatpush.bf16.msra.mxu0 0
        %2564 = vmatpush.bf16.msra.mxu0 0
        %2565 = vmatpush.bf16.msra.mxu0 0
        %2566 = vmatpush.bf16.msra.mxu0 %v2557
        %2567 = vmatpush.bf16.msra.mxu0 %v2556
        %2568 = vmatpush.bf16.msra.mxu0 %v2555
        %2569 = vmatpush.bf16.msra.mxu0 %v2554
        %2570 = vmatmul.bf16.gmra.mxu0 %v2514
        %v2571 = vpop.f32.mrf.mxu0
        %v2572 = vadd.f32 0.0, %v2571
        %v2573 = vpop.f32.mrf.mxu0
        %2574 = vdwg.mxu0
        %v2575 = vld [vmem:[%s14] sm:$0xff]
        %v2576 = vld [vmem:[%s14 + $0x8] sm:$0xff]
        %s2577 = scalar_lea.vmem %s14, 16
        %v2578 = vld [vmem:[%s2577] sm:$0xff]
        %v2579 = vld [vmem:[%s2577 + $0x8] sm:$0xff]
        %vm2580 = vcmask 64512
        %v2582 = vsel %vm2580, %v2578, 0
        %v2585 = vsel %vm2580, %v2579, 0
        %2587 = vmatpush.msra.mxu0 0.0
        %2588 = vmatpush.msra.mxu0 0.0
        %2589 = vmatpush.msra.mxu0 0.0
        %2590 = vmatpush.msra.mxu0 0.0
        %2591 = vmatpush.msra.mxu0 0.0
        %2592 = vmatpush.msra.mxu0 0.0
        %2593 = vmatpush.msra.mxu0 0.0
        %2594 = vmatpush.msra.mxu0 0.0
        %2595 = vmatpush.msra.mxu0 0.0
        %2596 = vmatpush.msra.mxu0 0.0
        %2597 = vmatpush.msra.mxu0 0.0
        %2598 = vmatpush.msra.mxu0 0.0
        %2599 = vmatpush.msra.mxu0 0.0
        %2600 = vmatpush.msra.mxu0 0.0
        %2601 = vmatpush.msra.mxu0 0.0
        %2602 = vmatpush.msra.mxu0 %v2572
        %2603 = vmatmul.f32.gmra.mxu0 %v2582
        %v2604 = vpop.f32.mrf.mxu0
        %v2605 = vadd.f32 0.0, %v2604
        %2606 = vmatmul.f32.gmra.mxu0 %v2585
        %v2607 = vpop.f32.mrf.mxu0
        %v2608 = vadd.f32 0.0, %v2607
        %2609 = vdwg.mxu0
        %v2611 = vsel %vm2580, %v2575, 0
        %v2614 = vsel %vm2580, %v2576, 0
        %2616 = vmatpush.msra.mxu0 0.0
        %2617 = vmatpush.msra.mxu0 0.0
        %2618 = vmatpush.msra.mxu0 0.0
        %2619 = vmatpush.msra.mxu0 0.0
        %2620 = vmatpush.msra.mxu0 0.0
        %2621 = vmatpush.msra.mxu0 0.0
        %2622 = vmatpush.msra.mxu0 0.0
        %2623 = vmatpush.msra.mxu0 0.0
        %2624 = vmatpush.msra.mxu0 0.0
        %2625 = vmatpush.msra.mxu0 0.0
        %2626 = vmatpush.msra.mxu0 0.0
        %2627 = vmatpush.msra.mxu0 0.0
        %2628 = vmatpush.msra.mxu0 0.0
        %2629 = vmatpush.msra.mxu0 0.0
        %2630 = vmatpush.msra.mxu0 0.0
        %2631 = vmatpush.msra.mxu0 %v2526
        %2632 = vmatmul.f32.gmra.mxu0 %v2611
        %v2633 = vpop.f32.mrf.mxu0
        %v2634 = vadd.f32 %v2605, %v2633
        %2635 = vmatmul.f32.gmra.mxu0 %v2614
        %v2636 = vpop.f32.mrf.mxu0
        %v2637 = vadd.f32 %v2608, %v2636
        %2638 = vdwg.mxu0
        %v2639 = vld [vmem:[#allocation18] sm:$0x1]
        %v2641 = vperm.slane %v2639, 0
        %v2643 = vadd.f32 %v2634, %v2641
        %v2644 = vadd.f32 %v2637, %v2641
        %2645 = vst [vmem:[#allocation10] sm:$0xff] %v2643
        %2646 = vst [vmem:[#allocation10 + $0x18] sm:$0xff] %v2644
        %v2647 = vld [vmem:[%s753] sm:$0xff]
        %v2648 = vld [vmem:[%s753 + $0x8] sm:$0xff]
        %2649 = vst [vmem:[#allocation10 + $0x8] sm:$0xff] %v2647
        %2650 = vst [vmem:[#allocation10 + $0x20] sm:$0xff] %v2648
        %v2651 = vld [vmem:[#allocation6] sm:$0xff]
        %v2652 = vld [vmem:[#allocation6 + $0x8] sm:$0xff]
        %2653 = vst [vmem:[#allocation10 + $0x10] sm:$0xff] %v2651
        %2654 = vst [vmem:[#allocation10 + $0x28] sm:$0xff] %v2652
        %v2655 = vld [vmem:[#allocation10] sm:$0xff]
        %v2656 = vld [vmem:[#allocation10 + $0x8] sm:$0xff]
        %v2657 = vld [vmem:[#allocation10 + $0x10] sm:$0xff]
        %v2658 = vld [vmem:[#allocation10 + $0x18] sm:$0xff]
        %v2659 = vld [vmem:[#allocation10 + $0x20] sm:$0xff]
        %v2660 = vld [vmem:[#allocation10 + $0x28] sm:$0xff]
        %v2661 = vrot.slane %v2655, 7
        %v2662 = vrot.slane %v2656, 7
        %v2663 = vrot.slane %v2657, 7
        %v2664 = vrot.slane %v2658, 7
        %v2665 = vrot.slane %v2659, 7
        %v2666 = vrot.slane %v2660, 7
        %v2667 = vlaneseq
        %v2668 = vshrl.u32 %v2667, 7
        %vm2669 = vcmp.lt.s32.totalorder %v2668, 1
        %v2670 = vsel %vm2669, %v2661, %v2664
        %v2671 = vsel %vm2669, %v2662, %v2665
        %v2672 = vsel %vm2669, %v2663, %v2666
        %v2673 = vsel %vm2669, %v2664, %v2661
        %v2674 = vsel %vm2669, %v2665, %v2662
        %v2675 = vsel %vm2669, %v2666, %v2663
        %v2676 = vrot.slane %v2655, 1
        %v2677 = vrot.slane %v2656, 1
        %v2678 = vrot.slane %v2657, 1
        %v2679 = vrot.slane %v2658, 1
        %v2680 = vrot.slane %v2659, 1
        %v2681 = vrot.slane %v2660, 1
        %vm2682 = vcmp.lt.s32.totalorder %v2668, 7
        %v2683 = vsel %vm2682, %v2676, %v2679
        %v2684 = vsel %vm2682, %v2677, %v2680
        %v2685 = vsel %vm2682, %v2678, %v2681
        %v2686 = vsel %vm2682, %v2679, %v2676
        %v2687 = vsel %vm2682, %v2680, %v2677
        %v2688 = vsel %vm2682, %v2681, %v2678
        %v2689 = vld [vmem:[%s4] sm:$0xff]
        %v2690 = vld [vmem:[%s4 + $0x8] sm:$0xff]
        %2692 = vset.pattern.permute.xlu0 0
        %2693 = vperm.xlu0 %2692, %v2689
        %v2694 = vpop.permute.xlu0 %2693
        %2697 = vset.pattern.permute.xlu0 0
        %2698 = vperm.xlu0 %2697, %v2690
        %v2699 = vpop.permute.xlu0 %2698
        %v2701 = vmul.f32 %v2673, %v2694
        %v2702 = vmul.f32 %v2674, %v2694
        %v2703 = vmul.f32 %v2675, %v2694
        %v2704 = vmul.f32 %v2670, %v2699
        %v2705 = vmul.f32 %v2671, %v2699
        %v2706 = vmul.f32 %v2672, %v2699
        %s2707 = scalar_lea.vmem %s4, 16
        %v2708 = vld [vmem:[%s2707] sm:$0xff]
        %v2709 = vld [vmem:[%s2707 + $0x8] sm:$0xff]
        %2711 = vset.pattern.permute.xlu0 0
        %2712 = vperm.xlu0 %2711, %v2708
        %v2713 = vpop.permute.xlu0 %2712
        %2716 = vset.pattern.permute.xlu0 0
        %2717 = vperm.xlu0 %2716, %v2709
        %v2718 = vpop.permute.xlu0 %2717
        %v2720 = vmul.f32 %v2683, %v2713
        %v2721 = vmul.f32 %v2684, %v2713
        %v2722 = vmul.f32 %v2685, %v2713
        %v2723 = vmul.f32 %v2686, %v2718
        %v2724 = vmul.f32 %v2687, %v2718
        %v2725 = vmul.f32 %v2688, %v2718
        %v2726 = vpack.c.bf16 %v2704, %v2701
        %v2727 = vpack.c.bf16 %v2705, %v2702
        %v2728 = vpack.c.bf16 %v2706, %v2703
        %v2729 = vld [vmem:[%s15] sm:$0xff]
        %v2730 = vld [vmem:[%s15 + $0x8] sm:$0xff]
        %v2731 = vld [vmem:[%s15 + $0x10] sm:$0xff]
        %v2732 = vld [vmem:[%s15 + $0x18] sm:$0xff]
        %v2733 = vld [vmem:[%s15 + $0x20] sm:$0xff]
        %v2734 = vld [vmem:[%s15 + $0x28] sm:$0xff]
        %v2735 = vld [vmem:[%s15 + $0x30] sm:$0xff]
        %v2736 = vld [vmem:[%s15 + $0x38] sm:$0xff]
        %v2737 = vld [vmem:[%s15 + $0x40] sm:$0xff]
        %v2738 = vld [vmem:[%s15 + $0x48] sm:$0xff]
        %v2739 = vld [vmem:[%s15 + $0x50] sm:$0xff]
        %v2740 = vld [vmem:[%s15 + $0x58] sm:$0xff]
        %v2741 = vld [vmem:[%s15 + $0x60] sm:$0xff]
        %v2742 = vld [vmem:[%s15 + $0x68] sm:$0xff]
        %v2743 = vld [vmem:[%s15 + $0x70] sm:$0xff]
        %v2744 = vld [vmem:[%s15 + $0x78] sm:$0xff]
        %v2745 = vld [vmem:[%s15 + $0x80] sm:$0xff]
        %v2746 = vld [vmem:[%s15 + $0x88] sm:$0xff]
        %v2747 = vld [vmem:[%s15 + $0x90] sm:$0xff]
        %v2748 = vld [vmem:[%s15 + $0x98] sm:$0xff]
        %v2749 = vld [vmem:[%s15 + $0xa0] sm:$0xff]
        %v2750 = vld [vmem:[%s15 + $0xa8] sm:$0xff]
        %v2751 = vld [vmem:[%s15 + $0xb0] sm:$0xff]
        %v2752 = vld [vmem:[%s15 + $0xb8] sm:$0xff]
        %v2753 = vld [vmem:[%s15 + $0xc0] sm:$0xff]
        %v2754 = vld [vmem:[%s15 + $0xc8] sm:$0xff]
        %v2755 = vld [vmem:[%s15 + $0xd0] sm:$0xff]
        %v2756 = vld [vmem:[%s15 + $0xd8] sm:$0xff]
        %v2757 = vld [vmem:[%s15 + $0xe0] sm:$0xff]
        %v2758 = vld [vmem:[%s15 + $0xe8] sm:$0xff]
        %v2759 = vld [vmem:[%s15 + $0xf0] sm:$0xff]
        %v2760 = vld [vmem:[%s15 + $0xf8] sm:$0xff]
        %v2761 = vld [vmem:[%s15 + $0x100] sm:$0xff]
        %v2762 = vld [vmem:[%s15 + $0x108] sm:$0xff]
        %v2763 = vld [vmem:[%s15 + $0x110] sm:$0xff]
        %v2764 = vld [vmem:[%s15 + $0x118] sm:$0xff]
        %v2765 = vld [vmem:[%s15 + $0x120] sm:$0xff]
        %v2766 = vld [vmem:[%s15 + $0x128] sm:$0xff]
        %v2767 = vld [vmem:[%s15 + $0x130] sm:$0xff]
        %v2768 = vld [vmem:[%s15 + $0x138] sm:$0xff]
        %v2769 = vld [vmem:[%s15 + $0x140] sm:$0xff]
        %v2770 = vld [vmem:[%s15 + $0x148] sm:$0xff]
        %v2771 = vld [vmem:[%s15 + $0x150] sm:$0xff]
        %v2772 = vld [vmem:[%s15 + $0x158] sm:$0xff]
        %v2773 = vld [vmem:[%s15 + $0x160] sm:$0xff]
        %v2774 = vld [vmem:[%s15 + $0x168] sm:$0xff]
        %v2775 = vld [vmem:[%s15 + $0x170] sm:$0xff]
        %v2776 = vld [vmem:[%s15 + $0x178] sm:$0xff]
        %v2777 = vld [vmem:[%s15 + $0x180] sm:$0xff]
        %v2778 = vld [vmem:[%s15 + $0x188] sm:$0xff]
        %v2779 = vld [vmem:[%s15 + $0x190] sm:$0xff]
        %v2780 = vld [vmem:[%s15 + $0x198] sm:$0xff]
        %v2781 = vld [vmem:[%s15 + $0x1a0] sm:$0xff]
        %v2782 = vld [vmem:[%s15 + $0x1a8] sm:$0xff]
        %v2783 = vld [vmem:[%s15 + $0x1b0] sm:$0xff]
        %v2784 = vld [vmem:[%s15 + $0x1b8] sm:$0xff]
        %v2785 = vld [vmem:[%s15 + $0x1c0] sm:$0xff]
        %v2786 = vld [vmem:[%s15 + $0x1c8] sm:$0xff]
        %v2787 = vld [vmem:[%s15 + $0x1d0] sm:$0xff]
        %v2788 = vld [vmem:[%s15 + $0x1d8] sm:$0xff]
        %v2789 = vld [vmem:[%s15 + $0x1e0] sm:$0xff]
        %v2790 = vld [vmem:[%s15 + $0x1e8] sm:$0xff]
        %v2791 = vld [vmem:[%s15 + $0x1f0] sm:$0xff]
        %v2792 = vld [vmem:[%s15 + $0x1f8] sm:$0xff]
        %v2793 = vld [vmem:[%s15 + $0x200] sm:$0xff]
        %v2794 = vld [vmem:[%s15 + $0x208] sm:$0xff]
        %v2795 = vld [vmem:[%s15 + $0x210] sm:$0xff]
        %v2796 = vld [vmem:[%s15 + $0x218] sm:$0xff]
        %v2797 = vld [vmem:[%s15 + $0x220] sm:$0xff]
        %v2798 = vld [vmem:[%s15 + $0x228] sm:$0xff]
        %v2799 = vld [vmem:[%s15 + $0x230] sm:$0xff]
        %v2800 = vld [vmem:[%s15 + $0x238] sm:$0xff]
        %v2801 = vld [vmem:[%s15 + $0x240] sm:$0xff]
        %v2802 = vld [vmem:[%s15 + $0x248] sm:$0xff]
        %v2803 = vld [vmem:[%s15 + $0x250] sm:$0xff]
        %v2804 = vld [vmem:[%s15 + $0x258] sm:$0xff]
        %v2805 = vld [vmem:[%s15 + $0x260] sm:$0xff]
        %v2806 = vld [vmem:[%s15 + $0x268] sm:$0xff]
        %v2807 = vld [vmem:[%s15 + $0x270] sm:$0xff]
        %v2808 = vld [vmem:[%s15 + $0x278] sm:$0xff]
        %v2809 = vld [vmem:[%s15 + $0x280] sm:$0xff]
        %v2810 = vld [vmem:[%s15 + $0x288] sm:$0xff]
        %v2811 = vld [vmem:[%s15 + $0x290] sm:$0xff]
        %v2812 = vld [vmem:[%s15 + $0x298] sm:$0xff]
        %v2813 = vld [vmem:[%s15 + $0x2a0] sm:$0xff]
        %v2814 = vld [vmem:[%s15 + $0x2a8] sm:$0xff]
        %v2815 = vld [vmem:[%s15 + $0x2b0] sm:$0xff]
        %v2816 = vld [vmem:[%s15 + $0x2b8] sm:$0xff]
        %v2817 = vld [vmem:[%s15 + $0x2c0] sm:$0xff]
        %v2818 = vld [vmem:[%s15 + $0x2c8] sm:$0xff]
        %v2819 = vld [vmem:[%s15 + $0x2d0] sm:$0xff]
        %v2820 = vld [vmem:[%s15 + $0x2d8] sm:$0xff]
        %v2821 = vld [vmem:[%s15 + $0x2e0] sm:$0xff]
        %v2822 = vld [vmem:[%s15 + $0x2e8] sm:$0xff]
        %v2823 = vld [vmem:[%s15 + $0x2f0] sm:$0xff]
        %v2824 = vld [vmem:[%s15 + $0x2f8] sm:$0xff]
        %v2825 = vpack.c.bf16 %v2658, %v2655
        %v2826 = vpack.c.bf16 %v2659, %v2656
        %v2827 = vpack.c.bf16 %v2660, %v2657
        %s2828 = scalar_lea.vmem %s15, 768
        %v2829 = vld [vmem:[%s2828] sm:$0xff]
        %v2830 = vld [vmem:[%s2828 + $0x8] sm:$0xff]
        %v2831 = vld [vmem:[%s2828 + $0x10] sm:$0xff]
        %v2832 = vld [vmem:[%s2828 + $0x18] sm:$0xff]
        %v2833 = vld [vmem:[%s2828 + $0x20] sm:$0xff]
        %v2834 = vld [vmem:[%s2828 + $0x28] sm:$0xff]
        %v2835 = vld [vmem:[%s2828 + $0x30] sm:$0xff]
        %v2836 = vld [vmem:[%s2828 + $0x38] sm:$0xff]
        %v2837 = vld [vmem:[%s2828 + $0x40] sm:$0xff]
        %v2838 = vld [vmem:[%s2828 + $0x48] sm:$0xff]
        %v2839 = vld [vmem:[%s2828 + $0x50] sm:$0xff]
        %v2840 = vld [vmem:[%s2828 + $0x58] sm:$0xff]
        %v2841 = vld [vmem:[%s2828 + $0x60] sm:$0xff]
        %v2842 = vld [vmem:[%s2828 + $0x68] sm:$0xff]
        %v2843 = vld [vmem:[%s2828 + $0x70] sm:$0xff]
        %v2844 = vld [vmem:[%s2828 + $0x78] sm:$0xff]
        %v2845 = vld [vmem:[%s2828 + $0x80] sm:$0xff]
        %v2846 = vld [vmem:[%s2828 + $0x88] sm:$0xff]
        %v2847 = vld [vmem:[%s2828 + $0x90] sm:$0xff]
        %v2848 = vld [vmem:[%s2828 + $0x98] sm:$0xff]
        %v2849 = vld [vmem:[%s2828 + $0xa0] sm:$0xff]
        %v2850 = vld [vmem:[%s2828 + $0xa8] sm:$0xff]
        %v2851 = vld [vmem:[%s2828 + $0xb0] sm:$0xff]
        %v2852 = vld [vmem:[%s2828 + $0xb8] sm:$0xff]
        %v2853 = vld [vmem:[%s2828 + $0xc0] sm:$0xff]
        %v2854 = vld [vmem:[%s2828 + $0xc8] sm:$0xff]
        %v2855 = vld [vmem:[%s2828 + $0xd0] sm:$0xff]
        %v2856 = vld [vmem:[%s2828 + $0xd8] sm:$0xff]
        %v2857 = vld [vmem:[%s2828 + $0xe0] sm:$0xff]
        %v2858 = vld [vmem:[%s2828 + $0xe8] sm:$0xff]
        %v2859 = vld [vmem:[%s2828 + $0xf0] sm:$0xff]
        %v2860 = vld [vmem:[%s2828 + $0xf8] sm:$0xff]
        %v2861 = vld [vmem:[%s2828 + $0x100] sm:$0xff]
        %v2862 = vld [vmem:[%s2828 + $0x108] sm:$0xff]
        %v2863 = vld [vmem:[%s2828 + $0x110] sm:$0xff]
        %v2864 = vld [vmem:[%s2828 + $0x118] sm:$0xff]
        %v2865 = vld [vmem:[%s2828 + $0x120] sm:$0xff]
        %v2866 = vld [vmem:[%s2828 + $0x128] sm:$0xff]
        %v2867 = vld [vmem:[%s2828 + $0x130] sm:$0xff]
        %v2868 = vld [vmem:[%s2828 + $0x138] sm:$0xff]
        %v2869 = vld [vmem:[%s2828 + $0x140] sm:$0xff]
        %v2870 = vld [vmem:[%s2828 + $0x148] sm:$0xff]
        %v2871 = vld [vmem:[%s2828 + $0x150] sm:$0xff]
        %v2872 = vld [vmem:[%s2828 + $0x158] sm:$0xff]
        %v2873 = vld [vmem:[%s2828 + $0x160] sm:$0xff]
        %v2874 = vld [vmem:[%s2828 + $0x168] sm:$0xff]
        %v2875 = vld [vmem:[%s2828 + $0x170] sm:$0xff]
        %v2876 = vld [vmem:[%s2828 + $0x178] sm:$0xff]
        %v2877 = vld [vmem:[%s2828 + $0x180] sm:$0xff]
        %v2878 = vld [vmem:[%s2828 + $0x188] sm:$0xff]
        %v2879 = vld [vmem:[%s2828 + $0x190] sm:$0xff]
        %v2880 = vld [vmem:[%s2828 + $0x198] sm:$0xff]
        %v2881 = vld [vmem:[%s2828 + $0x1a0] sm:$0xff]
        %v2882 = vld [vmem:[%s2828 + $0x1a8] sm:$0xff]
        %v2883 = vld [vmem:[%s2828 + $0x1b0] sm:$0xff]
        %v2884 = vld [vmem:[%s2828 + $0x1b8] sm:$0xff]
        %v2885 = vld [vmem:[%s2828 + $0x1c0] sm:$0xff]
        %v2886 = vld [vmem:[%s2828 + $0x1c8] sm:$0xff]
        %v2887 = vld [vmem:[%s2828 + $0x1d0] sm:$0xff]
        %v2888 = vld [vmem:[%s2828 + $0x1d8] sm:$0xff]
        %v2889 = vld [vmem:[%s2828 + $0x1e0] sm:$0xff]
        %v2890 = vld [vmem:[%s2828 + $0x1e8] sm:$0xff]
        %v2891 = vld [vmem:[%s2828 + $0x1f0] sm:$0xff]
        %v2892 = vld [vmem:[%s2828 + $0x1f8] sm:$0xff]
        %v2893 = vld [vmem:[%s2828 + $0x200] sm:$0xff]
        %v2894 = vld [vmem:[%s2828 + $0x208] sm:$0xff]
        %v2895 = vld [vmem:[%s2828 + $0x210] sm:$0xff]
        %v2896 = vld [vmem:[%s2828 + $0x218] sm:$0xff]
        %v2897 = vld [vmem:[%s2828 + $0x220] sm:$0xff]
        %v2898 = vld [vmem:[%s2828 + $0x228] sm:$0xff]
        %v2899 = vld [vmem:[%s2828 + $0x230] sm:$0xff]
        %v2900 = vld [vmem:[%s2828 + $0x238] sm:$0xff]
        %v2901 = vld [vmem:[%s2828 + $0x240] sm:$0xff]
        %v2902 = vld [vmem:[%s2828 + $0x248] sm:$0xff]
        %v2903 = vld [vmem:[%s2828 + $0x250] sm:$0xff]
        %v2904 = vld [vmem:[%s2828 + $0x258] sm:$0xff]
        %v2905 = vld [vmem:[%s2828 + $0x260] sm:$0xff]
        %v2906 = vld [vmem:[%s2828 + $0x268] sm:$0xff]
        %v2907 = vld [vmem:[%s2828 + $0x270] sm:$0xff]
        %v2908 = vld [vmem:[%s2828 + $0x278] sm:$0xff]
        %v2909 = vld [vmem:[%s2828 + $0x280] sm:$0xff]
        %v2910 = vld [vmem:[%s2828 + $0x288] sm:$0xff]
        %v2911 = vld [vmem:[%s2828 + $0x290] sm:$0xff]
        %v2912 = vld [vmem:[%s2828 + $0x298] sm:$0xff]
        %v2913 = vld [vmem:[%s2828 + $0x2a0] sm:$0xff]
        %v2914 = vld [vmem:[%s2828 + $0x2a8] sm:$0xff]
        %v2915 = vld [vmem:[%s2828 + $0x2b0] sm:$0xff]
        %v2916 = vld [vmem:[%s2828 + $0x2b8] sm:$0xff]
        %v2917 = vld [vmem:[%s2828 + $0x2c0] sm:$0xff]
        %v2918 = vld [vmem:[%s2828 + $0x2c8] sm:$0xff]
        %v2919 = vld [vmem:[%s2828 + $0x2d0] sm:$0xff]
        %v2920 = vld [vmem:[%s2828 + $0x2d8] sm:$0xff]
        %v2921 = vld [vmem:[%s2828 + $0x2e0] sm:$0xff]
        %v2922 = vld [vmem:[%s2828 + $0x2e8] sm:$0xff]
        %v2923 = vld [vmem:[%s2828 + $0x2f0] sm:$0xff]
        %v2924 = vld [vmem:[%s2828 + $0x2f8] sm:$0xff]
        %v3021 = vunpack.c.l.b16 %v2829
        %v3022 = vunpack.c.h.b16 %v2829
        %v3023 = vunpack.c.l.b16 %v2830
        %v3024 = vunpack.c.h.b16 %v2830
        %v3025 = vunpack.c.l.b16 %v2831
        %v3026 = vunpack.c.h.b16 %v2831
        %v3027 = vunpack.c.l.b16 %v2832
        %v3028 = vunpack.c.h.b16 %v2832
        %v3029 = vunpack.c.l.b16 %v2833
        %v3030 = vunpack.c.h.b16 %v2833
        %v3031 = vunpack.c.l.b16 %v2834
        %v3032 = vunpack.c.h.b16 %v2834
        %v3033 = vunpack.c.l.b16 %v2835
        %v3034 = vunpack.c.h.b16 %v2835
        %v3035 = vunpack.c.l.b16 %v2836
        %v3036 = vunpack.c.h.b16 %v2836
        %v3037 = vunpack.c.l.b16 %v2837
        %v3038 = vunpack.c.h.b16 %v2837
        %v3039 = vunpack.c.l.b16 %v2838
        %v3040 = vunpack.c.h.b16 %v2838
        %v3041 = vunpack.c.l.b16 %v2839
        %v3042 = vunpack.c.h.b16 %v2839
        %v3043 = vunpack.c.l.b16 %v2840
        %v3044 = vunpack.c.h.b16 %v2840
        %v3045 = vunpack.c.l.b16 %v2841
        %v3046 = vunpack.c.h.b16 %v2841
        %v3047 = vunpack.c.l.b16 %v2842
        %v3048 = vunpack.c.h.b16 %v2842
        %v3049 = vunpack.c.l.b16 %v2843
        %v3050 = vunpack.c.h.b16 %v2843
        %v3051 = vunpack.c.l.b16 %v2844
        %v3052 = vunpack.c.h.b16 %v2844
        %v3053 = vunpack.c.l.b16 %v2845
        %v3054 = vunpack.c.h.b16 %v2845
        %v3055 = vunpack.c.l.b16 %v2846
        %v3056 = vunpack.c.h.b16 %v2846
        %v3057 = vunpack.c.l.b16 %v2847
        %v3058 = vunpack.c.h.b16 %v2847
        %v3059 = vunpack.c.l.b16 %v2848
        %v3060 = vunpack.c.h.b16 %v2848
        %v3061 = vunpack.c.l.b16 %v2849
        %v3062 = vunpack.c.h.b16 %v2849
        %v3063 = vunpack.c.l.b16 %v2850
        %v3064 = vunpack.c.h.b16 %v2850
        %v3065 = vunpack.c.l.b16 %v2851
        %v3066 = vunpack.c.h.b16 %v2851
        %v3067 = vunpack.c.l.b16 %v2852
        %v3068 = vunpack.c.h.b16 %v2852
        %v3069 = vunpack.c.l.b16 %v2853
        %v3070 = vunpack.c.h.b16 %v2853
        %v3071 = vunpack.c.l.b16 %v2854
        %v3072 = vunpack.c.h.b16 %v2854
        %v3073 = vunpack.c.l.b16 %v2855
        %v3074 = vunpack.c.h.b16 %v2855
        %v3075 = vunpack.c.l.b16 %v2856
        %v3076 = vunpack.c.h.b16 %v2856
        %v3077 = vunpack.c.l.b16 %v2857
        %v3078 = vunpack.c.h.b16 %v2857
        %v3079 = vunpack.c.l.b16 %v2858
        %v3080 = vunpack.c.h.b16 %v2858
        %v3081 = vunpack.c.l.b16 %v2859
        %v3082 = vunpack.c.h.b16 %v2859
        %v3083 = vunpack.c.l.b16 %v2860
        %v3084 = vunpack.c.h.b16 %v2860
        %v3085 = vunpack.c.l.b16 %v2861
        %v3086 = vunpack.c.h.b16 %v2861
        %v3087 = vunpack.c.l.b16 %v2862
        %v3088 = vunpack.c.h.b16 %v2862
        %v3089 = vunpack.c.l.b16 %v2863
        %v3090 = vunpack.c.h.b16 %v2863
        %v3091 = vunpack.c.l.b16 %v2864
        %v3092 = vunpack.c.h.b16 %v2864
        %v3093 = vunpack.c.l.b16 %v2865
        %v3094 = vunpack.c.h.b16 %v2865
        %v3095 = vunpack.c.l.b16 %v2866
        %v3096 = vunpack.c.h.b16 %v2866
        %v3097 = vunpack.c.l.b16 %v2867
        %v3098 = vunpack.c.h.b16 %v2867
        %v3099 = vunpack.c.l.b16 %v2868
        %v3100 = vunpack.c.h.b16 %v2868
        %v3101 = vunpack.c.l.b16 %v2869
        %v3102 = vunpack.c.h.b16 %v2869
        %v3103 = vunpack.c.l.b16 %v2870
        %v3104 = vunpack.c.h.b16 %v2870
        %v3105 = vunpack.c.l.b16 %v2871
        %v3106 = vunpack.c.h.b16 %v2871
        %v3107 = vunpack.c.l.b16 %v2872
        %v3108 = vunpack.c.h.b16 %v2872
        %v3109 = vunpack.c.l.b16 %v2873
        %v3110 = vunpack.c.h.b16 %v2873
        %v3111 = vunpack.c.l.b16 %v2874
        %v3112 = vunpack.c.h.b16 %v2874
        %v3113 = vunpack.c.l.b16 %v2875
        %v3114 = vunpack.c.h.b16 %v2875
        %v3115 = vunpack.c.l.b16 %v2876
        %v3116 = vunpack.c.h.b16 %v2876
        %v3117 = vunpack.c.l.b16 %v2877
        %v3118 = vunpack.c.h.b16 %v2877
        %v3119 = vunpack.c.l.b16 %v2878
        %v3120 = vunpack.c.h.b16 %v2878
        %v3121 = vunpack.c.l.b16 %v2879
        %v3122 = vunpack.c.h.b16 %v2879
        %v3123 = vunpack.c.l.b16 %v2880
        %v3124 = vunpack.c.h.b16 %v2880
        %v3125 = vunpack.c.l.b16 %v2881
        %v3126 = vunpack.c.h.b16 %v2881
        %v3127 = vunpack.c.l.b16 %v2882
        %v3128 = vunpack.c.h.b16 %v2882
        %v3129 = vunpack.c.l.b16 %v2883
        %v3130 = vunpack.c.h.b16 %v2883
        %v3131 = vunpack.c.l.b16 %v2884
        %v3132 = vunpack.c.h.b16 %v2884
        %v3133 = vunpack.c.l.b16 %v2885
        %v3134 = vunpack.c.h.b16 %v2885
        %v3135 = vunpack.c.l.b16 %v2886
        %v3136 = vunpack.c.h.b16 %v2886
        %v3137 = vunpack.c.l.b16 %v2887
        %v3138 = vunpack.c.h.b16 %v2887
        %v3139 = vunpack.c.l.b16 %v2888
        %v3140 = vunpack.c.h.b16 %v2888
        %v3141 = vunpack.c.l.b16 %v2889
        %v3142 = vunpack.c.h.b16 %v2889
        %v3143 = vunpack.c.l.b16 %v2890
        %v3144 = vunpack.c.h.b16 %v2890
        %v3145 = vunpack.c.l.b16 %v2891
        %v3146 = vunpack.c.h.b16 %v2891
        %v3147 = vunpack.c.l.b16 %v2892
        %v3148 = vunpack.c.h.b16 %v2892
        %v3149 = vunpack.c.l.b16 %v2893
        %v3150 = vunpack.c.h.b16 %v2893
        %v3151 = vunpack.c.l.b16 %v2894
        %v3152 = vunpack.c.h.b16 %v2894
        %v3153 = vunpack.c.l.b16 %v2895
        %v3154 = vunpack.c.h.b16 %v2895
        %v3155 = vunpack.c.l.b16 %v2896
        %v3156 = vunpack.c.h.b16 %v2896
        %v3157 = vunpack.c.l.b16 %v2897
        %v3158 = vunpack.c.h.b16 %v2897
        %v3159 = vunpack.c.l.b16 %v2898
        %v3160 = vunpack.c.h.b16 %v2898
        %v3161 = vunpack.c.l.b16 %v2899
        %v3162 = vunpack.c.h.b16 %v2899
        %v3163 = vunpack.c.l.b16 %v2900
        %v3164 = vunpack.c.h.b16 %v2900
        %v3165 = vunpack.c.l.b16 %v2901
        %v3166 = vunpack.c.h.b16 %v2901
        %v3167 = vunpack.c.l.b16 %v2902
        %v3168 = vunpack.c.h.b16 %v2902
        %v3169 = vunpack.c.l.b16 %v2903
        %v3170 = vunpack.c.h.b16 %v2903
        %v3171 = vunpack.c.l.b16 %v2904
        %v3172 = vunpack.c.h.b16 %v2904
        %v3173 = vunpack.c.l.b16 %v2905
        %v3174 = vunpack.c.h.b16 %v2905
        %v3175 = vunpack.c.l.b16 %v2906
        %v3176 = vunpack.c.h.b16 %v2906
        %v3177 = vunpack.c.l.b16 %v2907
        %v3178 = vunpack.c.h.b16 %v2907
        %v3179 = vunpack.c.l.b16 %v2908
        %v3180 = vunpack.c.h.b16 %v2908
        %v3181 = vunpack.c.l.b16 %v2909
        %v3182 = vunpack.c.h.b16 %v2909
        %v3183 = vunpack.c.l.b16 %v2910
        %v3184 = vunpack.c.h.b16 %v2910
        %v3185 = vunpack.c.l.b16 %v2911
        %v3186 = vunpack.c.h.b16 %v2911
        %v3187 = vunpack.c.l.b16 %v2912
        %v3188 = vunpack.c.h.b16 %v2912
        %v3189 = vunpack.c.l.b16 %v2913
        %v3190 = vunpack.c.h.b16 %v2913
        %v3191 = vunpack.c.l.b16 %v2914
        %v3192 = vunpack.c.h.b16 %v2914
        %v3193 = vunpack.c.l.b16 %v2915
        %v3194 = vunpack.c.h.b16 %v2915
        %v3195 = vunpack.c.l.b16 %v2916
        %v3196 = vunpack.c.h.b16 %v2916
        %v3197 = vunpack.c.l.b16 %v2917
        %v3198 = vunpack.c.h.b16 %v2917
        %v3199 = vunpack.c.l.b16 %v2918
        %v3200 = vunpack.c.h.b16 %v2918
        %v3201 = vunpack.c.l.b16 %v2919
        %v3202 = vunpack.c.h.b16 %v2919
        %v3203 = vunpack.c.l.b16 %v2920
        %v3204 = vunpack.c.h.b16 %v2920
        %v3205 = vunpack.c.l.b16 %v2921
        %v3206 = vunpack.c.h.b16 %v2921
        %v3207 = vunpack.c.l.b16 %v2922
        %v3208 = vunpack.c.h.b16 %v2922
        %v3209 = vunpack.c.l.b16 %v2923
        %v3210 = vunpack.c.h.b16 %v2923
        %v3211 = vunpack.c.l.b16 %v2924
        %v3212 = vunpack.c.h.b16 %v2924
        %v3213 = vpack.c.b16 %v3025, %v3021
        %v3214 = vpack.c.b16 %v3026, %v3022
        %v3215 = vpack.c.b16 %v3027, %v3023
        %v3216 = vpack.c.b16 %v3028, %v3024
        %v3217 = vpack.c.b16 %v3033, %v3029
        %v3218 = vpack.c.b16 %v3034, %v3030
        %v3219 = vpack.c.b16 %v3035, %v3031
        %v3220 = vpack.c.b16 %v3036, %v3032
        %v3221 = vpack.c.b16 %v3041, %v3037
        %v3222 = vpack.c.b16 %v3042, %v3038
        %v3223 = vpack.c.b16 %v3043, %v3039
        %v3224 = vpack.c.b16 %v3044, %v3040
        %v3225 = vpack.c.b16 %v3049, %v3045
        %v3226 = vpack.c.b16 %v3050, %v3046
        %v3227 = vpack.c.b16 %v3051, %v3047
        %v3228 = vpack.c.b16 %v3052, %v3048
        %v3229 = vpack.c.b16 %v3057, %v3053
        %v3230 = vpack.c.b16 %v3058, %v3054
        %v3231 = vpack.c.b16 %v3059, %v3055
        %v3232 = vpack.c.b16 %v3060, %v3056
        %v3233 = vpack.c.b16 %v3065, %v3061
        %v3234 = vpack.c.b16 %v3066, %v3062
        %v3235 = vpack.c.b16 %v3067, %v3063
        %v3236 = vpack.c.b16 %v3068, %v3064
        %v3237 = vpack.c.b16 %v3073, %v3069
        %v3238 = vpack.c.b16 %v3074, %v3070
        %v3239 = vpack.c.b16 %v3075, %v3071
        %v3240 = vpack.c.b16 %v3076, %v3072
        %v3241 = vpack.c.b16 %v3081, %v3077
        %v3242 = vpack.c.b16 %v3082, %v3078
        %v3243 = vpack.c.b16 %v3083, %v3079
        %v3244 = vpack.c.b16 %v3084, %v3080
        %v3245 = vpack.c.b16 %v3089, %v3085
        %v3246 = vpack.c.b16 %v3090, %v3086
        %v3247 = vpack.c.b16 %v3091, %v3087
        %v3248 = vpack.c.b16 %v3092, %v3088
        %v3249 = vpack.c.b16 %v3097, %v3093
        %v3250 = vpack.c.b16 %v3098, %v3094
        %v3251 = vpack.c.b16 %v3099, %v3095
        %v3252 = vpack.c.b16 %v3100, %v3096
        %v3253 = vpack.c.b16 %v3105, %v3101
        %v3254 = vpack.c.b16 %v3106, %v3102
        %v3255 = vpack.c.b16 %v3107, %v3103
        %v3256 = vpack.c.b16 %v3108, %v3104
        %v3257 = vpack.c.b16 %v3113, %v3109
        %v3258 = vpack.c.b16 %v3114, %v3110
        %v3259 = vpack.c.b16 %v3115, %v3111
        %v3260 = vpack.c.b16 %v3116, %v3112
        %v3261 = vpack.c.b16 %v3121, %v3117
        %v3262 = vpack.c.b16 %v3122, %v3118
        %v3263 = vpack.c.b16 %v3123, %v3119
        %v3264 = vpack.c.b16 %v3124, %v3120
        %v3265 = vpack.c.b16 %v3129, %v3125
        %v3266 = vpack.c.b16 %v3130, %v3126
        %v3267 = vpack.c.b16 %v3131, %v3127
        %v3268 = vpack.c.b16 %v3132, %v3128
        %v3269 = vpack.c.b16 %v3137, %v3133
        %v3270 = vpack.c.b16 %v3138, %v3134
        %v3271 = vpack.c.b16 %v3139, %v3135
        %v3272 = vpack.c.b16 %v3140, %v3136
        %v3273 = vpack.c.b16 %v3145, %v3141
        %v3274 = vpack.c.b16 %v3146, %v3142
        %v3275 = vpack.c.b16 %v3147, %v3143
        %v3276 = vpack.c.b16 %v3148, %v3144
        %v3277 = vpack.c.b16 %v3153, %v3149
        %v3278 = vpack.c.b16 %v3154, %v3150
        %v3279 = vpack.c.b16 %v3155, %v3151
        %v3280 = vpack.c.b16 %v3156, %v3152
        %v3281 = vpack.c.b16 %v3161, %v3157
        %v3282 = vpack.c.b16 %v3162, %v3158
        %v3283 = vpack.c.b16 %v3163, %v3159
        %v3284 = vpack.c.b16 %v3164, %v3160
        %v3285 = vpack.c.b16 %v3169, %v3165
        %v3286 = vpack.c.b16 %v3170, %v3166
        %v3287 = vpack.c.b16 %v3171, %v3167
        %v3288 = vpack.c.b16 %v3172, %v3168
        %v3289 = vpack.c.b16 %v3177, %v3173
        %v3290 = vpack.c.b16 %v3178, %v3174
        %v3291 = vpack.c.b16 %v3179, %v3175
        %v3292 = vpack.c.b16 %v3180, %v3176
        %v3293 = vpack.c.b16 %v3185, %v3181
        %v3294 = vpack.c.b16 %v3186, %v3182
        %v3295 = vpack.c.b16 %v3187, %v3183
        %v3296 = vpack.c.b16 %v3188, %v3184
        %v3297 = vpack.c.b16 %v3193, %v3189
        %v3298 = vpack.c.b16 %v3194, %v3190
        %v3299 = vpack.c.b16 %v3195, %v3191
        %v3300 = vpack.c.b16 %v3196, %v3192
        %v3301 = vpack.c.b16 %v3201, %v3197
        %v3302 = vpack.c.b16 %v3202, %v3198
        %v3303 = vpack.c.b16 %v3203, %v3199
        %v3304 = vpack.c.b16 %v3204, %v3200
        %v3305 = vpack.c.b16 %v3209, %v3205
        %v3306 = vpack.c.b16 %v3210, %v3206
        %v3307 = vpack.c.b16 %v3211, %v3207
        %v3308 = vpack.c.b16 %v3212, %v3208
        %3405 = vmatpush.bf16.msra.mxu0 %v3241
        %3406 = vmatpush.bf16.msra.mxu0 %v3237
        %3407 = vmatpush.bf16.msra.mxu0 %v3233
        %3408 = vmatpush.bf16.msra.mxu0 %v3229
        %3409 = vmatpush.bf16.msra.mxu0 %v3225
        %3410 = vmatpush.bf16.msra.mxu0 %v3221
        %3411 = vmatpush.bf16.msra.mxu0 %v3217
        %3412 = vmatpush.bf16.msra.mxu0 %v3213
        %3413 = vmatmul.bf16.gmra.mxu0 %v2825
        %v3414 = vpop.f32.mrf.mxu0
        %v3415 = vadd.f32 0.0, %v3414
        %v3416 = vpop.f32.mrf.mxu0
        %v3417 = vadd.f32 0.0, %v3416
        %3418 = vdwg.mxu0
        %3419 = vmatpush.bf16.msra.mxu0 %v3273
        %3420 = vmatpush.bf16.msra.mxu0 %v3269
        %3421 = vmatpush.bf16.msra.mxu0 %v3265
        %3422 = vmatpush.bf16.msra.mxu0 %v3261
        %3423 = vmatpush.bf16.msra.mxu0 %v3257
        %3424 = vmatpush.bf16.msra.mxu0 %v3253
        %3425 = vmatpush.bf16.msra.mxu0 %v3249
        %3426 = vmatpush.bf16.msra.mxu0 %v3245
        %3427 = vmatmul.bf16.gmra.mxu0 %v2826
        %v3428 = vpop.f32.mrf.mxu0
        %v3429 = vadd.f32 %v3415, %v3428
        %v3430 = vpop.f32.mrf.mxu0
        %v3431 = vadd.f32 %v3417, %v3430
        %3432 = vdwg.mxu0
        %3433 = vmatpush.bf16.msra.mxu0 %v3305
        %3434 = vmatpush.bf16.msra.mxu0 %v3301
        %3435 = vmatpush.bf16.msra.mxu0 %v3297
        %3436 = vmatpush.bf16.msra.mxu0 %v3293
        %3437 = vmatpush.bf16.msra.mxu0 %v3289
        %3438 = vmatpush.bf16.msra.mxu0 %v3285
        %3439 = vmatpush.bf16.msra.mxu0 %v3281
        %3440 = vmatpush.bf16.msra.mxu0 %v3277
        %3441 = vmatmul.bf16.gmra.mxu0 %v2827
        %v3442 = vpop.f32.mrf.mxu0
        %v3443 = vadd.f32 %v3429, %v3442
        %v3444 = vpop.f32.mrf.mxu0
        %v3445 = vadd.f32 %v3431, %v3444
        %3446 = vdwg.mxu0
        %3447 = vmatpush.bf16.msra.mxu0 %v3242
        %3448 = vmatpush.bf16.msra.mxu0 %v3238
        %3449 = vmatpush.bf16.msra.mxu0 %v3234
        %3450 = vmatpush.bf16.msra.mxu0 %v3230
        %3451 = vmatpush.bf16.msra.mxu0 %v3226
        %3452 = vmatpush.bf16.msra.mxu0 %v3222
        %3453 = vmatpush.bf16.msra.mxu0 %v3218
        %3454 = vmatpush.bf16.msra.mxu0 %v3214
        %3455 = vmatmul.bf16.gmra.mxu0 %v2825
        %v3456 = vpop.f32.mrf.mxu0
        %v3457 = vadd.f32 0.0, %v3456
        %v3458 = vpop.f32.mrf.mxu0
        %v3459 = vadd.f32 0.0, %v3458
        %3460 = vdwg.mxu0
        %3461 = vmatpush.bf16.msra.mxu0 %v3274
        %3462 = vmatpush.bf16.msra.mxu0 %v3270
        %3463 = vmatpush.bf16.msra.mxu0 %v3266
        %3464 = vmatpush.bf16.msra.mxu0 %v3262
        %3465 = vmatpush.bf16.msra.mxu0 %v3258
        %3466 = vmatpush.bf16.msra.mxu0 %v3254
        %3467 = vmatpush.bf16.msra.mxu0 %v3250
        %3468 = vmatpush.bf16.msra.mxu0 %v3246
        %3469 = vmatmul.bf16.gmra.mxu0 %v2826
        %v3470 = vpop.f32.mrf.mxu0
        %v3471 = vadd.f32 %v3457, %v3470
        %v3472 = vpop.f32.mrf.mxu0
        %v3473 = vadd.f32 %v3459, %v3472
        %3474 = vdwg.mxu0
        %3475 = vmatpush.bf16.msra.mxu0 %v3306
        %3476 = vmatpush.bf16.msra.mxu0 %v3302
        %3477 = vmatpush.bf16.msra.mxu0 %v3298
        %3478 = vmatpush.bf16.msra.mxu0 %v3294
        %3479 = vmatpush.bf16.msra.mxu0 %v3290
        %3480 = vmatpush.bf16.msra.mxu0 %v3286
        %3481 = vmatpush.bf16.msra.mxu0 %v3282
        %3482 = vmatpush.bf16.msra.mxu0 %v3278
        %3483 = vmatmul.bf16.gmra.mxu0 %v2827
        %v3484 = vpop.f32.mrf.mxu0
        %v3485 = vadd.f32 %v3471, %v3484
        %v3486 = vpop.f32.mrf.mxu0
        %v3487 = vadd.f32 %v3473, %v3486
        %3488 = vdwg.mxu0
        %3489 = vmatpush.bf16.msra.mxu0 %v3243
        %3490 = vmatpush.bf16.msra.mxu0 %v3239
        %3491 = vmatpush.bf16.msra.mxu0 %v3235
        %3492 = vmatpush.bf16.msra.mxu0 %v3231
        %3493 = vmatpush.bf16.msra.mxu0 %v3227
        %3494 = vmatpush.bf16.msra.mxu0 %v3223
        %3495 = vmatpush.bf16.msra.mxu0 %v3219
        %3496 = vmatpush.bf16.msra.mxu0 %v3215
        %3497 = vmatmul.bf16.gmra.mxu0 %v2825
        %v3498 = vpop.f32.mrf.mxu0
        %v3499 = vadd.f32 0.0, %v3498
        %v3500 = vpop.f32.mrf.mxu0
        %v3501 = vadd.f32 0.0, %v3500
        %3502 = vdwg.mxu0
        %3503 = vmatpush.bf16.msra.mxu0 %v3275
        %3504 = vmatpush.bf16.msra.mxu0 %v3271
        %3505 = vmatpush.bf16.msra.mxu0 %v3267
        %3506 = vmatpush.bf16.msra.mxu0 %v3263
        %3507 = vmatpush.bf16.msra.mxu0 %v3259
        %3508 = vmatpush.bf16.msra.mxu0 %v3255
        %3509 = vmatpush.bf16.msra.mxu0 %v3251
        %3510 = vmatpush.bf16.msra.mxu0 %v3247
        %3511 = vmatmul.bf16.gmra.mxu0 %v2826
        %v3512 = vpop.f32.mrf.mxu0
        %v3513 = vadd.f32 %v3499, %v3512
        %v3514 = vpop.f32.mrf.mxu0
        %v3515 = vadd.f32 %v3501, %v3514
        %3516 = vdwg.mxu0
        %3517 = vmatpush.bf16.msra.mxu0 %v3307
        %3518 = vmatpush.bf16.msra.mxu0 %v3303
        %3519 = vmatpush.bf16.msra.mxu0 %v3299
        %3520 = vmatpush.bf16.msra.mxu0 %v3295
        %3521 = vmatpush.bf16.msra.mxu0 %v3291
        %3522 = vmatpush.bf16.msra.mxu0 %v3287
        %3523 = vmatpush.bf16.msra.mxu0 %v3283
        %3524 = vmatpush.bf16.msra.mxu0 %v3279
        %3525 = vmatmul.bf16.gmra.mxu0 %v2827
        %v3526 = vpop.f32.mrf.mxu0
        %v3527 = vadd.f32 %v3513, %v3526
        %v3528 = vpop.f32.mrf.mxu0
        %v3529 = vadd.f32 %v3515, %v3528
        %3530 = vdwg.mxu0
        %3531 = vmatpush.bf16.msra.mxu0 %v3244
        %3532 = vmatpush.bf16.msra.mxu0 %v3240
        %3533 = vmatpush.bf16.msra.mxu0 %v3236
        %3534 = vmatpush.bf16.msra.mxu0 %v3232
        %3535 = vmatpush.bf16.msra.mxu0 %v3228
        %3536 = vmatpush.bf16.msra.mxu0 %v3224
        %3537 = vmatpush.bf16.msra.mxu0 %v3220
        %3538 = vmatpush.bf16.msra.mxu0 %v3216
        %3539 = vmatmul.bf16.gmra.mxu0 %v2825
        %v3540 = vpop.f32.mrf.mxu0
        %v3541 = vadd.f32 0.0, %v3540
        %v3542 = vpop.f32.mrf.mxu0
        %v3543 = vadd.f32 0.0, %v3542
        %3544 = vdwg.mxu0
        %3545 = vmatpush.bf16.msra.mxu0 %v3276
        %3546 = vmatpush.bf16.msra.mxu0 %v3272
        %3547 = vmatpush.bf16.msra.mxu0 %v3268
        %3548 = vmatpush.bf16.msra.mxu0 %v3264
        %3549 = vmatpush.bf16.msra.mxu0 %v3260
        %3550 = vmatpush.bf16.msra.mxu0 %v3256
        %3551 = vmatpush.bf16.msra.mxu0 %v3252
        %3552 = vmatpush.bf16.msra.mxu0 %v3248
        %3553 = vmatmul.bf16.gmra.mxu0 %v2826
        %v3554 = vpop.f32.mrf.mxu0
        %v3555 = vadd.f32 %v3541, %v3554
        %v3556 = vpop.f32.mrf.mxu0
        %v3557 = vadd.f32 %v3543, %v3556
        %3558 = vdwg.mxu0
        %3559 = vmatpush.bf16.msra.mxu0 %v3308
        %3560 = vmatpush.bf16.msra.mxu0 %v3304
        %3561 = vmatpush.bf16.msra.mxu0 %v3300
        %3562 = vmatpush.bf16.msra.mxu0 %v3296
        %3563 = vmatpush.bf16.msra.mxu0 %v3292
        %3564 = vmatpush.bf16.msra.mxu0 %v3288
        %3565 = vmatpush.bf16.msra.mxu0 %v3284
        %3566 = vmatpush.bf16.msra.mxu0 %v3280
        %3567 = vmatmul.bf16.gmra.mxu0 %v2827
        %v3568 = vpop.f32.mrf.mxu0
        %v3569 = vadd.f32 %v3555, %v3568
        %v3570 = vpop.f32.mrf.mxu0
        %v3571 = vadd.f32 %v3557, %v3570
        %3572 = vdwg.mxu0
        %v3669 = vunpack.c.l.b16 %v2729
        %v3670 = vunpack.c.h.b16 %v2729
        %v3671 = vunpack.c.l.b16 %v2730
        %v3672 = vunpack.c.h.b16 %v2730
        %v3673 = vunpack.c.l.b16 %v2731
        %v3674 = vunpack.c.h.b16 %v2731
        %v3675 = vunpack.c.l.b16 %v2732
        %v3676 = vunpack.c.h.b16 %v2732
        %v3677 = vunpack.c.l.b16 %v2733
        %v3678 = vunpack.c.h.b16 %v2733
        %v3679 = vunpack.c.l.b16 %v2734
        %v3680 = vunpack.c.h.b16 %v2734
        %v3681 = vunpack.c.l.b16 %v2735
        %v3682 = vunpack.c.h.b16 %v2735
        %v3683 = vunpack.c.l.b16 %v2736
        %v3684 = vunpack.c.h.b16 %v2736
        %v3685 = vunpack.c.l.b16 %v2737
        %v3686 = vunpack.c.h.b16 %v2737
        %v3687 = vunpack.c.l.b16 %v2738
        %v3688 = vunpack.c.h.b16 %v2738
        %v3689 = vunpack.c.l.b16 %v2739
        %v3690 = vunpack.c.h.b16 %v2739
        %v3691 = vunpack.c.l.b16 %v2740
        %v3692 = vunpack.c.h.b16 %v2740
        %v3693 = vunpack.c.l.b16 %v2741
        %v3694 = vunpack.c.h.b16 %v2741
        %v3695 = vunpack.c.l.b16 %v2742
        %v3696 = vunpack.c.h.b16 %v2742
        %v3697 = vunpack.c.l.b16 %v2743
        %v3698 = vunpack.c.h.b16 %v2743
        %v3699 = vunpack.c.l.b16 %v2744
        %v3700 = vunpack.c.h.b16 %v2744
        %v3701 = vunpack.c.l.b16 %v2745
        %v3702 = vunpack.c.h.b16 %v2745
        %v3703 = vunpack.c.l.b16 %v2746
        %v3704 = vunpack.c.h.b16 %v2746
        %v3705 = vunpack.c.l.b16 %v2747
        %v3706 = vunpack.c.h.b16 %v2747
        %v3707 = vunpack.c.l.b16 %v2748
        %v3708 = vunpack.c.h.b16 %v2748
        %v3709 = vunpack.c.l.b16 %v2749
        %v3710 = vunpack.c.h.b16 %v2749
        %v3711 = vunpack.c.l.b16 %v2750
        %v3712 = vunpack.c.h.b16 %v2750
        %v3713 = vunpack.c.l.b16 %v2751
        %v3714 = vunpack.c.h.b16 %v2751
        %v3715 = vunpack.c.l.b16 %v2752
        %v3716 = vunpack.c.h.b16 %v2752
        %v3717 = vunpack.c.l.b16 %v2753
        %v3718 = vunpack.c.h.b16 %v2753
        %v3719 = vunpack.c.l.b16 %v2754
        %v3720 = vunpack.c.h.b16 %v2754
        %v3721 = vunpack.c.l.b16 %v2755
        %v3722 = vunpack.c.h.b16 %v2755
        %v3723 = vunpack.c.l.b16 %v2756
        %v3724 = vunpack.c.h.b16 %v2756
        %v3725 = vunpack.c.l.b16 %v2757
        %v3726 = vunpack.c.h.b16 %v2757
        %v3727 = vunpack.c.l.b16 %v2758
        %v3728 = vunpack.c.h.b16 %v2758
        %v3729 = vunpack.c.l.b16 %v2759
        %v3730 = vunpack.c.h.b16 %v2759
        %v3731 = vunpack.c.l.b16 %v2760
        %v3732 = vunpack.c.h.b16 %v2760
        %v3733 = vunpack.c.l.b16 %v2761
        %v3734 = vunpack.c.h.b16 %v2761
        %v3735 = vunpack.c.l.b16 %v2762
        %v3736 = vunpack.c.h.b16 %v2762
        %v3737 = vunpack.c.l.b16 %v2763
        %v3738 = vunpack.c.h.b16 %v2763
        %v3739 = vunpack.c.l.b16 %v2764
        %v3740 = vunpack.c.h.b16 %v2764
        %v3741 = vunpack.c.l.b16 %v2765
        %v3742 = vunpack.c.h.b16 %v2765
        %v3743 = vunpack.c.l.b16 %v2766
        %v3744 = vunpack.c.h.b16 %v2766
        %v3745 = vunpack.c.l.b16 %v2767
        %v3746 = vunpack.c.h.b16 %v2767
        %v3747 = vunpack.c.l.b16 %v2768
        %v3748 = vunpack.c.h.b16 %v2768
        %v3749 = vunpack.c.l.b16 %v2769
        %v3750 = vunpack.c.h.b16 %v2769
        %v3751 = vunpack.c.l.b16 %v2770
        %v3752 = vunpack.c.h.b16 %v2770
        %v3753 = vunpack.c.l.b16 %v2771
        %v3754 = vunpack.c.h.b16 %v2771
        %v3755 = vunpack.c.l.b16 %v2772
        %v3756 = vunpack.c.h.b16 %v2772
        %v3757 = vunpack.c.l.b16 %v2773
        %v3758 = vunpack.c.h.b16 %v2773
        %v3759 = vunpack.c.l.b16 %v2774
        %v3760 = vunpack.c.h.b16 %v2774
        %v3761 = vunpack.c.l.b16 %v2775
        %v3762 = vunpack.c.h.b16 %v2775
        %v3763 = vunpack.c.l.b16 %v2776
        %v3764 = vunpack.c.h.b16 %v2776
        %v3765 = vunpack.c.l.b16 %v2777
        %v3766 = vunpack.c.h.b16 %v2777
        %v3767 = vunpack.c.l.b16 %v2778
        %v3768 = vunpack.c.h.b16 %v2778
        %v3769 = vunpack.c.l.b16 %v2779
        %v3770 = vunpack.c.h.b16 %v2779
        %v3771 = vunpack.c.l.b16 %v2780
        %v3772 = vunpack.c.h.b16 %v2780
        %v3773 = vunpack.c.l.b16 %v2781
        %v3774 = vunpack.c.h.b16 %v2781
        %v3775 = vunpack.c.l.b16 %v2782
        %v3776 = vunpack.c.h.b16 %v2782
        %v3777 = vunpack.c.l.b16 %v2783
        %v3778 = vunpack.c.h.b16 %v2783
        %v3779 = vunpack.c.l.b16 %v2784
        %v3780 = vunpack.c.h.b16 %v2784
        %v3781 = vunpack.c.l.b16 %v2785
        %v3782 = vunpack.c.h.b16 %v2785
        %v3783 = vunpack.c.l.b16 %v2786
        %v3784 = vunpack.c.h.b16 %v2786
        %v3785 = vunpack.c.l.b16 %v2787
        %v3786 = vunpack.c.h.b16 %v2787
        %v3787 = vunpack.c.l.b16 %v2788
        %v3788 = vunpack.c.h.b16 %v2788
        %v3789 = vunpack.c.l.b16 %v2789
        %v3790 = vunpack.c.h.b16 %v2789
        %v3791 = vunpack.c.l.b16 %v2790
        %v3792 = vunpack.c.h.b16 %v2790
        %v3793 = vunpack.c.l.b16 %v2791
        %v3794 = vunpack.c.h.b16 %v2791
        %v3795 = vunpack.c.l.b16 %v2792
        %v3796 = vunpack.c.h.b16 %v2792
        %v3797 = vunpack.c.l.b16 %v2793
        %v3798 = vunpack.c.h.b16 %v2793
        %v3799 = vunpack.c.l.b16 %v2794
        %v3800 = vunpack.c.h.b16 %v2794
        %v3801 = vunpack.c.l.b16 %v2795
        %v3802 = vunpack.c.h.b16 %v2795
        %v3803 = vunpack.c.l.b16 %v2796
        %v3804 = vunpack.c.h.b16 %v2796
        %v3805 = vunpack.c.l.b16 %v2797
        %v3806 = vunpack.c.h.b16 %v2797
        %v3807 = vunpack.c.l.b16 %v2798
        %v3808 = vunpack.c.h.b16 %v2798
        %v3809 = vunpack.c.l.b16 %v2799
        %v3810 = vunpack.c.h.b16 %v2799
        %v3811 = vunpack.c.l.b16 %v2800
        %v3812 = vunpack.c.h.b16 %v2800
        %v3813 = vunpack.c.l.b16 %v2801
        %v3814 = vunpack.c.h.b16 %v2801
        %v3815 = vunpack.c.l.b16 %v2802
        %v3816 = vunpack.c.h.b16 %v2802
        %v3817 = vunpack.c.l.b16 %v2803
        %v3818 = vunpack.c.h.b16 %v2803
        %v3819 = vunpack.c.l.b16 %v2804
        %v3820 = vunpack.c.h.b16 %v2804
        %v3821 = vunpack.c.l.b16 %v2805
        %v3822 = vunpack.c.h.b16 %v2805
        %v3823 = vunpack.c.l.b16 %v2806
        %v3824 = vunpack.c.h.b16 %v2806
        %v3825 = vunpack.c.l.b16 %v2807
        %v3826 = vunpack.c.h.b16 %v2807
        %v3827 = vunpack.c.l.b16 %v2808
        %v3828 = vunpack.c.h.b16 %v2808
        %v3829 = vunpack.c.l.b16 %v2809
        %v3830 = vunpack.c.h.b16 %v2809
        %v3831 = vunpack.c.l.b16 %v2810
        %v3832 = vunpack.c.h.b16 %v2810
        %v3833 = vunpack.c.l.b16 %v2811
        %v3834 = vunpack.c.h.b16 %v2811
        %v3835 = vunpack.c.l.b16 %v2812
        %v3836 = vunpack.c.h.b16 %v2812
        %v3837 = vunpack.c.l.b16 %v2813
        %v3838 = vunpack.c.h.b16 %v2813
        %v3839 = vunpack.c.l.b16 %v2814
        %v3840 = vunpack.c.h.b16 %v2814
        %v3841 = vunpack.c.l.b16 %v2815
        %v3842 = vunpack.c.h.b16 %v2815
        %v3843 = vunpack.c.l.b16 %v2816
        %v3844 = vunpack.c.h.b16 %v2816
        %v3845 = vunpack.c.l.b16 %v2817
        %v3846 = vunpack.c.h.b16 %v2817
        %v3847 = vunpack.c.l.b16 %v2818
        %v3848 = vunpack.c.h.b16 %v2818
        %v3849 = vunpack.c.l.b16 %v2819
        %v3850 = vunpack.c.h.b16 %v2819
        %v3851 = vunpack.c.l.b16 %v2820
        %v3852 = vunpack.c.h.b16 %v2820
        %v3853 = vunpack.c.l.b16 %v2821
        %v3854 = vunpack.c.h.b16 %v2821
        %v3855 = vunpack.c.l.b16 %v2822
        %v3856 = vunpack.c.h.b16 %v2822
        %v3857 = vunpack.c.l.b16 %v2823
        %v3858 = vunpack.c.h.b16 %v2823
        %v3859 = vunpack.c.l.b16 %v2824
        %v3860 = vunpack.c.h.b16 %v2824
        %v3861 = vpack.c.b16 %v3673, %v3669
        %v3862 = vpack.c.b16 %v3674, %v3670
        %v3863 = vpack.c.b16 %v3675, %v3671
        %v3864 = vpack.c.b16 %v3676, %v3672
        %v3865 = vpack.c.b16 %v3681, %v3677
        %v3866 = vpack.c.b16 %v3682, %v3678
        %v3867 = vpack.c.b16 %v3683, %v3679
        %v3868 = vpack.c.b16 %v3684, %v3680
        %v3869 = vpack.c.b16 %v3689, %v3685
        %v3870 = vpack.c.b16 %v3690, %v3686
        %v3871 = vpack.c.b16 %v3691, %v3687
        %v3872 = vpack.c.b16 %v3692, %v3688
        %v3873 = vpack.c.b16 %v3697, %v3693
        %v3874 = vpack.c.b16 %v3698, %v3694
        %v3875 = vpack.c.b16 %v3699, %v3695
        %v3876 = vpack.c.b16 %v3700, %v3696
        %v3877 = vpack.c.b16 %v3705, %v3701
        %v3878 = vpack.c.b16 %v3706, %v3702
        %v3879 = vpack.c.b16 %v3707, %v3703
        %v3880 = vpack.c.b16 %v3708, %v3704
        %v3881 = vpack.c.b16 %v3713, %v3709
        %v3882 = vpack.c.b16 %v3714, %v3710
        %v3883 = vpack.c.b16 %v3715, %v3711
        %v3884 = vpack.c.b16 %v3716, %v3712
        %v3885 = vpack.c.b16 %v3721, %v3717
        %v3886 = vpack.c.b16 %v3722, %v3718
        %v3887 = vpack.c.b16 %v3723, %v3719
        %v3888 = vpack.c.b16 %v3724, %v3720
        %v3889 = vpack.c.b16 %v3729, %v3725
        %v3890 = vpack.c.b16 %v3730, %v3726
        %v3891 = vpack.c.b16 %v3731, %v3727
        %v3892 = vpack.c.b16 %v3732, %v3728
        %v3893 = vpack.c.b16 %v3737, %v3733
        %v3894 = vpack.c.b16 %v3738, %v3734
        %v3895 = vpack.c.b16 %v3739, %v3735
        %v3896 = vpack.c.b16 %v3740, %v3736
        %v3897 = vpack.c.b16 %v3745, %v3741
        %v3898 = vpack.c.b16 %v3746, %v3742
        %v3899 = vpack.c.b16 %v3747, %v3743
        %v3900 = vpack.c.b16 %v3748, %v3744
        %v3901 = vpack.c.b16 %v3753, %v3749
        %v3902 = vpack.c.b16 %v3754, %v3750
        %v3903 = vpack.c.b16 %v3755, %v3751
        %v3904 = vpack.c.b16 %v3756, %v3752
        %v3905 = vpack.c.b16 %v3761, %v3757
        %v3906 = vpack.c.b16 %v3762, %v3758
        %v3907 = vpack.c.b16 %v3763, %v3759
        %v3908 = vpack.c.b16 %v3764, %v3760
        %v3909 = vpack.c.b16 %v3769, %v3765
        %v3910 = vpack.c.b16 %v3770, %v3766
        %v3911 = vpack.c.b16 %v3771, %v3767
        %v3912 = vpack.c.b16 %v3772, %v3768
        %v3913 = vpack.c.b16 %v3777, %v3773
        %v3914 = vpack.c.b16 %v3778, %v3774
        %v3915 = vpack.c.b16 %v3779, %v3775
        %v3916 = vpack.c.b16 %v3780, %v3776
        %v3917 = vpack.c.b16 %v3785, %v3781
        %v3918 = vpack.c.b16 %v3786, %v3782
        %v3919 = vpack.c.b16 %v3787, %v3783
        %v3920 = vpack.c.b16 %v3788, %v3784
        %v3921 = vpack.c.b16 %v3793, %v3789
        %v3922 = vpack.c.b16 %v3794, %v3790
        %v3923 = vpack.c.b16 %v3795, %v3791
        %v3924 = vpack.c.b16 %v3796, %v3792
        %v3925 = vpack.c.b16 %v3801, %v3797
        %v3926 = vpack.c.b16 %v3802, %v3798
        %v3927 = vpack.c.b16 %v3803, %v3799
        %v3928 = vpack.c.b16 %v3804, %v3800
        %v3929 = vpack.c.b16 %v3809, %v3805
        %v3930 = vpack.c.b16 %v3810, %v3806
        %v3931 = vpack.c.b16 %v3811, %v3807
        %v3932 = vpack.c.b16 %v3812, %v3808
        %v3933 = vpack.c.b16 %v3817, %v3813
        %v3934 = vpack.c.b16 %v3818, %v3814
        %v3935 = vpack.c.b16 %v3819, %v3815
        %v3936 = vpack.c.b16 %v3820, %v3816
        %v3937 = vpack.c.b16 %v3825, %v3821
        %v3938 = vpack.c.b16 %v3826, %v3822
        %v3939 = vpack.c.b16 %v3827, %v3823
        %v3940 = vpack.c.b16 %v3828, %v3824
        %v3941 = vpack.c.b16 %v3833, %v3829
        %v3942 = vpack.c.b16 %v3834, %v3830
        %v3943 = vpack.c.b16 %v3835, %v3831
        %v3944 = vpack.c.b16 %v3836, %v3832
        %v3945 = vpack.c.b16 %v3841, %v3837
        %v3946 = vpack.c.b16 %v3842, %v3838
        %v3947 = vpack.c.b16 %v3843, %v3839
        %v3948 = vpack.c.b16 %v3844, %v3840
        %v3949 = vpack.c.b16 %v3849, %v3845
        %v3950 = vpack.c.b16 %v3850, %v3846
        %v3951 = vpack.c.b16 %v3851, %v3847
        %v3952 = vpack.c.b16 %v3852, %v3848
        %v3953 = vpack.c.b16 %v3857, %v3853
        %v3954 = vpack.c.b16 %v3858, %v3854
        %v3955 = vpack.c.b16 %v3859, %v3855
        %v3956 = vpack.c.b16 %v3860, %v3856
        %4053 = vmatpush.bf16.msra.mxu0 %v3889
        %4054 = vmatpush.bf16.msra.mxu0 %v3885
        %4055 = vmatpush.bf16.msra.mxu0 %v3881
        %4056 = vmatpush.bf16.msra.mxu0 %v3877
        %4057 = vmatpush.bf16.msra.mxu0 %v3873
        %4058 = vmatpush.bf16.msra.mxu0 %v3869
        %4059 = vmatpush.bf16.msra.mxu0 %v3865
        %4060 = vmatpush.bf16.msra.mxu0 %v3861
        %4061 = vmatmul.bf16.gmra.mxu0 %v2726
        %v4062 = vpop.f32.mrf.mxu0
        %v4063 = vadd.f32 %v3443, %v4062
        %v4064 = vpop.f32.mrf.mxu0
        %v4065 = vadd.f32 %v3445, %v4064
        %4066 = vdwg.mxu0
        %4067 = vmatpush.bf16.msra.mxu0 %v3921
        %4068 = vmatpush.bf16.msra.mxu0 %v3917
        %4069 = vmatpush.bf16.msra.mxu0 %v3913
        %4070 = vmatpush.bf16.msra.mxu0 %v3909
        %4071 = vmatpush.bf16.msra.mxu0 %v3905
        %4072 = vmatpush.bf16.msra.mxu0 %v3901
        %4073 = vmatpush.bf16.msra.mxu0 %v3897
        %4074 = vmatpush.bf16.msra.mxu0 %v3893
        %4075 = vmatmul.bf16.gmra.mxu0 %v2727
        %v4076 = vpop.f32.mrf.mxu0
        %v4077 = vadd.f32 %v4063, %v4076
        %v4078 = vpop.f32.mrf.mxu0
        %v4079 = vadd.f32 %v4065, %v4078
        %4080 = vdwg.mxu0
        %4081 = vmatpush.bf16.msra.mxu0 %v3953
        %4082 = vmatpush.bf16.msra.mxu0 %v3949
        %4083 = vmatpush.bf16.msra.mxu0 %v3945
        %4084 = vmatpush.bf16.msra.mxu0 %v3941
        %4085 = vmatpush.bf16.msra.mxu0 %v3937
        %4086 = vmatpush.bf16.msra.mxu0 %v3933
        %4087 = vmatpush.bf16.msra.mxu0 %v3929
        %4088 = vmatpush.bf16.msra.mxu0 %v3925
        %4089 = vmatmul.bf16.gmra.mxu0 %v2728
        %v4090 = vpop.f32.mrf.mxu0
        %v4091 = vadd.f32 %v4077, %v4090
        %v4092 = vpop.f32.mrf.mxu0
        %v4093 = vadd.f32 %v4079, %v4092
        %4094 = vdwg.mxu0
        %4095 = vmatpush.bf16.msra.mxu0 %v3890
        %4096 = vmatpush.bf16.msra.mxu0 %v3886
        %4097 = vmatpush.bf16.msra.mxu0 %v3882
        %4098 = vmatpush.bf16.msra.mxu0 %v3878
        %4099 = vmatpush.bf16.msra.mxu0 %v3874
        %4100 = vmatpush.bf16.msra.mxu0 %v3870
        %4101 = vmatpush.bf16.msra.mxu0 %v3866
        %4102 = vmatpush.bf16.msra.mxu0 %v3862
        %4103 = vmatmul.bf16.gmra.mxu0 %v2726
        %v4104 = vpop.f32.mrf.mxu0
        %v4105 = vadd.f32 %v3485, %v4104
        %v4106 = vpop.f32.mrf.mxu0
        %v4107 = vadd.f32 %v3487, %v4106
        %4108 = vdwg.mxu0
        %4109 = vmatpush.bf16.msra.mxu0 %v3922
        %4110 = vmatpush.bf16.msra.mxu0 %v3918
        %4111 = vmatpush.bf16.msra.mxu0 %v3914
        %4112 = vmatpush.bf16.msra.mxu0 %v3910
        %4113 = vmatpush.bf16.msra.mxu0 %v3906
        %4114 = vmatpush.bf16.msra.mxu0 %v3902
        %4115 = vmatpush.bf16.msra.mxu0 %v3898
        %4116 = vmatpush.bf16.msra.mxu0 %v3894
        %4117 = vmatmul.bf16.gmra.mxu0 %v2727
        %v4118 = vpop.f32.mrf.mxu0
        %v4119 = vadd.f32 %v4105, %v4118
        %v4120 = vpop.f32.mrf.mxu0
        %v4121 = vadd.f32 %v4107, %v4120
        %4122 = vdwg.mxu0
        %4123 = vmatpush.bf16.msra.mxu0 %v3954
        %4124 = vmatpush.bf16.msra.mxu0 %v3950
        %4125 = vmatpush.bf16.msra.mxu0 %v3946
        %4126 = vmatpush.bf16.msra.mxu0 %v3942
        %4127 = vmatpush.bf16.msra.mxu0 %v3938
        %4128 = vmatpush.bf16.msra.mxu0 %v3934
        %4129 = vmatpush.bf16.msra.mxu0 %v3930
        %4130 = vmatpush.bf16.msra.mxu0 %v3926
        %4131 = vmatmul.bf16.gmra.mxu0 %v2728
        %v4132 = vpop.f32.mrf.mxu0
        %v4133 = vadd.f32 %v4119, %v4132
        %v4134 = vpop.f32.mrf.mxu0
        %v4135 = vadd.f32 %v4121, %v4134
        %4136 = vdwg.mxu0
        %4137 = vmatpush.bf16.msra.mxu0 %v3891
        %4138 = vmatpush.bf16.msra.mxu0 %v3887
        %4139 = vmatpush.bf16.msra.mxu0 %v3883
        %4140 = vmatpush.bf16.msra.mxu0 %v3879
        %4141 = vmatpush.bf16.msra.mxu0 %v3875
        %4142 = vmatpush.bf16.msra.mxu0 %v3871
        %4143 = vmatpush.bf16.msra.mxu0 %v3867
        %4144 = vmatpush.bf16.msra.mxu0 %v3863
        %4145 = vmatmul.bf16.gmra.mxu0 %v2726
        %v4146 = vpop.f32.mrf.mxu0
        %v4147 = vadd.f32 %v3527, %v4146
        %v4148 = vpop.f32.mrf.mxu0
        %v4149 = vadd.f32 %v3529, %v4148
        %4150 = vdwg.mxu0
        %4151 = vmatpush.bf16.msra.mxu0 %v3923
        %4152 = vmatpush.bf16.msra.mxu0 %v3919
        %4153 = vmatpush.bf16.msra.mxu0 %v3915
        %4154 = vmatpush.bf16.msra.mxu0 %v3911
        %4155 = vmatpush.bf16.msra.mxu0 %v3907
        %4156 = vmatpush.bf16.msra.mxu0 %v3903
        %4157 = vmatpush.bf16.msra.mxu0 %v3899
        %4158 = vmatpush.bf16.msra.mxu0 %v3895
        %4159 = vmatmul.bf16.gmra.mxu0 %v2727
        %v4160 = vpop.f32.mrf.mxu0
        %v4161 = vadd.f32 %v4147, %v4160
        %v4162 = vpop.f32.mrf.mxu0
        %v4163 = vadd.f32 %v4149, %v4162
        %4164 = vdwg.mxu0
        %4165 = vmatpush.bf16.msra.mxu0 %v3955
        %4166 = vmatpush.bf16.msra.mxu0 %v3951
        %4167 = vmatpush.bf16.msra.mxu0 %v3947
        %4168 = vmatpush.bf16.msra.mxu0 %v3943
        %4169 = vmatpush.bf16.msra.mxu0 %v3939
        %4170 = vmatpush.bf16.msra.mxu0 %v3935
        %4171 = vmatpush.bf16.msra.mxu0 %v3931
        %4172 = vmatpush.bf16.msra.mxu0 %v3927
        %4173 = vmatmul.bf16.gmra.mxu0 %v2728
        %v4174 = vpop.f32.mrf.mxu0
        %v4175 = vadd.f32 %v4161, %v4174
        %v4176 = vpop.f32.mrf.mxu0
        %v4177 = vadd.f32 %v4163, %v4176
        %4178 = vdwg.mxu0
        %4179 = vmatpush.bf16.msra.mxu0 %v3892
        %4180 = vmatpush.bf16.msra.mxu0 %v3888
        %4181 = vmatpush.bf16.msra.mxu0 %v3884
        %4182 = vmatpush.bf16.msra.mxu0 %v3880
        %4183 = vmatpush.bf16.msra.mxu0 %v3876
        %4184 = vmatpush.bf16.msra.mxu0 %v3872
        %4185 = vmatpush.bf16.msra.mxu0 %v3868
        %4186 = vmatpush.bf16.msra.mxu0 %v3864
        %4187 = vmatmul.bf16.gmra.mxu0 %v2726
        %v4188 = vpop.f32.mrf.mxu0
        %v4189 = vadd.f32 %v3569, %v4188
        %v4190 = vpop.f32.mrf.mxu0
        %v4191 = vadd.f32 %v3571, %v4190
        %4192 = vdwg.mxu0
        %4193 = vmatpush.bf16.msra.mxu0 %v3924
        %4194 = vmatpush.bf16.msra.mxu0 %v3920
        %4195 = vmatpush.bf16.msra.mxu0 %v3916
        %4196 = vmatpush.bf16.msra.mxu0 %v3912
        %4197 = vmatpush.bf16.msra.mxu0 %v3908
        %4198 = vmatpush.bf16.msra.mxu0 %v3904
        %4199 = vmatpush.bf16.msra.mxu0 %v3900
        %4200 = vmatpush.bf16.msra.mxu0 %v3896
        %4201 = vmatmul.bf16.gmra.mxu0 %v2727
        %v4202 = vpop.f32.mrf.mxu0
        %v4203 = vadd.f32 %v4189, %v4202
        %v4204 = vpop.f32.mrf.mxu0
        %v4205 = vadd.f32 %v4191, %v4204
        %4206 = vdwg.mxu0
        %4207 = vmatpush.bf16.msra.mxu0 %v3956
        %4208 = vmatpush.bf16.msra.mxu0 %v3952
        %4209 = vmatpush.bf16.msra.mxu0 %v3948
        %4210 = vmatpush.bf16.msra.mxu0 %v3944
        %4211 = vmatpush.bf16.msra.mxu0 %v3940
        %4212 = vmatpush.bf16.msra.mxu0 %v3936
        %4213 = vmatpush.bf16.msra.mxu0 %v3932
        %4214 = vmatpush.bf16.msra.mxu0 %v3928
        %4215 = vmatmul.bf16.gmra.mxu0 %v2728
        %v4216 = vpop.f32.mrf.mxu0
        %v4217 = vadd.f32 %v4203, %v4216
        %v4218 = vpop.f32.mrf.mxu0
        %v4219 = vadd.f32 %v4205, %v4218
        %4220 = vdwg.mxu0
        %v4221 = vpack.c.bf16 %v2723, %v2720
        %v4222 = vpack.c.bf16 %v2724, %v2721
        %v4223 = vpack.c.bf16 %v2725, %v2722
        %s4224 = scalar_lea.vmem %s15, 1536
        %v4225 = vld [vmem:[%s4224] sm:$0xff]
        %v4226 = vld [vmem:[%s4224 + $0x8] sm:$0xff]
        %v4227 = vld [vmem:[%s4224 + $0x10] sm:$0xff]
        %v4228 = vld [vmem:[%s4224 + $0x18] sm:$0xff]
        %v4229 = vld [vmem:[%s4224 + $0x20] sm:$0xff]
        %v4230 = vld [vmem:[%s4224 + $0x28] sm:$0xff]
        %v4231 = vld [vmem:[%s4224 + $0x30] sm:$0xff]
        %v4232 = vld [vmem:[%s4224 + $0x38] sm:$0xff]
        %v4233 = vld [vmem:[%s4224 + $0x40] sm:$0xff]
        %v4234 = vld [vmem:[%s4224 + $0x48] sm:$0xff]
        %v4235 = vld [vmem:[%s4224 + $0x50] sm:$0xff]
        %v4236 = vld [vmem:[%s4224 + $0x58] sm:$0xff]
        %v4237 = vld [vmem:[%s4224 + $0x60] sm:$0xff]
        %v4238 = vld [vmem:[%s4224 + $0x68] sm:$0xff]
        %v4239 = vld [vmem:[%s4224 + $0x70] sm:$0xff]
        %v4240 = vld [vmem:[%s4224 + $0x78] sm:$0xff]
        %v4241 = vld [vmem:[%s4224 + $0x80] sm:$0xff]
        %v4242 = vld [vmem:[%s4224 + $0x88] sm:$0xff]
        %v4243 = vld [vmem:[%s4224 + $0x90] sm:$0xff]
        %v4244 = vld [vmem:[%s4224 + $0x98] sm:$0xff]
        %v4245 = vld [vmem:[%s4224 + $0xa0] sm:$0xff]
        %v4246 = vld [vmem:[%s4224 + $0xa8] sm:$0xff]
        %v4247 = vld [vmem:[%s4224 + $0xb0] sm:$0xff]
        %v4248 = vld [vmem:[%s4224 + $0xb8] sm:$0xff]
        %v4249 = vld [vmem:[%s4224 + $0xc0] sm:$0xff]
        %v4250 = vld [vmem:[%s4224 + $0xc8] sm:$0xff]
        %v4251 = vld [vmem:[%s4224 + $0xd0] sm:$0xff]
        %v4252 = vld [vmem:[%s4224 + $0xd8] sm:$0xff]
        %v4253 = vld [vmem:[%s4224 + $0xe0] sm:$0xff]
        %v4254 = vld [vmem:[%s4224 + $0xe8] sm:$0xff]
        %v4255 = vld [vmem:[%s4224 + $0xf0] sm:$0xff]
        %v4256 = vld [vmem:[%s4224 + $0xf8] sm:$0xff]
        %v4257 = vld [vmem:[%s4224 + $0x100] sm:$0xff]
        %v4258 = vld [vmem:[%s4224 + $0x108] sm:$0xff]
        %v4259 = vld [vmem:[%s4224 + $0x110] sm:$0xff]
        %v4260 = vld [vmem:[%s4224 + $0x118] sm:$0xff]
        %v4261 = vld [vmem:[%s4224 + $0x120] sm:$0xff]
        %v4262 = vld [vmem:[%s4224 + $0x128] sm:$0xff]
        %v4263 = vld [vmem:[%s4224 + $0x130] sm:$0xff]
        %v4264 = vld [vmem:[%s4224 + $0x138] sm:$0xff]
        %v4265 = vld [vmem:[%s4224 + $0x140] sm:$0xff]
        %v4266 = vld [vmem:[%s4224 + $0x148] sm:$0xff]
        %v4267 = vld [vmem:[%s4224 + $0x150] sm:$0xff]
        %v4268 = vld [vmem:[%s4224 + $0x158] sm:$0xff]
        %v4269 = vld [vmem:[%s4224 + $0x160] sm:$0xff]
        %v4270 = vld [vmem:[%s4224 + $0x168] sm:$0xff]
        %v4271 = vld [vmem:[%s4224 + $0x170] sm:$0xff]
        %v4272 = vld [vmem:[%s4224 + $0x178] sm:$0xff]
        %v4273 = vld [vmem:[%s4224 + $0x180] sm:$0xff]
        %v4274 = vld [vmem:[%s4224 + $0x188] sm:$0xff]
        %v4275 = vld [vmem:[%s4224 + $0x190] sm:$0xff]
        %v4276 = vld [vmem:[%s4224 + $0x198] sm:$0xff]
        %v4277 = vld [vmem:[%s4224 + $0x1a0] sm:$0xff]
        %v4278 = vld [vmem:[%s4224 + $0x1a8] sm:$0xff]
        %v4279 = vld [vmem:[%s4224 + $0x1b0] sm:$0xff]
        %v4280 = vld [vmem:[%s4224 + $0x1b8] sm:$0xff]
        %v4281 = vld [vmem:[%s4224 + $0x1c0] sm:$0xff]
        %v4282 = vld [vmem:[%s4224 + $0x1c8] sm:$0xff]
        %v4283 = vld [vmem:[%s4224 + $0x1d0] sm:$0xff]
        %v4284 = vld [vmem:[%s4224 + $0x1d8] sm:$0xff]
        %v4285 = vld [vmem:[%s4224 + $0x1e0] sm:$0xff]
        %v4286 = vld [vmem:[%s4224 + $0x1e8] sm:$0xff]
        %v4287 = vld [vmem:[%s4224 + $0x1f0] sm:$0xff]
        %v4288 = vld [vmem:[%s4224 + $0x1f8] sm:$0xff]
        %v4289 = vld [vmem:[%s4224 + $0x200] sm:$0xff]
        %v4290 = vld [vmem:[%s4224 + $0x208] sm:$0xff]
        %v4291 = vld [vmem:[%s4224 + $0x210] sm:$0xff]
        %v4292 = vld [vmem:[%s4224 + $0x218] sm:$0xff]
        %v4293 = vld [vmem:[%s4224 + $0x220] sm:$0xff]
        %v4294 = vld [vmem:[%s4224 + $0x228] sm:$0xff]
        %v4295 = vld [vmem:[%s4224 + $0x230] sm:$0xff]
        %v4296 = vld [vmem:[%s4224 + $0x238] sm:$0xff]
        %v4297 = vld [vmem:[%s4224 + $0x240] sm:$0xff]
        %v4298 = vld [vmem:[%s4224 + $0x248] sm:$0xff]
        %v4299 = vld [vmem:[%s4224 + $0x250] sm:$0xff]
        %v4300 = vld [vmem:[%s4224 + $0x258] sm:$0xff]
        %v4301 = vld [vmem:[%s4224 + $0x260] sm:$0xff]
        %v4302 = vld [vmem:[%s4224 + $0x268] sm:$0xff]
        %v4303 = vld [vmem:[%s4224 + $0x270] sm:$0xff]
        %v4304 = vld [vmem:[%s4224 + $0x278] sm:$0xff]
        %v4305 = vld [vmem:[%s4224 + $0x280] sm:$0xff]
        %v4306 = vld [vmem:[%s4224 + $0x288] sm:$0xff]
        %v4307 = vld [vmem:[%s4224 + $0x290] sm:$0xff]
        %v4308 = vld [vmem:[%s4224 + $0x298] sm:$0xff]
        %v4309 = vld [vmem:[%s4224 + $0x2a0] sm:$0xff]
        %v4310 = vld [vmem:[%s4224 + $0x2a8] sm:$0xff]
        %v4311 = vld [vmem:[%s4224 + $0x2b0] sm:$0xff]
        %v4312 = vld [vmem:[%s4224 + $0x2b8] sm:$0xff]
        %v4313 = vld [vmem:[%s4224 + $0x2c0] sm:$0xff]
        %v4314 = vld [vmem:[%s4224 + $0x2c8] sm:$0xff]
        %v4315 = vld [vmem:[%s4224 + $0x2d0] sm:$0xff]
        %v4316 = vld [vmem:[%s4224 + $0x2d8] sm:$0xff]
        %v4317 = vld [vmem:[%s4224 + $0x2e0] sm:$0xff]
        %v4318 = vld [vmem:[%s4224 + $0x2e8] sm:$0xff]
        %v4319 = vld [vmem:[%s4224 + $0x2f0] sm:$0xff]
        %v4320 = vld [vmem:[%s4224 + $0x2f8] sm:$0xff]
        %v4417 = vunpack.c.l.b16 %v4225
        %v4418 = vunpack.c.h.b16 %v4225
        %v4419 = vunpack.c.l.b16 %v4226
        %v4420 = vunpack.c.h.b16 %v4226
        %v4421 = vunpack.c.l.b16 %v4227
        %v4422 = vunpack.c.h.b16 %v4227
        %v4423 = vunpack.c.l.b16 %v4228
        %v4424 = vunpack.c.h.b16 %v4228
        %v4425 = vunpack.c.l.b16 %v4229
        %v4426 = vunpack.c.h.b16 %v4229
        %v4427 = vunpack.c.l.b16 %v4230
        %v4428 = vunpack.c.h.b16 %v4230
        %v4429 = vunpack.c.l.b16 %v4231
        %v4430 = vunpack.c.h.b16 %v4231
        %v4431 = vunpack.c.l.b16 %v4232
        %v4432 = vunpack.c.h.b16 %v4232
        %v4433 = vunpack.c.l.b16 %v4233
        %v4434 = vunpack.c.h.b16 %v4233
        %v4435 = vunpack.c.l.b16 %v4234
        %v4436 = vunpack.c.h.b16 %v4234
        %v4437 = vunpack.c.l.b16 %v4235
        %v4438 = vunpack.c.h.b16 %v4235
        %v4439 = vunpack.c.l.b16 %v4236
        %v4440 = vunpack.c.h.b16 %v4236
        %v4441 = vunpack.c.l.b16 %v4237
        %v4442 = vunpack.c.h.b16 %v4237
        %v4443 = vunpack.c.l.b16 %v4238
        %v4444 = vunpack.c.h.b16 %v4238
        %v4445 = vunpack.c.l.b16 %v4239
        %v4446 = vunpack.c.h.b16 %v4239
        %v4447 = vunpack.c.l.b16 %v4240
        %v4448 = vunpack.c.h.b16 %v4240
        %v4449 = vunpack.c.l.b16 %v4241
        %v4450 = vunpack.c.h.b16 %v4241
        %v4451 = vunpack.c.l.b16 %v4242
        %v4452 = vunpack.c.h.b16 %v4242
        %v4453 = vunpack.c.l.b16 %v4243
        %v4454 = vunpack.c.h.b16 %v4243
        %v4455 = vunpack.c.l.b16 %v4244
        %v4456 = vunpack.c.h.b16 %v4244
        %v4457 = vunpack.c.l.b16 %v4245
        %v4458 = vunpack.c.h.b16 %v4245
        %v4459 = vunpack.c.l.b16 %v4246
        %v4460 = vunpack.c.h.b16 %v4246
        %v4461 = vunpack.c.l.b16 %v4247
        %v4462 = vunpack.c.h.b16 %v4247
        %v4463 = vunpack.c.l.b16 %v4248
        %v4464 = vunpack.c.h.b16 %v4248
        %v4465 = vunpack.c.l.b16 %v4249
        %v4466 = vunpack.c.h.b16 %v4249
        %v4467 = vunpack.c.l.b16 %v4250
        %v4468 = vunpack.c.h.b16 %v4250
        %v4469 = vunpack.c.l.b16 %v4251
        %v4470 = vunpack.c.h.b16 %v4251
        %v4471 = vunpack.c.l.b16 %v4252
        %v4472 = vunpack.c.h.b16 %v4252
        %v4473 = vunpack.c.l.b16 %v4253
        %v4474 = vunpack.c.h.b16 %v4253
        %v4475 = vunpack.c.l.b16 %v4254
        %v4476 = vunpack.c.h.b16 %v4254
        %v4477 = vunpack.c.l.b16 %v4255
        %v4478 = vunpack.c.h.b16 %v4255
        %v4479 = vunpack.c.l.b16 %v4256
        %v4480 = vunpack.c.h.b16 %v4256
        %v4481 = vunpack.c.l.b16 %v4257
        %v4482 = vunpack.c.h.b16 %v4257
        %v4483 = vunpack.c.l.b16 %v4258
        %v4484 = vunpack.c.h.b16 %v4258
        %v4485 = vunpack.c.l.b16 %v4259
        %v4486 = vunpack.c.h.b16 %v4259
        %v4487 = vunpack.c.l.b16 %v4260
        %v4488 = vunpack.c.h.b16 %v4260
        %v4489 = vunpack.c.l.b16 %v4261
        %v4490 = vunpack.c.h.b16 %v4261
        %v4491 = vunpack.c.l.b16 %v4262
        %v4492 = vunpack.c.h.b16 %v4262
        %v4493 = vunpack.c.l.b16 %v4263
        %v4494 = vunpack.c.h.b16 %v4263
        %v4495 = vunpack.c.l.b16 %v4264
        %v4496 = vunpack.c.h.b16 %v4264
        %v4497 = vunpack.c.l.b16 %v4265
        %v4498 = vunpack.c.h.b16 %v4265
        %v4499 = vunpack.c.l.b16 %v4266
        %v4500 = vunpack.c.h.b16 %v4266
        %v4501 = vunpack.c.l.b16 %v4267
        %v4502 = vunpack.c.h.b16 %v4267
        %v4503 = vunpack.c.l.b16 %v4268
        %v4504 = vunpack.c.h.b16 %v4268
        %v4505 = vunpack.c.l.b16 %v4269
        %v4506 = vunpack.c.h.b16 %v4269
        %v4507 = vunpack.c.l.b16 %v4270
        %v4508 = vunpack.c.h.b16 %v4270
        %v4509 = vunpack.c.l.b16 %v4271
        %v4510 = vunpack.c.h.b16 %v4271
        %v4511 = vunpack.c.l.b16 %v4272
        %v4512 = vunpack.c.h.b16 %v4272
        %v4513 = vunpack.c.l.b16 %v4273
        %v4514 = vunpack.c.h.b16 %v4273
        %v4515 = vunpack.c.l.b16 %v4274
        %v4516 = vunpack.c.h.b16 %v4274
        %v4517 = vunpack.c.l.b16 %v4275
        %v4518 = vunpack.c.h.b16 %v4275
        %v4519 = vunpack.c.l.b16 %v4276
        %v4520 = vunpack.c.h.b16 %v4276
        %v4521 = vunpack.c.l.b16 %v4277
        %v4522 = vunpack.c.h.b16 %v4277
        %v4523 = vunpack.c.l.b16 %v4278
        %v4524 = vunpack.c.h.b16 %v4278
        %v4525 = vunpack.c.l.b16 %v4279
        %v4526 = vunpack.c.h.b16 %v4279
        %v4527 = vunpack.c.l.b16 %v4280
        %v4528 = vunpack.c.h.b16 %v4280
        %v4529 = vunpack.c.l.b16 %v4281
        %v4530 = vunpack.c.h.b16 %v4281
        %v4531 = vunpack.c.l.b16 %v4282
        %v4532 = vunpack.c.h.b16 %v4282
        %v4533 = vunpack.c.l.b16 %v4283
        %v4534 = vunpack.c.h.b16 %v4283
        %v4535 = vunpack.c.l.b16 %v4284
        %v4536 = vunpack.c.h.b16 %v4284
        %v4537 = vunpack.c.l.b16 %v4285
        %v4538 = vunpack.c.h.b16 %v4285
        %v4539 = vunpack.c.l.b16 %v4286
        %v4540 = vunpack.c.h.b16 %v4286
        %v4541 = vunpack.c.l.b16 %v4287
        %v4542 = vunpack.c.h.b16 %v4287
        %v4543 = vunpack.c.l.b16 %v4288
        %v4544 = vunpack.c.h.b16 %v4288
        %v4545 = vunpack.c.l.b16 %v4289
        %v4546 = vunpack.c.h.b16 %v4289
        %v4547 = vunpack.c.l.b16 %v4290
        %v4548 = vunpack.c.h.b16 %v4290
        %v4549 = vunpack.c.l.b16 %v4291
        %v4550 = vunpack.c.h.b16 %v4291
        %v4551 = vunpack.c.l.b16 %v4292
        %v4552 = vunpack.c.h.b16 %v4292
        %v4553 = vunpack.c.l.b16 %v4293
        %v4554 = vunpack.c.h.b16 %v4293
        %v4555 = vunpack.c.l.b16 %v4294
        %v4556 = vunpack.c.h.b16 %v4294
        %v4557 = vunpack.c.l.b16 %v4295
        %v4558 = vunpack.c.h.b16 %v4295
        %v4559 = vunpack.c.l.b16 %v4296
        %v4560 = vunpack.c.h.b16 %v4296
        %v4561 = vunpack.c.l.b16 %v4297
        %v4562 = vunpack.c.h.b16 %v4297
        %v4563 = vunpack.c.l.b16 %v4298
        %v4564 = vunpack.c.h.b16 %v4298
        %v4565 = vunpack.c.l.b16 %v4299
        %v4566 = vunpack.c.h.b16 %v4299
        %v4567 = vunpack.c.l.b16 %v4300
        %v4568 = vunpack.c.h.b16 %v4300
        %v4569 = vunpack.c.l.b16 %v4301
        %v4570 = vunpack.c.h.b16 %v4301
        %v4571 = vunpack.c.l.b16 %v4302
        %v4572 = vunpack.c.h.b16 %v4302
        %v4573 = vunpack.c.l.b16 %v4303
        %v4574 = vunpack.c.h.b16 %v4303
        %v4575 = vunpack.c.l.b16 %v4304
        %v4576 = vunpack.c.h.b16 %v4304
        %v4577 = vunpack.c.l.b16 %v4305
        %v4578 = vunpack.c.h.b16 %v4305
        %v4579 = vunpack.c.l.b16 %v4306
        %v4580 = vunpack.c.h.b16 %v4306
        %v4581 = vunpack.c.l.b16 %v4307
        %v4582 = vunpack.c.h.b16 %v4307
        %v4583 = vunpack.c.l.b16 %v4308
        %v4584 = vunpack.c.h.b16 %v4308
        %v4585 = vunpack.c.l.b16 %v4309
        %v4586 = vunpack.c.h.b16 %v4309
        %v4587 = vunpack.c.l.b16 %v4310
        %v4588 = vunpack.c.h.b16 %v4310
        %v4589 = vunpack.c.l.b16 %v4311
        %v4590 = vunpack.c.h.b16 %v4311
        %v4591 = vunpack.c.l.b16 %v4312
        %v4592 = vunpack.c.h.b16 %v4312
        %v4593 = vunpack.c.l.b16 %v4313
        %v4594 = vunpack.c.h.b16 %v4313
        %v4595 = vunpack.c.l.b16 %v4314
        %v4596 = vunpack.c.h.b16 %v4314
        %v4597 = vunpack.c.l.b16 %v4315
        %v4598 = vunpack.c.h.b16 %v4315
        %v4599 = vunpack.c.l.b16 %v4316
        %v4600 = vunpack.c.h.b16 %v4316
        %v4601 = vunpack.c.l.b16 %v4317
        %v4602 = vunpack.c.h.b16 %v4317
        %v4603 = vunpack.c.l.b16 %v4318
        %v4604 = vunpack.c.h.b16 %v4318
        %v4605 = vunpack.c.l.b16 %v4319
        %v4606 = vunpack.c.h.b16 %v4319
        %v4607 = vunpack.c.l.b16 %v4320
        %v4608 = vunpack.c.h.b16 %v4320
        %v4609 = vpack.c.b16 %v4421, %v4417
        %v4610 = vpack.c.b16 %v4422, %v4418
        %v4611 = vpack.c.b16 %v4423, %v4419
        %v4612 = vpack.c.b16 %v4424, %v4420
        %v4613 = vpack.c.b16 %v4429, %v4425
        %v4614 = vpack.c.b16 %v4430, %v4426
        %v4615 = vpack.c.b16 %v4431, %v4427
        %v4616 = vpack.c.b16 %v4432, %v4428
        %v4617 = vpack.c.b16 %v4437, %v4433
        %v4618 = vpack.c.b16 %v4438, %v4434
        %v4619 = vpack.c.b16 %v4439, %v4435
        %v4620 = vpack.c.b16 %v4440, %v4436
        %v4621 = vpack.c.b16 %v4445, %v4441
        %v4622 = vpack.c.b16 %v4446, %v4442
        %v4623 = vpack.c.b16 %v4447, %v4443
        %v4624 = vpack.c.b16 %v4448, %v4444
        %v4625 = vpack.c.b16 %v4453, %v4449
        %v4626 = vpack.c.b16 %v4454, %v4450
        %v4627 = vpack.c.b16 %v4455, %v4451
        %v4628 = vpack.c.b16 %v4456, %v4452
        %v4629 = vpack.c.b16 %v4461, %v4457
        %v4630 = vpack.c.b16 %v4462, %v4458
        %v4631 = vpack.c.b16 %v4463, %v4459
        %v4632 = vpack.c.b16 %v4464, %v4460
        %v4633 = vpack.c.b16 %v4469, %v4465
        %v4634 = vpack.c.b16 %v4470, %v4466
        %v4635 = vpack.c.b16 %v4471, %v4467
        %v4636 = vpack.c.b16 %v4472, %v4468
        %v4637 = vpack.c.b16 %v4477, %v4473
        %v4638 = vpack.c.b16 %v4478, %v4474
        %v4639 = vpack.c.b16 %v4479, %v4475
        %v4640 = vpack.c.b16 %v4480, %v4476
        %v4641 = vpack.c.b16 %v4485, %v4481
        %v4642 = vpack.c.b16 %v4486, %v4482
        %v4643 = vpack.c.b16 %v4487, %v4483
        %v4644 = vpack.c.b16 %v4488, %v4484
        %v4645 = vpack.c.b16 %v4493, %v4489
        %v4646 = vpack.c.b16 %v4494, %v4490
        %v4647 = vpack.c.b16 %v4495, %v4491
        %v4648 = vpack.c.b16 %v4496, %v4492
        %v4649 = vpack.c.b16 %v4501, %v4497
        %v4650 = vpack.c.b16 %v4502, %v4498
        %v4651 = vpack.c.b16 %v4503, %v4499
        %v4652 = vpack.c.b16 %v4504, %v4500
        %v4653 = vpack.c.b16 %v4509, %v4505
        %v4654 = vpack.c.b16 %v4510, %v4506
        %v4655 = vpack.c.b16 %v4511, %v4507
        %v4656 = vpack.c.b16 %v4512, %v4508
        %v4657 = vpack.c.b16 %v4517, %v4513
        %v4658 = vpack.c.b16 %v4518, %v4514
        %v4659 = vpack.c.b16 %v4519, %v4515
        %v4660 = vpack.c.b16 %v4520, %v4516
        %v4661 = vpack.c.b16 %v4525, %v4521
        %v4662 = vpack.c.b16 %v4526, %v4522
        %v4663 = vpack.c.b16 %v4527, %v4523
        %v4664 = vpack.c.b16 %v4528, %v4524
        %v4665 = vpack.c.b16 %v4533, %v4529
        %v4666 = vpack.c.b16 %v4534, %v4530
        %v4667 = vpack.c.b16 %v4535, %v4531
        %v4668 = vpack.c.b16 %v4536, %v4532
        %v4669 = vpack.c.b16 %v4541, %v4537
        %v4670 = vpack.c.b16 %v4542, %v4538
        %v4671 = vpack.c.b16 %v4543, %v4539
        %v4672 = vpack.c.b16 %v4544, %v4540
        %v4673 = vpack.c.b16 %v4549, %v4545
        %v4674 = vpack.c.b16 %v4550, %v4546
        %v4675 = vpack.c.b16 %v4551, %v4547
        %v4676 = vpack.c.b16 %v4552, %v4548
        %v4677 = vpack.c.b16 %v4557, %v4553
        %v4678 = vpack.c.b16 %v4558, %v4554
        %v4679 = vpack.c.b16 %v4559, %v4555
        %v4680 = vpack.c.b16 %v4560, %v4556
        %v4681 = vpack.c.b16 %v4565, %v4561
        %v4682 = vpack.c.b16 %v4566, %v4562
        %v4683 = vpack.c.b16 %v4567, %v4563
        %v4684 = vpack.c.b16 %v4568, %v4564
        %v4685 = vpack.c.b16 %v4573, %v4569
        %v4686 = vpack.c.b16 %v4574, %v4570
        %v4687 = vpack.c.b16 %v4575, %v4571
        %v4688 = vpack.c.b16 %v4576, %v4572
        %v4689 = vpack.c.b16 %v4581, %v4577
        %v4690 = vpack.c.b16 %v4582, %v4578
        %v4691 = vpack.c.b16 %v4583, %v4579
        %v4692 = vpack.c.b16 %v4584, %v4580
        %v4693 = vpack.c.b16 %v4589, %v4585
        %v4694 = vpack.c.b16 %v4590, %v4586
        %v4695 = vpack.c.b16 %v4591, %v4587
        %v4696 = vpack.c.b16 %v4592, %v4588
        %v4697 = vpack.c.b16 %v4597, %v4593
        %v4698 = vpack.c.b16 %v4598, %v4594
        %v4699 = vpack.c.b16 %v4599, %v4595
        %v4700 = vpack.c.b16 %v4600, %v4596
        %v4701 = vpack.c.b16 %v4605, %v4601
        %v4702 = vpack.c.b16 %v4606, %v4602
        %v4703 = vpack.c.b16 %v4607, %v4603
        %v4704 = vpack.c.b16 %v4608, %v4604
        %4801 = vmatpush.bf16.msra.mxu0 %v4637
        %4802 = vmatpush.bf16.msra.mxu0 %v4633
        %4803 = vmatpush.bf16.msra.mxu0 %v4629
        %4804 = vmatpush.bf16.msra.mxu0 %v4625
        %4805 = vmatpush.bf16.msra.mxu0 %v4621
        %4806 = vmatpush.bf16.msra.mxu0 %v4617
        %4807 = vmatpush.bf16.msra.mxu0 %v4613
        %4808 = vmatpush.bf16.msra.mxu0 %v4609
        %4809 = vmatmul.bf16.gmra.mxu0 %v4221
        %v4810 = vpop.f32.mrf.mxu0
        %v4811 = vadd.f32 0.0, %v4810
        %v4812 = vpop.f32.mrf.mxu0
        %v4813 = vadd.f32 0.0, %v4812
        %4814 = vdwg.mxu0
        %4815 = vmatpush.bf16.msra.mxu0 %v4669
        %4816 = vmatpush.bf16.msra.mxu0 %v4665
        %4817 = vmatpush.bf16.msra.mxu0 %v4661
        %4818 = vmatpush.bf16.msra.mxu0 %v4657
        %4819 = vmatpush.bf16.msra.mxu0 %v4653
        %4820 = vmatpush.bf16.msra.mxu0 %v4649
        %4821 = vmatpush.bf16.msra.mxu0 %v4645
        %4822 = vmatpush.bf16.msra.mxu0 %v4641
        %4823 = vmatmul.bf16.gmra.mxu0 %v4222
        %v4824 = vpop.f32.mrf.mxu0
        %v4825 = vadd.f32 %v4811, %v4824
        %v4826 = vpop.f32.mrf.mxu0
        %v4827 = vadd.f32 %v4813, %v4826
        %4828 = vdwg.mxu0
        %4829 = vmatpush.bf16.msra.mxu0 %v4701
        %4830 = vmatpush.bf16.msra.mxu0 %v4697
        %4831 = vmatpush.bf16.msra.mxu0 %v4693
        %4832 = vmatpush.bf16.msra.mxu0 %v4689
        %4833 = vmatpush.bf16.msra.mxu0 %v4685
        %4834 = vmatpush.bf16.msra.mxu0 %v4681
        %4835 = vmatpush.bf16.msra.mxu0 %v4677
        %4836 = vmatpush.bf16.msra.mxu0 %v4673
        %4837 = vmatmul.bf16.gmra.mxu0 %v4223
        %v4838 = vpop.f32.mrf.mxu0
        %v4839 = vadd.f32 %v4825, %v4838
        %v4840 = vpop.f32.mrf.mxu0
        %v4841 = vadd.f32 %v4827, %v4840
        %4842 = vdwg.mxu0
        %4843 = vmatpush.bf16.msra.mxu0 %v4638
        %4844 = vmatpush.bf16.msra.mxu0 %v4634
        %4845 = vmatpush.bf16.msra.mxu0 %v4630
        %4846 = vmatpush.bf16.msra.mxu0 %v4626
        %4847 = vmatpush.bf16.msra.mxu0 %v4622
        %4848 = vmatpush.bf16.msra.mxu0 %v4618
        %4849 = vmatpush.bf16.msra.mxu0 %v4614
        %4850 = vmatpush.bf16.msra.mxu0 %v4610
        %4851 = vmatmul.bf16.gmra.mxu0 %v4221
        %v4852 = vpop.f32.mrf.mxu0
        %v4853 = vadd.f32 0.0, %v4852
        %v4854 = vpop.f32.mrf.mxu0
        %v4855 = vadd.f32 0.0, %v4854
        %4856 = vdwg.mxu0
        %4857 = vmatpush.bf16.msra.mxu0 %v4670
        %4858 = vmatpush.bf16.msra.mxu0 %v4666
        %4859 = vmatpush.bf16.msra.mxu0 %v4662
        %4860 = vmatpush.bf16.msra.mxu0 %v4658
        %4861 = vmatpush.bf16.msra.mxu0 %v4654
        %4862 = vmatpush.bf16.msra.mxu0 %v4650
        %4863 = vmatpush.bf16.msra.mxu0 %v4646
        %4864 = vmatpush.bf16.msra.mxu0 %v4642
        %4865 = vmatmul.bf16.gmra.mxu0 %v4222
        %v4866 = vpop.f32.mrf.mxu0
        %v4867 = vadd.f32 %v4853, %v4866
        %v4868 = vpop.f32.mrf.mxu0
        %v4869 = vadd.f32 %v4855, %v4868
        %4870 = vdwg.mxu0
        %4871 = vmatpush.bf16.msra.mxu0 %v4702
        %4872 = vmatpush.bf16.msra.mxu0 %v4698
        %4873 = vmatpush.bf16.msra.mxu0 %v4694
        %4874 = vmatpush.bf16.msra.mxu0 %v4690
        %4875 = vmatpush.bf16.msra.mxu0 %v4686
        %4876 = vmatpush.bf16.msra.mxu0 %v4682
        %4877 = vmatpush.bf16.msra.mxu0 %v4678
        %4878 = vmatpush.bf16.msra.mxu0 %v4674
        %4879 = vmatmul.bf16.gmra.mxu0 %v4223
        %v4880 = vpop.f32.mrf.mxu0
        %v4881 = vadd.f32 %v4867, %v4880
        %v4882 = vpop.f32.mrf.mxu0
        %v4883 = vadd.f32 %v4869, %v4882
        %4884 = vdwg.mxu0
        %4885 = vmatpush.bf16.msra.mxu0 %v4639
        %4886 = vmatpush.bf16.msra.mxu0 %v4635
        %4887 = vmatpush.bf16.msra.mxu0 %v4631
        %4888 = vmatpush.bf16.msra.mxu0 %v4627
        %4889 = vmatpush.bf16.msra.mxu0 %v4623
        %4890 = vmatpush.bf16.msra.mxu0 %v4619
        %4891 = vmatpush.bf16.msra.mxu0 %v4615
        %4892 = vmatpush.bf16.msra.mxu0 %v4611
        %4893 = vmatmul.bf16.gmra.mxu0 %v4221
        %v4894 = vpop.f32.mrf.mxu0
        %v4895 = vadd.f32 0.0, %v4894
        %v4896 = vpop.f32.mrf.mxu0
        %v4897 = vadd.f32 0.0, %v4896
        %4898 = vdwg.mxu0
        %4899 = vmatpush.bf16.msra.mxu0 %v4671
        %4900 = vmatpush.bf16.msra.mxu0 %v4667
        %4901 = vmatpush.bf16.msra.mxu0 %v4663
        %4902 = vmatpush.bf16.msra.mxu0 %v4659
        %4903 = vmatpush.bf16.msra.mxu0 %v4655
        %4904 = vmatpush.bf16.msra.mxu0 %v4651
        %4905 = vmatpush.bf16.msra.mxu0 %v4647
        %4906 = vmatpush.bf16.msra.mxu0 %v4643
        %4907 = vmatmul.bf16.gmra.mxu0 %v4222
        %v4908 = vpop.f32.mrf.mxu0
        %v4909 = vadd.f32 %v4895, %v4908
        %v4910 = vpop.f32.mrf.mxu0
        %v4911 = vadd.f32 %v4897, %v4910
        %4912 = vdwg.mxu0
        %4913 = vmatpush.bf16.msra.mxu0 %v4703
        %4914 = vmatpush.bf16.msra.mxu0 %v4699
        %4915 = vmatpush.bf16.msra.mxu0 %v4695
        %4916 = vmatpush.bf16.msra.mxu0 %v4691
        %4917 = vmatpush.bf16.msra.mxu0 %v4687
        %4918 = vmatpush.bf16.msra.mxu0 %v4683
        %4919 = vmatpush.bf16.msra.mxu0 %v4679
        %4920 = vmatpush.bf16.msra.mxu0 %v4675
        %4921 = vmatmul.bf16.gmra.mxu0 %v4223
        %v4922 = vpop.f32.mrf.mxu0
        %v4923 = vadd.f32 %v4909, %v4922
        %v4924 = vpop.f32.mrf.mxu0
        %v4925 = vadd.f32 %v4911, %v4924
        %4926 = vdwg.mxu0
        %4927 = vmatpush.bf16.msra.mxu0 %v4640
        %4928 = vmatpush.bf16.msra.mxu0 %v4636
        %4929 = vmatpush.bf16.msra.mxu0 %v4632
        %4930 = vmatpush.bf16.msra.mxu0 %v4628
        %4931 = vmatpush.bf16.msra.mxu0 %v4624
        %4932 = vmatpush.bf16.msra.mxu0 %v4620
        %4933 = vmatpush.bf16.msra.mxu0 %v4616
        %4934 = vmatpush.bf16.msra.mxu0 %v4612
        %4935 = vmatmul.bf16.gmra.mxu0 %v4221
        %v4936 = vpop.f32.mrf.mxu0
        %v4937 = vadd.f32 0.0, %v4936
        %v4938 = vpop.f32.mrf.mxu0
        %v4939 = vadd.f32 0.0, %v4938
        %4940 = vdwg.mxu0
        %4941 = vmatpush.bf16.msra.mxu0 %v4672
        %4942 = vmatpush.bf16.msra.mxu0 %v4668
        %4943 = vmatpush.bf16.msra.mxu0 %v4664
        %4944 = vmatpush.bf16.msra.mxu0 %v4660
        %4945 = vmatpush.bf16.msra.mxu0 %v4656
        %4946 = vmatpush.bf16.msra.mxu0 %v4652
        %4947 = vmatpush.bf16.msra.mxu0 %v4648
        %4948 = vmatpush.bf16.msra.mxu0 %v4644
        %4949 = vmatmul.bf16.gmra.mxu0 %v4222
        %v4950 = vpop.f32.mrf.mxu0
        %v4951 = vadd.f32 %v4937, %v4950
        %v4952 = vpop.f32.mrf.mxu0
        %v4953 = vadd.f32 %v4939, %v4952
        %4954 = vdwg.mxu0
        %4955 = vmatpush.bf16.msra.mxu0 %v4704
        %4956 = vmatpush.bf16.msra.mxu0 %v4700
        %4957 = vmatpush.bf16.msra.mxu0 %v4696
        %4958 = vmatpush.bf16.msra.mxu0 %v4692
        %4959 = vmatpush.bf16.msra.mxu0 %v4688
        %4960 = vmatpush.bf16.msra.mxu0 %v4684
        %4961 = vmatpush.bf16.msra.mxu0 %v4680
        %4962 = vmatpush.bf16.msra.mxu0 %v4676
        %4963 = vmatmul.bf16.gmra.mxu0 %v4223
        %v4964 = vpop.f32.mrf.mxu0
        %v4965 = vadd.f32 %v4951, %v4964
        %v4966 = vpop.f32.mrf.mxu0
        %v4967 = vadd.f32 %v4953, %v4966
        %4968 = vdwg.mxu0
        %v4969 = vadd.f32 %v4091, %v4839
        %v4970 = vadd.f32 %v4133, %v4881
        %v4971 = vadd.f32 %v4175, %v4923
        %v4972 = vadd.f32 %v4217, %v4965
        %v4973 = vadd.f32 %v4093, %v4841
        %v4974 = vadd.f32 %v4135, %v4883
        %v4975 = vadd.f32 %v4177, %v4925
        %v4976 = vadd.f32 %v4219, %v4967
        %v4977 = vld [vmem:[#allocation19] sm:$0xf]
        %v4979 = vperm.slane %v4977, 0
        %v4980 = vperm.slane %v4977, 1
        %v4981 = vperm.slane %v4977, 2
        %v4982 = vperm.slane %v4977, 3
        %v4987 = vadd.f32 %v4969, %v4979
        %v4988 = vadd.f32 %v4970, %v4980
        %v4989 = vadd.f32 %v4971, %v4981
        %v4990 = vadd.f32 %v4972, %v4982
        %v4991 = vadd.f32 %v4973, %v4979
        %v4992 = vadd.f32 %v4974, %v4980
        %v4993 = vadd.f32 %v4975, %v4981
        %v4994 = vadd.f32 %v4976, %v4982
        %v4995 = vld [vmem:[#allocation7] sm:$0xff]
        %v4996 = vld [vmem:[#allocation7 + $0x8] sm:$0xff]
        %v4997 = vxor.u32 %v4987, 2147483648
        %v4998 = vxor.u32 %v4991, 2147483648
        %v4999 = vmul.f32 %v4997, 1.442695
        %v5000 = vpow.pop %v4999
        %v5001 = vmul.f32 %v4998, 1.442695
        %v5002 = vpow.pop %v5001
        %v5003 = vadd.f32 %v5000, 1.0
        %v5004 = vadd.f32 %v5002, 1.0
        %v5005 = vrcp.pop %v5003
        %v5006 = vmul.f32 %v5003, %v5005
        %v5007 = vsub.f32 1.0, %v5006
        %v5008 = vmul.f32 %v5005, %v5007
        %v5009 = vadd.f32 %v5005, %v5008
        %vm5010 = vweird.f32 %v5003
        %vm5011 = vweird.f32 %v5005
        %vm5012 = vmor %vm5010, %vm5011
        %v5013 = vsel %vm5012, %v5005, %v5009
        %v5014 = vand.u32 2147483647, %v5003
        %vm5015 = vcmp.eq.f32.partialorder %v5014, 8.507059e+37
        %v5016 = vand.u32 %v5003, 2147483648
        %v5017 = vor.u32 1.1754944e-38, %v5016
        %v5018 = vsel %vm5015, %v5017, %v5013
        %v5019 = vmul.f32 1.0, %v5018
        %v5020 = vrcp.pop %v5004
        %v5021 = vmul.f32 %v5004, %v5020
        %v5022 = vsub.f32 1.0, %v5021
        %v5023 = vmul.f32 %v5020, %v5022
        %v5024 = vadd.f32 %v5020, %v5023
        %vm5025 = vweird.f32 %v5004
        %vm5026 = vweird.f32 %v5020
        %vm5027 = vmor %vm5025, %vm5026
        %v5028 = vsel %vm5027, %v5020, %v5024
        %v5029 = vand.u32 2147483647, %v5004
        %vm5030 = vcmp.eq.f32.partialorder %v5029, 8.507059e+37
        %v5031 = vand.u32 %v5004, 2147483648
        %v5032 = vor.u32 1.1754944e-38, %v5031
        %v5033 = vsel %vm5030, %v5032, %v5028
        %v5034 = vmul.f32 1.0, %v5033
        %v5035 = vxor.u32 %v4988, 2147483648
        %v5036 = vxor.u32 %v4992, 2147483648
        %v5037 = vmul.f32 %v5035, 1.442695
        %v5038 = vpow.pop %v5037
        %v5039 = vmul.f32 %v5036, 1.442695
        %v5040 = vpow.pop %v5039
        %v5041 = vadd.f32 %v5038, 1.0
        %v5042 = vadd.f32 %v5040, 1.0
        %v5043 = vrcp.pop %v5041
        %v5044 = vmul.f32 %v5041, %v5043
        %v5045 = vsub.f32 1.0, %v5044
        %v5046 = vmul.f32 %v5043, %v5045
        %v5047 = vadd.f32 %v5043, %v5046
        %vm5048 = vweird.f32 %v5041
        %vm5049 = vweird.f32 %v5043
        %vm5050 = vmor %vm5048, %vm5049
        %v5051 = vsel %vm5050, %v5043, %v5047
        %v5052 = vand.u32 2147483647, %v5041
        %vm5053 = vcmp.eq.f32.partialorder %v5052, 8.507059e+37
        %v5054 = vand.u32 %v5041, 2147483648
        %v5055 = vor.u32 1.1754944e-38, %v5054
        %v5056 = vsel %vm5053, %v5055, %v5051
        %v5057 = vmul.f32 1.0, %v5056
        %v5058 = vrcp.pop %v5042
        %v5059 = vmul.f32 %v5042, %v5058
        %v5060 = vsub.f32 1.0, %v5059
        %v5061 = vmul.f32 %v5058, %v5060
        %v5062 = vadd.f32 %v5058, %v5061
        %vm5063 = vweird.f32 %v5042
        %vm5064 = vweird.f32 %v5058
        %vm5065 = vmor %vm5063, %vm5064
        %v5066 = vsel %vm5065, %v5058, %v5062
        %v5067 = vand.u32 2147483647, %v5042
        %vm5068 = vcmp.eq.f32.partialorder %v5067, 8.507059e+37
        %v5069 = vand.u32 %v5042, 2147483648
        %v5070 = vor.u32 1.1754944e-38, %v5069
        %v5071 = vsel %vm5068, %v5070, %v5066
        %v5072 = vmul.f32 1.0, %v5071
        %v5073 = vxor.u32 %v4989, 2147483648
        %v5074 = vxor.u32 %v4993, 2147483648
        %v5075 = vmul.f32 %v5073, 1.442695
        %v5076 = vpow.pop %v5075
        %v5077 = vmul.f32 %v5074, 1.442695
        %v5078 = vpow.pop %v5077
        %v5079 = vadd.f32 %v5076, 1.0
        %v5080 = vadd.f32 %v5078, 1.0
        %v5081 = vrcp.pop %v5079
        %v5082 = vmul.f32 %v5079, %v5081
        %v5083 = vsub.f32 1.0, %v5082
        %v5084 = vmul.f32 %v5081, %v5083
        %v5085 = vadd.f32 %v5081, %v5084
        %vm5086 = vweird.f32 %v5079
        %vm5087 = vweird.f32 %v5081
        %vm5088 = vmor %vm5086, %vm5087
        %v5089 = vsel %vm5088, %v5081, %v5085
        %v5090 = vand.u32 2147483647, %v5079
        %vm5091 = vcmp.eq.f32.partialorder %v5090, 8.507059e+37
        %v5092 = vand.u32 %v5079, 2147483648
        %v5093 = vor.u32 1.1754944e-38, %v5092
        %v5094 = vsel %vm5091, %v5093, %v5089
        %v5095 = vmul.f32 1.0, %v5094
        %v5096 = vrcp.pop %v5080
        %v5097 = vmul.f32 %v5080, %v5096
        %v5098 = vsub.f32 1.0, %v5097
        %v5099 = vmul.f32 %v5096, %v5098
        %v5100 = vadd.f32 %v5096, %v5099
        %vm5101 = vweird.f32 %v5080
        %vm5102 = vweird.f32 %v5096
        %vm5103 = vmor %vm5101, %vm5102
        %v5104 = vsel %vm5103, %v5096, %v5100
        %v5105 = vand.u32 2147483647, %v5080
        %vm5106 = vcmp.eq.f32.partialorder %v5105, 8.507059e+37
        %v5107 = vand.u32 %v5080, 2147483648
        %v5108 = vor.u32 1.1754944e-38, %v5107
        %v5109 = vsel %vm5106, %v5108, %v5104
        %v5110 = vmul.f32 1.0, %v5109
        %v5111 = vtanh.pop %v4990
        %v5112 = vtanh.pop %v4994
        %v5113 = vmul.f32 %v5057, %v4995
        %v5114 = vmul.f32 %v5072, %v4996
        %v5115 = vmul.f32 %v5019, %v5111
        %v5116 = vmul.f32 %v5034, %v5112
        %v5117 = vadd.f32 %v5113, %v5115
        %v5118 = vadd.f32 %v5114, %v5116
        %v5119 = vtanh.pop %v5117
        %v5120 = vtanh.pop %v5118
        %v5121 = vmul.f32 %v5095, %v5119
        %v5122 = vmul.f32 %v5110, %v5120
        %5123 = vst [vmem:[#allocation6] sm:$0xff] %v5121
        %5124 = vst [vmem:[#allocation6 + $0x8] sm:$0xff] %v5122
        %5125 = vst [vmem:[#allocation7] sm:$0xff] %v5117
        %5126 = vst [vmem:[#allocation7 + $0x8] sm:$0xff] %v5118
        %v5127 = vrot.slane %v5121, 7
        %v5128 = vrot.slane %v5122, 7
        %v5129 = vsel %vm2669, %v5127, %v5128
        %v5130 = vsel %vm2669, %v5128, %v5127
        %v5131 = vrot.slane %v5121, 1
        %v5132 = vrot.slane %v5122, 1
        %v5133 = vsel %vm2682, %v5131, %v5132
        %v5134 = vsel %vm2682, %v5132, %v5131
        %v5135 = vld [vmem:[%s4] sm:$0xff]
        %v5136 = vld [vmem:[%s4 + $0x8] sm:$0xff]
        %5138 = vset.pattern.permute.xlu0 0
        %5139 = vperm.xlu0 %5138, %v5135
        %v5140 = vpop.permute.xlu0 %5139
        %5143 = vset.pattern.permute.xlu0 0
        %5144 = vperm.xlu0 %5143, %v5136
        %v5145 = vpop.permute.xlu0 %5144
        %v5147 = vmul.f32 %v5130, %v5140
        %v5148 = vmul.f32 %v5129, %v5145
        %v5149 = vld [vmem:[%s2707] sm:$0xff]
        %v5150 = vld [vmem:[%s2707 + $0x8] sm:$0xff]
        %5152 = vset.pattern.permute.xlu0 0
        %5153 = vperm.xlu0 %5152, %v5149
        %v5154 = vpop.permute.xlu0 %5153
        %5157 = vset.pattern.permute.xlu0 0
        %5158 = vperm.xlu0 %5157, %v5150
        %v5159 = vpop.permute.xlu0 %5158
        %v5161 = vmul.f32 %v5133, %v5154
        %v5162 = vmul.f32 %v5134, %v5159
        %v5163 = vpack.c.bf16 %v5148, %v5147
        %v5164 = vld [vmem:[#allocation21] sm:$0xf]
        %v5165 = vld [vmem:[#allocation21 + $0x4] sm:$0xf]
        %v5166 = vld [vmem:[#allocation21 + $0x8] sm:$0xf]
        %v5167 = vld [vmem:[#allocation21 + $0xc] sm:$0xf]
        %v5168 = vld [vmem:[#allocation21 + $0x10] sm:$0xf]
        %v5169 = vld [vmem:[#allocation21 + $0x14] sm:$0xf]
        %v5170 = vld [vmem:[#allocation21 + $0x18] sm:$0xf]
        %v5171 = vld [vmem:[#allocation21 + $0x1c] sm:$0xf]
        %v5172 = vld [vmem:[#allocation21 + $0x20] sm:$0xf]
        %v5173 = vld [vmem:[#allocation21 + $0x24] sm:$0xf]
        %v5174 = vld [vmem:[#allocation21 + $0x28] sm:$0xf]
        %v5175 = vld [vmem:[#allocation21 + $0x2c] sm:$0xf]
        %v5176 = vld [vmem:[#allocation21 + $0x30] sm:$0xf]
        %v5177 = vld [vmem:[#allocation21 + $0x34] sm:$0xf]
        %v5178 = vld [vmem:[#allocation21 + $0x38] sm:$0xf]
        %v5179 = vld [vmem:[#allocation21 + $0x3c] sm:$0xf]
        %v5180 = vpack.c.bf16 %v5122, %v5121
        %s5181 = scalar_lea.vmem [#allocation21], 64
        %v5182 = vld [vmem:[%s5181] sm:$0xf]
        %v5183 = vld [vmem:[%s5181 + $0x4] sm:$0xf]
        %v5184 = vld [vmem:[%s5181 + $0x8] sm:$0xf]
        %v5185 = vld [vmem:[%s5181 + $0xc] sm:$0xf]
        %v5186 = vld [vmem:[%s5181 + $0x10] sm:$0xf]
        %v5187 = vld [vmem:[%s5181 + $0x14] sm:$0xf]
        %v5188 = vld [vmem:[%s5181 + $0x18] sm:$0xf]
        %v5189 = vld [vmem:[%s5181 + $0x1c] sm:$0xf]
        %v5190 = vld [vmem:[%s5181 + $0x20] sm:$0xf]
        %v5191 = vld [vmem:[%s5181 + $0x24] sm:$0xf]
        %v5192 = vld [vmem:[%s5181 + $0x28] sm:$0xf]
        %v5193 = vld [vmem:[%s5181 + $0x2c] sm:$0xf]
        %v5194 = vld [vmem:[%s5181 + $0x30] sm:$0xf]
        %v5195 = vld [vmem:[%s5181 + $0x34] sm:$0xf]
        %v5196 = vld [vmem:[%s5181 + $0x38] sm:$0xf]
        %v5197 = vld [vmem:[%s5181 + $0x3c] sm:$0xf]
        %v5214 = vunpack.c.l.b16 %v5182
        %v5215 = vunpack.c.l.b16 %v5183
        %v5216 = vunpack.c.l.b16 %v5184
        %v5217 = vunpack.c.l.b16 %v5185
        %v5218 = vunpack.c.l.b16 %v5186
        %v5219 = vunpack.c.l.b16 %v5187
        %v5220 = vunpack.c.l.b16 %v5188
        %v5221 = vunpack.c.l.b16 %v5189
        %v5222 = vunpack.c.l.b16 %v5190
        %v5223 = vunpack.c.l.b16 %v5191
        %v5224 = vunpack.c.l.b16 %v5192
        %v5225 = vunpack.c.l.b16 %v5193
        %v5226 = vunpack.c.l.b16 %v5194
        %v5227 = vunpack.c.l.b16 %v5195
        %v5228 = vunpack.c.l.b16 %v5196
        %v5229 = vunpack.c.l.b16 %v5197
        %v5230 = vpack.c.b16 %v5215, %v5214
        %v5231 = vpack.c.b16 %v5217, %v5216
        %v5232 = vpack.c.b16 %v5219, %v5218
        %v5233 = vpack.c.b16 %v5221, %v5220
        %v5234 = vpack.c.b16 %v5223, %v5222
        %v5235 = vpack.c.b16 %v5225, %v5224
        %v5236 = vpack.c.b16 %v5227, %v5226
        %v5237 = vpack.c.b16 %v5229, %v5228
        %5246 = vmatpush.bf16.msra.mxu0 %v5237
        %5247 = vmatpush.bf16.msra.mxu0 %v5236
        %5248 = vmatpush.bf16.msra.mxu0 %v5235
        %5249 = vmatpush.bf16.msra.mxu0 %v5234
        %5250 = vmatpush.bf16.msra.mxu0 %v5233
        %5251 = vmatpush.bf16.msra.mxu0 %v5232
        %5252 = vmatpush.bf16.msra.mxu0 %v5231
        %5253 = vmatpush.bf16.msra.mxu0 %v5230
        %5254 = vmatmul.bf16.gmra.mxu0 %v5180
        %v5255 = vpop.f32.mrf.mxu0
        %v5256 = vadd.f32 0.0, %v5255
        %v5257 = vpop.f32.mrf.mxu0
        %v5258 = vadd.f32 0.0, %v5257
        %5259 = vdwg.mxu0
        %v5276 = vunpack.c.l.b16 %v5164
        %v5277 = vunpack.c.l.b16 %v5165
        %v5278 = vunpack.c.l.b16 %v5166
        %v5279 = vunpack.c.l.b16 %v5167
        %v5280 = vunpack.c.l.b16 %v5168
        %v5281 = vunpack.c.l.b16 %v5169
        %v5282 = vunpack.c.l.b16 %v5170
        %v5283 = vunpack.c.l.b16 %v5171
        %v5284 = vunpack.c.l.b16 %v5172
        %v5285 = vunpack.c.l.b16 %v5173
        %v5286 = vunpack.c.l.b16 %v5174
        %v5287 = vunpack.c.l.b16 %v5175
        %v5288 = vunpack.c.l.b16 %v5176
        %v5289 = vunpack.c.l.b16 %v5177
        %v5290 = vunpack.c.l.b16 %v5178
        %v5291 = vunpack.c.l.b16 %v5179
        %v5292 = vpack.c.b16 %v5277, %v5276
        %v5293 = vpack.c.b16 %v5279, %v5278
        %v5294 = vpack.c.b16 %v5281, %v5280
        %v5295 = vpack.c.b16 %v5283, %v5282
        %v5296 = vpack.c.b16 %v5285, %v5284
        %v5297 = vpack.c.b16 %v5287, %v5286
        %v5298 = vpack.c.b16 %v5289, %v5288
        %v5299 = vpack.c.b16 %v5291, %v5290
        %5308 = vmatpush.bf16.msra.mxu0 %v5299
        %5309 = vmatpush.bf16.msra.mxu0 %v5298
        %5310 = vmatpush.bf16.msra.mxu0 %v5297
        %5311 = vmatpush.bf16.msra.mxu0 %v5296
        %5312 = vmatpush.bf16.msra.mxu0 %v5295
        %5313 = vmatpush.bf16.msra.mxu0 %v5294
        %5314 = vmatpush.bf16.msra.mxu0 %v5293
        %5315 = vmatpush.bf16.msra.mxu0 %v5292
        %5316 = vmatmul.bf16.gmra.mxu0 %v5163
        %v5317 = vpop.f32.mrf.mxu0
        %v5318 = vadd.f32 %v5256, %v5317
        %v5319 = vpop.f32.mrf.mxu0
        %v5320 = vadd.f32 %v5258, %v5319
        %5321 = vdwg.mxu0
        %v5322 = vpack.c.bf16 %v5162, %v5161
        %s5323 = scalar_lea.vmem [#allocation21], 128
        %v5324 = vld [vmem:[%s5323] sm:$0xf]
        %v5325 = vld [vmem:[%s5323 + $0x4] sm:$0xf]
        %v5326 = vld [vmem:[%s5323 + $0x8] sm:$0xf]
        %v5327 = vld [vmem:[%s5323 + $0xc] sm:$0xf]
        %v5328 = vld [vmem:[%s5323 + $0x10] sm:$0xf]
        %v5329 = vld [vmem:[%s5323 + $0x14] sm:$0xf]
        %v5330 = vld [vmem:[%s5323 + $0x18] sm:$0xf]
        %v5331 = vld [vmem:[%s5323 + $0x1c] sm:$0xf]
        %v5332 = vld [vmem:[%s5323 + $0x20] sm:$0xf]
        %v5333 = vld [vmem:[%s5323 + $0x24] sm:$0xf]
        %v5334 = vld [vmem:[%s5323 + $0x28] sm:$0xf]
        %v5335 = vld [vmem:[%s5323 + $0x2c] sm:$0xf]
        %v5336 = vld [vmem:[%s5323 + $0x30] sm:$0xf]
        %v5337 = vld [vmem:[%s5323 + $0x34] sm:$0xf]
        %v5338 = vld [vmem:[%s5323 + $0x38] sm:$0xf]
        %v5339 = vld [vmem:[%s5323 + $0x3c] sm:$0xf]
        %v5356 = vunpack.c.l.b16 %v5324
        %v5357 = vunpack.c.l.b16 %v5325
        %v5358 = vunpack.c.l.b16 %v5326
        %v5359 = vunpack.c.l.b16 %v5327
        %v5360 = vunpack.c.l.b16 %v5328
        %v5361 = vunpack.c.l.b16 %v5329
        %v5362 = vunpack.c.l.b16 %v5330
        %v5363 = vunpack.c.l.b16 %v5331
        %v5364 = vunpack.c.l.b16 %v5332
        %v5365 = vunpack.c.l.b16 %v5333
        %v5366 = vunpack.c.l.b16 %v5334
        %v5367 = vunpack.c.l.b16 %v5335
        %v5368 = vunpack.c.l.b16 %v5336
        %v5369 = vunpack.c.l.b16 %v5337
        %v5370 = vunpack.c.l.b16 %v5338
        %v5371 = vunpack.c.l.b16 %v5339
        %v5372 = vpack.c.b16 %v5357, %v5356
        %v5373 = vpack.c.b16 %v5359, %v5358
        %v5374 = vpack.c.b16 %v5361, %v5360
        %v5375 = vpack.c.b16 %v5363, %v5362
        %v5376 = vpack.c.b16 %v5365, %v5364
        %v5377 = vpack.c.b16 %v5367, %v5366
        %v5378 = vpack.c.b16 %v5369, %v5368
        %v5379 = vpack.c.b16 %v5371, %v5370
        %5388 = vmatpush.bf16.msra.mxu0 %v5379
        %5389 = vmatpush.bf16.msra.mxu0 %v5378
        %5390 = vmatpush.bf16.msra.mxu0 %v5377
        %5391 = vmatpush.bf16.msra.mxu0 %v5376
        %5392 = vmatpush.bf16.msra.mxu0 %v5375
        %5393 = vmatpush.bf16.msra.mxu0 %v5374
        %5394 = vmatpush.bf16.msra.mxu0 %v5373
        %5395 = vmatpush.bf16.msra.mxu0 %v5372
        %5396 = vmatmul.bf16.gmra.mxu0 %v5322
        %v5397 = vpop.f32.mrf.mxu0
        %v5398 = vadd.f32 0.0, %v5397
        %v5399 = vpop.f32.mrf.mxu0
        %v5400 = vadd.f32 0.0, %v5399
        %5401 = vdwg.mxu0
        %v5402 = vadd.f32 %v5318, %v5398
        %v5403 = vadd.f32 %v5320, %v5400
        %v5404 = vld [vmem:[#allocation22] sm:$0x1]
        %v5406 = vperm.slane %v5404, 0
        %v5408 = vadd.f32 %v5402, %v5406
        %v5409 = vadd.f32 %v5403, %v5406
        %5410 = vst [vmem:[%s759] sm:$0xff] %v5408
        %5411 = vst [vmem:[%s759 + $0x8] sm:$0xff] %v5409
        %s5412 = smul.u32 2, %s35
        %p5413 = scmp.lt.s32.totalorder %s5412, 3
        %s5414 = scalar_select %p5413, %s5412, 3
        %s5415 = smul.addr %s5414, 8
        %s5416 = scalar_lea.vmem %s19, %s5415
        // Predicated region
        $region133: #{rvosnet_forward.3} parent=95 // pred_check
          %p5417 = pneg %p467
        $region134: #{rvosnet_forward.3} parent=95 // pred_check_branch
          %5419 = sbr.rel (%p5417) target = $region136
        $region135: #{rvosnet_forward.3} parent=95 // pred_region
          %s5420 = smul.u32 2, %s35
        $region136: #{rvosnet_forward.3} parent=95 // pred_fallthru
          _
      $region96: #{rvosnet_forward.3} parent=5 // pred_fallthru
        _
      %p5421 = scmp.le.s32.totalorder 2, %s30
      // Predicated region
      $region137: #{rvosnet_forward.3} parent=5 // pred_check
        %p5422 = pneg %p5421
      $region138: #{rvosnet_forward.3} parent=5 // pred_check_branch
        %5424 = sbr.rel (%p5422) target = $region140
      $region139: #{rvosnet_forward.3} parent=5 // pred_region
        %s5425 = ssub.s32 %s30, 2
        // Predicated region
        $region141: #{rvosnet_forward.3} parent=139 // pred_check
          %p5426 = pneg %p473
        $region142: #{rvosnet_forward.3} parent=139 // pred_check_branch
          %5428 = sbr.rel (%p5426) target = $region144
        $region143: #{rvosnet_forward.3} parent=139 // pred_region
          %s5429 = smul.u32 2, %s36
          %p5430 = scmp.lt.s32.totalorder %s5429, 3
          %s5431 = scalar_select %p5430, %s5429, 3
          %s5432 = smul.addr %s5431, 8
          %s5433 = scalar_lea.vmem %s19, %s5432
        $region144: #{rvosnet_forward.3} parent=139 // pred_fallthru
          _
      $region140: #{rvosnet_forward.3} parent=5 // pred_fallthru
        _
    $region6: #{rvosnet_forward.3} parent=1 // loop_footer
      %s34 = sadd.s32 1, %s30
    $region7: #{rvosnet_forward.3} parent=1 // loop_footer_branch
      %29 = sbr.rel target = $region3
    $region8: #{rvosnet_forward.3} parent=1 // loop_exit
      _
    %5434 = vsyncpa [#allocation12], 1
    %s5435 = scalar_lea.sflag [#allocation12], 1
    %5436 = vsyncpa %s5435, 1
    %5437 = vsyncpa [#allocation14], 1
    %5438 = vsyncpa [#allocation17], 1
    %5439 = vsyncpa [#allocation20], 1
    %5440 = vsyncpa [#allocation23], 1

</llo_original>
